<compile_context>
chip_gen: v7x
topology: tpu7x:2x2x1
jax: 0.10.0
libtpu: 0.0.40
codegen_flags: <defaults>
</compile_context>

<pallas_src>
import jax
import jax.numpy as jnp
from jax.experimental import pallas as pl
from jax.experimental.pallas import tpu as pltpu


# ----------------------------------------------------------------------------
# Model constants
# ----------------------------------------------------------------------------
IMG_DIM, POSE_DIM, GAZE_DIM, BBOX_DIM, OCR_DIM = 512, 150, 6, 108, 64
IMG_PAD, POSE_PAD, GAZE_PAD, BBOX_PAD, OCR_PAD = 512, 256, 128, 128, 128
FEAT_DIM = IMG_DIM + POSE_DIM + GAZE_DIM + BBOX_DIM + OCR_DIM    # 840
FEAT_PAD = IMG_PAD + POSE_PAD + GAZE_PAD + BBOX_PAD + OCR_PAD    # 1152 = 9*128
K_TAPS = 5            # Conv1d kernel size
PAD_ROWS = 8          # >= K_TAPS-1 causal zero rows, multiple of 8 sublanes
HIDDEN = 512
OCR_IN = 729
HEAD_DIM = 27
HEAD_PAD = 128        # left | right | zero-pad -> lane-dense output

PGB_IN = POSE_DIM + GAZE_DIM + BBOX_DIM      # 264  (pose|gaze|bbox concat)
PGB_IN_PAD = 384                             # 3*128, lane-dense operand
PGB_OUT = POSE_PAD + GAZE_PAD + BBOX_PAD     # 512  (padded output segment)


# ----------------------------------------------------------------------------
# Fused Pallas kernel
# ----------------------------------------------------------------------------
def fused_kernel(pooled_ref, pgb_ref, ocr_ref,
                 w_img_ref, b_img_ref,
                 w_pgb_ref, b_pgb_ref,
                 w_ocr_ref, b_ocr_ref,
                 w_conv_ref, b_conv_ref,
                 w_heads_ref, b_heads_ref,
                 out_ref,
                 feats_ref):
    """Branch encoders + concat + causal conv(k=5) + ReLU + merged heads.

    feats_ref : VMEM (B, T+PAD_ROWS, FEAT_PAD) bf16.  Rows 0:PAD_ROWS are the
                causal left pad (zeroed here).  The lane-pad columns of the
                real rows are exact zeros BY CONSTRUCTION: every branch
                weight/bias is zero-padded in pack_params, so ReLU(x@W_pad+0)
                stores exact zeros into those columns (invariant required
                since we no longer memset the whole slab).
    out_ref   : (B*T, 128) f32 — cols 0:27 = left head, 27:54 = right head.
    """
    B, TPAD, FP = feats_ref.shape
    T = TPAD - PAD_ROWS
    BT = B * T
    C = pooled_ref.shape[1]
    bf16 = jnp.bfloat16
    f32 = jnp.float32

    # --- causal left pad: zero ONLY the pad rows (one aligned sublane group)
    feats_ref[:, 0:PAD_ROWS, :] = jnp.zeros((B, PAD_ROWS, FP), bf16)

    # --- surrogate image encoder: Linear C->512 on pre-pooled input.
    # C = 3 -> three broadcast FMAs on the VPU (overlaps with MXU work),
    # instead of an f32 MXU dot that would use 3 of 128/256 rows.
    pooled = pooled_ref[...]                                      # (BT, C) f32
    w_img = w_img_ref[...]                                        # (C, 512) f32
    img_feat = jnp.broadcast_to(b_img_ref[...], (BT, IMG_PAD))    # (BT, 512)
    for c in range(C):                                            # static unroll
        img_feat = img_feat + pooled[:, c:c + 1] * w_img[c:c + 1, :]
    feats_ref[:, PAD_ROWS:, 0:IMG_PAD] = (
        img_feat.reshape(B, T, IMG_PAD).astype(bf16))

    # --- pose|gaze|bbox: ONE block-diagonal matmul + bias + ReLU,
    # one lane-aligned 512-wide store (zero-padded weights keep pad cols = 0).
    pgb = jnp.dot(pgb_ref[...], w_pgb_ref[...], preferred_element_type=f32)
    pgb = jnp.maximum(pgb + b_pgb_ref[...], 0.0).astype(bf16)     # (BT, 512)
    feats_ref[:, PAD_ROWS:, IMG_PAD:IMG_PAD + PGB_OUT] = (
        pgb.reshape(B, T, PGB_OUT))

    # --- OCR branch: per-batch, broadcast over T.
    ocr = jnp.dot(ocr_ref[...], w_ocr_ref[...], preferred_element_type=f32)
    ocr = jnp.maximum(ocr + b_ocr_ref[...], 0.0).astype(bf16)     # (B, 128)
    feats_ref[:, PAD_ROWS:, IMG_PAD + PGB_OUT:FP] = jnp.broadcast_to(
        ocr[:, None, :], (B, T, OCR_PAD))

    # --- causal Conv1d(k=5) as 5 accumulated tap matmuls (no im2col buffer):
    # tap k reads padded features at times t+k-4 for outputs t.
    base = PAD_ROWS - (K_TAPS - 1)
    acc = jnp.zeros((BT, HIDDEN), f32)
    for k in range(K_TAPS):                                       # static unroll
        tap = feats_ref[:, base + k:base + k + T, :].reshape(BT, FP)
        acc = acc + jnp.dot(tap, w_conv_ref[k], preferred_element_type=f32)
    h = jnp.maximum(acc + b_conv_ref[...], 0.0)                   # (BT, 512) f32
    # nn.Dropout(p=0.2) is the identity at inference time.

    # --- merged left|right heads: one lane-dense (BT, 128) output store.
    out = jnp.dot(h.astype(bf16), w_heads_ref[...],
                  preferred_element_type=f32) + b_heads_ref[...]
    out_ref[...] = out.astype(out_ref.dtype)


# ----------------------------------------------------------------------------
# Wrapper
# ----------------------------------------------------------------------------
def resnet_conv1d_forward(params, images, poses, gazes, bboxes, ocr_tensor):
    B, T, C, H, W = images.shape
    BT = B * T

    # Global average pool stays OUTSIDE the kernel: the kernel only sees
    # (BT, C) instead of raw pixels (cuts kernel input bytes by H*W).
    pooled = images.reshape(BT, C, H * W).mean(axis=-1).astype(jnp.float32)

    # pose|gaze|bbox concatenated and zero-padded to a lane-dense (BT, 384)
    # operand for the block-diagonal branch matmul (pad cols hit zero rows).
    pgb = jnp.concatenate([
        poses.reshape(BT, POSE_DIM).astype(jnp.float32),
        gazes.reshape(BT, GAZE_DIM).astype(jnp.float32),
        bboxes.reshape(BT, BBOX_DIM).astype(jnp.float32),
    ], axis=-1)
    pgb = jnp.pad(pgb, ((0, 0), (0, PGB_IN_PAD - PGB_IN))).astype(jnp.bfloat16)
    ocr = ocr_tensor.astype(jnp.bfloat16)

    operands = (pooled, pgb, ocr,
                params['w_img'], params['b_img'],
                params['w_pgb'], params['b_pgb'],
                params['w_ocr'], params['b_ocr'],
                params['w_conv'], params['b_conv'],
                params['w_heads'], params['b_heads'])

    vmem = pl.BlockSpec(memory_space=pltpu.MemorySpace.VMEM)
    out = pl.pallas_call(
        fused_kernel,
        out_shape=jax.ShapeDtypeStruct((BT, HEAD_PAD), jnp.float32),
        in_specs=[vmem] * len(operands),
        out_specs=vmem,
        scratch_shapes=[
            pltpu.VMEM((B, T + PAD_ROWS, FEAT_PAD), jnp.bfloat16),
        ],
    )(*operands)

    left = out[:, 0:HEAD_DIM].reshape(B, T, HEAD_DIM)
    right = out[:, HEAD_DIM:2 * HEAD_DIM].reshape(B, T, HEAD_DIM)
    return left, right


# ----------------------------------------------------------------------------
# Parameters: "torch-layout" init + packing into kernel-ready padded layout
# ----------------------------------------------------------------------------
def init_raw_params(key, img_channels):
    ks = jax.random.split(key, 16)

    def lin(kw, kb, din, dout):
        w = jax.random.normal(kw, (din, dout), jnp.float32) * 0.02
        b = jax.random.normal(kb, (dout,), jnp.float32) * 0.02
        return w, b

    p = {}
    p['w_img'], p['b_img'] = lin(ks[0], ks[1], img_channels, IMG_DIM)    # surrogate
    p['w_pose'], p['b_pose'] = lin(ks[2], ks[3], POSE_DIM, POSE_DIM)
    p['w_gaze'], p['b_gaze'] = lin(ks[4], ks[5], GAZE_DIM, GAZE_DIM)
    p['w_bbox'], p['b_bbox'] = lin(ks[6], ks[7], BBOX_DIM, BBOX_DIM)
    p['w_ocr'], p['b_ocr'] = lin(ks[8], ks[9], OCR_IN, OCR_DIM)
    # Conv1d(840->512, k=5): torch weight (512, 840, 5) stored per-tap as
    # (5, 840, 512) = transpose(2, 1, 0).
    p['w_conv'] = jax.random.normal(ks[10], (K_TAPS, FEAT_DIM, HIDDEN),
                                    jnp.float32) * 0.02
    p['b_conv'] = jax.random.normal(ks[11], (HIDDEN,), jnp.float32) * 0.02
    p['w_left'], p['b_left'] = lin(ks[12], ks[13], HIDDEN, HEAD_DIM)
    p['w_right'], p['b_right'] = lin(ks[14], ks[15], HIDDEN, HEAD_DIM)
    return p


def pack_params(raw):
    """Pad / repack raw weights into the lane-aligned bf16 kernel layout.

    INVARIANT (relied on by the kernel, which only zeroes the pad ROWS of
    feats): every lane-pad column of every branch output segment must get an
    exact-zero weight column AND zero bias, so the branch matmuls themselves
    write zeros into those columns.
    """
    bf16 = jnp.bfloat16
    f32 = jnp.float32
    p = {}

    # Image surrogate projection: C is tiny -> VPU FMAs in-kernel, keep f32.
    p['w_img'] = raw['w_img'].astype(f32)                          # (C, 512)
    p['b_img'] = raw['b_img'].reshape(1, IMG_PAD).astype(f32)

    # pose | gaze | bbox fused block-diagonal weight (384, 512).
    w_pgb = jnp.zeros((PGB_IN_PAD, PGB_OUT), f32)
    b_pgb = jnp.zeros((PGB_OUT,), f32)
    in_off, out_off = 0, 0
    for name, din, dpad in (('pose', POSE_DIM, POSE_PAD),
                            ('gaze', GAZE_DIM, GAZE_PAD),
                            ('bbox', BBOX_DIM, BBOX_PAD)):
        w_pgb = w_pgb.at[in_off:in_off + din,
                         out_off:out_off + din].set(raw[f'w_{name}'])
        b_pgb = b_pgb.at[out_off:out_off + din].set(raw[f'b_{name}'])
        in_off += din
        out_off += dpad
    p['w_pgb'] = w_pgb.astype(bf16)
    p['b_pgb'] = b_pgb.reshape(1, PGB_OUT).astype(f32)

    # OCR branch (output zero-padded 64 -> 128).
    p['w_ocr'] = jnp.pad(raw['w_ocr'],
                         ((0, 0), (0, OCR_PAD - OCR_DIM))).astype(bf16)
    p['b_ocr'] = jnp.pad(raw['b_ocr'],
                         (0, OCR_PAD - OCR_DIM)).reshape(1, OCR_PAD).astype(f32)

    # Conv weight: insert zero rows matching the padded feature segments,
    # kept per-tap: (5, 1152, 512).
    real = [IMG_DIM, POSE_DIM, GAZE_DIM, BBOX_DIM, OCR_DIM]
    padded = [IMG_PAD, POSE_PAD, GAZE_PAD, BBOX_PAD, OCR_PAD]
    taps = []
    for k in range(K_TAPS):
        rows, start = [], 0
        for r, rp in zip(real, padded):
            rows.append(raw['w_conv'][k, start:start + r, :])
            if rp > r:
                rows.append(jnp.zeros((rp - r, HIDDEN), jnp.float32))
            start += r
        taps.append(jnp.concatenate(rows, axis=0))                 # (1152, 512)
    p['w_conv'] = jnp.stack(taps, axis=0).astype(bf16)             # (5,1152,512)
    p['b_conv'] = raw['b_conv'].reshape(1, HIDDEN).astype(f32)

    # Merged heads: left -> cols 0:27, right -> cols 27:54, rest zero.
    w_heads = jnp.zeros((HIDDEN, HEAD_PAD), jnp.float32)
    w_heads = w_heads.at[:, 0:HEAD_DIM].set(raw['w_left'])
    w_heads = w_heads.at[:, HEAD_DIM:2 * HEAD_DIM].set(raw['w_right'])
    b_heads = jnp.zeros((HEAD_PAD,), jnp.float32)
    b_heads = b_heads.at[0:HEAD_DIM].set(raw['b_left'])
    b_heads = b_heads.at[HEAD_DIM:2 * HEAD_DIM].set(raw['b_right'])
    p['w_heads'] = w_heads.astype(bf16)
    p['b_heads'] = b_heads.reshape(1, HEAD_PAD).astype(f32)
    return p


# ----------------------------------------------------------------------------
# Pure-JAX f32 reference (mirrors the PyTorch module with the same surrogate)
# ----------------------------------------------------------------------------
def reference_forward(raw, images, poses, gazes, bboxes, ocr_tensor):
    B, T, C, H, W = images.shape
    BT = B * T
    pooled = images.reshape(BT, C, H * W).mean(-1)
    img_feat = pooled @ raw['w_img'] + raw['b_img']
    pose_feat = jax.nn.relu(poses.reshape(BT, POSE_DIM) @ raw['w_pose'] + raw['b_pose'])
    gaze_feat = jax.nn.relu(gazes.reshape(BT, GAZE_DIM) @ raw['w_gaze'] + raw['b_gaze'])
    bbox_feat = jax.nn.relu(bboxes.reshape(BT, BBOX_DIM) @ raw['w_bbox'] + raw['b_bbox'])
    ocr_feat = jax.nn.relu(ocr_tensor @ raw['w_ocr'] + raw['b_ocr'])
    feats = jnp.concatenate([
        img_feat.reshape(B, T, IMG_DIM),
        pose_feat.reshape(B, T, POSE_DIM),
        gaze_feat.reshape(B, T, GAZE_DIM),
        bbox_feat.reshape(B, T, BBOX_DIM),
        jnp.broadcast_to(ocr_feat[:, None, :], (B, T, OCR_DIM)),
    ], axis=-1)
    fp = jnp.pad(feats, ((0, 0), (K_TAPS - 1, 0), (0, 0)))
    conv = jnp.broadcast_to(raw['b_conv'][None, None, :], (B, T, HIDDEN))
    for k in range(K_TAPS):
        conv = conv + jnp.einsum('btf,fo->bto', fp[:, k:k + T, :], raw['w_conv'][k])
    h = jax.nn.relu(conv)
    left = h @ raw['w_left'] + raw['b_left']
    right = h @ raw['w_right'] + raw['b_right']
    return left, right


# ----------------------------------------------------------------------------
# Main
# ----------------------------------------------------------------------------
if __name__ == "__main__":
    key = jax.random.PRNGKey(0)
    kp, ki, k1, k2, k3, k4 = jax.random.split(key, 6)

    B, T, C, H, W = 2, 8, 3, 16, 16
    images = jax.random.normal(ki, (B, T, C, H, W), jnp.float32)
    poses = jax.random.normal(k1, (B, T, POSE_DIM), jnp.float32)
    gazes = jax.random.normal(k2, (B, T, GAZE_DIM), jnp.float32)
    bboxes = jax.random.normal(k3, (B, T, BBOX_DIM), jnp.float32)
    ocr_tensor = jax.random.normal(k4, (B, OCR_IN), jnp.float32)

    raw = init_raw_params(kp, C)
    params = pack_params(raw)

    fwd = jax.jit(resnet_conv1d_forward)
    left, right = fwd(params, images, poses, gazes, bboxes, ocr_tensor)
    jax.block_until_ready((left, right))

    assert left.shape == (B, T, HEAD_DIM) and right.shape == (B, T, HEAD_DIM)
    assert left.dtype == jnp.float32 and right.dtype == jnp.float32

    # Numerical check against the f32 reference (bf16-MXU tolerance).
    ref_l, ref_r = reference_forward(raw, images, poses, gazes, bboxes, ocr_tensor)
    assert bool(jnp.allclose(left, ref_l, atol=5e-2, rtol=5e-2))
    assert bool(jnp.allclose(right, ref_r, atol=5e-2, rtol=5e-2))

    print("KERNEL_OK")
</pallas_src>

<mosaic_0001>
module attributes {stable_mosaic.version = 11 : i64} {
  func.func @fused_kernel(%arg0: memref<16x3xf32, #tpu.memory_space<vmem>>, %arg1: memref<16x384xbf16, #tpu.memory_space<vmem>>, %arg2: memref<2x729xbf16, #tpu.memory_space<vmem>>, %arg3: memref<3x512xf32, #tpu.memory_space<vmem>>, %arg4: memref<1x512xf32, #tpu.memory_space<vmem>>, %arg5: memref<384x512xbf16, #tpu.memory_space<vmem>>, %arg6: memref<1x512xf32, #tpu.memory_space<vmem>>, %arg7: memref<729x128xbf16, #tpu.memory_space<vmem>>, %arg8: memref<1x128xf32, #tpu.memory_space<vmem>>, %arg9: memref<5x1152x512xbf16, #tpu.memory_space<vmem>>, %arg10: memref<1x512xf32, #tpu.memory_space<vmem>>, %arg11: memref<512x128xbf16, #tpu.memory_space<vmem>>, %arg12: memref<1x128xf32, #tpu.memory_space<vmem>>, %arg13: memref<16x128xf32, #tpu.memory_space<vmem>>, %arg14: memref<2x16x1152xbf16, #tpu.memory_space<vmem>>) attributes {dimension_semantics = [], scalar_prefetch = 0 : i64, scratch_operands = 1 : i64, tpu.core_type = #tpu.core_type<tc>} {
    %cst = arith.constant 0.000000e+00 : bf16
    %0 = vector.broadcast %cst : bf16 to vector<2x8x1152xbf16>
    %c0 = arith.constant 0 : index
    %c0_0 = arith.constant 0 : index
    %c0_1 = arith.constant 0 : index
    %1 = vector.load %arg14[%c0, %c0_0, %c0_1] : memref<2x16x1152xbf16, #tpu.memory_space<vmem>>, vector<2x8x1152xbf16>
    tpu.vector_store %arg14[%c0, %c0_0, %c0_1], %0 {strides = array<i32>} : memref<2x16x1152xbf16, #tpu.memory_space<vmem>>, vector<2x8x1152xbf16>,
    %c0_2 = arith.constant 0 : index
    %c0_3 = arith.constant 0 : index
    %2 = vector.load %arg0[%c0_2, %c0_3] : memref<16x3xf32, #tpu.memory_space<vmem>>, vector<16x3xf32>
    %c0_4 = arith.constant 0 : index
    %c0_5 = arith.constant 0 : index
    %3 = vector.load %arg3[%c0_4, %c0_5] : memref<3x512xf32, #tpu.memory_space<vmem>>, vector<3x512xf32>
    %c0_6 = arith.constant 0 : index
    %c0_7 = arith.constant 0 : index
    %4 = vector.load %arg4[%c0_6, %c0_7] : memref<1x512xf32, #tpu.memory_space<vmem>>, vector<1x512xf32>
    %5 = vector.shape_cast %4 : vector<1x512xf32> to vector<1x512xf32>
    %6 = vector.broadcast %5 : vector<1x512xf32> to vector<16x512xf32>
    %7 = vector.extract_strided_slice %2 {offsets = [0, 0], sizes = [16, 1], strides = [1, 1]} : vector<16x3xf32> to vector<16x1xf32>
    %8 = vector.extract_strided_slice %3 {offsets = [0, 0], sizes = [1, 512], strides = [1, 1]} : vector<3x512xf32> to vector<1x512xf32>
    %9 = vector.broadcast %7 : vector<16x1xf32> to vector<16x512xf32>
    %10 = vector.broadcast %8 : vector<1x512xf32> to vector<16x512xf32>
    %11 = arith.mulf %9, %10 : vector<16x512xf32>
    %12 = arith.addf %6, %11 : vector<16x512xf32>
    %13 = vector.extract_strided_slice %2 {offsets = [0, 1], sizes = [16, 1], strides = [1, 1]} : vector<16x3xf32> to vector<16x1xf32>
    %14 = vector.extract_strided_slice %3 {offsets = [1, 0], sizes = [1, 512], strides = [1, 1]} : vector<3x512xf32> to vector<1x512xf32>
    %15 = vector.broadcast %13 : vector<16x1xf32> to vector<16x512xf32>
    %16 = vector.broadcast %14 : vector<1x512xf32> to vector<16x512xf32>
    %17 = arith.mulf %15, %16 : vector<16x512xf32>
    %18 = arith.addf %12, %17 : vector<16x512xf32>
    %19 = vector.extract_strided_slice %2 {offsets = [0, 2], sizes = [16, 1], strides = [1, 1]} : vector<16x3xf32> to vector<16x1xf32>
    %20 = vector.extract_strided_slice %3 {offsets = [2, 0], sizes = [1, 512], strides = [1, 1]} : vector<3x512xf32> to vector<1x512xf32>
    %21 = vector.broadcast %19 : vector<16x1xf32> to vector<16x512xf32>
    %22 = vector.broadcast %20 : vector<1x512xf32> to vector<16x512xf32>
    %23 = arith.mulf %21, %22 : vector<16x512xf32>
    %24 = arith.addf %18, %23 : vector<16x512xf32>
    %25 = vector.shape_cast %24 : vector<16x512xf32> to vector<2x8x512xf32>
    %26 = arith.truncf %25 : vector<2x8x512xf32> to vector<2x8x512xbf16>
    %c0_8 = arith.constant 0 : index
    %c8 = arith.constant 8 : index
    %c0_9 = arith.constant 0 : index
    %27 = vector.load %arg14[%c0_8, %c8, %c0_9] : memref<2x16x1152xbf16, #tpu.memory_space<vmem>>, vector<2x8x512xbf16>
    tpu.vector_store %arg14[%c0_8, %c8, %c0_9], %26 {strides = array<i32>} : memref<2x16x1152xbf16, #tpu.memory_space<vmem>>, vector<2x8x512xbf16>,
    %c0_10 = arith.constant 0 : index
    %c0_11 = arith.constant 0 : index
    %28 = vector.load %arg1[%c0_10, %c0_11] : memref<16x384xbf16, #tpu.memory_space<vmem>>, vector<16x384xbf16>
    %c0_12 = arith.constant 0 : index
    %c0_13 = arith.constant 0 : index
    %29 = vector.load %arg5[%c0_12, %c0_13] : memref<384x512xbf16, #tpu.memory_space<vmem>>, vector<384x512xbf16>
    %cst_14 = arith.constant dense<0.000000e+00> : vector<16x512xf32>
    %30 = tpu.matmul %28, %29, %cst_14 {dimension_numbers = #tpu.dot_dimension_numbers<[1], [0], [0], [1], [0, 0, 1, 1], [], []>} : vector<16x384xbf16>, vector<384x512xbf16>, vector<16x512xf32> -> vector<16x512xf32>
    %c0_15 = arith.constant 0 : index
    %c0_16 = arith.constant 0 : index
    %31 = vector.load %arg6[%c0_15, %c0_16] : memref<1x512xf32, #tpu.memory_space<vmem>>, vector<1x512xf32>
    %32 = vector.broadcast %31 : vector<1x512xf32> to vector<16x512xf32>
    %33 = arith.addf %30, %32 : vector<16x512xf32>
    %cst_17 = arith.constant 0.000000e+00 : f32
    %34 = vector.broadcast %cst_17 : f32 to vector<16x512xf32>
    %35 = arith.maximumf %33, %34 : vector<16x512xf32>
    %36 = arith.truncf %35 : vector<16x512xf32> to vector<16x512xbf16>
    %37 = vector.shape_cast %36 : vector<16x512xbf16> to vector<2x8x512xbf16>
    %c0_18 = arith.constant 0 : index
    %c8_19 = arith.constant 8 : index
    %c512 = arith.constant 512 : index
    %38 = vector.load %arg14[%c0_18, %c8_19, %c512] : memref<2x16x1152xbf16, #tpu.memory_space<vmem>>, vector<2x8x512xbf16>
    tpu.vector_store %arg14[%c0_18, %c8_19, %c512], %37 {strides = array<i32>} : memref<2x16x1152xbf16, #tpu.memory_space<vmem>>, vector<2x8x512xbf16>,
    %c0_20 = arith.constant 0 : index
    %c0_21 = arith.constant 0 : index
    %39 = vector.load %arg2[%c0_20, %c0_21] : memref<2x729xbf16, #tpu.memory_space<vmem>>, vector<2x729xbf16>
    %c0_22 = arith.constant 0 : index
    %c0_23 = arith.constant 0 : index
    %40 = vector.load %arg7[%c0_22, %c0_23] : memref<729x128xbf16, #tpu.memory_space<vmem>>, vector<729x128xbf16>
    %cst_24 = arith.constant dense<0.000000e+00> : vector<2x128xf32>
    %41 = tpu.matmul %39, %40, %cst_24 {dimension_numbers = #tpu.dot_dimension_numbers<[1], [0], [0], [1], [0, 0, 1, 1], [], []>} : vector<2x729xbf16>, vector<729x128xbf16>, vector<2x128xf32> -> vector<2x128xf32>
    %c0_25 = arith.constant 0 : index
    %c0_26 = arith.constant 0 : index
    %42 = vector.load %arg8[%c0_25, %c0_26] : memref<1x128xf32, #tpu.memory_space<vmem>>, vector<1x128xf32>
    %43 = vector.broadcast %42 : vector<1x128xf32> to vector<2x128xf32>
    %44 = arith.addf %41, %43 : vector<2x128xf32>
    %cst_27 = arith.constant 0.000000e+00 : f32
    %45 = vector.broadcast %cst_27 : f32 to vector<2x128xf32>
    %46 = arith.maximumf %44, %45 : vector<2x128xf32>
    %47 = arith.truncf %46 : vector<2x128xf32> to vector<2x128xbf16>
    %48 = vector.shape_cast %47 : vector<2x128xbf16> to vector<2x1x128xbf16>
    %49 = vector.shape_cast %48 : vector<2x1x128xbf16> to vector<2x1x128xbf16>
    %50 = vector.broadcast %49 : vector<2x1x128xbf16> to vector<2x8x128xbf16>
    %c0_28 = arith.constant 0 : index
    %c8_29 = arith.constant 8 : index
    %c1024 = arith.constant 1024 : index
    %51 = vector.load %arg14[%c0_28, %c8_29, %c1024] : memref<2x16x1152xbf16, #tpu.memory_space<vmem>>, vector<2x8x128xbf16>
    tpu.vector_store %arg14[%c0_28, %c8_29, %c1024], %50 {strides = array<i32>} : memref<2x16x1152xbf16, #tpu.memory_space<vmem>>, vector<2x8x128xbf16>,
    %cst_30 = arith.constant 0.000000e+00 : f32
    %52 = vector.broadcast %cst_30 : f32 to vector<16x512xf32>
    %c0_31 = arith.constant 0 : index
    %c4 = arith.constant 4 : index
    %c0_32 = arith.constant 0 : index
    %53 = vector.load %arg14[%c0_31, %c4, %c0_32] : memref<2x16x1152xbf16, #tpu.memory_space<vmem>>, vector<2x8x1152xbf16>
    %54 = vector.shape_cast %53 : vector<2x8x1152xbf16> to vector<16x1152xbf16>
    %c0_33 = arith.constant 0 : index
    %c0_34 = arith.constant 0 : index
    %c0_35 = arith.constant 0 : index
    %55 = vector.load %arg9[%c0_33, %c0_34, %c0_35] : memref<5x1152x512xbf16, #tpu.memory_space<vmem>>, vector<1x1152x512xbf16>
    %56 = vector.shape_cast %55 : vector<1x1152x512xbf16> to vector<1152x512xbf16>
    %cst_36 = arith.constant dense<0.000000e+00> : vector<16x512xf32>
    %57 = tpu.matmul %54, %56, %cst_36 {dimension_numbers = #tpu.dot_dimension_numbers<[1], [0], [0], [1], [0, 0, 1, 1], [], []>} : vector<16x1152xbf16>, vector<1152x512xbf16>, vector<16x512xf32> -> vector<16x512xf32>
    %58 = arith.addf %52, %57 : vector<16x512xf32>
    %c0_37 = arith.constant 0 : index
    %c5 = arith.constant 5 : index
    %c0_38 = arith.constant 0 : index
    %59 = vector.load %arg14[%c0_37, %c5, %c0_38] : memref<2x16x1152xbf16, #tpu.memory_space<vmem>>, vector<2x8x1152xbf16>
    %60 = vector.shape_cast %59 : vector<2x8x1152xbf16> to vector<16x1152xbf16>
    %c1 = arith.constant 1 : index
    %c0_39 = arith.constant 0 : index
    %c0_40 = arith.constant 0 : index
    %61 = vector.load %arg9[%c1, %c0_39, %c0_40] : memref<5x1152x512xbf16, #tpu.memory_space<vmem>>, vector<1x1152x512xbf16>
    %62 = vector.shape_cast %61 : vector<1x1152x512xbf16> to vector<1152x512xbf16>
    %cst_41 = arith.constant dense<0.000000e+00> : vector<16x512xf32>
    %63 = tpu.matmul %60, %62, %cst_41 {dimension_numbers = #tpu.dot_dimension_numbers<[1], [0], [0], [1], [0, 0, 1, 1], [], []>} : vector<16x1152xbf16>, vector<1152x512xbf16>, vector<16x512xf32> -> vector<16x512xf32>
    %64 = arith.addf %58, %63 : vector<16x512xf32>
    %c0_42 = arith.constant 0 : index
    %c6 = arith.constant 6 : index
    %c0_43 = arith.constant 0 : index
    %65 = vector.load %arg14[%c0_42, %c6, %c0_43] : memref<2x16x1152xbf16, #tpu.memory_space<vmem>>, vector<2x8x1152xbf16>
    %66 = vector.shape_cast %65 : vector<2x8x1152xbf16> to vector<16x1152xbf16>
    %c2 = arith.constant 2 : index
    %c0_44 = arith.constant 0 : index
    %c0_45 = arith.constant 0 : index
    %67 = vector.load %arg9[%c2, %c0_44, %c0_45] : memref<5x1152x512xbf16, #tpu.memory_space<vmem>>, vector<1x1152x512xbf16>
    %68 = vector.shape_cast %67 : vector<1x1152x512xbf16> to vector<1152x512xbf16>
    %cst_46 = arith.constant dense<0.000000e+00> : vector<16x512xf32>
    %69 = tpu.matmul %66, %68, %cst_46 {dimension_numbers = #tpu.dot_dimension_numbers<[1], [0], [0], [1], [0, 0, 1, 1], [], []>} : vector<16x1152xbf16>, vector<1152x512xbf16>, vector<16x512xf32> -> vector<16x512xf32>
    %70 = arith.addf %64, %69 : vector<16x512xf32>
    %c0_47 = arith.constant 0 : index
    %c7 = arith.constant 7 : index
    %c0_48 = arith.constant 0 : index
    %71 = vector.load %arg14[%c0_47, %c7, %c0_48] : memref<2x16x1152xbf16, #tpu.memory_space<vmem>>, vector<2x8x1152xbf16>
    %72 = vector.shape_cast %71 : vector<2x8x1152xbf16> to vector<16x1152xbf16>
    %c3 = arith.constant 3 : index
    %c0_49 = arith.constant 0 : index
    %c0_50 = arith.constant 0 : index
    %73 = vector.load %arg9[%c3, %c0_49, %c0_50] : memref<5x1152x512xbf16, #tpu.memory_space<vmem>>, vector<1x1152x512xbf16>
    %74 = vector.shape_cast %73 : vector<1x1152x512xbf16> to vector<1152x512xbf16>
    %cst_51 = arith.constant dense<0.000000e+00> : vector<16x512xf32>
    %75 = tpu.matmul %72, %74, %cst_51 {dimension_numbers = #tpu.dot_dimension_numbers<[1], [0], [0], [1], [0, 0, 1, 1], [], []>} : vector<16x1152xbf16>, vector<1152x512xbf16>, vector<16x512xf32> -> vector<16x512xf32>
    %76 = arith.addf %70, %75 : vector<16x512xf32>
    %c0_52 = arith.constant 0 : index
    %c8_53 = arith.constant 8 : index
    %c0_54 = arith.constant 0 : index
    %77 = vector.load %arg14[%c0_52, %c8_53, %c0_54] : memref<2x16x1152xbf16, #tpu.memory_space<vmem>>, vector<2x8x1152xbf16>
    %78 = vector.shape_cast %77 : vector<2x8x1152xbf16> to vector<16x1152xbf16>
    %c4_55 = arith.constant 4 : index
    %c0_56 = arith.constant 0 : index
    %c0_57 = arith.constant 0 : index
    %79 = vector.load %arg9[%c4_55, %c0_56, %c0_57] : memref<5x1152x512xbf16, #tpu.memory_space<vmem>>, vector<1x1152x512xbf16>
    %80 = vector.shape_cast %79 : vector<1x1152x512xbf16> to vector<1152x512xbf16>
    %cst_58 = arith.constant dense<0.000000e+00> : vector<16x512xf32>
    %81 = tpu.matmul %78, %80, %cst_58 {dimension_numbers = #tpu.dot_dimension_numbers<[1], [0], [0], [1], [0, 0, 1, 1], [], []>} : vector<16x1152xbf16>, vector<1152x512xbf16>, vector<16x512xf32> -> vector<16x512xf32>
    %82 = arith.addf %76, %81 : vector<16x512xf32>
    %c0_59 = arith.constant 0 : index
    %c0_60 = arith.constant 0 : index
    %83 = vector.load %arg10[%c0_59, %c0_60] : memref<1x512xf32, #tpu.memory_space<vmem>>, vector<1x512xf32>
    %84 = vector.broadcast %83 : vector<1x512xf32> to vector<16x512xf32>
    %85 = arith.addf %82, %84 : vector<16x512xf32>
    %cst_61 = arith.constant 0.000000e+00 : f32
    %86 = vector.broadcast %cst_61 : f32 to vector<16x512xf32>
    %87 = arith.maximumf %85, %86 : vector<16x512xf32>
    %88 = arith.truncf %87 : vector<16x512xf32> to vector<16x512xbf16>
    %c0_62 = arith.constant 0 : index
    %c0_63 = arith.constant 0 : index
    %89 = vector.load %arg11[%c0_62, %c0_63] : memref<512x128xbf16, #tpu.memory_space<vmem>>, vector<512x128xbf16>
    %cst_64 = arith.constant dense<0.000000e+00> : vector<16x128xf32>
    %90 = tpu.matmul %88, %89, %cst_64 {dimension_numbers = #tpu.dot_dimension_numbers<[1], [0], [0], [1], [0, 0, 1, 1], [], []>} : vector<16x512xbf16>, vector<512x128xbf16>, vector<16x128xf32> -> vector<16x128xf32>
    %c0_65 = arith.constant 0 : index
    %c0_66 = arith.constant 0 : index
    %91 = vector.load %arg12[%c0_65, %c0_66] : memref<1x128xf32, #tpu.memory_space<vmem>>, vector<1x128xf32>
    %92 = vector.broadcast %91 : vector<1x128xf32> to vector<16x128xf32>
    %93 = arith.addf %90, %92 : vector<16x128xf32>
    %c0_67 = arith.constant 0 : index
    %c0_68 = arith.constant 0 : index
    %94 = vector.load %arg13[%c0_67, %c0_68] : memref<16x128xf32, #tpu.memory_space<vmem>>, vector<16x128xf32>
    tpu.vector_store %arg13[%c0_67, %c0_68], %93 {strides = array<i32>} : memref<16x128xf32, #tpu.memory_space<vmem>>, vector<16x128xf32>,
    return
  }
}

</mosaic_0001>

<llo_original>
// kernel: resnet_conv1d_forward.1
$region0: #{resnet_conv1d_forward.1}
  #allocation0 [shape = 'u32[]', space=smem, size = 0x4, offset = 0x4, fixed_abs, tag = 'smem constant byte address 0x4 - core index']
  #allocation1 [shape = 'u32[144,128]{1,0:T(1,128)}', space=vmem, size = 0x12000, scoped, tag = 'internal scratch']
  #allocation2 [shape = 'bf16[2,16,1152]{2,1,0:T(16,128)(2,1)}', space=vmem, size = 0x12000, scoped, tag = 'scratch operand']
  %s0 = inlined_call_operand.vmem [shape: f32[16,3], index: 0, kind: input, shape index: {}]
  %s1 = inlined_call_operand.vmem [shape: bf16[16,384], index: 1, kind: input, shape index: {}]
  %s2 = inlined_call_operand.vmem [shape: bf16[2,729], index: 2, kind: input, shape index: {}]
  %s3 = inlined_call_operand.hbm [shape: f32[3,512], index: 3, kind: input, shape index: {}]
  %s4 = inlined_call_operand.hbm [shape: f32[1,512], index: 4, kind: input, shape index: {}]
  %s5 = inlined_call_operand.hbm [shape: bf16[384,512], index: 5, kind: input, shape index: {}]
  %s6 = inlined_call_operand.hbm [shape: f32[1,512], index: 6, kind: input, shape index: {}]
  %s7 = inlined_call_operand.hbm [shape: bf16[729,128], index: 7, kind: input, shape index: {}]
  %s8 = inlined_call_operand.hbm [shape: f32[1,128], index: 8, kind: input, shape index: {}]
  %s9 = inlined_call_operand.hbm [shape: bf16[5,1152,512], index: 9, kind: input, shape index: {}]
  %s10 = inlined_call_operand.hbm [shape: f32[1,512], index: 10, kind: input, shape index: {}]
  %s11 = inlined_call_operand.hbm [shape: bf16[512,128], index: 11, kind: input, shape index: {}]
  %s12 = inlined_call_operand.hbm [shape: f32[1,128], index: 12, kind: input, shape index: {}]
  %s13 = inlined_call_operand.vmem [shape: f32[16,128], index: 13, kind: output, shape index: {}]
  %s14 = sld [smem:[#allocation0]]
  $region102: #{resnet_conv1d_forward.1} parent=0
    _
  %s16 = ssub.s32 1, %s14
  %s17 = scalar_select 0, %s16, %s14
  $region1: #{resnet_conv1d_forward.1} parent=0
    #allocation3 [shape = 'u8[8192]{0}', space=vmem, size = 0x2000, scoped, tag = 'input window, operand 3, single buffered']
    #allocation4 [shape = 's32[1]{0}', space=sflag, size = 0x4, scoped, tag = 'scoped memory for resnet_conv1d_forward.1']
    #allocation5 [shape = 'u8[2048]{0}', space=vmem, size = 0x800, scoped, tag = 'input window, operand 4, single buffered']
    #allocation6 [shape = 's32[1]{0}', space=sflag, size = 0x4, scoped, tag = 'scoped memory for resnet_conv1d_forward.1']
    #allocation7 [shape = 'u8[393216]{0}', space=vmem, size = 0x60000, scoped, tag = 'input window, operand 5, single buffered']
    #allocation8 [shape = 'u8[2048]{0}', space=vmem, size = 0x800, scoped, tag = 'input window, operand 6, single buffered']
    #allocation9 [shape = 's32[1]{0}', space=sflag, size = 0x4, scoped, tag = 'scoped memory for resnet_conv1d_forward.1']
    #allocation10 [shape = 'u8[188416]{0}', space=vmem, size = 0x2e000, scoped, tag = 'input window, operand 7, single buffered']
    #allocation11 [shape = 'u8[512]{0}', space=vmem, size = 0x400, scoped, tag = 'input window, operand 8, single buffered']
    #allocation12 [shape = 's32[1]{0}', space=sflag, size = 0x4, scoped, tag = 'scoped memory for resnet_conv1d_forward.1']
    #allocation13 [shape = 'u8[5898240]{0}', space=vmem, size = 0x5a0000, scoped, tag = 'input window, operand 9, single buffered']
    #allocation14 [shape = 'u8[2048]{0}', space=vmem, size = 0x800, scoped, tag = 'input window, operand 10, single buffered']
    #allocation15 [shape = 's32[1]{0}', space=sflag, size = 0x4, scoped, tag = 'scoped memory for resnet_conv1d_forward.1']
    #allocation16 [shape = 'u8[131072]{0}', space=vmem, size = 0x20000, scoped, tag = 'input window, operand 11, single buffered']
    #allocation17 [shape = 'u8[512]{0}', space=vmem, size = 0x400, scoped, tag = 'input window, operand 12, single buffered']
    #allocation18 [shape = 's32[1]{0}', space=sflag, size = 0x4, scoped, tag = 'scoped memory for resnet_conv1d_forward.1']
    %18 = vsyncpa [#allocation4], 0
    %19 = vsyncpa [#allocation6], 0
    %20 = vsyncpa [#allocation9], 0
    %21 = vsyncpa [#allocation12], 0
    %22 = vsyncpa [#allocation15], 0
    %23 = vsyncpa [#allocation18], 0
    // Predicated region
    $region2: #{resnet_conv1d_forward.1} parent=1 // pred_check
      _
    $region3: #{resnet_conv1d_forward.1} parent=1 // pred_check_branch
      %25 = sbr.rel (0) target = $region5
    $region4: #{resnet_conv1d_forward.1} parent=1 // pred_region
      _
    $region5: #{resnet_conv1d_forward.1} parent=1 // pred_fallthru
      _
    // Predicated region
    $region6: #{resnet_conv1d_forward.1} parent=1 // pred_check
      _
    $region7: #{resnet_conv1d_forward.1} parent=1 // pred_check_branch
      %27 = sbr.rel (0) target = $region9
    $region8: #{resnet_conv1d_forward.1} parent=1 // pred_region
      _
    $region9: #{resnet_conv1d_forward.1} parent=1 // pred_fallthru
      _
    // Predicated region
    $region10: #{resnet_conv1d_forward.1} parent=1 // pred_check
      _
    $region11: #{resnet_conv1d_forward.1} parent=1 // pred_check_branch
      %29 = sbr.rel (0) target = $region13
    $region12: #{resnet_conv1d_forward.1} parent=1 // pred_region
      _
    $region13: #{resnet_conv1d_forward.1} parent=1 // pred_fallthru
      _
    // Predicated region
    $region14: #{resnet_conv1d_forward.1} parent=1 // pred_check
      _
    $region15: #{resnet_conv1d_forward.1} parent=1 // pred_check_branch
      %31 = sbr.rel (0) target = $region17
    $region16: #{resnet_conv1d_forward.1} parent=1 // pred_region
      %s33 = ssub.s32 256, 256
      %34 = vsyncadd [#allocation4], %s33
      %s36 = sshll.u32 [#allocation3], 4
      %s37 = int_to_ptr.vmem [resolvable:$true] %s36
      %39 = dma.hbm_to_vmem [thread:$0]  %s3, 256, %s37, [#allocation4]
    $region17: #{resnet_conv1d_forward.1} parent=1 // pred_fallthru
      _
    // Predicated region
    $region18: #{resnet_conv1d_forward.1} parent=1 // pred_check
      _
    $region19: #{resnet_conv1d_forward.1} parent=1 // pred_check_branch
      %41 = sbr.rel (0) target = $region21
    $region20: #{resnet_conv1d_forward.1} parent=1 // pred_region
      %s43 = ssub.s32 64, 64
      %44 = vsyncadd [#allocation6], %s43
      %s46 = sshll.u32 [#allocation5], 4
      %s47 = int_to_ptr.vmem [resolvable:$true] %s46
      %49 = dma.hbm_to_vmem [thread:$0]  %s4, 64, %s47, [#allocation6]
    $region21: #{resnet_conv1d_forward.1} parent=1 // pred_fallthru
      _
    // Predicated region
    $region22: #{resnet_conv1d_forward.1} parent=1 // pred_check
      _
    $region23: #{resnet_conv1d_forward.1} parent=1 // pred_check_branch
      %51 = sbr.rel (0) target = $region25
    $region24: #{resnet_conv1d_forward.1} parent=1 // pred_region
      %s53 = ssub.s32 12288, 12288
      %54 = vsyncadd [#allocation6], %s53
      %s55 = sshll.u32 [#allocation7], 4
      %s56 = int_to_ptr.vmem [resolvable:$true] %s55
      %61 = dma.hbm_to_vmem [thread:$0]  %s5, 12288, %s56, [#allocation6], 256, 256, 16
    $region25: #{resnet_conv1d_forward.1} parent=1 // pred_fallthru
      _
    // Predicated region
    $region26: #{resnet_conv1d_forward.1} parent=1 // pred_check
      _
    $region27: #{resnet_conv1d_forward.1} parent=1 // pred_check_branch
      %63 = sbr.rel (0) target = $region29
    $region28: #{resnet_conv1d_forward.1} parent=1 // pred_region
      %s65 = ssub.s32 64, 64
      %66 = vsyncadd [#allocation9], %s65
      %s68 = sshll.u32 [#allocation8], 4
      %s69 = int_to_ptr.vmem [resolvable:$true] %s68
      %71 = dma.hbm_to_vmem [thread:$0]  %s6, 64, %s69, [#allocation9]
    $region29: #{resnet_conv1d_forward.1} parent=1 // pred_fallthru
      _
    // Predicated region
    $region30: #{resnet_conv1d_forward.1} parent=1 // pred_check
      _
    $region31: #{resnet_conv1d_forward.1} parent=1 // pred_check_branch
      %73 = sbr.rel (0) target = $region33
    $region32: #{resnet_conv1d_forward.1} parent=1 // pred_region
      %s75 = ssub.s32 5888, 5888
      %76 = vsyncadd [#allocation9], %s75
      %s77 = sshll.u32 [#allocation10], 4
      %s78 = int_to_ptr.vmem [resolvable:$true] %s77
      %83 = dma.hbm_to_vmem [thread:$0]  %s7, 5888, %s78, [#allocation9], 64, 64, 4
    $region33: #{resnet_conv1d_forward.1} parent=1 // pred_fallthru
      _
    // Predicated region
    $region34: #{resnet_conv1d_forward.1} parent=1 // pred_check
      _
    $region35: #{resnet_conv1d_forward.1} parent=1 // pred_check_branch
      %85 = sbr.rel (0) target = $region37
    $region36: #{resnet_conv1d_forward.1} parent=1 // pred_region
      %s87 = ssub.s32 16, 16
      %88 = vsyncadd [#allocation12], %s87
      %s90 = sshll.u32 [#allocation11], 4
      %s91 = int_to_ptr.vmem [resolvable:$true] %s90
      %93 = dma.hbm_to_vmem [thread:$0]  %s8, 16, %s91, [#allocation12]
    $region37: #{resnet_conv1d_forward.1} parent=1 // pred_fallthru
      _
    // Predicated region
    $region38: #{resnet_conv1d_forward.1} parent=1 // pred_check
      _
    $region39: #{resnet_conv1d_forward.1} parent=1 // pred_check_branch
      %95 = sbr.rel (0) target = $region41
    $region40: #{resnet_conv1d_forward.1} parent=1 // pred_region
      %s97 = ssub.s32 184320, 184320
      %98 = vsyncadd [#allocation12], %s97
      %s99 = sshll.u32 [#allocation13], 4
      %s100 = int_to_ptr.vmem [resolvable:$true] %s99
      %105 = dma.hbm_to_vmem [thread:$0]  %s9, 184320, %s100, [#allocation12], 256, 256, 16
    $region41: #{resnet_conv1d_forward.1} parent=1 // pred_fallthru
      _
    // Predicated region
    $region42: #{resnet_conv1d_forward.1} parent=1 // pred_check
      _
    $region43: #{resnet_conv1d_forward.1} parent=1 // pred_check_branch
      %107 = sbr.rel (0) target = $region45
    $region44: #{resnet_conv1d_forward.1} parent=1 // pred_region
      %s109 = ssub.s32 64, 64
      %110 = vsyncadd [#allocation15], %s109
      %s112 = sshll.u32 [#allocation14], 4
      %s113 = int_to_ptr.vmem [resolvable:$true] %s112
      %115 = dma.hbm_to_vmem [thread:$0]  %s10, 64, %s113, [#allocation15]
    $region45: #{resnet_conv1d_forward.1} parent=1 // pred_fallthru
      _
    // Predicated region
    $region46: #{resnet_conv1d_forward.1} parent=1 // pred_check
      _
    $region47: #{resnet_conv1d_forward.1} parent=1 // pred_check_branch
      %117 = sbr.rel (0) target = $region49
    $region48: #{resnet_conv1d_forward.1} parent=1 // pred_region
      %s119 = ssub.s32 4096, 4096
      %120 = vsyncadd [#allocation15], %s119
      %s121 = sshll.u32 [#allocation16], 4
      %s122 = int_to_ptr.vmem [resolvable:$true] %s121
      %127 = dma.hbm_to_vmem [thread:$0]  %s11, 4096, %s122, [#allocation15], 64, 64, 4
    $region49: #{resnet_conv1d_forward.1} parent=1 // pred_fallthru
      _
    // Predicated region
    $region50: #{resnet_conv1d_forward.1} parent=1 // pred_check
      _
    $region51: #{resnet_conv1d_forward.1} parent=1 // pred_check_branch
      %129 = sbr.rel (0) target = $region53
    $region52: #{resnet_conv1d_forward.1} parent=1 // pred_region
      %s131 = ssub.s32 16, 16
      %132 = vsyncadd [#allocation18], %s131
      %s134 = sshll.u32 [#allocation17], 4
      %s135 = int_to_ptr.vmem [resolvable:$true] %s134
      %137 = dma.hbm_to_vmem [thread:$0]  %s12, 16, %s135, [#allocation18]
    $region53: #{resnet_conv1d_forward.1} parent=1 // pred_fallthru
      _
    // Predicated region
    $region54: #{resnet_conv1d_forward.1} parent=1 // pred_check
      _
    $region55: #{resnet_conv1d_forward.1} parent=1 // pred_check_branch
      %139 = sbr.rel (0) target = $region57
    $region56: #{resnet_conv1d_forward.1} parent=1 // pred_region
      %140 = dma.done [#allocation4], 256
    $region57: #{resnet_conv1d_forward.1} parent=1 // pred_fallthru
      _
    // Predicated region
    $region58: #{resnet_conv1d_forward.1} parent=1 // pred_check
      _
    $region59: #{resnet_conv1d_forward.1} parent=1 // pred_check_branch
      %142 = sbr.rel (0) target = $region61
    $region60: #{resnet_conv1d_forward.1} parent=1 // pred_region
      %143 = dma.done [#allocation6], 64
    $region61: #{resnet_conv1d_forward.1} parent=1 // pred_fallthru
      _
    // Predicated region
    $region62: #{resnet_conv1d_forward.1} parent=1 // pred_check
      _
    $region63: #{resnet_conv1d_forward.1} parent=1 // pred_check_branch
      %145 = sbr.rel (0) target = $region65
    $region64: #{resnet_conv1d_forward.1} parent=1 // pred_region
      %146 = dma.done [#allocation6], 12288
    $region65: #{resnet_conv1d_forward.1} parent=1 // pred_fallthru
      _
    // Predicated region
    $region66: #{resnet_conv1d_forward.1} parent=1 // pred_check
      _
    $region67: #{resnet_conv1d_forward.1} parent=1 // pred_check_branch
      %148 = sbr.rel (0) target = $region69
    $region68: #{resnet_conv1d_forward.1} parent=1 // pred_region
      %149 = dma.done [#allocation9], 64
    $region69: #{resnet_conv1d_forward.1} parent=1 // pred_fallthru
      _
    // Predicated region
    $region70: #{resnet_conv1d_forward.1} parent=1 // pred_check
      _
    $region71: #{resnet_conv1d_forward.1} parent=1 // pred_check_branch
      %151 = sbr.rel (0) target = $region73
    $region72: #{resnet_conv1d_forward.1} parent=1 // pred_region
      %152 = dma.done [#allocation9], 5888
    $region73: #{resnet_conv1d_forward.1} parent=1 // pred_fallthru
      _
    // Predicated region
    $region74: #{resnet_conv1d_forward.1} parent=1 // pred_check
      _
    $region75: #{resnet_conv1d_forward.1} parent=1 // pred_check_branch
      %154 = sbr.rel (0) target = $region77
    $region76: #{resnet_conv1d_forward.1} parent=1 // pred_region
      %155 = dma.done [#allocation12], 16
    $region77: #{resnet_conv1d_forward.1} parent=1 // pred_fallthru
      _
    // Predicated region
    $region78: #{resnet_conv1d_forward.1} parent=1 // pred_check
      _
    $region79: #{resnet_conv1d_forward.1} parent=1 // pred_check_branch
      %157 = sbr.rel (0) target = $region81
    $region80: #{resnet_conv1d_forward.1} parent=1 // pred_region
      %158 = dma.done [#allocation12], 184320
    $region81: #{resnet_conv1d_forward.1} parent=1 // pred_fallthru
      _
    // Predicated region
    $region82: #{resnet_conv1d_forward.1} parent=1 // pred_check
      _
    $region83: #{resnet_conv1d_forward.1} parent=1 // pred_check_branch
      %160 = sbr.rel (0) target = $region85
    $region84: #{resnet_conv1d_forward.1} parent=1 // pred_region
      %161 = dma.done [#allocation15], 64
    $region85: #{resnet_conv1d_forward.1} parent=1 // pred_fallthru
      _
    // Predicated region
    $region86: #{resnet_conv1d_forward.1} parent=1 // pred_check
      _
    $region87: #{resnet_conv1d_forward.1} parent=1 // pred_check_branch
      %163 = sbr.rel (0) target = $region89
    $region88: #{resnet_conv1d_forward.1} parent=1 // pred_region
      %164 = dma.done [#allocation15], 4096
    $region89: #{resnet_conv1d_forward.1} parent=1 // pred_fallthru
      _
    // Predicated region
    $region90: #{resnet_conv1d_forward.1} parent=1 // pred_check
      _
    $region91: #{resnet_conv1d_forward.1} parent=1 // pred_check_branch
      %166 = sbr.rel (0) target = $region93
    $region92: #{resnet_conv1d_forward.1} parent=1 // pred_region
      %167 = dma.done [#allocation18], 16
    $region93: #{resnet_conv1d_forward.1} parent=1 // pred_fallthru
      _
    %169 = vst [vmem:[#allocation2] sm:$0xf] 0
    %170 = vst [vmem:[#allocation2 + $0x8] sm:$0xf] 0
    %171 = vst [vmem:[#allocation2 + $0x10] sm:$0xf] 0
    %172 = vst [vmem:[#allocation2 + $0x18] sm:$0xf] 0
    %173 = vst [vmem:[#allocation2 + $0x20] sm:$0xf] 0
    %174 = vst [vmem:[#allocation2 + $0x28] sm:$0xf] 0
    %175 = vst [vmem:[#allocation2 + $0x30] sm:$0xf] 0
    %176 = vst [vmem:[#allocation2 + $0x38] sm:$0xf] 0
    %177 = vst [vmem:[#allocation2 + $0x40] sm:$0xf] 0
    %178 = vst [vmem:[#allocation2 + $0x48] sm:$0xf] 0
    %179 = vst [vmem:[#allocation2 + $0x50] sm:$0xf] 0
    %180 = vst [vmem:[#allocation2 + $0x58] sm:$0xf] 0
    %181 = vst [vmem:[#allocation2 + $0x60] sm:$0xf] 0
    %182 = vst [vmem:[#allocation2 + $0x68] sm:$0xf] 0
    %183 = vst [vmem:[#allocation2 + $0x70] sm:$0xf] 0
    %184 = vst [vmem:[#allocation2 + $0x78] sm:$0xf] 0
    %185 = vst [vmem:[#allocation2 + $0x80] sm:$0xf] 0
    %186 = vst [vmem:[#allocation2 + $0x88] sm:$0xf] 0
    %v187 = vld [vmem:[%s0] sm:$0xff]
    %v188 = vld [vmem:[%s0 + $0x8] sm:$0xff]
    %v189 = vld [vmem:[#allocation3] sm:$0x77]
    %v190 = vld [vmem:[#allocation3 + $0x8] sm:$0x77]
    %v191 = vld [vmem:[#allocation5] sm:$0xf]
    %v193 = vlaneseq
    %v194 = vshrl.u32 %v193, 7
    %v195 = vsub.s32 0, %v194
    %v196 = vrot.slane %v191, %v195
    %v197 = vlaneseq
    %v198 = vshrl.u32 %v197, 7
    %v199 = vsub.s32 1, %v198
    %v200 = vrot.slane %v191, %v199
    %v201 = vlaneseq
    %v202 = vshrl.u32 %v201, 7
    %v203 = vsub.s32 2, %v202
    %v204 = vrot.slane %v191, %v203
    %v205 = vlaneseq
    %v206 = vshrl.u32 %v205, 7
    %v207 = vsub.s32 3, %v206
    %v208 = vrot.slane %v191, %v207
    %214 = vset.pattern.permute.xlu0 0
    %215 = vperm.xlu0 %214, %v187
    %v216 = vpop.permute.xlu0 %215
    %219 = vset.pattern.permute.xlu0 0
    %220 = vperm.xlu0 %219, %v188
    %v221 = vpop.permute.xlu0 %220
    %v225 = vlaneseq
    %v226 = vshrl.u32 %v225, 7
    %v227 = vsub.s32 0, %v226
    %v228 = vrot.slane %v189, %v227
    %v229 = vlaneseq
    %v230 = vshrl.u32 %v229, 7
    %v231 = vsub.s32 4, %v230
    %v232 = vrot.slane %v189, %v231
    %v233 = vlaneseq
    %v234 = vshrl.u32 %v233, 7
    %v235 = vsub.s32 0, %v234
    %v236 = vrot.slane %v190, %v235
    %v237 = vlaneseq
    %v238 = vshrl.u32 %v237, 7
    %v239 = vsub.s32 4, %v238
    %v240 = vrot.slane %v190, %v239
    %v245 = vlaneseq
    %v246 = vshrl.u32 %v245, 7
    %v247 = vsub.s32 0, %v246
    %v248 = vrot.slane %v228, %v247
    %v249 = vlaneseq
    %v250 = vshrl.u32 %v249, 7
    %v251 = vsub.s32 0, %v250
    %v252 = vrot.slane %v232, %v251
    %v253 = vlaneseq
    %v254 = vshrl.u32 %v253, 7
    %v255 = vsub.s32 0, %v254
    %v256 = vrot.slane %v236, %v255
    %v257 = vlaneseq
    %v258 = vshrl.u32 %v257, 7
    %v259 = vsub.s32 0, %v258
    %v260 = vrot.slane %v240, %v259
    %v261 = vmul.f32 %v216, %v248
    %v262 = vmul.f32 %v216, %v252
    %v263 = vmul.f32 %v216, %v256
    %v264 = vmul.f32 %v216, %v260
    %v265 = vmul.f32 %v221, %v248
    %v266 = vmul.f32 %v221, %v252
    %v267 = vmul.f32 %v221, %v256
    %v268 = vmul.f32 %v221, %v260
    %v269 = vadd.f32 %v196, %v261
    %v270 = vadd.f32 %v200, %v262
    %v271 = vadd.f32 %v204, %v263
    %v272 = vadd.f32 %v208, %v264
    %v273 = vadd.f32 %v196, %v265
    %v274 = vadd.f32 %v200, %v266
    %v275 = vadd.f32 %v204, %v267
    %v276 = vadd.f32 %v208, %v268
    %277 = vset.pattern.permute.xlu0 1
    %278 = vperm.xlu0 %277, %v187
    %v279 = vpop.permute.xlu0 %278
    %281 = vset.pattern.permute.xlu0 1
    %282 = vperm.xlu0 %281, %v188
    %v283 = vpop.permute.xlu0 %282
    %v285 = vlaneseq
    %v286 = vshrl.u32 %v285, 7
    %v287 = vsub.s32 1, %v286
    %v288 = vrot.slane %v189, %v287
    %v289 = vlaneseq
    %v290 = vshrl.u32 %v289, 7
    %v291 = vsub.s32 5, %v290
    %v292 = vrot.slane %v189, %v291
    %v293 = vlaneseq
    %v294 = vshrl.u32 %v293, 7
    %v295 = vsub.s32 1, %v294
    %v296 = vrot.slane %v190, %v295
    %v297 = vlaneseq
    %v298 = vshrl.u32 %v297, 7
    %v299 = vsub.s32 5, %v298
    %v300 = vrot.slane %v190, %v299
    %v305 = vlaneseq
    %v306 = vshrl.u32 %v305, 7
    %v307 = vsub.s32 1, %v306
    %v308 = vrot.slane %v288, %v307
    %v309 = vlaneseq
    %v310 = vshrl.u32 %v309, 7
    %v311 = vsub.s32 1, %v310
    %v312 = vrot.slane %v292, %v311
    %v313 = vlaneseq
    %v314 = vshrl.u32 %v313, 7
    %v315 = vsub.s32 1, %v314
    %v316 = vrot.slane %v296, %v315
    %v317 = vlaneseq
    %v318 = vshrl.u32 %v317, 7
    %v319 = vsub.s32 1, %v318
    %v320 = vrot.slane %v300, %v319
    %v321 = vmul.f32 %v279, %v308
    %v322 = vmul.f32 %v279, %v312
    %v323 = vmul.f32 %v279, %v316
    %v324 = vmul.f32 %v279, %v320
    %v325 = vmul.f32 %v283, %v308
    %v326 = vmul.f32 %v283, %v312
    %v327 = vmul.f32 %v283, %v316
    %v328 = vmul.f32 %v283, %v320
    %v329 = vadd.f32 %v269, %v321
    %v330 = vadd.f32 %v270, %v322
    %v331 = vadd.f32 %v271, %v323
    %v332 = vadd.f32 %v272, %v324
    %v333 = vadd.f32 %v273, %v325
    %v334 = vadd.f32 %v274, %v326
    %v335 = vadd.f32 %v275, %v327
    %v336 = vadd.f32 %v276, %v328
    %337 = vset.pattern.permute.xlu0 2
    %338 = vperm.xlu0 %337, %v187
    %v339 = vpop.permute.xlu0 %338
    %341 = vset.pattern.permute.xlu0 2
    %342 = vperm.xlu0 %341, %v188
    %v343 = vpop.permute.xlu0 %342
    %v345 = vlaneseq
    %v346 = vshrl.u32 %v345, 7
    %v347 = vsub.s32 2, %v346
    %v348 = vrot.slane %v189, %v347
    %v349 = vlaneseq
    %v350 = vshrl.u32 %v349, 7
    %v351 = vsub.s32 6, %v350
    %v352 = vrot.slane %v189, %v351
    %v353 = vlaneseq
    %v354 = vshrl.u32 %v353, 7
    %v355 = vsub.s32 2, %v354
    %v356 = vrot.slane %v190, %v355
    %v357 = vlaneseq
    %v358 = vshrl.u32 %v357, 7
    %v359 = vsub.s32 6, %v358
    %v360 = vrot.slane %v190, %v359
    %v365 = vlaneseq
    %v366 = vshrl.u32 %v365, 7
    %v367 = vsub.s32 2, %v366
    %v368 = vrot.slane %v348, %v367
    %v369 = vlaneseq
    %v370 = vshrl.u32 %v369, 7
    %v371 = vsub.s32 2, %v370
    %v372 = vrot.slane %v352, %v371
    %v373 = vlaneseq
    %v374 = vshrl.u32 %v373, 7
    %v375 = vsub.s32 2, %v374
    %v376 = vrot.slane %v356, %v375
    %v377 = vlaneseq
    %v378 = vshrl.u32 %v377, 7
    %v379 = vsub.s32 2, %v378
    %v380 = vrot.slane %v360, %v379
    %v381 = vmul.f32 %v339, %v368
    %v382 = vmul.f32 %v339, %v372
    %v383 = vmul.f32 %v339, %v376
    %v384 = vmul.f32 %v339, %v380
    %v385 = vmul.f32 %v343, %v368
    %v386 = vmul.f32 %v343, %v372
    %v387 = vmul.f32 %v343, %v376
    %v388 = vmul.f32 %v343, %v380
    %v389 = vadd.f32 %v329, %v381
    %v390 = vadd.f32 %v330, %v382
    %v391 = vadd.f32 %v331, %v383
    %v392 = vadd.f32 %v332, %v384
    %v393 = vadd.f32 %v333, %v385
    %v394 = vadd.f32 %v334, %v386
    %v395 = vadd.f32 %v335, %v387
    %v396 = vadd.f32 %v336, %v388
    %v397 = vpack.c.bf16 %v389, %v389
    %v398 = vpack.c.bf16 %v390, %v390
    %v399 = vpack.c.bf16 %v391, %v391
    %v400 = vpack.c.bf16 %v392, %v392
    %v401 = vpack.c.bf16 %v393, %v393
    %v402 = vpack.c.bf16 %v394, %v394
    %v403 = vpack.c.bf16 %v395, %v395
    %v404 = vpack.c.bf16 %v396, %v396
    %v413 = vrot.slane %v397, 4
    %v414 = vrot.slane %v398, 4
    %v415 = vrot.slane %v399, 4
    %v416 = vrot.slane %v400, 4
    %v417 = vrot.slane %v401, 4
    %v418 = vrot.slane %v402, 4
    %v419 = vrot.slane %v403, 4
    %v420 = vrot.slane %v404, 4
    %429 = vst [vmem:[#allocation2] sm:$0xf0] %v413
    %430 = vst [vmem:[#allocation2 + $0x8] sm:$0xf0] %v414
    %431 = vst [vmem:[#allocation2 + $0x10] sm:$0xf0] %v415
    %432 = vst [vmem:[#allocation2 + $0x18] sm:$0xf0] %v416
    %433 = vst [vmem:[#allocation2 + $0x48] sm:$0xf0] %v417
    %434 = vst [vmem:[#allocation2 + $0x50] sm:$0xf0] %v418
    %435 = vst [vmem:[#allocation2 + $0x58] sm:$0xf0] %v419
    %436 = vst [vmem:[#allocation2 + $0x60] sm:$0xf0] %v420
    %v437 = vld [vmem:[%s1] sm:$0xff]
    %v438 = vld [vmem:[%s1 + $0x8] sm:$0xf]
    %v439 = vld [vmem:[%s1 + $0xc] sm:$0xff]
    %v440 = vld [vmem:[%s1 + $0x14] sm:$0xf]
    %v441 = vld [vmem:[#allocation7] sm:$0xff]
    %v442 = vld [vmem:[#allocation7 + $0x8] sm:$0xff]
    %v443 = vld [vmem:[#allocation7 + $0x10] sm:$0xff]
    %v444 = vld [vmem:[#allocation7 + $0x18] sm:$0xff]
    %v445 = vld [vmem:[#allocation7 + $0x20] sm:$0xff]
    %v446 = vld [vmem:[#allocation7 + $0x28] sm:$0xff]
    %v447 = vld [vmem:[#allocation7 + $0x30] sm:$0xff]
    %v448 = vld [vmem:[#allocation7 + $0x38] sm:$0xff]
    %v449 = vld [vmem:[#allocation7 + $0x40] sm:$0xff]
    %v450 = vld [vmem:[#allocation7 + $0x48] sm:$0xff]
    %v451 = vld [vmem:[#allocation7 + $0x50] sm:$0xff]
    %v452 = vld [vmem:[#allocation7 + $0x58] sm:$0xff]
    %v453 = vld [vmem:[#allocation7 + $0x60] sm:$0xff]
    %v454 = vld [vmem:[#allocation7 + $0x68] sm:$0xff]
    %v455 = vld [vmem:[#allocation7 + $0x70] sm:$0xff]
    %v456 = vld [vmem:[#allocation7 + $0x78] sm:$0xff]
    %v457 = vld [vmem:[#allocation7 + $0x80] sm:$0xff]
    %v458 = vld [vmem:[#allocation7 + $0x88] sm:$0xff]
    %v459 = vld [vmem:[#allocation7 + $0x90] sm:$0xff]
    %v460 = vld [vmem:[#allocation7 + $0x98] sm:$0xff]
    %v461 = vld [vmem:[#allocation7 + $0xa0] sm:$0xff]
    %v462 = vld [vmem:[#allocation7 + $0xa8] sm:$0xff]
    %v463 = vld [vmem:[#allocation7 + $0xb0] sm:$0xff]
    %v464 = vld [vmem:[#allocation7 + $0xb8] sm:$0xff]
    %v465 = vld [vmem:[#allocation7 + $0xc0] sm:$0xff]
    %v466 = vld [vmem:[#allocation7 + $0xc8] sm:$0xff]
    %v467 = vld [vmem:[#allocation7 + $0xd0] sm:$0xff]
    %v468 = vld [vmem:[#allocation7 + $0xd8] sm:$0xff]
    %v469 = vld [vmem:[#allocation7 + $0xe0] sm:$0xff]
    %v470 = vld [vmem:[#allocation7 + $0xe8] sm:$0xff]
    %v471 = vld [vmem:[#allocation7 + $0xf0] sm:$0xff]
    %v472 = vld [vmem:[#allocation7 + $0xf8] sm:$0xff]
    %v473 = vld [vmem:[#allocation7 + $0x100] sm:$0xff]
    %v474 = vld [vmem:[#allocation7 + $0x108] sm:$0xff]
    %v475 = vld [vmem:[#allocation7 + $0x110] sm:$0xff]
    %v476 = vld [vmem:[#allocation7 + $0x118] sm:$0xff]
    %v477 = vld [vmem:[#allocation7 + $0x120] sm:$0xff]
    %v478 = vld [vmem:[#allocation7 + $0x128] sm:$0xff]
    %v479 = vld [vmem:[#allocation7 + $0x130] sm:$0xff]
    %v480 = vld [vmem:[#allocation7 + $0x138] sm:$0xff]
    %v481 = vld [vmem:[#allocation7 + $0x140] sm:$0xff]
    %v482 = vld [vmem:[#allocation7 + $0x148] sm:$0xff]
    %v483 = vld [vmem:[#allocation7 + $0x150] sm:$0xff]
    %v484 = vld [vmem:[#allocation7 + $0x158] sm:$0xff]
    %v485 = vld [vmem:[#allocation7 + $0x160] sm:$0xff]
    %v486 = vld [vmem:[#allocation7 + $0x168] sm:$0xff]
    %v487 = vld [vmem:[#allocation7 + $0x170] sm:$0xff]
    %v488 = vld [vmem:[#allocation7 + $0x178] sm:$0xff]
    %v489 = vld [vmem:[#allocation7 + $0x180] sm:$0xff]
    %v490 = vld [vmem:[#allocation7 + $0x188] sm:$0xff]
    %v491 = vld [vmem:[#allocation7 + $0x190] sm:$0xff]
    %v492 = vld [vmem:[#allocation7 + $0x198] sm:$0xff]
    %v493 = vld [vmem:[#allocation7 + $0x1a0] sm:$0xff]
    %v494 = vld [vmem:[#allocation7 + $0x1a8] sm:$0xff]
    %v495 = vld [vmem:[#allocation7 + $0x1b0] sm:$0xff]
    %v496 = vld [vmem:[#allocation7 + $0x1b8] sm:$0xff]
    %v497 = vld [vmem:[#allocation7 + $0x1c0] sm:$0xff]
    %v498 = vld [vmem:[#allocation7 + $0x1c8] sm:$0xff]
    %v499 = vld [vmem:[#allocation7 + $0x1d0] sm:$0xff]
    %v500 = vld [vmem:[#allocation7 + $0x1d8] sm:$0xff]
    %v501 = vld [vmem:[#allocation7 + $0x1e0] sm:$0xff]
    %v502 = vld [vmem:[#allocation7 + $0x1e8] sm:$0xff]
    %v503 = vld [vmem:[#allocation7 + $0x1f0] sm:$0xff]
    %v504 = vld [vmem:[#allocation7 + $0x1f8] sm:$0xff]
    %v505 = vld [vmem:[#allocation7 + $0x200] sm:$0xff]
    %v506 = vld [vmem:[#allocation7 + $0x208] sm:$0xff]
    %v507 = vld [vmem:[#allocation7 + $0x210] sm:$0xff]
    %v508 = vld [vmem:[#allocation7 + $0x218] sm:$0xff]
    %v509 = vld [vmem:[#allocation7 + $0x220] sm:$0xff]
    %v510 = vld [vmem:[#allocation7 + $0x228] sm:$0xff]
    %v511 = vld [vmem:[#allocation7 + $0x230] sm:$0xff]
    %v512 = vld [vmem:[#allocation7 + $0x238] sm:$0xff]
    %v513 = vld [vmem:[#allocation7 + $0x240] sm:$0xff]
    %v514 = vld [vmem:[#allocation7 + $0x248] sm:$0xff]
    %v515 = vld [vmem:[#allocation7 + $0x250] sm:$0xff]
    %v516 = vld [vmem:[#allocation7 + $0x258] sm:$0xff]
    %v517 = vld [vmem:[#allocation7 + $0x260] sm:$0xff]
    %v518 = vld [vmem:[#allocation7 + $0x268] sm:$0xff]
    %v519 = vld [vmem:[#allocation7 + $0x270] sm:$0xff]
    %v520 = vld [vmem:[#allocation7 + $0x278] sm:$0xff]
    %v521 = vld [vmem:[#allocation7 + $0x280] sm:$0xff]
    %v522 = vld [vmem:[#allocation7 + $0x288] sm:$0xff]
    %v523 = vld [vmem:[#allocation7 + $0x290] sm:$0xff]
    %v524 = vld [vmem:[#allocation7 + $0x298] sm:$0xff]
    %v525 = vld [vmem:[#allocation7 + $0x2a0] sm:$0xff]
    %v526 = vld [vmem:[#allocation7 + $0x2a8] sm:$0xff]
    %v527 = vld [vmem:[#allocation7 + $0x2b0] sm:$0xff]
    %v528 = vld [vmem:[#allocation7 + $0x2b8] sm:$0xff]
    %v529 = vld [vmem:[#allocation7 + $0x2c0] sm:$0xff]
    %v530 = vld [vmem:[#allocation7 + $0x2c8] sm:$0xff]
    %v531 = vld [vmem:[#allocation7 + $0x2d0] sm:$0xff]
    %v532 = vld [vmem:[#allocation7 + $0x2d8] sm:$0xff]
    %v533 = vld [vmem:[#allocation7 + $0x2e0] sm:$0xff]
    %v534 = vld [vmem:[#allocation7 + $0x2e8] sm:$0xff]
    %v535 = vld [vmem:[#allocation7 + $0x2f0] sm:$0xff]
    %v536 = vld [vmem:[#allocation7 + $0x2f8] sm:$0xff]
    %v537 = vld [vmem:[#allocation8] sm:$0xf]
    %v539 = vlaneseq
    %v540 = vshrl.u32 %v539, 7
    %v541 = vsub.s32 0, %v540
    %v542 = vrot.slane %v537, %v541
    %v543 = vlaneseq
    %v544 = vshrl.u32 %v543, 7
    %v545 = vsub.s32 1, %v544
    %v546 = vrot.slane %v537, %v545
    %v547 = vlaneseq
    %v548 = vshrl.u32 %v547, 7
    %v549 = vsub.s32 2, %v548
    %v550 = vrot.slane %v537, %v549
    %v551 = vlaneseq
    %v552 = vshrl.u32 %v551, 7
    %v553 = vsub.s32 3, %v552
    %v554 = vrot.slane %v537, %v553
    %v563 = vunpack.c.l.b16 %v437
    %v564 = vunpack.c.h.b16 %v437
    %v565 = vunpack.c.l.b16 %v438
    %v566 = vunpack.c.l.b16 %v439
    %v567 = vunpack.c.h.b16 %v439
    %v568 = vunpack.c.l.b16 %v440
    %v569 = vpack.c.b16 %v566, %v563
    %v570 = vpack.c.b16 %v567, %v564
    %v571 = vpack.c.b16 %v568, %v565
    %v671 = vunpack.c.l.b16 %v441
    %v672 = vunpack.c.h.b16 %v441
    %v673 = vunpack.c.l.b16 %v442
    %v674 = vunpack.c.h.b16 %v442
    %v675 = vunpack.c.l.b16 %v443
    %v676 = vunpack.c.h.b16 %v443
    %v677 = vunpack.c.l.b16 %v444
    %v678 = vunpack.c.h.b16 %v444
    %v679 = vunpack.c.l.b16 %v445
    %v680 = vunpack.c.h.b16 %v445
    %v681 = vunpack.c.l.b16 %v446
    %v682 = vunpack.c.h.b16 %v446
    %v683 = vunpack.c.l.b16 %v447
    %v684 = vunpack.c.h.b16 %v447
    %v685 = vunpack.c.l.b16 %v448
    %v686 = vunpack.c.h.b16 %v448
    %v687 = vunpack.c.l.b16 %v449
    %v688 = vunpack.c.h.b16 %v449
    %v689 = vunpack.c.l.b16 %v450
    %v690 = vunpack.c.h.b16 %v450
    %v691 = vunpack.c.l.b16 %v451
    %v692 = vunpack.c.h.b16 %v451
    %v693 = vunpack.c.l.b16 %v452
    %v694 = vunpack.c.h.b16 %v452
    %v695 = vunpack.c.l.b16 %v453
    %v696 = vunpack.c.h.b16 %v453
    %v697 = vunpack.c.l.b16 %v454
    %v698 = vunpack.c.h.b16 %v454
    %v699 = vunpack.c.l.b16 %v455
    %v700 = vunpack.c.h.b16 %v455
    %v701 = vunpack.c.l.b16 %v456
    %v702 = vunpack.c.h.b16 %v456
    %v703 = vunpack.c.l.b16 %v457
    %v704 = vunpack.c.h.b16 %v457
    %v705 = vunpack.c.l.b16 %v458
    %v706 = vunpack.c.h.b16 %v458
    %v707 = vunpack.c.l.b16 %v459
    %v708 = vunpack.c.h.b16 %v459
    %v709 = vunpack.c.l.b16 %v460
    %v710 = vunpack.c.h.b16 %v460
    %v711 = vunpack.c.l.b16 %v461
    %v712 = vunpack.c.h.b16 %v461
    %v713 = vunpack.c.l.b16 %v462
    %v714 = vunpack.c.h.b16 %v462
    %v715 = vunpack.c.l.b16 %v463
    %v716 = vunpack.c.h.b16 %v463
    %v717 = vunpack.c.l.b16 %v464
    %v718 = vunpack.c.h.b16 %v464
    %v719 = vunpack.c.l.b16 %v465
    %v720 = vunpack.c.h.b16 %v465
    %v721 = vunpack.c.l.b16 %v466
    %v722 = vunpack.c.h.b16 %v466
    %v723 = vunpack.c.l.b16 %v467
    %v724 = vunpack.c.h.b16 %v467
    %v725 = vunpack.c.l.b16 %v468
    %v726 = vunpack.c.h.b16 %v468
    %v727 = vunpack.c.l.b16 %v469
    %v728 = vunpack.c.h.b16 %v469
    %v729 = vunpack.c.l.b16 %v470
    %v730 = vunpack.c.h.b16 %v470
    %v731 = vunpack.c.l.b16 %v471
    %v732 = vunpack.c.h.b16 %v471
    %v733 = vunpack.c.l.b16 %v472
    %v734 = vunpack.c.h.b16 %v472
    %v735 = vunpack.c.l.b16 %v473
    %v736 = vunpack.c.h.b16 %v473
    %v737 = vunpack.c.l.b16 %v474
    %v738 = vunpack.c.h.b16 %v474
    %v739 = vunpack.c.l.b16 %v475
    %v740 = vunpack.c.h.b16 %v475
    %v741 = vunpack.c.l.b16 %v476
    %v742 = vunpack.c.h.b16 %v476
    %v743 = vunpack.c.l.b16 %v477
    %v744 = vunpack.c.h.b16 %v477
    %v745 = vunpack.c.l.b16 %v478
    %v746 = vunpack.c.h.b16 %v478
    %v747 = vunpack.c.l.b16 %v479
    %v748 = vunpack.c.h.b16 %v479
    %v749 = vunpack.c.l.b16 %v480
    %v750 = vunpack.c.h.b16 %v480
    %v751 = vunpack.c.l.b16 %v481
    %v752 = vunpack.c.h.b16 %v481
    %v753 = vunpack.c.l.b16 %v482
    %v754 = vunpack.c.h.b16 %v482
    %v755 = vunpack.c.l.b16 %v483
    %v756 = vunpack.c.h.b16 %v483
    %v757 = vunpack.c.l.b16 %v484
    %v758 = vunpack.c.h.b16 %v484
    %v759 = vunpack.c.l.b16 %v485
    %v760 = vunpack.c.h.b16 %v485
    %v761 = vunpack.c.l.b16 %v486
    %v762 = vunpack.c.h.b16 %v486
    %v763 = vunpack.c.l.b16 %v487
    %v764 = vunpack.c.h.b16 %v487
    %v765 = vunpack.c.l.b16 %v488
    %v766 = vunpack.c.h.b16 %v488
    %v767 = vunpack.c.l.b16 %v489
    %v768 = vunpack.c.h.b16 %v489
    %v769 = vunpack.c.l.b16 %v490
    %v770 = vunpack.c.h.b16 %v490
    %v771 = vunpack.c.l.b16 %v491
    %v772 = vunpack.c.h.b16 %v491
    %v773 = vunpack.c.l.b16 %v492
    %v774 = vunpack.c.h.b16 %v492
    %v775 = vunpack.c.l.b16 %v493
    %v776 = vunpack.c.h.b16 %v493
    %v777 = vunpack.c.l.b16 %v494
    %v778 = vunpack.c.h.b16 %v494
    %v779 = vunpack.c.l.b16 %v495
    %v780 = vunpack.c.h.b16 %v495
    %v781 = vunpack.c.l.b16 %v496
    %v782 = vunpack.c.h.b16 %v496
    %v783 = vunpack.c.l.b16 %v497
    %v784 = vunpack.c.h.b16 %v497
    %v785 = vunpack.c.l.b16 %v498
    %v786 = vunpack.c.h.b16 %v498
    %v787 = vunpack.c.l.b16 %v499
    %v788 = vunpack.c.h.b16 %v499
    %v789 = vunpack.c.l.b16 %v500
    %v790 = vunpack.c.h.b16 %v500
    %v791 = vunpack.c.l.b16 %v501
    %v792 = vunpack.c.h.b16 %v501
    %v793 = vunpack.c.l.b16 %v502
    %v794 = vunpack.c.h.b16 %v502
    %v795 = vunpack.c.l.b16 %v503
    %v796 = vunpack.c.h.b16 %v503
    %v797 = vunpack.c.l.b16 %v504
    %v798 = vunpack.c.h.b16 %v504
    %v799 = vunpack.c.l.b16 %v505
    %v800 = vunpack.c.h.b16 %v505
    %v801 = vunpack.c.l.b16 %v506
    %v802 = vunpack.c.h.b16 %v506
    %v803 = vunpack.c.l.b16 %v507
    %v804 = vunpack.c.h.b16 %v507
    %v805 = vunpack.c.l.b16 %v508
    %v806 = vunpack.c.h.b16 %v508
    %v807 = vunpack.c.l.b16 %v509
    %v808 = vunpack.c.h.b16 %v509
    %v809 = vunpack.c.l.b16 %v510
    %v810 = vunpack.c.h.b16 %v510
    %v811 = vunpack.c.l.b16 %v511
    %v812 = vunpack.c.h.b16 %v511
    %v813 = vunpack.c.l.b16 %v512
    %v814 = vunpack.c.h.b16 %v512
    %v815 = vunpack.c.l.b16 %v513
    %v816 = vunpack.c.h.b16 %v513
    %v817 = vunpack.c.l.b16 %v514
    %v818 = vunpack.c.h.b16 %v514
    %v819 = vunpack.c.l.b16 %v515
    %v820 = vunpack.c.h.b16 %v515
    %v821 = vunpack.c.l.b16 %v516
    %v822 = vunpack.c.h.b16 %v516
    %v823 = vunpack.c.l.b16 %v517
    %v824 = vunpack.c.h.b16 %v517
    %v825 = vunpack.c.l.b16 %v518
    %v826 = vunpack.c.h.b16 %v518
    %v827 = vunpack.c.l.b16 %v519
    %v828 = vunpack.c.h.b16 %v519
    %v829 = vunpack.c.l.b16 %v520
    %v830 = vunpack.c.h.b16 %v520
    %v831 = vunpack.c.l.b16 %v521
    %v832 = vunpack.c.h.b16 %v521
    %v833 = vunpack.c.l.b16 %v522
    %v834 = vunpack.c.h.b16 %v522
    %v835 = vunpack.c.l.b16 %v523
    %v836 = vunpack.c.h.b16 %v523
    %v837 = vunpack.c.l.b16 %v524
    %v838 = vunpack.c.h.b16 %v524
    %v839 = vunpack.c.l.b16 %v525
    %v840 = vunpack.c.h.b16 %v525
    %v841 = vunpack.c.l.b16 %v526
    %v842 = vunpack.c.h.b16 %v526
    %v843 = vunpack.c.l.b16 %v527
    %v844 = vunpack.c.h.b16 %v527
    %v845 = vunpack.c.l.b16 %v528
    %v846 = vunpack.c.h.b16 %v528
    %v847 = vunpack.c.l.b16 %v529
    %v848 = vunpack.c.h.b16 %v529
    %v849 = vunpack.c.l.b16 %v530
    %v850 = vunpack.c.h.b16 %v530
    %v851 = vunpack.c.l.b16 %v531
    %v852 = vunpack.c.h.b16 %v531
    %v853 = vunpack.c.l.b16 %v532
    %v854 = vunpack.c.h.b16 %v532
    %v855 = vunpack.c.l.b16 %v533
    %v856 = vunpack.c.h.b16 %v533
    %v857 = vunpack.c.l.b16 %v534
    %v858 = vunpack.c.h.b16 %v534
    %v859 = vunpack.c.l.b16 %v535
    %v860 = vunpack.c.h.b16 %v535
    %v861 = vunpack.c.l.b16 %v536
    %v862 = vunpack.c.h.b16 %v536
    %v863 = vpack.c.b16 %v675, %v671
    %v864 = vpack.c.b16 %v676, %v672
    %v865 = vpack.c.b16 %v677, %v673
    %v866 = vpack.c.b16 %v678, %v674
    %v867 = vpack.c.b16 %v683, %v679
    %v868 = vpack.c.b16 %v684, %v680
    %v869 = vpack.c.b16 %v685, %v681
    %v870 = vpack.c.b16 %v686, %v682
    %v871 = vpack.c.b16 %v691, %v687
    %v872 = vpack.c.b16 %v692, %v688
    %v873 = vpack.c.b16 %v693, %v689
    %v874 = vpack.c.b16 %v694, %v690
    %v875 = vpack.c.b16 %v699, %v695
    %v876 = vpack.c.b16 %v700, %v696
    %v877 = vpack.c.b16 %v701, %v697
    %v878 = vpack.c.b16 %v702, %v698
    %v879 = vpack.c.b16 %v707, %v703
    %v880 = vpack.c.b16 %v708, %v704
    %v881 = vpack.c.b16 %v709, %v705
    %v882 = vpack.c.b16 %v710, %v706
    %v883 = vpack.c.b16 %v715, %v711
    %v884 = vpack.c.b16 %v716, %v712
    %v885 = vpack.c.b16 %v717, %v713
    %v886 = vpack.c.b16 %v718, %v714
    %v887 = vpack.c.b16 %v723, %v719
    %v888 = vpack.c.b16 %v724, %v720
    %v889 = vpack.c.b16 %v725, %v721
    %v890 = vpack.c.b16 %v726, %v722
    %v891 = vpack.c.b16 %v731, %v727
    %v892 = vpack.c.b16 %v732, %v728
    %v893 = vpack.c.b16 %v733, %v729
    %v894 = vpack.c.b16 %v734, %v730
    %v895 = vpack.c.b16 %v739, %v735
    %v896 = vpack.c.b16 %v740, %v736
    %v897 = vpack.c.b16 %v741, %v737
    %v898 = vpack.c.b16 %v742, %v738
    %v899 = vpack.c.b16 %v747, %v743
    %v900 = vpack.c.b16 %v748, %v744
    %v901 = vpack.c.b16 %v749, %v745
    %v902 = vpack.c.b16 %v750, %v746
    %v903 = vpack.c.b16 %v755, %v751
    %v904 = vpack.c.b16 %v756, %v752
    %v905 = vpack.c.b16 %v757, %v753
    %v906 = vpack.c.b16 %v758, %v754
    %v907 = vpack.c.b16 %v763, %v759
    %v908 = vpack.c.b16 %v764, %v760
    %v909 = vpack.c.b16 %v765, %v761
    %v910 = vpack.c.b16 %v766, %v762
    %v911 = vpack.c.b16 %v771, %v767
    %v912 = vpack.c.b16 %v772, %v768
    %v913 = vpack.c.b16 %v773, %v769
    %v914 = vpack.c.b16 %v774, %v770
    %v915 = vpack.c.b16 %v779, %v775
    %v916 = vpack.c.b16 %v780, %v776
    %v917 = vpack.c.b16 %v781, %v777
    %v918 = vpack.c.b16 %v782, %v778
    %v919 = vpack.c.b16 %v787, %v783
    %v920 = vpack.c.b16 %v788, %v784
    %v921 = vpack.c.b16 %v789, %v785
    %v922 = vpack.c.b16 %v790, %v786
    %v923 = vpack.c.b16 %v795, %v791
    %v924 = vpack.c.b16 %v796, %v792
    %v925 = vpack.c.b16 %v797, %v793
    %v926 = vpack.c.b16 %v798, %v794
    %v927 = vpack.c.b16 %v803, %v799
    %v928 = vpack.c.b16 %v804, %v800
    %v929 = vpack.c.b16 %v805, %v801
    %v930 = vpack.c.b16 %v806, %v802
    %v931 = vpack.c.b16 %v811, %v807
    %v932 = vpack.c.b16 %v812, %v808
    %v933 = vpack.c.b16 %v813, %v809
    %v934 = vpack.c.b16 %v814, %v810
    %v935 = vpack.c.b16 %v819, %v815
    %v936 = vpack.c.b16 %v820, %v816
    %v937 = vpack.c.b16 %v821, %v817
    %v938 = vpack.c.b16 %v822, %v818
    %v939 = vpack.c.b16 %v827, %v823
    %v940 = vpack.c.b16 %v828, %v824
    %v941 = vpack.c.b16 %v829, %v825
    %v942 = vpack.c.b16 %v830, %v826
    %v943 = vpack.c.b16 %v835, %v831
    %v944 = vpack.c.b16 %v836, %v832
    %v945 = vpack.c.b16 %v837, %v833
    %v946 = vpack.c.b16 %v838, %v834
    %v947 = vpack.c.b16 %v843, %v839
    %v948 = vpack.c.b16 %v844, %v840
    %v949 = vpack.c.b16 %v845, %v841
    %v950 = vpack.c.b16 %v846, %v842
    %v951 = vpack.c.b16 %v851, %v847
    %v952 = vpack.c.b16 %v852, %v848
    %v953 = vpack.c.b16 %v853, %v849
    %v954 = vpack.c.b16 %v854, %v850
    %v955 = vpack.c.b16 %v859, %v855
    %v956 = vpack.c.b16 %v860, %v856
    %v957 = vpack.c.b16 %v861, %v857
    %v958 = vpack.c.b16 %v862, %v858
    %1055 = vmatprep.subr.bf16.mxu0 %v864
    %1056 = vmatpush1.bf16.msra.mxu0 %v863
    %1057 = vmatprep.subr.bf16.mxu0 %v868
    %1058 = vmatpush1.bf16.msra.mxu0 %v867
    %1059 = vmatprep.subr.bf16.mxu0 %v872
    %1060 = vmatpush1.bf16.msra.mxu0 %v871
    %1061 = vmatprep.subr.bf16.mxu0 %v876
    %1062 = vmatpush1.bf16.msra.mxu0 %v875
    %1063 = vmatprep.subr.bf16.mxu0 %v880
    %1064 = vmatpush1.bf16.msra.mxu0 %v879
    %1065 = vmatprep.subr.bf16.mxu0 %v884
    %1066 = vmatpush1.bf16.msra.mxu0 %v883
    %1067 = vmatprep.subr.bf16.mxu0 %v888
    %1068 = vmatpush1.bf16.msra.mxu0 %v887
    %1069 = vmatprep.subr.bf16.mxu0 %v892
    %1070 = vmatpush1.bf16.msra.mxu0 %v891
    %1071 = vmatprep.subr.bf16.mxu0 %v896
    %1072 = vmatpush1.bf16.msra.mxu0 %v895
    %1073 = vmatprep.subr.bf16.mxu0 %v900
    %1074 = vmatpush1.bf16.msra.mxu0 %v899
    %1075 = vmatprep.subr.bf16.mxu0 %v904
    %1076 = vmatpush1.bf16.msra.mxu0 %v903
    %1077 = vmatprep.subr.bf16.mxu0 %v908
    %1078 = vmatpush1.bf16.msra.mxu0 %v907
    %1079 = vmatprep.subr.bf16.mxu0 %v912
    %1080 = vmatpush1.bf16.msra.mxu0 %v911
    %1081 = vmatprep.subr.bf16.mxu0 %v916
    %1082 = vmatpush1.bf16.msra.mxu0 %v915
    %1083 = vmatprep.subr.bf16.mxu0 %v920
    %1084 = vmatpush1.bf16.msra.mxu0 %v919
    %1085 = vmatprep.subr.bf16.mxu0 %v924
    %1086 = vmatpush1.bf16.msra.mxu0 %v923
    %1087 = vmatprep.mubr.bf16.mxu0 %v570
    %1088 = vmatmul.mubr.bf16.gmra.mrb[0].mxu0 %v569
    %v1089 = vpop.f32.mrb[0].mxu0
    %v1090 = vadd.f32 %v542, %v1089
    %v1091 = vpop.f32.mrb[0].mxu0
    %v1092 = vadd.f32 %v546, %v1091
    %v1093 = vpop.f32.mrb[0].mxu0
    %v1094 = vadd.f32 %v542, %v1093
    %v1095 = vpop.f32.mrb[0].mxu0
    %v1096 = vadd.f32 %v546, %v1095
    %1097 = vdwg.mxu0
    %1098 = vmatprep.subr.bf16.mxu0 %v928
    %1099 = vmatpush1.bf16.msra.mxu0 %v927
    %1100 = vmatprep.subr.bf16.mxu0 %v932
    %1101 = vmatpush1.bf16.msra.mxu0 %v931
    %1102 = vmatprep.subr.bf16.mxu0 %v936
    %1103 = vmatpush1.bf16.msra.mxu0 %v935
    %1104 = vmatprep.subr.bf16.mxu0 %v940
    %1105 = vmatpush1.bf16.msra.mxu0 %v939
    %1106 = vmatprep.subr.bf16.mxu0 %v944
    %1107 = vmatpush1.bf16.msra.mxu0 %v943
    %1108 = vmatprep.subr.bf16.mxu0 %v948
    %1109 = vmatpush1.bf16.msra.mxu0 %v947
    %1110 = vmatprep.subr.bf16.mxu0 %v952
    %1111 = vmatpush1.bf16.msra.mxu0 %v951
    %1112 = vmatprep.subr.bf16.mxu0 %v956
    %1113 = vmatpush1.bf16.msra.mxu0 %v955
    %1114 = vmatprep.subr.bf16.mxu0 0
    %1115 = vmatpush1.bf16.msra.mxu0 0
    %1116 = vmatprep.subr.bf16.mxu0 0
    %1117 = vmatpush1.bf16.msra.mxu0 0
    %1118 = vmatprep.subr.bf16.mxu0 0
    %1119 = vmatpush1.bf16.msra.mxu0 0
    %1120 = vmatprep.subr.bf16.mxu0 0
    %1121 = vmatpush1.bf16.msra.mxu0 0
    %1122 = vmatprep.subr.bf16.mxu0 0
    %1123 = vmatpush1.bf16.msra.mxu0 0
    %1124 = vmatprep.subr.bf16.mxu0 0
    %1125 = vmatpush1.bf16.msra.mxu0 0
    %1126 = vmatprep.subr.bf16.mxu0 0
    %1127 = vmatpush1.bf16.msra.mxu0 0
    %1128 = vmatprep.subr.bf16.mxu0 0
    %1129 = vmatpush1.bf16.msra.mxu0 0
    %1130 = vmatprep.mubr.bf16.mxu0 0
    %1131 = vmatmul.mubr.bf16.gmra.mrb[0].mxu0 %v571
    %v1132 = vpop.f32.mrb[0].mxu0
    %v1133 = vadd.f32 %v1090, %v1132
    %v1134 = vpop.f32.mrb[0].mxu0
    %v1135 = vadd.f32 %v1092, %v1134
    %v1136 = vpop.f32.mrb[0].mxu0
    %v1137 = vadd.f32 %v1094, %v1136
    %v1138 = vpop.f32.mrb[0].mxu0
    %v1139 = vadd.f32 %v1096, %v1138
    %1140 = vdwg.mxu0
    %1141 = vmatprep.subr.bf16.mxu0 %v866
    %1142 = vmatpush1.bf16.msra.mxu0 %v865
    %1143 = vmatprep.subr.bf16.mxu0 %v870
    %1144 = vmatpush1.bf16.msra.mxu0 %v869
    %1145 = vmatprep.subr.bf16.mxu0 %v874
    %1146 = vmatpush1.bf16.msra.mxu0 %v873
    %1147 = vmatprep.subr.bf16.mxu0 %v878
    %1148 = vmatpush1.bf16.msra.mxu0 %v877
    %1149 = vmatprep.subr.bf16.mxu0 %v882
    %1150 = vmatpush1.bf16.msra.mxu0 %v881
    %1151 = vmatprep.subr.bf16.mxu0 %v886
    %1152 = vmatpush1.bf16.msra.mxu0 %v885
    %1153 = vmatprep.subr.bf16.mxu0 %v890
    %1154 = vmatpush1.bf16.msra.mxu0 %v889
    %1155 = vmatprep.subr.bf16.mxu0 %v894
    %1156 = vmatpush1.bf16.msra.mxu0 %v893
    %1157 = vmatprep.subr.bf16.mxu0 %v898
    %1158 = vmatpush1.bf16.msra.mxu0 %v897
    %1159 = vmatprep.subr.bf16.mxu0 %v902
    %1160 = vmatpush1.bf16.msra.mxu0 %v901
    %1161 = vmatprep.subr.bf16.mxu0 %v906
    %1162 = vmatpush1.bf16.msra.mxu0 %v905
    %1163 = vmatprep.subr.bf16.mxu0 %v910
    %1164 = vmatpush1.bf16.msra.mxu0 %v909
    %1165 = vmatprep.subr.bf16.mxu0 %v914
    %1166 = vmatpush1.bf16.msra.mxu0 %v913
    %1167 = vmatprep.subr.bf16.mxu0 %v918
    %1168 = vmatpush1.bf16.msra.mxu0 %v917
    %1169 = vmatprep.subr.bf16.mxu0 %v922
    %1170 = vmatpush1.bf16.msra.mxu0 %v921
    %1171 = vmatprep.subr.bf16.mxu0 %v926
    %1172 = vmatpush1.bf16.msra.mxu0 %v925
    %1173 = vmatprep.mubr.bf16.mxu0 %v570
    %1174 = vmatmul.mubr.bf16.gmra.mrb[0].mxu0 %v569
    %v1175 = vpop.f32.mrb[0].mxu0
    %v1176 = vadd.f32 %v550, %v1175
    %v1177 = vpop.f32.mrb[0].mxu0
    %v1178 = vadd.f32 %v554, %v1177
    %v1179 = vpop.f32.mrb[0].mxu0
    %v1180 = vadd.f32 %v550, %v1179
    %v1181 = vpop.f32.mrb[0].mxu0
    %v1182 = vadd.f32 %v554, %v1181
    %1183 = vdwg.mxu0
    %1184 = vmatprep.subr.bf16.mxu0 %v930
    %1185 = vmatpush1.bf16.msra.mxu0 %v929
    %1186 = vmatprep.subr.bf16.mxu0 %v934
    %1187 = vmatpush1.bf16.msra.mxu0 %v933
    %1188 = vmatprep.subr.bf16.mxu0 %v938
    %1189 = vmatpush1.bf16.msra.mxu0 %v937
    %1190 = vmatprep.subr.bf16.mxu0 %v942
    %1191 = vmatpush1.bf16.msra.mxu0 %v941
    %1192 = vmatprep.subr.bf16.mxu0 %v946
    %1193 = vmatpush1.bf16.msra.mxu0 %v945
    %1194 = vmatprep.subr.bf16.mxu0 %v950
    %1195 = vmatpush1.bf16.msra.mxu0 %v949
    %1196 = vmatprep.subr.bf16.mxu0 %v954
    %1197 = vmatpush1.bf16.msra.mxu0 %v953
    %1198 = vmatprep.subr.bf16.mxu0 %v958
    %1199 = vmatpush1.bf16.msra.mxu0 %v957
    %1200 = vmatprep.subr.bf16.mxu0 0
    %1201 = vmatpush1.bf16.msra.mxu0 0
    %1202 = vmatprep.subr.bf16.mxu0 0
    %1203 = vmatpush1.bf16.msra.mxu0 0
    %1204 = vmatprep.subr.bf16.mxu0 0
    %1205 = vmatpush1.bf16.msra.mxu0 0
    %1206 = vmatprep.subr.bf16.mxu0 0
    %1207 = vmatpush1.bf16.msra.mxu0 0
    %1208 = vmatprep.subr.bf16.mxu0 0
    %1209 = vmatpush1.bf16.msra.mxu0 0
    %1210 = vmatprep.subr.bf16.mxu0 0
    %1211 = vmatpush1.bf16.msra.mxu0 0
    %1212 = vmatprep.subr.bf16.mxu0 0
    %1213 = vmatpush1.bf16.msra.mxu0 0
    %1214 = vmatprep.subr.bf16.mxu0 0
    %1215 = vmatpush1.bf16.msra.mxu0 0
    %1216 = vmatprep.mubr.bf16.mxu0 0
    %1217 = vmatmul.mubr.bf16.gmra.mrb[0].mxu0 %v571
    %v1218 = vpop.f32.mrb[0].mxu0
    %v1219 = vadd.f32 %v1176, %v1218
    %v1220 = vpop.f32.mrb[0].mxu0
    %v1221 = vadd.f32 %v1178, %v1220
    %v1222 = vpop.f32.mrb[0].mxu0
    %v1223 = vadd.f32 %v1180, %v1222
    %v1224 = vpop.f32.mrb[0].mxu0
    %v1225 = vadd.f32 %v1182, %v1224
    %1226 = vdwg.mxu0
    %v1227 = vmax.f32 %v1133, 0.0
    %v1228 = vmax.f32 %v1135, 0.0
    %v1229 = vmax.f32 %v1219, 0.0
    %v1230 = vmax.f32 %v1221, 0.0
    %v1231 = vmax.f32 %v1137, 0.0
    %v1232 = vmax.f32 %v1139, 0.0
    %v1233 = vmax.f32 %v1223, 0.0
    %v1234 = vmax.f32 %v1225, 0.0
    %v1235 = vpack.c.bf16 %v1231, %v1227
    %v1236 = vpack.c.bf16 %v1232, %v1228
    %v1237 = vpack.c.bf16 %v1233, %v1229
    %v1238 = vpack.c.bf16 %v1234, %v1230
    %v1243 = vunpack.c.l.b16 %v1235
    %v1244 = vunpack.c.l.b16 %v1236
    %v1245 = vunpack.c.l.b16 %v1237
    %v1246 = vunpack.c.l.b16 %v1238
    %v1247 = vunpack.c.h.b16 %v1235
    %v1248 = vunpack.c.h.b16 %v1236
    %v1249 = vunpack.c.h.b16 %v1237
    %v1250 = vunpack.c.h.b16 %v1238
    %v1251 = vpack.c.b16 %v1243, %v1243
    %v1252 = vpack.c.b16 %v1244, %v1244
    %v1253 = vpack.c.b16 %v1245, %v1245
    %v1254 = vpack.c.b16 %v1246, %v1246
    %v1255 = vpack.c.b16 %v1247, %v1247
    %v1256 = vpack.c.b16 %v1248, %v1248
    %v1257 = vpack.c.b16 %v1249, %v1249
    %v1258 = vpack.c.b16 %v1250, %v1250
    %1267 = vst [vmem:[#allocation2 + $0x20] sm:$0xf0] %v1251
    %1268 = vst [vmem:[#allocation2 + $0x28] sm:$0xf0] %v1252
    %1269 = vst [vmem:[#allocation2 + $0x30] sm:$0xf0] %v1253
    %1270 = vst [vmem:[#allocation2 + $0x38] sm:$0xf0] %v1254
    %1271 = vst [vmem:[#allocation2 + $0x68] sm:$0xf0] %v1255
    %1272 = vst [vmem:[#allocation2 + $0x70] sm:$0xf0] %v1256
    %1273 = vst [vmem:[#allocation2 + $0x78] sm:$0xf0] %v1257
    %1274 = vst [vmem:[#allocation2 + $0x80] sm:$0xf0] %v1258
    %v1275 = vld [vmem:[%s2] sm:$0x3f]
    %v1276 = vld [vmem:[#allocation10] sm:$0xf]
    %v1277 = vld [vmem:[#allocation10 + $0x4] sm:$0xf]
    %v1278 = vld [vmem:[#allocation10 + $0x8] sm:$0xf]
    %v1279 = vld [vmem:[#allocation10 + $0xc] sm:$0xf]
    %v1280 = vld [vmem:[#allocation10 + $0x10] sm:$0xf]
    %v1281 = vld [vmem:[#allocation10 + $0x14] sm:$0xf]
    %v1282 = vld [vmem:[#allocation10 + $0x18] sm:$0xf]
    %v1283 = vld [vmem:[#allocation10 + $0x1c] sm:$0xf]
    %v1284 = vld [vmem:[#allocation10 + $0x20] sm:$0xf]
    %v1285 = vld [vmem:[#allocation10 + $0x24] sm:$0xf]
    %v1286 = vld [vmem:[#allocation10 + $0x28] sm:$0xf]
    %v1287 = vld [vmem:[#allocation10 + $0x2c] sm:$0xf]
    %v1288 = vld [vmem:[#allocation10 + $0x30] sm:$0xf]
    %v1289 = vld [vmem:[#allocation10 + $0x34] sm:$0xf]
    %v1290 = vld [vmem:[#allocation10 + $0x38] sm:$0xf]
    %v1291 = vld [vmem:[#allocation10 + $0x3c] sm:$0xf]
    %v1292 = vld [vmem:[#allocation10 + $0x40] sm:$0xf]
    %v1293 = vld [vmem:[#allocation10 + $0x44] sm:$0xf]
    %v1294 = vld [vmem:[#allocation10 + $0x48] sm:$0xf]
    %v1295 = vld [vmem:[#allocation10 + $0x4c] sm:$0xf]
    %v1296 = vld [vmem:[#allocation10 + $0x50] sm:$0xf]
    %v1297 = vld [vmem:[#allocation10 + $0x54] sm:$0xf]
    %v1298 = vld [vmem:[#allocation10 + $0x58] sm:$0xf]
    %v1299 = vld [vmem:[#allocation10 + $0x5c] sm:$0xf]
    %v1300 = vld [vmem:[#allocation10 + $0x60] sm:$0xf]
    %v1301 = vld [vmem:[#allocation10 + $0x64] sm:$0xf]
    %v1302 = vld [vmem:[#allocation10 + $0x68] sm:$0xf]
    %v1303 = vld [vmem:[#allocation10 + $0x6c] sm:$0xf]
    %v1304 = vld [vmem:[#allocation10 + $0x70] sm:$0xf]
    %v1305 = vld [vmem:[#allocation10 + $0x74] sm:$0xf]
    %v1306 = vld [vmem:[#allocation10 + $0x78] sm:$0xf]
    %v1307 = vld [vmem:[#allocation10 + $0x7c] sm:$0xf]
    %v1308 = vld [vmem:[#allocation10 + $0x80] sm:$0xf]
    %v1309 = vld [vmem:[#allocation10 + $0x84] sm:$0xf]
    %v1310 = vld [vmem:[#allocation10 + $0x88] sm:$0xf]
    %v1311 = vld [vmem:[#allocation10 + $0x8c] sm:$0xf]
    %v1312 = vld [vmem:[#allocation10 + $0x90] sm:$0xf]
    %v1313 = vld [vmem:[#allocation10 + $0x94] sm:$0xf]
    %v1314 = vld [vmem:[#allocation10 + $0x98] sm:$0xf]
    %v1315 = vld [vmem:[#allocation10 + $0x9c] sm:$0xf]
    %v1316 = vld [vmem:[#allocation10 + $0xa0] sm:$0xf]
    %v1317 = vld [vmem:[#allocation10 + $0xa4] sm:$0xf]
    %v1318 = vld [vmem:[#allocation10 + $0xa8] sm:$0xf]
    %v1319 = vld [vmem:[#allocation10 + $0xac] sm:$0xf]
    %v1320 = vld [vmem:[#allocation10 + $0xb0] sm:$0xf]
    %v1321 = vld [vmem:[#allocation10 + $0xb4] sm:$0xf]
    %v1322 = vld [vmem:[#allocation10 + $0xb8] sm:$0xf]
    %v1323 = vld [vmem:[#allocation10 + $0xbc] sm:$0xf]
    %v1324 = vld [vmem:[#allocation10 + $0xc0] sm:$0xf]
    %v1325 = vld [vmem:[#allocation10 + $0xc4] sm:$0xf]
    %v1326 = vld [vmem:[#allocation10 + $0xc8] sm:$0xf]
    %v1327 = vld [vmem:[#allocation10 + $0xcc] sm:$0xf]
    %v1328 = vld [vmem:[#allocation10 + $0xd0] sm:$0xf]
    %v1329 = vld [vmem:[#allocation10 + $0xd4] sm:$0xf]
    %v1330 = vld [vmem:[#allocation10 + $0xd8] sm:$0xf]
    %v1331 = vld [vmem:[#allocation10 + $0xdc] sm:$0xf]
    %v1332 = vld [vmem:[#allocation10 + $0xe0] sm:$0xf]
    %v1333 = vld [vmem:[#allocation10 + $0xe4] sm:$0xf]
    %v1334 = vld [vmem:[#allocation10 + $0xe8] sm:$0xf]
    %v1335 = vld [vmem:[#allocation10 + $0xec] sm:$0xf]
    %v1336 = vld [vmem:[#allocation10 + $0xf0] sm:$0xf]
    %v1337 = vld [vmem:[#allocation10 + $0xf4] sm:$0xf]
    %v1338 = vld [vmem:[#allocation10 + $0xf8] sm:$0xf]
    %v1339 = vld [vmem:[#allocation10 + $0xfc] sm:$0xf]
    %v1340 = vld [vmem:[#allocation10 + $0x100] sm:$0xf]
    %v1341 = vld [vmem:[#allocation10 + $0x104] sm:$0xf]
    %v1342 = vld [vmem:[#allocation10 + $0x108] sm:$0xf]
    %v1343 = vld [vmem:[#allocation10 + $0x10c] sm:$0xf]
    %v1344 = vld [vmem:[#allocation10 + $0x110] sm:$0xf]
    %v1345 = vld [vmem:[#allocation10 + $0x114] sm:$0xf]
    %v1346 = vld [vmem:[#allocation10 + $0x118] sm:$0xf]
    %v1347 = vld [vmem:[#allocation10 + $0x11c] sm:$0xf]
    %v1348 = vld [vmem:[#allocation10 + $0x120] sm:$0xf]
    %v1349 = vld [vmem:[#allocation10 + $0x124] sm:$0xf]
    %v1350 = vld [vmem:[#allocation10 + $0x128] sm:$0xf]
    %v1351 = vld [vmem:[#allocation10 + $0x12c] sm:$0xf]
    %v1352 = vld [vmem:[#allocation10 + $0x130] sm:$0xf]
    %v1353 = vld [vmem:[#allocation10 + $0x134] sm:$0xf]
    %v1354 = vld [vmem:[#allocation10 + $0x138] sm:$0xf]
    %v1355 = vld [vmem:[#allocation10 + $0x13c] sm:$0xf]
    %v1356 = vld [vmem:[#allocation10 + $0x140] sm:$0xf]
    %v1357 = vld [vmem:[#allocation10 + $0x144] sm:$0xf]
    %v1358 = vld [vmem:[#allocation10 + $0x148] sm:$0xf]
    %v1359 = vld [vmem:[#allocation10 + $0x14c] sm:$0xf]
    %v1360 = vld [vmem:[#allocation10 + $0x150] sm:$0xf]
    %v1361 = vld [vmem:[#allocation10 + $0x154] sm:$0xf]
    %v1362 = vld [vmem:[#allocation10 + $0x158] sm:$0xf]
    %v1363 = vld [vmem:[#allocation10 + $0x15c] sm:$0xf]
    %v1364 = vld [vmem:[#allocation10 + $0x160] sm:$0xf]
    %v1365 = vld [vmem:[#allocation10 + $0x164] sm:$0xf]
    %v1366 = vld [vmem:[#allocation10 + $0x168] sm:$0xf]
    %v1367 = vld [vmem:[#allocation10 + $0x16c] sm:$0x1]
    %v1368 = vld [vmem:[#allocation11] sm:$0x1]
    %v1370 = vlaneseq
    %v1371 = vshrl.u32 %v1370, 7
    %v1372 = vsub.s32 0, %v1371
    %v1373 = vrot.slane %v1368, %v1372
    %v1376 = vcombine.high %v1275, %v1275
    %v1378 = vunpack.c.l.s4 1966171168
    %v1379 = vunpack.c.0.s8 %v1378
    %v1380 = vlaneseq
    %v1381 = vshrl.u32 %v1380, 7
    %v1382 = vsub.s32 %v1379, %v1381
    %v1383 = vrot.slane %v1275, %v1382
    %v1385 = vunpack.c.l.s4 1966171168
    %v1386 = vunpack.c.0.s8 %v1385
    %v1387 = vlaneseq
    %v1388 = vshrl.u32 %v1387, 7
    %v1389 = vsub.s32 %v1386, %v1388
    %v1390 = vrot.slane %v1376, %v1389
    %v1391 = vcombine.high %v1383, %v1383
    %v1392 = vcombine.high %v1390, %v1390
    %v1394 = vunpack.c.l.s4 1966171168
    %v1395 = vunpack.c.0.s8 %v1394
    %v1396 = vlaneseq
    %v1397 = vshrl.u32 %v1396, 7
    %v1398 = vsub.s32 %v1395, %v1397
    %v1399 = vrot.slane %v1383, %v1398
    %v1401 = vunpack.c.l.s4 1966171168
    %v1402 = vunpack.c.0.s8 %v1401
    %v1403 = vlaneseq
    %v1404 = vshrl.u32 %v1403, 7
    %v1405 = vsub.s32 %v1402, %v1404
    %v1406 = vrot.slane %v1390, %v1405
    %v1408 = vunpack.c.l.s4 1966171168
    %v1409 = vunpack.c.0.s8 %v1408
    %v1410 = vlaneseq
    %v1411 = vshrl.u32 %v1410, 7
    %v1412 = vsub.s32 %v1409, %v1411
    %v1413 = vrot.slane %v1391, %v1412
    %v1415 = vunpack.c.l.s4 1966171168
    %v1416 = vunpack.c.0.s8 %v1415
    %v1417 = vlaneseq
    %v1418 = vshrl.u32 %v1417, 7
    %v1419 = vsub.s32 %v1416, %v1418
    %v1420 = vrot.slane %v1392, %v1419
    %v1421 = vcombine.high %v1399, %v1399
    %v1422 = vcombine.high %v1413, %v1413
    %v1520 = vunpack.c.l.b16 %v1276
    %v1521 = vunpack.c.l.b16 %v1277
    %v1522 = vunpack.c.l.b16 %v1278
    %v1523 = vunpack.c.l.b16 %v1279
    %v1524 = vunpack.c.l.b16 %v1280
    %v1525 = vunpack.c.l.b16 %v1281
    %v1526 = vunpack.c.l.b16 %v1282
    %v1527 = vunpack.c.l.b16 %v1283
    %v1528 = vunpack.c.l.b16 %v1284
    %v1529 = vunpack.c.l.b16 %v1285
    %v1530 = vunpack.c.l.b16 %v1286
    %v1531 = vunpack.c.l.b16 %v1287
    %v1532 = vunpack.c.l.b16 %v1288
    %v1533 = vunpack.c.l.b16 %v1289
    %v1534 = vunpack.c.l.b16 %v1290
    %v1535 = vunpack.c.l.b16 %v1291
    %v1536 = vunpack.c.l.b16 %v1292
    %v1537 = vunpack.c.l.b16 %v1293
    %v1538 = vunpack.c.l.b16 %v1294
    %v1539 = vunpack.c.l.b16 %v1295
    %v1540 = vunpack.c.l.b16 %v1296
    %v1541 = vunpack.c.l.b16 %v1297
    %v1542 = vunpack.c.l.b16 %v1298
    %v1543 = vunpack.c.l.b16 %v1299
    %v1544 = vunpack.c.l.b16 %v1300
    %v1545 = vunpack.c.l.b16 %v1301
    %v1546 = vunpack.c.l.b16 %v1302
    %v1547 = vunpack.c.l.b16 %v1303
    %v1548 = vunpack.c.l.b16 %v1304
    %v1549 = vunpack.c.l.b16 %v1305
    %v1550 = vunpack.c.l.b16 %v1306
    %v1551 = vunpack.c.l.b16 %v1307
    %v1552 = vunpack.c.l.b16 %v1308
    %v1553 = vunpack.c.l.b16 %v1309
    %v1554 = vunpack.c.l.b16 %v1310
    %v1555 = vunpack.c.l.b16 %v1311
    %v1556 = vunpack.c.l.b16 %v1312
    %v1557 = vunpack.c.l.b16 %v1313
    %v1558 = vunpack.c.l.b16 %v1314
    %v1559 = vunpack.c.l.b16 %v1315
    %v1560 = vunpack.c.l.b16 %v1316
    %v1561 = vunpack.c.l.b16 %v1317
    %v1562 = vunpack.c.l.b16 %v1318
    %v1563 = vunpack.c.l.b16 %v1319
    %v1564 = vunpack.c.l.b16 %v1320
    %v1565 = vunpack.c.l.b16 %v1321
    %v1566 = vunpack.c.l.b16 %v1322
    %v1567 = vunpack.c.l.b16 %v1323
    %v1568 = vunpack.c.l.b16 %v1324
    %v1569 = vunpack.c.l.b16 %v1325
    %v1570 = vunpack.c.l.b16 %v1326
    %v1571 = vunpack.c.l.b16 %v1327
    %v1572 = vunpack.c.l.b16 %v1328
    %v1573 = vunpack.c.l.b16 %v1329
    %v1574 = vunpack.c.l.b16 %v1330
    %v1575 = vunpack.c.l.b16 %v1331
    %v1576 = vunpack.c.l.b16 %v1332
    %v1577 = vunpack.c.l.b16 %v1333
    %v1578 = vunpack.c.l.b16 %v1334
    %v1579 = vunpack.c.l.b16 %v1335
    %v1580 = vunpack.c.l.b16 %v1336
    %v1581 = vunpack.c.l.b16 %v1337
    %v1582 = vunpack.c.l.b16 %v1338
    %v1583 = vunpack.c.l.b16 %v1339
    %v1584 = vunpack.c.l.b16 %v1340
    %v1585 = vunpack.c.l.b16 %v1341
    %v1586 = vunpack.c.l.b16 %v1342
    %v1587 = vunpack.c.l.b16 %v1343
    %v1588 = vunpack.c.l.b16 %v1344
    %v1589 = vunpack.c.l.b16 %v1345
    %v1590 = vunpack.c.l.b16 %v1346
    %v1591 = vunpack.c.l.b16 %v1347
    %v1592 = vunpack.c.l.b16 %v1348
    %v1593 = vunpack.c.l.b16 %v1349
    %v1594 = vunpack.c.l.b16 %v1350
    %v1595 = vunpack.c.l.b16 %v1351
    %v1596 = vunpack.c.l.b16 %v1352
    %v1597 = vunpack.c.l.b16 %v1353
    %v1598 = vunpack.c.l.b16 %v1354
    %v1599 = vunpack.c.l.b16 %v1355
    %v1600 = vunpack.c.l.b16 %v1356
    %v1601 = vunpack.c.l.b16 %v1357
    %v1602 = vunpack.c.l.b16 %v1358
    %v1603 = vunpack.c.l.b16 %v1359
    %v1604 = vunpack.c.l.b16 %v1360
    %v1605 = vunpack.c.l.b16 %v1361
    %v1606 = vunpack.c.l.b16 %v1362
    %v1607 = vunpack.c.l.b16 %v1363
    %v1608 = vunpack.c.l.b16 %v1364
    %v1609 = vunpack.c.l.b16 %v1365
    %v1610 = vunpack.c.l.b16 %v1366
    %v1611 = vunpack.c.l.b16 %v1367
    %v1612 = vpack.c.b16 %v1521, %v1520
    %v1613 = vpack.c.b16 %v1523, %v1522
    %v1614 = vpack.c.b16 %v1525, %v1524
    %v1615 = vpack.c.b16 %v1527, %v1526
    %v1616 = vpack.c.b16 %v1529, %v1528
    %v1617 = vpack.c.b16 %v1531, %v1530
    %v1618 = vpack.c.b16 %v1533, %v1532
    %v1619 = vpack.c.b16 %v1535, %v1534
    %v1620 = vpack.c.b16 %v1537, %v1536
    %v1621 = vpack.c.b16 %v1539, %v1538
    %v1622 = vpack.c.b16 %v1541, %v1540
    %v1623 = vpack.c.b16 %v1543, %v1542
    %v1624 = vpack.c.b16 %v1545, %v1544
    %v1625 = vpack.c.b16 %v1547, %v1546
    %v1626 = vpack.c.b16 %v1549, %v1548
    %v1627 = vpack.c.b16 %v1551, %v1550
    %v1628 = vpack.c.b16 %v1553, %v1552
    %v1629 = vpack.c.b16 %v1555, %v1554
    %v1630 = vpack.c.b16 %v1557, %v1556
    %v1631 = vpack.c.b16 %v1559, %v1558
    %v1632 = vpack.c.b16 %v1561, %v1560
    %v1633 = vpack.c.b16 %v1563, %v1562
    %v1634 = vpack.c.b16 %v1565, %v1564
    %v1635 = vpack.c.b16 %v1567, %v1566
    %v1636 = vpack.c.b16 %v1569, %v1568
    %v1637 = vpack.c.b16 %v1571, %v1570
    %v1638 = vpack.c.b16 %v1573, %v1572
    %v1639 = vpack.c.b16 %v1575, %v1574
    %v1640 = vpack.c.b16 %v1577, %v1576
    %v1641 = vpack.c.b16 %v1579, %v1578
    %v1642 = vpack.c.b16 %v1581, %v1580
    %v1643 = vpack.c.b16 %v1583, %v1582
    %v1644 = vpack.c.b16 %v1585, %v1584
    %v1645 = vpack.c.b16 %v1587, %v1586
    %v1646 = vpack.c.b16 %v1589, %v1588
    %v1647 = vpack.c.b16 %v1591, %v1590
    %v1648 = vpack.c.b16 %v1593, %v1592
    %v1649 = vpack.c.b16 %v1595, %v1594
    %v1650 = vpack.c.b16 %v1597, %v1596
    %v1651 = vpack.c.b16 %v1599, %v1598
    %v1652 = vpack.c.b16 %v1601, %v1600
    %v1653 = vpack.c.b16 %v1603, %v1602
    %v1654 = vpack.c.b16 %v1605, %v1604
    %v1655 = vpack.c.b16 %v1607, %v1606
    %v1656 = vpack.c.b16 %v1609, %v1608
    %v1657 = vpack.c.b16 %v1611, %v1610
    %vm1703 = vcmask 728064
    %v1705 = vsel %vm1703, %v1420, 0
    %vm1707 = vcmask 1043456
    %vm1708 = vcmask 1044480
    %v1709 = vsel %vm1707, 4294967295, 65535
    %v1710 = vsel %vm1708, %v1709, 0
    %v1712 = vand.u32 %v1657, %v1710
    %1714 = vmatprep.subr.bf16.mxu0 0
    %1715 = vmatpush1.bf16.msra.mxu0 %v1612
    %1716 = vmatprep.subr.bf16.mxu0 0
    %1717 = vmatpush1.bf16.msra.mxu0 %v1613
    %1718 = vmatprep.subr.bf16.mxu0 0
    %1719 = vmatpush1.bf16.msra.mxu0 %v1614
    %1720 = vmatprep.subr.bf16.mxu0 0
    %1721 = vmatpush1.bf16.msra.mxu0 %v1615
    %1722 = vmatprep.subr.bf16.mxu0 0
    %1723 = vmatpush1.bf16.msra.mxu0 %v1616
    %1724 = vmatprep.subr.bf16.mxu0 0
    %1725 = vmatpush1.bf16.msra.mxu0 %v1617
    %1726 = vmatprep.subr.bf16.mxu0 0
    %1727 = vmatpush1.bf16.msra.mxu0 %v1618
    %1728 = vmatprep.subr.bf16.mxu0 0
    %1729 = vmatpush1.bf16.msra.mxu0 %v1619
    %1730 = vmatprep.subr.bf16.mxu0 0
    %1731 = vmatpush1.bf16.msra.mxu0 %v1620
    %1732 = vmatprep.subr.bf16.mxu0 0
    %1733 = vmatpush1.bf16.msra.mxu0 %v1621
    %1734 = vmatprep.subr.bf16.mxu0 0
    %1735 = vmatpush1.bf16.msra.mxu0 %v1622
    %1736 = vmatprep.subr.bf16.mxu0 0
    %1737 = vmatpush1.bf16.msra.mxu0 %v1623
    %1738 = vmatprep.subr.bf16.mxu0 0
    %1739 = vmatpush1.bf16.msra.mxu0 %v1624
    %1740 = vmatprep.subr.bf16.mxu0 0
    %1741 = vmatpush1.bf16.msra.mxu0 %v1625
    %1742 = vmatprep.subr.bf16.mxu0 0
    %1743 = vmatpush1.bf16.msra.mxu0 %v1626
    %1744 = vmatprep.subr.bf16.mxu0 0
    %1745 = vmatpush1.bf16.msra.mxu0 %v1627
    %1746 = vmatprep.mubr.bf16.mxu0 %v1413
    %1747 = vmatmul.mubr.bf16.gmra.mrb[0].mxu0 %v1399
    %v1748 = vpop.f32.mrb[0].mxu0
    %v1749 = vadd.f32 %v1373, %v1748
    %v1750 = vpop.f32.mrb[0].mxu0
    %v1751 = vpop.f32.mrb[0].mxu0
    %v1752 = vpop.f32.mrb[0].mxu0
    %1753 = vdwg.mxu0
    %1754 = vmatprep.subr.bf16.mxu0 0
    %1755 = vmatpush1.bf16.msra.mxu0 %v1628
    %1756 = vmatprep.subr.bf16.mxu0 0
    %1757 = vmatpush1.bf16.msra.mxu0 %v1629
    %1758 = vmatprep.subr.bf16.mxu0 0
    %1759 = vmatpush1.bf16.msra.mxu0 %v1630
    %1760 = vmatprep.subr.bf16.mxu0 0
    %1761 = vmatpush1.bf16.msra.mxu0 %v1631
    %1762 = vmatprep.subr.bf16.mxu0 0
    %1763 = vmatpush1.bf16.msra.mxu0 %v1632
    %1764 = vmatprep.subr.bf16.mxu0 0
    %1765 = vmatpush1.bf16.msra.mxu0 %v1633
    %1766 = vmatprep.subr.bf16.mxu0 0
    %1767 = vmatpush1.bf16.msra.mxu0 %v1634
    %1768 = vmatprep.subr.bf16.mxu0 0
    %1769 = vmatpush1.bf16.msra.mxu0 %v1635
    %1770 = vmatprep.subr.bf16.mxu0 0
    %1771 = vmatpush1.bf16.msra.mxu0 %v1636
    %1772 = vmatprep.subr.bf16.mxu0 0
    %1773 = vmatpush1.bf16.msra.mxu0 %v1637
    %1774 = vmatprep.subr.bf16.mxu0 0
    %1775 = vmatpush1.bf16.msra.mxu0 %v1638
    %1776 = vmatprep.subr.bf16.mxu0 0
    %1777 = vmatpush1.bf16.msra.mxu0 %v1639
    %1778 = vmatprep.subr.bf16.mxu0 0
    %1779 = vmatpush1.bf16.msra.mxu0 %v1640
    %1780 = vmatprep.subr.bf16.mxu0 0
    %1781 = vmatpush1.bf16.msra.mxu0 %v1641
    %1782 = vmatprep.subr.bf16.mxu0 0
    %1783 = vmatpush1.bf16.msra.mxu0 %v1642
    %1784 = vmatprep.subr.bf16.mxu0 0
    %1785 = vmatpush1.bf16.msra.mxu0 %v1643
    %1786 = vmatprep.mubr.bf16.mxu0 %v1422
    %1787 = vmatmul.mubr.bf16.gmra.mrb[0].mxu0 %v1421
    %v1788 = vpop.f32.mrb[0].mxu0
    %v1789 = vadd.f32 %v1749, %v1788
    %v1790 = vpop.f32.mrb[0].mxu0
    %v1791 = vpop.f32.mrb[0].mxu0
    %v1792 = vpop.f32.mrb[0].mxu0
    %1793 = vdwg.mxu0
    %1794 = vmatprep.subr.bf16.mxu0 0
    %1795 = vmatpush1.bf16.msra.mxu0 %v1644
    %1796 = vmatprep.subr.bf16.mxu0 0
    %1797 = vmatpush1.bf16.msra.mxu0 %v1645
    %1798 = vmatprep.subr.bf16.mxu0 0
    %1799 = vmatpush1.bf16.msra.mxu0 %v1646
    %1800 = vmatprep.subr.bf16.mxu0 0
    %1801 = vmatpush1.bf16.msra.mxu0 %v1647
    %1802 = vmatprep.subr.bf16.mxu0 0
    %1803 = vmatpush1.bf16.msra.mxu0 %v1648
    %1804 = vmatprep.subr.bf16.mxu0 0
    %1805 = vmatpush1.bf16.msra.mxu0 %v1649
    %1806 = vmatprep.subr.bf16.mxu0 0
    %1807 = vmatpush1.bf16.msra.mxu0 %v1650
    %1808 = vmatprep.subr.bf16.mxu0 0
    %1809 = vmatpush1.bf16.msra.mxu0 %v1651
    %1810 = vmatprep.subr.bf16.mxu0 0
    %1811 = vmatpush1.bf16.msra.mxu0 %v1652
    %1812 = vmatprep.subr.bf16.mxu0 0
    %1813 = vmatpush1.bf16.msra.mxu0 %v1653
    %1814 = vmatprep.subr.bf16.mxu0 0
    %1815 = vmatpush1.bf16.msra.mxu0 %v1654
    %1816 = vmatprep.subr.bf16.mxu0 0
    %1817 = vmatpush1.bf16.msra.mxu0 %v1655
    %1818 = vmatprep.subr.bf16.mxu0 0
    %1819 = vmatpush1.bf16.msra.mxu0 %v1656
    %1820 = vmatprep.subr.bf16.mxu0 0
    %1821 = vmatpush1.bf16.msra.mxu0 %v1712
    %1822 = vmatprep.subr.bf16.mxu0 0
    %1823 = vmatpush1.bf16.msra.mxu0 0
    %1824 = vmatprep.subr.bf16.mxu0 0
    %1825 = vmatpush1.bf16.msra.mxu0 0
    %1826 = vmatprep.mubr.bf16.mxu0 %v1705
    %1827 = vmatmul.mubr.bf16.gmra.mrb[0].mxu0 %v1406
    %v1828 = vpop.f32.mrb[0].mxu0
    %v1829 = vadd.f32 %v1789, %v1828
    %v1830 = vpop.f32.mrb[0].mxu0
    %v1831 = vpop.f32.mrb[0].mxu0
    %v1832 = vpop.f32.mrb[0].mxu0
    %1833 = vdwg.mxu0
    %v1834 = vmax.f32 %v1829, 0.0
    %v1835 = vpack.c.bf16 %v1834, %v1834
    %v1838 = vunpack.c.l.s4 1966171168
    %v1839 = vunpack.c.0.s8 %v1838
    %v1840 = vlaneseq
    %v1841 = vshrl.u32 %v1840, 7
    %v1842 = vsub.s32 %v1839, %v1841
    %v1843 = vrot.slane %v1835, %v1842
    %v1845 = vunpack.c.l.s4 1966171168
    %v1846 = vunpack.c.0.s8 %v1845
    %v1847 = vlaneseq
    %v1848 = vshrl.u32 %v1847, 7
    %v1849 = vsub.s32 %v1846, %v1848
    %v1850 = vrot.slane %v1843, %v1849
    %v1851 = vunpack.i.l.s16 %v1850
    %v1852 = vunpack.i.h.s16 %v1850
    %v1853 = vpack.i.b16 %v1851, %v1851
    %v1854 = vpack.i.b16 %v1852, %v1852
    %v1855 = vlaneseq
    %v1856 = vshrl.u32 %v1855, 7
    %v1857 = vsub.s32 0, %v1856
    %v1858 = vrot.slane %v1853, %v1857
    %v1859 = vlaneseq
    %v1860 = vshrl.u32 %v1859, 7
    %v1861 = vsub.s32 0, %v1860
    %v1862 = vrot.slane %v1854, %v1861
    %v1864 = vpack.i.b16 %v1858, %v1858
    %v1866 = vlaneseq
    %v1867 = vshrl.u32 %v1866, 7
    %v1868 = vsub.s32 0, %v1867
    %v1869 = vrot.slane %v1864, %v1868
    %v1871 = vpack.i.b16 %v1862, %v1862
    %v1873 = vlaneseq
    %v1874 = vshrl.u32 %v1873, 7
    %v1875 = vsub.s32 0, %v1874
    %v1876 = vrot.slane %v1871, %v1875
    %1877 = vst [vmem:[#allocation2 + $0x40] sm:$0xf0] %v1869
    %1878 = vst [vmem:[#allocation2 + $0x88] sm:$0xf0] %v1876
    %v1879 = vld [vmem:[#allocation2] sm:$0x3c]
    %v1880 = vld [vmem:[#allocation2 + $0x8] sm:$0x3c]
    %v1881 = vld [vmem:[#allocation2 + $0x10] sm:$0x3c]
    %v1882 = vld [vmem:[#allocation2 + $0x18] sm:$0x3c]
    %v1883 = vld [vmem:[#allocation2 + $0x20] sm:$0x3c]
    %v1884 = vld [vmem:[#allocation2 + $0x28] sm:$0x3c]
    %v1885 = vld [vmem:[#allocation2 + $0x30] sm:$0x3c]
    %v1886 = vld [vmem:[#allocation2 + $0x38] sm:$0x3c]
    %v1887 = vld [vmem:[#allocation2 + $0x40] sm:$0x3c]
    %v1888 = vld [vmem:[#allocation2 + $0x48] sm:$0x3c]
    %v1889 = vld [vmem:[#allocation2 + $0x50] sm:$0x3c]
    %v1890 = vld [vmem:[#allocation2 + $0x58] sm:$0x3c]
    %v1891 = vld [vmem:[#allocation2 + $0x60] sm:$0x3c]
    %v1892 = vld [vmem:[#allocation2 + $0x68] sm:$0x3c]
    %v1893 = vld [vmem:[#allocation2 + $0x70] sm:$0x3c]
    %v1894 = vld [vmem:[#allocation2 + $0x78] sm:$0x3c]
    %v1895 = vld [vmem:[#allocation2 + $0x80] sm:$0x3c]
    %v1896 = vld [vmem:[#allocation2 + $0x88] sm:$0x3c]
    %v1915 = vunpack.c.l.b16 %v1879
    %v1916 = vunpack.c.l.b16 %v1880
    %v1917 = vunpack.c.l.b16 %v1881
    %v1918 = vunpack.c.l.b16 %v1882
    %v1919 = vunpack.c.l.b16 %v1883
    %v1920 = vunpack.c.l.b16 %v1884
    %v1921 = vunpack.c.l.b16 %v1885
    %v1922 = vunpack.c.l.b16 %v1886
    %v1923 = vunpack.c.l.b16 %v1887
    %v1924 = vunpack.c.h.b16 %v1879
    %v1925 = vunpack.c.h.b16 %v1880
    %v1926 = vunpack.c.h.b16 %v1881
    %v1927 = vunpack.c.h.b16 %v1882
    %v1928 = vunpack.c.h.b16 %v1883
    %v1929 = vunpack.c.h.b16 %v1884
    %v1930 = vunpack.c.h.b16 %v1885
    %v1931 = vunpack.c.h.b16 %v1886
    %v1932 = vunpack.c.h.b16 %v1887
    %v1933 = vunpack.c.l.b16 %v1888
    %v1934 = vunpack.c.l.b16 %v1889
    %v1935 = vunpack.c.l.b16 %v1890
    %v1936 = vunpack.c.l.b16 %v1891
    %v1937 = vunpack.c.l.b16 %v1892
    %v1938 = vunpack.c.l.b16 %v1893
    %v1939 = vunpack.c.l.b16 %v1894
    %v1940 = vunpack.c.l.b16 %v1895
    %v1941 = vunpack.c.l.b16 %v1896
    %v1942 = vunpack.c.h.b16 %v1888
    %v1943 = vunpack.c.h.b16 %v1889
    %v1944 = vunpack.c.h.b16 %v1890
    %v1945 = vunpack.c.h.b16 %v1891
    %v1946 = vunpack.c.h.b16 %v1892
    %v1947 = vunpack.c.h.b16 %v1893
    %v1948 = vunpack.c.h.b16 %v1894
    %v1949 = vunpack.c.h.b16 %v1895
    %v1950 = vunpack.c.h.b16 %v1896
    %v1951 = vpack.c.b16 %v1916, %v1915
    %v1952 = vpack.c.b16 %v1918, %v1917
    %v1953 = vpack.c.b16 %v1920, %v1919
    %v1954 = vpack.c.b16 %v1922, %v1921
    %v1955 = vpack.c.b16 %v1923, %v1923
    %v1956 = vpack.c.b16 %v1925, %v1924
    %v1957 = vpack.c.b16 %v1927, %v1926
    %v1958 = vpack.c.b16 %v1929, %v1928
    %v1959 = vpack.c.b16 %v1931, %v1930
    %v1960 = vpack.c.b16 %v1932, %v1932
    %v1961 = vpack.c.b16 %v1934, %v1933
    %v1962 = vpack.c.b16 %v1936, %v1935
    %v1963 = vpack.c.b16 %v1938, %v1937
    %v1964 = vpack.c.b16 %v1940, %v1939
    %v1965 = vpack.c.b16 %v1941, %v1941
    %v1966 = vpack.c.b16 %v1943, %v1942
    %v1967 = vpack.c.b16 %v1945, %v1944
    %v1968 = vpack.c.b16 %v1947, %v1946
    %v1969 = vpack.c.b16 %v1949, %v1948
    %v1970 = vpack.c.b16 %v1950, %v1950
    %vm1971 = vcmask 1041408
    %vm1972 = vcmask 1045508
    %vm1973 = vmor %vm1971, %vm1972
    %v1974 = vrot.slane %v1951, 6
    %v1975 = vrot.slane %v1974, 4
    %v1976 = vrot.slane %v1956, 6
    %v1977 = vsel %vm1973, %v1975, %v1976
    %v1978 = vrot.slane %v1952, 6
    %v1979 = vrot.slane %v1978, 4
    %v1980 = vrot.slane %v1957, 6
    %v1981 = vsel %vm1973, %v1979, %v1980
    %v1982 = vrot.slane %v1953, 6
    %v1983 = vrot.slane %v1982, 4
    %v1984 = vrot.slane %v1958, 6
    %v1985 = vsel %vm1973, %v1983, %v1984
    %v1986 = vrot.slane %v1954, 6
    %v1987 = vrot.slane %v1986, 4
    %v1988 = vrot.slane %v1959, 6
    %v1989 = vsel %vm1973, %v1987, %v1988
    %v1990 = vrot.slane %v1955, 6
    %v1991 = vrot.slane %v1990, 4
    %v1992 = vrot.slane %v1960, 6
    %v1993 = vsel %vm1973, %v1991, %v1992
    %v1994 = vrot.slane %v1961, 6
    %v1995 = vrot.slane %v1994, 4
    %v1996 = vrot.slane %v1966, 6
    %v1997 = vsel %vm1973, %v1995, %v1996
    %v1998 = vrot.slane %v1962, 6
    %v1999 = vrot.slane %v1998, 4
    %v2000 = vrot.slane %v1967, 6
    %v2001 = vsel %vm1973, %v1999, %v2000
    %v2002 = vrot.slane %v1963, 6
    %v2003 = vrot.slane %v2002, 4
    %v2004 = vrot.slane %v1968, 6
    %v2005 = vsel %vm1973, %v2003, %v2004
    %v2006 = vrot.slane %v1964, 6
    %v2007 = vrot.slane %v2006, 4
    %v2008 = vrot.slane %v1969, 6
    %v2009 = vsel %vm1973, %v2007, %v2008
    %v2010 = vrot.slane %v1965, 6
    %v2011 = vrot.slane %v2010, 4
    %v2012 = vrot.slane %v1970, 6
    %v2013 = vsel %vm1973, %v2011, %v2012
    %v2014 = vld [vmem:[#allocation13] sm:$0xff]
    %v2015 = vld [vmem:[#allocation13 + $0x8] sm:$0xff]
    %v2016 = vld [vmem:[#allocation13 + $0x10] sm:$0xff]
    %v2017 = vld [vmem:[#allocation13 + $0x18] sm:$0xff]
    %v2018 = vld [vmem:[#allocation13 + $0x20] sm:$0xff]
    %v2019 = vld [vmem:[#allocation13 + $0x28] sm:$0xff]
    %v2020 = vld [vmem:[#allocation13 + $0x30] sm:$0xff]
    %v2021 = vld [vmem:[#allocation13 + $0x38] sm:$0xff]
    %v2022 = vld [vmem:[#allocation13 + $0x40] sm:$0xff]
    %v2023 = vld [vmem:[#allocation13 + $0x48] sm:$0xff]
    %v2024 = vld [vmem:[#allocation13 + $0x50] sm:$0xff]
    %v2025 = vld [vmem:[#allocation13 + $0x58] sm:$0xff]
    %v2026 = vld [vmem:[#allocation13 + $0x60] sm:$0xff]
    %v2027 = vld [vmem:[#allocation13 + $0x68] sm:$0xff]
    %v2028 = vld [vmem:[#allocation13 + $0x70] sm:$0xff]
    %v2029 = vld [vmem:[#allocation13 + $0x78] sm:$0xff]
    %v2030 = vld [vmem:[#allocation13 + $0x80] sm:$0xff]
    %v2031 = vld [vmem:[#allocation13 + $0x88] sm:$0xff]
    %v2032 = vld [vmem:[#allocation13 + $0x90] sm:$0xff]
    %v2033 = vld [vmem:[#allocation13 + $0x98] sm:$0xff]
    %v2034 = vld [vmem:[#allocation13 + $0xa0] sm:$0xff]
    %v2035 = vld [vmem:[#allocation13 + $0xa8] sm:$0xff]
    %v2036 = vld [vmem:[#allocation13 + $0xb0] sm:$0xff]
    %v2037 = vld [vmem:[#allocation13 + $0xb8] sm:$0xff]
    %v2038 = vld [vmem:[#allocation13 + $0xc0] sm:$0xff]
    %v2039 = vld [vmem:[#allocation13 + $0xc8] sm:$0xff]
    %v2040 = vld [vmem:[#allocation13 + $0xd0] sm:$0xff]
    %v2041 = vld [vmem:[#allocation13 + $0xd8] sm:$0xff]
    %v2042 = vld [vmem:[#allocation13 + $0xe0] sm:$0xff]
    %v2043 = vld [vmem:[#allocation13 + $0xe8] sm:$0xff]
    %v2044 = vld [vmem:[#allocation13 + $0xf0] sm:$0xff]
    %v2045 = vld [vmem:[#allocation13 + $0xf8] sm:$0xff]
    %v2046 = vld [vmem:[#allocation13 + $0x100] sm:$0xff]
    %v2047 = vld [vmem:[#allocation13 + $0x108] sm:$0xff]
    %v2048 = vld [vmem:[#allocation13 + $0x110] sm:$0xff]
    %v2049 = vld [vmem:[#allocation13 + $0x118] sm:$0xff]
    %v2050 = vld [vmem:[#allocation13 + $0x120] sm:$0xff]
    %v2051 = vld [vmem:[#allocation13 + $0x128] sm:$0xff]
    %v2052 = vld [vmem:[#allocation13 + $0x130] sm:$0xff]
    %v2053 = vld [vmem:[#allocation13 + $0x138] sm:$0xff]
    %v2054 = vld [vmem:[#allocation13 + $0x140] sm:$0xff]
    %v2055 = vld [vmem:[#allocation13 + $0x148] sm:$0xff]
    %v2056 = vld [vmem:[#allocation13 + $0x150] sm:$0xff]
    %v2057 = vld [vmem:[#allocation13 + $0x158] sm:$0xff]
    %v2058 = vld [vmem:[#allocation13 + $0x160] sm:$0xff]
    %v2059 = vld [vmem:[#allocation13 + $0x168] sm:$0xff]
    %v2060 = vld [vmem:[#allocation13 + $0x170] sm:$0xff]
    %v2061 = vld [vmem:[#allocation13 + $0x178] sm:$0xff]
    %v2062 = vld [vmem:[#allocation13 + $0x180] sm:$0xff]
    %v2063 = vld [vmem:[#allocation13 + $0x188] sm:$0xff]
    %v2064 = vld [vmem:[#allocation13 + $0x190] sm:$0xff]
    %v2065 = vld [vmem:[#allocation13 + $0x198] sm:$0xff]
    %v2066 = vld [vmem:[#allocation13 + $0x1a0] sm:$0xff]
    %v2067 = vld [vmem:[#allocation13 + $0x1a8] sm:$0xff]
    %v2068 = vld [vmem:[#allocation13 + $0x1b0] sm:$0xff]
    %v2069 = vld [vmem:[#allocation13 + $0x1b8] sm:$0xff]
    %v2070 = vld [vmem:[#allocation13 + $0x1c0] sm:$0xff]
    %v2071 = vld [vmem:[#allocation13 + $0x1c8] sm:$0xff]
    %v2072 = vld [vmem:[#allocation13 + $0x1d0] sm:$0xff]
    %v2073 = vld [vmem:[#allocation13 + $0x1d8] sm:$0xff]
    %v2074 = vld [vmem:[#allocation13 + $0x1e0] sm:$0xff]
    %v2075 = vld [vmem:[#allocation13 + $0x1e8] sm:$0xff]
    %v2076 = vld [vmem:[#allocation13 + $0x1f0] sm:$0xff]
    %v2077 = vld [vmem:[#allocation13 + $0x1f8] sm:$0xff]
    %v2078 = vld [vmem:[#allocation13 + $0x200] sm:$0xff]
    %v2079 = vld [vmem:[#allocation13 + $0x208] sm:$0xff]
    %v2080 = vld [vmem:[#allocation13 + $0x210] sm:$0xff]
    %v2081 = vld [vmem:[#allocation13 + $0x218] sm:$0xff]
    %v2082 = vld [vmem:[#allocation13 + $0x220] sm:$0xff]
    %v2083 = vld [vmem:[#allocation13 + $0x228] sm:$0xff]
    %v2084 = vld [vmem:[#allocation13 + $0x230] sm:$0xff]
    %v2085 = vld [vmem:[#allocation13 + $0x238] sm:$0xff]
    %v2086 = vld [vmem:[#allocation13 + $0x240] sm:$0xff]
    %v2087 = vld [vmem:[#allocation13 + $0x248] sm:$0xff]
    %v2088 = vld [vmem:[#allocation13 + $0x250] sm:$0xff]
    %v2089 = vld [vmem:[#allocation13 + $0x258] sm:$0xff]
    %v2090 = vld [vmem:[#allocation13 + $0x260] sm:$0xff]
    %v2091 = vld [vmem:[#allocation13 + $0x268] sm:$0xff]
    %v2092 = vld [vmem:[#allocation13 + $0x270] sm:$0xff]
    %v2093 = vld [vmem:[#allocation13 + $0x278] sm:$0xff]
    %v2094 = vld [vmem:[#allocation13 + $0x280] sm:$0xff]
    %v2095 = vld [vmem:[#allocation13 + $0x288] sm:$0xff]
    %v2096 = vld [vmem:[#allocation13 + $0x290] sm:$0xff]
    %v2097 = vld [vmem:[#allocation13 + $0x298] sm:$0xff]
    %v2098 = vld [vmem:[#allocation13 + $0x2a0] sm:$0xff]
    %v2099 = vld [vmem:[#allocation13 + $0x2a8] sm:$0xff]
    %v2100 = vld [vmem:[#allocation13 + $0x2b0] sm:$0xff]
    %v2101 = vld [vmem:[#allocation13 + $0x2b8] sm:$0xff]
    %v2102 = vld [vmem:[#allocation13 + $0x2c0] sm:$0xff]
    %v2103 = vld [vmem:[#allocation13 + $0x2c8] sm:$0xff]
    %v2104 = vld [vmem:[#allocation13 + $0x2d0] sm:$0xff]
    %v2105 = vld [vmem:[#allocation13 + $0x2d8] sm:$0xff]
    %v2106 = vld [vmem:[#allocation13 + $0x2e0] sm:$0xff]
    %v2107 = vld [vmem:[#allocation13 + $0x2e8] sm:$0xff]
    %v2108 = vld [vmem:[#allocation13 + $0x2f0] sm:$0xff]
    %v2109 = vld [vmem:[#allocation13 + $0x2f8] sm:$0xff]
    %v2110 = vld [vmem:[#allocation13 + $0x300] sm:$0xff]
    %v2111 = vld [vmem:[#allocation13 + $0x308] sm:$0xff]
    %v2112 = vld [vmem:[#allocation13 + $0x310] sm:$0xff]
    %v2113 = vld [vmem:[#allocation13 + $0x318] sm:$0xff]
    %v2114 = vld [vmem:[#allocation13 + $0x320] sm:$0xff]
    %v2115 = vld [vmem:[#allocation13 + $0x328] sm:$0xff]
    %v2116 = vld [vmem:[#allocation13 + $0x330] sm:$0xff]
    %v2117 = vld [vmem:[#allocation13 + $0x338] sm:$0xff]
    %v2118 = vld [vmem:[#allocation13 + $0x340] sm:$0xff]
    %v2119 = vld [vmem:[#allocation13 + $0x348] sm:$0xff]
    %v2120 = vld [vmem:[#allocation13 + $0x350] sm:$0xff]
    %v2121 = vld [vmem:[#allocation13 + $0x358] sm:$0xff]
    %v2122 = vld [vmem:[#allocation13 + $0x360] sm:$0xff]
    %v2123 = vld [vmem:[#allocation13 + $0x368] sm:$0xff]
    %v2124 = vld [vmem:[#allocation13 + $0x370] sm:$0xff]
    %v2125 = vld [vmem:[#allocation13 + $0x378] sm:$0xff]
    %v2126 = vld [vmem:[#allocation13 + $0x380] sm:$0xff]
    %v2127 = vld [vmem:[#allocation13 + $0x388] sm:$0xff]
    %v2128 = vld [vmem:[#allocation13 + $0x390] sm:$0xff]
    %v2129 = vld [vmem:[#allocation13 + $0x398] sm:$0xff]
    %v2130 = vld [vmem:[#allocation13 + $0x3a0] sm:$0xff]
    %v2131 = vld [vmem:[#allocation13 + $0x3a8] sm:$0xff]
    %v2132 = vld [vmem:[#allocation13 + $0x3b0] sm:$0xff]
    %v2133 = vld [vmem:[#allocation13 + $0x3b8] sm:$0xff]
    %v2134 = vld [vmem:[#allocation13 + $0x3c0] sm:$0xff]
    %v2135 = vld [vmem:[#allocation13 + $0x3c8] sm:$0xff]
    %v2136 = vld [vmem:[#allocation13 + $0x3d0] sm:$0xff]
    %v2137 = vld [vmem:[#allocation13 + $0x3d8] sm:$0xff]
    %v2138 = vld [vmem:[#allocation13 + $0x3e0] sm:$0xff]
    %v2139 = vld [vmem:[#allocation13 + $0x3e8] sm:$0xff]
    %v2140 = vld [vmem:[#allocation13 + $0x3f0] sm:$0xff]
    %v2141 = vld [vmem:[#allocation13 + $0x3f8] sm:$0xff]
    %v2142 = vld [vmem:[#allocation13 + $0x400] sm:$0xff]
    %v2143 = vld [vmem:[#allocation13 + $0x408] sm:$0xff]
    %v2144 = vld [vmem:[#allocation13 + $0x410] sm:$0xff]
    %v2145 = vld [vmem:[#allocation13 + $0x418] sm:$0xff]
    %v2146 = vld [vmem:[#allocation13 + $0x420] sm:$0xff]
    %v2147 = vld [vmem:[#allocation13 + $0x428] sm:$0xff]
    %v2148 = vld [vmem:[#allocation13 + $0x430] sm:$0xff]
    %v2149 = vld [vmem:[#allocation13 + $0x438] sm:$0xff]
    %v2150 = vld [vmem:[#allocation13 + $0x440] sm:$0xff]
    %v2151 = vld [vmem:[#allocation13 + $0x448] sm:$0xff]
    %v2152 = vld [vmem:[#allocation13 + $0x450] sm:$0xff]
    %v2153 = vld [vmem:[#allocation13 + $0x458] sm:$0xff]
    %v2154 = vld [vmem:[#allocation13 + $0x460] sm:$0xff]
    %v2155 = vld [vmem:[#allocation13 + $0x468] sm:$0xff]
    %v2156 = vld [vmem:[#allocation13 + $0x470] sm:$0xff]
    %v2157 = vld [vmem:[#allocation13 + $0x478] sm:$0xff]
    %v2158 = vld [vmem:[#allocation13 + $0x480] sm:$0xff]
    %v2159 = vld [vmem:[#allocation13 + $0x488] sm:$0xff]
    %v2160 = vld [vmem:[#allocation13 + $0x490] sm:$0xff]
    %v2161 = vld [vmem:[#allocation13 + $0x498] sm:$0xff]
    %v2162 = vld [vmem:[#allocation13 + $0x4a0] sm:$0xff]
    %v2163 = vld [vmem:[#allocation13 + $0x4a8] sm:$0xff]
    %v2164 = vld [vmem:[#allocation13 + $0x4b0] sm:$0xff]
    %v2165 = vld [vmem:[#allocation13 + $0x4b8] sm:$0xff]
    %v2166 = vld [vmem:[#allocation13 + $0x4c0] sm:$0xff]
    %v2167 = vld [vmem:[#allocation13 + $0x4c8] sm:$0xff]
    %v2168 = vld [vmem:[#allocation13 + $0x4d0] sm:$0xff]
    %v2169 = vld [vmem:[#allocation13 + $0x4d8] sm:$0xff]
    %v2170 = vld [vmem:[#allocation13 + $0x4e0] sm:$0xff]
    %v2171 = vld [vmem:[#allocation13 + $0x4e8] sm:$0xff]
    %v2172 = vld [vmem:[#allocation13 + $0x4f0] sm:$0xff]
    %v2173 = vld [vmem:[#allocation13 + $0x4f8] sm:$0xff]
    %v2174 = vld [vmem:[#allocation13 + $0x500] sm:$0xff]
    %v2175 = vld [vmem:[#allocation13 + $0x508] sm:$0xff]
    %v2176 = vld [vmem:[#allocation13 + $0x510] sm:$0xff]
    %v2177 = vld [vmem:[#allocation13 + $0x518] sm:$0xff]
    %v2178 = vld [vmem:[#allocation13 + $0x520] sm:$0xff]
    %v2179 = vld [vmem:[#allocation13 + $0x528] sm:$0xff]
    %v2180 = vld [vmem:[#allocation13 + $0x530] sm:$0xff]
    %v2181 = vld [vmem:[#allocation13 + $0x538] sm:$0xff]
    %v2182 = vld [vmem:[#allocation13 + $0x540] sm:$0xff]
    %v2183 = vld [vmem:[#allocation13 + $0x548] sm:$0xff]
    %v2184 = vld [vmem:[#allocation13 + $0x550] sm:$0xff]
    %v2185 = vld [vmem:[#allocation13 + $0x558] sm:$0xff]
    %v2186 = vld [vmem:[#allocation13 + $0x560] sm:$0xff]
    %v2187 = vld [vmem:[#allocation13 + $0x568] sm:$0xff]
    %v2188 = vld [vmem:[#allocation13 + $0x570] sm:$0xff]
    %v2189 = vld [vmem:[#allocation13 + $0x578] sm:$0xff]
    %v2190 = vld [vmem:[#allocation13 + $0x580] sm:$0xff]
    %v2191 = vld [vmem:[#allocation13 + $0x588] sm:$0xff]
    %v2192 = vld [vmem:[#allocation13 + $0x590] sm:$0xff]
    %v2193 = vld [vmem:[#allocation13 + $0x598] sm:$0xff]
    %v2194 = vld [vmem:[#allocation13 + $0x5a0] sm:$0xff]
    %v2195 = vld [vmem:[#allocation13 + $0x5a8] sm:$0xff]
    %v2196 = vld [vmem:[#allocation13 + $0x5b0] sm:$0xff]
    %v2197 = vld [vmem:[#allocation13 + $0x5b8] sm:$0xff]
    %v2198 = vld [vmem:[#allocation13 + $0x5c0] sm:$0xff]
    %v2199 = vld [vmem:[#allocation13 + $0x5c8] sm:$0xff]
    %v2200 = vld [vmem:[#allocation13 + $0x5d0] sm:$0xff]
    %v2201 = vld [vmem:[#allocation13 + $0x5d8] sm:$0xff]
    %v2202 = vld [vmem:[#allocation13 + $0x5e0] sm:$0xff]
    %v2203 = vld [vmem:[#allocation13 + $0x5e8] sm:$0xff]
    %v2204 = vld [vmem:[#allocation13 + $0x5f0] sm:$0xff]
    %v2205 = vld [vmem:[#allocation13 + $0x5f8] sm:$0xff]
    %v2206 = vld [vmem:[#allocation13 + $0x600] sm:$0xff]
    %v2207 = vld [vmem:[#allocation13 + $0x608] sm:$0xff]
    %v2208 = vld [vmem:[#allocation13 + $0x610] sm:$0xff]
    %v2209 = vld [vmem:[#allocation13 + $0x618] sm:$0xff]
    %v2210 = vld [vmem:[#allocation13 + $0x620] sm:$0xff]
    %v2211 = vld [vmem:[#allocation13 + $0x628] sm:$0xff]
    %v2212 = vld [vmem:[#allocation13 + $0x630] sm:$0xff]
    %v2213 = vld [vmem:[#allocation13 + $0x638] sm:$0xff]
    %v2214 = vld [vmem:[#allocation13 + $0x640] sm:$0xff]
    %v2215 = vld [vmem:[#allocation13 + $0x648] sm:$0xff]
    %v2216 = vld [vmem:[#allocation13 + $0x650] sm:$0xff]
    %v2217 = vld [vmem:[#allocation13 + $0x658] sm:$0xff]
    %v2218 = vld [vmem:[#allocation13 + $0x660] sm:$0xff]
    %v2219 = vld [vmem:[#allocation13 + $0x668] sm:$0xff]
    %v2220 = vld [vmem:[#allocation13 + $0x670] sm:$0xff]
    %v2221 = vld [vmem:[#allocation13 + $0x678] sm:$0xff]
    %v2222 = vld [vmem:[#allocation13 + $0x680] sm:$0xff]
    %v2223 = vld [vmem:[#allocation13 + $0x688] sm:$0xff]
    %v2224 = vld [vmem:[#allocation13 + $0x690] sm:$0xff]
    %v2225 = vld [vmem:[#allocation13 + $0x698] sm:$0xff]
    %v2226 = vld [vmem:[#allocation13 + $0x6a0] sm:$0xff]
    %v2227 = vld [vmem:[#allocation13 + $0x6a8] sm:$0xff]
    %v2228 = vld [vmem:[#allocation13 + $0x6b0] sm:$0xff]
    %v2229 = vld [vmem:[#allocation13 + $0x6b8] sm:$0xff]
    %v2230 = vld [vmem:[#allocation13 + $0x6c0] sm:$0xff]
    %v2231 = vld [vmem:[#allocation13 + $0x6c8] sm:$0xff]
    %v2232 = vld [vmem:[#allocation13 + $0x6d0] sm:$0xff]
    %v2233 = vld [vmem:[#allocation13 + $0x6d8] sm:$0xff]
    %v2234 = vld [vmem:[#allocation13 + $0x6e0] sm:$0xff]
    %v2235 = vld [vmem:[#allocation13 + $0x6e8] sm:$0xff]
    %v2236 = vld [vmem:[#allocation13 + $0x6f0] sm:$0xff]
    %v2237 = vld [vmem:[#allocation13 + $0x6f8] sm:$0xff]
    %v2238 = vld [vmem:[#allocation13 + $0x700] sm:$0xff]
    %v2239 = vld [vmem:[#allocation13 + $0x708] sm:$0xff]
    %v2240 = vld [vmem:[#allocation13 + $0x710] sm:$0xff]
    %v2241 = vld [vmem:[#allocation13 + $0x718] sm:$0xff]
    %v2242 = vld [vmem:[#allocation13 + $0x720] sm:$0xff]
    %v2243 = vld [vmem:[#allocation13 + $0x728] sm:$0xff]
    %v2244 = vld [vmem:[#allocation13 + $0x730] sm:$0xff]
    %v2245 = vld [vmem:[#allocation13 + $0x738] sm:$0xff]
    %v2246 = vld [vmem:[#allocation13 + $0x740] sm:$0xff]
    %v2247 = vld [vmem:[#allocation13 + $0x748] sm:$0xff]
    %v2248 = vld [vmem:[#allocation13 + $0x750] sm:$0xff]
    %v2249 = vld [vmem:[#allocation13 + $0x758] sm:$0xff]
    %v2250 = vld [vmem:[#allocation13 + $0x760] sm:$0xff]
    %v2251 = vld [vmem:[#allocation13 + $0x768] sm:$0xff]
    %v2252 = vld [vmem:[#allocation13 + $0x770] sm:$0xff]
    %v2253 = vld [vmem:[#allocation13 + $0x778] sm:$0xff]
    %v2254 = vld [vmem:[#allocation13 + $0x780] sm:$0xff]
    %v2255 = vld [vmem:[#allocation13 + $0x788] sm:$0xff]
    %v2256 = vld [vmem:[#allocation13 + $0x790] sm:$0xff]
    %v2257 = vld [vmem:[#allocation13 + $0x798] sm:$0xff]
    %v2258 = vld [vmem:[#allocation13 + $0x7a0] sm:$0xff]
    %v2259 = vld [vmem:[#allocation13 + $0x7a8] sm:$0xff]
    %v2260 = vld [vmem:[#allocation13 + $0x7b0] sm:$0xff]
    %v2261 = vld [vmem:[#allocation13 + $0x7b8] sm:$0xff]
    %v2262 = vld [vmem:[#allocation13 + $0x7c0] sm:$0xff]
    %v2263 = vld [vmem:[#allocation13 + $0x7c8] sm:$0xff]
    %v2264 = vld [vmem:[#allocation13 + $0x7d0] sm:$0xff]
    %v2265 = vld [vmem:[#allocation13 + $0x7d8] sm:$0xff]
    %v2266 = vld [vmem:[#allocation13 + $0x7e0] sm:$0xff]
    %v2267 = vld [vmem:[#allocation13 + $0x7e8] sm:$0xff]
    %v2268 = vld [vmem:[#allocation13 + $0x7f0] sm:$0xff]
    %v2269 = vld [vmem:[#allocation13 + $0x7f8] sm:$0xff]
    %v2270 = vld [vmem:[#allocation13 + $0x800] sm:$0xff]
    %v2271 = vld [vmem:[#allocation13 + $0x808] sm:$0xff]
    %v2272 = vld [vmem:[#allocation13 + $0x810] sm:$0xff]
    %v2273 = vld [vmem:[#allocation13 + $0x818] sm:$0xff]
    %v2274 = vld [vmem:[#allocation13 + $0x820] sm:$0xff]
    %v2275 = vld [vmem:[#allocation13 + $0x828] sm:$0xff]
    %v2276 = vld [vmem:[#allocation13 + $0x830] sm:$0xff]
    %v2277 = vld [vmem:[#allocation13 + $0x838] sm:$0xff]
    %v2278 = vld [vmem:[#allocation13 + $0x840] sm:$0xff]
    %v2279 = vld [vmem:[#allocation13 + $0x848] sm:$0xff]
    %v2280 = vld [vmem:[#allocation13 + $0x850] sm:$0xff]
    %v2281 = vld [vmem:[#allocation13 + $0x858] sm:$0xff]
    %v2282 = vld [vmem:[#allocation13 + $0x860] sm:$0xff]
    %v2283 = vld [vmem:[#allocation13 + $0x868] sm:$0xff]
    %v2284 = vld [vmem:[#allocation13 + $0x870] sm:$0xff]
    %v2285 = vld [vmem:[#allocation13 + $0x878] sm:$0xff]
    %v2286 = vld [vmem:[#allocation13 + $0x880] sm:$0xff]
    %v2287 = vld [vmem:[#allocation13 + $0x888] sm:$0xff]
    %v2288 = vld [vmem:[#allocation13 + $0x890] sm:$0xff]
    %v2289 = vld [vmem:[#allocation13 + $0x898] sm:$0xff]
    %v2290 = vld [vmem:[#allocation13 + $0x8a0] sm:$0xff]
    %v2291 = vld [vmem:[#allocation13 + $0x8a8] sm:$0xff]
    %v2292 = vld [vmem:[#allocation13 + $0x8b0] sm:$0xff]
    %v2293 = vld [vmem:[#allocation13 + $0x8b8] sm:$0xff]
    %v2294 = vld [vmem:[#allocation13 + $0x8c0] sm:$0xff]
    %v2295 = vld [vmem:[#allocation13 + $0x8c8] sm:$0xff]
    %v2296 = vld [vmem:[#allocation13 + $0x8d0] sm:$0xff]
    %v2297 = vld [vmem:[#allocation13 + $0x8d8] sm:$0xff]
    %v2298 = vld [vmem:[#allocation13 + $0x8e0] sm:$0xff]
    %v2299 = vld [vmem:[#allocation13 + $0x8e8] sm:$0xff]
    %v2300 = vld [vmem:[#allocation13 + $0x8f0] sm:$0xff]
    %v2301 = vld [vmem:[#allocation13 + $0x8f8] sm:$0xff]
    %v2302 = vld [vmem:[#allocation2] sm:$0x7c]
    %v2303 = vld [vmem:[#allocation2 + $0x8] sm:$0x7c]
    %v2304 = vld [vmem:[#allocation2 + $0x10] sm:$0x7c]
    %v2305 = vld [vmem:[#allocation2 + $0x18] sm:$0x7c]
    %v2306 = vld [vmem:[#allocation2 + $0x20] sm:$0x7c]
    %v2307 = vld [vmem:[#allocation2 + $0x28] sm:$0x7c]
    %v2308 = vld [vmem:[#allocation2 + $0x30] sm:$0x7c]
    %v2309 = vld [vmem:[#allocation2 + $0x38] sm:$0x7c]
    %v2310 = vld [vmem:[#allocation2 + $0x40] sm:$0x7c]
    %v2311 = vld [vmem:[#allocation2 + $0x48] sm:$0x7c]
    %v2312 = vld [vmem:[#allocation2 + $0x50] sm:$0x7c]
    %v2313 = vld [vmem:[#allocation2 + $0x58] sm:$0x7c]
    %v2314 = vld [vmem:[#allocation2 + $0x60] sm:$0x7c]
    %v2315 = vld [vmem:[#allocation2 + $0x68] sm:$0x7c]
    %v2316 = vld [vmem:[#allocation2 + $0x70] sm:$0x7c]
    %v2317 = vld [vmem:[#allocation2 + $0x78] sm:$0x7c]
    %v2318 = vld [vmem:[#allocation2 + $0x80] sm:$0x7c]
    %v2319 = vld [vmem:[#allocation2 + $0x88] sm:$0x7c]
    %v2338 = vunpack.c.l.b16 %v2302
    %v2339 = vunpack.c.l.b16 %v2303
    %v2340 = vunpack.c.l.b16 %v2304
    %v2341 = vunpack.c.l.b16 %v2305
    %v2342 = vunpack.c.l.b16 %v2306
    %v2343 = vunpack.c.l.b16 %v2307
    %v2344 = vunpack.c.l.b16 %v2308
    %v2345 = vunpack.c.l.b16 %v2309
    %v2346 = vunpack.c.l.b16 %v2310
    %v2347 = vunpack.c.h.b16 %v2302
    %v2348 = vunpack.c.h.b16 %v2303
    %v2349 = vunpack.c.h.b16 %v2304
    %v2350 = vunpack.c.h.b16 %v2305
    %v2351 = vunpack.c.h.b16 %v2306
    %v2352 = vunpack.c.h.b16 %v2307
    %v2353 = vunpack.c.h.b16 %v2308
    %v2354 = vunpack.c.h.b16 %v2309
    %v2355 = vunpack.c.h.b16 %v2310
    %v2356 = vunpack.c.l.b16 %v2311
    %v2357 = vunpack.c.l.b16 %v2312
    %v2358 = vunpack.c.l.b16 %v2313
    %v2359 = vunpack.c.l.b16 %v2314
    %v2360 = vunpack.c.l.b16 %v2315
    %v2361 = vunpack.c.l.b16 %v2316
    %v2362 = vunpack.c.l.b16 %v2317
    %v2363 = vunpack.c.l.b16 %v2318
    %v2364 = vunpack.c.l.b16 %v2319
    %v2365 = vunpack.c.h.b16 %v2311
    %v2366 = vunpack.c.h.b16 %v2312
    %v2367 = vunpack.c.h.b16 %v2313
    %v2368 = vunpack.c.h.b16 %v2314
    %v2369 = vunpack.c.h.b16 %v2315
    %v2370 = vunpack.c.h.b16 %v2316
    %v2371 = vunpack.c.h.b16 %v2317
    %v2372 = vunpack.c.h.b16 %v2318
    %v2373 = vunpack.c.h.b16 %v2319
    %v2374 = vpack.c.b16 %v2339, %v2338
    %v2375 = vpack.c.b16 %v2341, %v2340
    %v2376 = vpack.c.b16 %v2343, %v2342
    %v2377 = vpack.c.b16 %v2345, %v2344
    %v2378 = vpack.c.b16 %v2346, %v2346
    %v2379 = vpack.c.b16 %v2348, %v2347
    %v2380 = vpack.c.b16 %v2350, %v2349
    %v2381 = vpack.c.b16 %v2352, %v2351
    %v2382 = vpack.c.b16 %v2354, %v2353
    %v2383 = vpack.c.b16 %v2355, %v2355
    %v2384 = vpack.c.b16 %v2357, %v2356
    %v2385 = vpack.c.b16 %v2359, %v2358
    %v2386 = vpack.c.b16 %v2361, %v2360
    %v2387 = vpack.c.b16 %v2363, %v2362
    %v2388 = vpack.c.b16 %v2364, %v2364
    %v2389 = vpack.c.b16 %v2366, %v2365
    %v2390 = vpack.c.b16 %v2368, %v2367
    %v2391 = vpack.c.b16 %v2370, %v2369
    %v2392 = vpack.c.b16 %v2372, %v2371
    %v2393 = vpack.c.b16 %v2373, %v2373
    %vm2394 = vsmask.f32 1280
    %vm2395 = vsmask.f32 5392
    %vm2396 = vmor %vm2394, %vm2395
    %v2398 = vshrl.u32 %v2374, 16
    %v2400 = vrot.slane %v2398, 6
    %v2401 = vshll.u32 %v2374, 16
    %v2403 = vrot.slane %v2401, 7
    %v2404 = vor.u32 %v2400, %v2403
    %v2405 = vrot.slane %v2404, 4
    %v2407 = vshrl.u32 %v2379, 16
    %v2409 = vrot.slane %v2407, 6
    %v2410 = vshll.u32 %v2379, 16
    %v2412 = vrot.slane %v2410, 7
    %v2413 = vor.u32 %v2409, %v2412
    %v2414 = vsel %vm2396, %v2405, %v2413
    %v2416 = vshrl.u32 %v2375, 16
    %v2418 = vrot.slane %v2416, 6
    %v2419 = vshll.u32 %v2375, 16
    %v2421 = vrot.slane %v2419, 7
    %v2422 = vor.u32 %v2418, %v2421
    %v2423 = vrot.slane %v2422, 4
    %v2425 = vshrl.u32 %v2380, 16
    %v2427 = vrot.slane %v2425, 6
    %v2428 = vshll.u32 %v2380, 16
    %v2430 = vrot.slane %v2428, 7
    %v2431 = vor.u32 %v2427, %v2430
    %v2432 = vsel %vm2396, %v2423, %v2431
    %v2434 = vshrl.u32 %v2376, 16
    %v2436 = vrot.slane %v2434, 6
    %v2437 = vshll.u32 %v2376, 16
    %v2439 = vrot.slane %v2437, 7
    %v2440 = vor.u32 %v2436, %v2439
    %v2441 = vrot.slane %v2440, 4
    %v2443 = vshrl.u32 %v2381, 16
    %v2445 = vrot.slane %v2443, 6
    %v2446 = vshll.u32 %v2381, 16
    %v2448 = vrot.slane %v2446, 7
    %v2449 = vor.u32 %v2445, %v2448
    %v2450 = vsel %vm2396, %v2441, %v2449
    %v2452 = vshrl.u32 %v2377, 16
    %v2454 = vrot.slane %v2452, 6
    %v2455 = vshll.u32 %v2377, 16
    %v2457 = vrot.slane %v2455, 7
    %v2458 = vor.u32 %v2454, %v2457
    %v2459 = vrot.slane %v2458, 4
    %v2461 = vshrl.u32 %v2382, 16
    %v2463 = vrot.slane %v2461, 6
    %v2464 = vshll.u32 %v2382, 16
    %v2466 = vrot.slane %v2464, 7
    %v2467 = vor.u32 %v2463, %v2466
    %v2468 = vsel %vm2396, %v2459, %v2467
    %v2470 = vshrl.u32 %v2378, 16
    %v2472 = vrot.slane %v2470, 6
    %v2473 = vshll.u32 %v2378, 16
    %v2475 = vrot.slane %v2473, 7
    %v2476 = vor.u32 %v2472, %v2475
    %v2477 = vrot.slane %v2476, 4
    %v2479 = vshrl.u32 %v2383, 16
    %v2481 = vrot.slane %v2479, 6
    %v2482 = vshll.u32 %v2383, 16
    %v2484 = vrot.slane %v2482, 7
    %v2485 = vor.u32 %v2481, %v2484
    %v2486 = vsel %vm2396, %v2477, %v2485
    %v2488 = vshrl.u32 %v2384, 16
    %v2490 = vrot.slane %v2488, 6
    %v2491 = vshll.u32 %v2384, 16
    %v2493 = vrot.slane %v2491, 7
    %v2494 = vor.u32 %v2490, %v2493
    %v2495 = vrot.slane %v2494, 4
    %v2497 = vshrl.u32 %v2389, 16
    %v2499 = vrot.slane %v2497, 6
    %v2500 = vshll.u32 %v2389, 16
    %v2502 = vrot.slane %v2500, 7
    %v2503 = vor.u32 %v2499, %v2502
    %v2504 = vsel %vm2396, %v2495, %v2503
    %v2506 = vshrl.u32 %v2385, 16
    %v2508 = vrot.slane %v2506, 6
    %v2509 = vshll.u32 %v2385, 16
    %v2511 = vrot.slane %v2509, 7
    %v2512 = vor.u32 %v2508, %v2511
    %v2513 = vrot.slane %v2512, 4
    %v2515 = vshrl.u32 %v2390, 16
    %v2517 = vrot.slane %v2515, 6
    %v2518 = vshll.u32 %v2390, 16
    %v2520 = vrot.slane %v2518, 7
    %v2521 = vor.u32 %v2517, %v2520
    %v2522 = vsel %vm2396, %v2513, %v2521
    %v2524 = vshrl.u32 %v2386, 16
    %v2526 = vrot.slane %v2524, 6
    %v2527 = vshll.u32 %v2386, 16
    %v2529 = vrot.slane %v2527, 7
    %v2530 = vor.u32 %v2526, %v2529
    %v2531 = vrot.slane %v2530, 4
    %v2533 = vshrl.u32 %v2391, 16
    %v2535 = vrot.slane %v2533, 6
    %v2536 = vshll.u32 %v2391, 16
    %v2538 = vrot.slane %v2536, 7
    %v2539 = vor.u32 %v2535, %v2538
    %v2540 = vsel %vm2396, %v2531, %v2539
    %v2542 = vshrl.u32 %v2387, 16
    %v2544 = vrot.slane %v2542, 6
    %v2545 = vshll.u32 %v2387, 16
    %v2547 = vrot.slane %v2545, 7
    %v2548 = vor.u32 %v2544, %v2547
    %v2549 = vrot.slane %v2548, 4
    %v2551 = vshrl.u32 %v2392, 16
    %v2553 = vrot.slane %v2551, 6
    %v2554 = vshll.u32 %v2392, 16
    %v2556 = vrot.slane %v2554, 7
    %v2557 = vor.u32 %v2553, %v2556
    %v2558 = vsel %vm2396, %v2549, %v2557
    %v2560 = vshrl.u32 %v2388, 16
    %v2562 = vrot.slane %v2560, 6
    %v2563 = vshll.u32 %v2388, 16
    %v2565 = vrot.slane %v2563, 7
    %v2566 = vor.u32 %v2562, %v2565
    %v2567 = vrot.slane %v2566, 4
    %v2569 = vshrl.u32 %v2393, 16
    %v2571 = vrot.slane %v2569, 6
    %v2572 = vshll.u32 %v2393, 16
    %v2574 = vrot.slane %v2572, 7
    %v2575 = vor.u32 %v2571, %v2574
    %v2576 = vsel %vm2396, %v2567, %v2575
    %s2577 = scalar_lea.vmem [#allocation13], 2304
    %v2578 = vld [vmem:[%s2577] sm:$0xff]
    %v2579 = vld [vmem:[%s2577 + $0x8] sm:$0xff]
    %v2580 = vld [vmem:[%s2577 + $0x10] sm:$0xff]
    %v2581 = vld [vmem:[%s2577 + $0x18] sm:$0xff]
    %v2582 = vld [vmem:[%s2577 + $0x20] sm:$0xff]
    %v2583 = vld [vmem:[%s2577 + $0x28] sm:$0xff]
    %v2584 = vld [vmem:[%s2577 + $0x30] sm:$0xff]
    %v2585 = vld [vmem:[%s2577 + $0x38] sm:$0xff]
    %v2586 = vld [vmem:[%s2577 + $0x40] sm:$0xff]
    %v2587 = vld [vmem:[%s2577 + $0x48] sm:$0xff]
    %v2588 = vld [vmem:[%s2577 + $0x50] sm:$0xff]
    %v2589 = vld [vmem:[%s2577 + $0x58] sm:$0xff]
    %v2590 = vld [vmem:[%s2577 + $0x60] sm:$0xff]
    %v2591 = vld [vmem:[%s2577 + $0x68] sm:$0xff]
    %v2592 = vld [vmem:[%s2577 + $0x70] sm:$0xff]
    %v2593 = vld [vmem:[%s2577 + $0x78] sm:$0xff]
    %v2594 = vld [vmem:[%s2577 + $0x80] sm:$0xff]
    %v2595 = vld [vmem:[%s2577 + $0x88] sm:$0xff]
    %v2596 = vld [vmem:[%s2577 + $0x90] sm:$0xff]
    %v2597 = vld [vmem:[%s2577 + $0x98] sm:$0xff]
    %v2598 = vld [vmem:[%s2577 + $0xa0] sm:$0xff]
    %v2599 = vld [vmem:[%s2577 + $0xa8] sm:$0xff]
    %v2600 = vld [vmem:[%s2577 + $0xb0] sm:$0xff]
    %v2601 = vld [vmem:[%s2577 + $0xb8] sm:$0xff]
    %v2602 = vld [vmem:[%s2577 + $0xc0] sm:$0xff]
    %v2603 = vld [vmem:[%s2577 + $0xc8] sm:$0xff]
    %v2604 = vld [vmem:[%s2577 + $0xd0] sm:$0xff]
    %v2605 = vld [vmem:[%s2577 + $0xd8] sm:$0xff]
    %v2606 = vld [vmem:[%s2577 + $0xe0] sm:$0xff]
    %v2607 = vld [vmem:[%s2577 + $0xe8] sm:$0xff]
    %v2608 = vld [vmem:[%s2577 + $0xf0] sm:$0xff]
    %v2609 = vld [vmem:[%s2577 + $0xf8] sm:$0xff]
    %v2610 = vld [vmem:[%s2577 + $0x100] sm:$0xff]
    %v2611 = vld [vmem:[%s2577 + $0x108] sm:$0xff]
    %v2612 = vld [vmem:[%s2577 + $0x110] sm:$0xff]
    %v2613 = vld [vmem:[%s2577 + $0x118] sm:$0xff]
    %v2614 = vld [vmem:[%s2577 + $0x120] sm:$0xff]
    %v2615 = vld [vmem:[%s2577 + $0x128] sm:$0xff]
    %v2616 = vld [vmem:[%s2577 + $0x130] sm:$0xff]
    %v2617 = vld [vmem:[%s2577 + $0x138] sm:$0xff]
    %v2618 = vld [vmem:[%s2577 + $0x140] sm:$0xff]
    %v2619 = vld [vmem:[%s2577 + $0x148] sm:$0xff]
    %v2620 = vld [vmem:[%s2577 + $0x150] sm:$0xff]
    %v2621 = vld [vmem:[%s2577 + $0x158] sm:$0xff]
    %v2622 = vld [vmem:[%s2577 + $0x160] sm:$0xff]
    %v2623 = vld [vmem:[%s2577 + $0x168] sm:$0xff]
    %v2624 = vld [vmem:[%s2577 + $0x170] sm:$0xff]
    %v2625 = vld [vmem:[%s2577 + $0x178] sm:$0xff]
    %v2626 = vld [vmem:[%s2577 + $0x180] sm:$0xff]
    %v2627 = vld [vmem:[%s2577 + $0x188] sm:$0xff]
    %v2628 = vld [vmem:[%s2577 + $0x190] sm:$0xff]
    %v2629 = vld [vmem:[%s2577 + $0x198] sm:$0xff]
    %v2630 = vld [vmem:[%s2577 + $0x1a0] sm:$0xff]
    %v2631 = vld [vmem:[%s2577 + $0x1a8] sm:$0xff]
    %v2632 = vld [vmem:[%s2577 + $0x1b0] sm:$0xff]
    %v2633 = vld [vmem:[%s2577 + $0x1b8] sm:$0xff]
    %v2634 = vld [vmem:[%s2577 + $0x1c0] sm:$0xff]
    %v2635 = vld [vmem:[%s2577 + $0x1c8] sm:$0xff]
    %v2636 = vld [vmem:[%s2577 + $0x1d0] sm:$0xff]
    %v2637 = vld [vmem:[%s2577 + $0x1d8] sm:$0xff]
    %v2638 = vld [vmem:[%s2577 + $0x1e0] sm:$0xff]
    %v2639 = vld [vmem:[%s2577 + $0x1e8] sm:$0xff]
    %v2640 = vld [vmem:[%s2577 + $0x1f0] sm:$0xff]
    %v2641 = vld [vmem:[%s2577 + $0x1f8] sm:$0xff]
    %v2642 = vld [vmem:[%s2577 + $0x200] sm:$0xff]
    %v2643 = vld [vmem:[%s2577 + $0x208] sm:$0xff]
    %v2644 = vld [vmem:[%s2577 + $0x210] sm:$0xff]
    %v2645 = vld [vmem:[%s2577 + $0x218] sm:$0xff]
    %v2646 = vld [vmem:[%s2577 + $0x220] sm:$0xff]
    %v2647 = vld [vmem:[%s2577 + $0x228] sm:$0xff]
    %v2648 = vld [vmem:[%s2577 + $0x230] sm:$0xff]
    %v2649 = vld [vmem:[%s2577 + $0x238] sm:$0xff]
    %v2650 = vld [vmem:[%s2577 + $0x240] sm:$0xff]
    %v2651 = vld [vmem:[%s2577 + $0x248] sm:$0xff]
    %v2652 = vld [vmem:[%s2577 + $0x250] sm:$0xff]
    %v2653 = vld [vmem:[%s2577 + $0x258] sm:$0xff]
    %v2654 = vld [vmem:[%s2577 + $0x260] sm:$0xff]
    %v2655 = vld [vmem:[%s2577 + $0x268] sm:$0xff]
    %v2656 = vld [vmem:[%s2577 + $0x270] sm:$0xff]
    %v2657 = vld [vmem:[%s2577 + $0x278] sm:$0xff]
    %v2658 = vld [vmem:[%s2577 + $0x280] sm:$0xff]
    %v2659 = vld [vmem:[%s2577 + $0x288] sm:$0xff]
    %v2660 = vld [vmem:[%s2577 + $0x290] sm:$0xff]
    %v2661 = vld [vmem:[%s2577 + $0x298] sm:$0xff]
    %v2662 = vld [vmem:[%s2577 + $0x2a0] sm:$0xff]
    %v2663 = vld [vmem:[%s2577 + $0x2a8] sm:$0xff]
    %v2664 = vld [vmem:[%s2577 + $0x2b0] sm:$0xff]
    %v2665 = vld [vmem:[%s2577 + $0x2b8] sm:$0xff]
    %v2666 = vld [vmem:[%s2577 + $0x2c0] sm:$0xff]
    %v2667 = vld [vmem:[%s2577 + $0x2c8] sm:$0xff]
    %v2668 = vld [vmem:[%s2577 + $0x2d0] sm:$0xff]
    %v2669 = vld [vmem:[%s2577 + $0x2d8] sm:$0xff]
    %v2670 = vld [vmem:[%s2577 + $0x2e0] sm:$0xff]
    %v2671 = vld [vmem:[%s2577 + $0x2e8] sm:$0xff]
    %v2672 = vld [vmem:[%s2577 + $0x2f0] sm:$0xff]
    %v2673 = vld [vmem:[%s2577 + $0x2f8] sm:$0xff]
    %v2674 = vld [vmem:[%s2577 + $0x300] sm:$0xff]
    %v2675 = vld [vmem:[%s2577 + $0x308] sm:$0xff]
    %v2676 = vld [vmem:[%s2577 + $0x310] sm:$0xff]
    %v2677 = vld [vmem:[%s2577 + $0x318] sm:$0xff]
    %v2678 = vld [vmem:[%s2577 + $0x320] sm:$0xff]
    %v2679 = vld [vmem:[%s2577 + $0x328] sm:$0xff]
    %v2680 = vld [vmem:[%s2577 + $0x330] sm:$0xff]
    %v2681 = vld [vmem:[%s2577 + $0x338] sm:$0xff]
    %v2682 = vld [vmem:[%s2577 + $0x340] sm:$0xff]
    %v2683 = vld [vmem:[%s2577 + $0x348] sm:$0xff]
    %v2684 = vld [vmem:[%s2577 + $0x350] sm:$0xff]
    %v2685 = vld [vmem:[%s2577 + $0x358] sm:$0xff]
    %v2686 = vld [vmem:[%s2577 + $0x360] sm:$0xff]
    %v2687 = vld [vmem:[%s2577 + $0x368] sm:$0xff]
    %v2688 = vld [vmem:[%s2577 + $0x370] sm:$0xff]
    %v2689 = vld [vmem:[%s2577 + $0x378] sm:$0xff]
    %v2690 = vld [vmem:[%s2577 + $0x380] sm:$0xff]
    %v2691 = vld [vmem:[%s2577 + $0x388] sm:$0xff]
    %v2692 = vld [vmem:[%s2577 + $0x390] sm:$0xff]
    %v2693 = vld [vmem:[%s2577 + $0x398] sm:$0xff]
    %v2694 = vld [vmem:[%s2577 + $0x3a0] sm:$0xff]
    %v2695 = vld [vmem:[%s2577 + $0x3a8] sm:$0xff]
    %v2696 = vld [vmem:[%s2577 + $0x3b0] sm:$0xff]
    %v2697 = vld [vmem:[%s2577 + $0x3b8] sm:$0xff]
    %v2698 = vld [vmem:[%s2577 + $0x3c0] sm:$0xff]
    %v2699 = vld [vmem:[%s2577 + $0x3c8] sm:$0xff]
    %v2700 = vld [vmem:[%s2577 + $0x3d0] sm:$0xff]
    %v2701 = vld [vmem:[%s2577 + $0x3d8] sm:$0xff]
    %v2702 = vld [vmem:[%s2577 + $0x3e0] sm:$0xff]
    %v2703 = vld [vmem:[%s2577 + $0x3e8] sm:$0xff]
    %v2704 = vld [vmem:[%s2577 + $0x3f0] sm:$0xff]
    %v2705 = vld [vmem:[%s2577 + $0x3f8] sm:$0xff]
    %v2706 = vld [vmem:[%s2577 + $0x400] sm:$0xff]
    %v2707 = vld [vmem:[%s2577 + $0x408] sm:$0xff]
    %v2708 = vld [vmem:[%s2577 + $0x410] sm:$0xff]
    %v2709 = vld [vmem:[%s2577 + $0x418] sm:$0xff]
    %v2710 = vld [vmem:[%s2577 + $0x420] sm:$0xff]
    %v2711 = vld [vmem:[%s2577 + $0x428] sm:$0xff]
    %v2712 = vld [vmem:[%s2577 + $0x430] sm:$0xff]
    %v2713 = vld [vmem:[%s2577 + $0x438] sm:$0xff]
    %v2714 = vld [vmem:[%s2577 + $0x440] sm:$0xff]
    %v2715 = vld [vmem:[%s2577 + $0x448] sm:$0xff]
    %v2716 = vld [vmem:[%s2577 + $0x450] sm:$0xff]
    %v2717 = vld [vmem:[%s2577 + $0x458] sm:$0xff]
    %v2718 = vld [vmem:[%s2577 + $0x460] sm:$0xff]
    %v2719 = vld [vmem:[%s2577 + $0x468] sm:$0xff]
    %v2720 = vld [vmem:[%s2577 + $0x470] sm:$0xff]
    %v2721 = vld [vmem:[%s2577 + $0x478] sm:$0xff]
    %v2722 = vld [vmem:[%s2577 + $0x480] sm:$0xff]
    %v2723 = vld [vmem:[%s2577 + $0x488] sm:$0xff]
    %v2724 = vld [vmem:[%s2577 + $0x490] sm:$0xff]
    %v2725 = vld [vmem:[%s2577 + $0x498] sm:$0xff]
    %v2726 = vld [vmem:[%s2577 + $0x4a0] sm:$0xff]
    %v2727 = vld [vmem:[%s2577 + $0x4a8] sm:$0xff]
    %v2728 = vld [vmem:[%s2577 + $0x4b0] sm:$0xff]
    %v2729 = vld [vmem:[%s2577 + $0x4b8] sm:$0xff]
    %v2730 = vld [vmem:[%s2577 + $0x4c0] sm:$0xff]
    %v2731 = vld [vmem:[%s2577 + $0x4c8] sm:$0xff]
    %v2732 = vld [vmem:[%s2577 + $0x4d0] sm:$0xff]
    %v2733 = vld [vmem:[%s2577 + $0x4d8] sm:$0xff]
    %v2734 = vld [vmem:[%s2577 + $0x4e0] sm:$0xff]
    %v2735 = vld [vmem:[%s2577 + $0x4e8] sm:$0xff]
    %v2736 = vld [vmem:[%s2577 + $0x4f0] sm:$0xff]
    %v2737 = vld [vmem:[%s2577 + $0x4f8] sm:$0xff]
    %v2738 = vld [vmem:[%s2577 + $0x500] sm:$0xff]
    %v2739 = vld [vmem:[%s2577 + $0x508] sm:$0xff]
    %v2740 = vld [vmem:[%s2577 + $0x510] sm:$0xff]
    %v2741 = vld [vmem:[%s2577 + $0x518] sm:$0xff]
    %v2742 = vld [vmem:[%s2577 + $0x520] sm:$0xff]
    %v2743 = vld [vmem:[%s2577 + $0x528] sm:$0xff]
    %v2744 = vld [vmem:[%s2577 + $0x530] sm:$0xff]
    %v2745 = vld [vmem:[%s2577 + $0x538] sm:$0xff]
    %v2746 = vld [vmem:[%s2577 + $0x540] sm:$0xff]
    %v2747 = vld [vmem:[%s2577 + $0x548] sm:$0xff]
    %v2748 = vld [vmem:[%s2577 + $0x550] sm:$0xff]
    %v2749 = vld [vmem:[%s2577 + $0x558] sm:$0xff]
    %v2750 = vld [vmem:[%s2577 + $0x560] sm:$0xff]
    %v2751 = vld [vmem:[%s2577 + $0x568] sm:$0xff]
    %v2752 = vld [vmem:[%s2577 + $0x570] sm:$0xff]
    %v2753 = vld [vmem:[%s2577 + $0x578] sm:$0xff]
    %v2754 = vld [vmem:[%s2577 + $0x580] sm:$0xff]
    %v2755 = vld [vmem:[%s2577 + $0x588] sm:$0xff]
    %v2756 = vld [vmem:[%s2577 + $0x590] sm:$0xff]
    %v2757 = vld [vmem:[%s2577 + $0x598] sm:$0xff]
    %v2758 = vld [vmem:[%s2577 + $0x5a0] sm:$0xff]
    %v2759 = vld [vmem:[%s2577 + $0x5a8] sm:$0xff]
    %v2760 = vld [vmem:[%s2577 + $0x5b0] sm:$0xff]
    %v2761 = vld [vmem:[%s2577 + $0x5b8] sm:$0xff]
    %v2762 = vld [vmem:[%s2577 + $0x5c0] sm:$0xff]
    %v2763 = vld [vmem:[%s2577 + $0x5c8] sm:$0xff]
    %v2764 = vld [vmem:[%s2577 + $0x5d0] sm:$0xff]
    %v2765 = vld [vmem:[%s2577 + $0x5d8] sm:$0xff]
    %v2766 = vld [vmem:[%s2577 + $0x5e0] sm:$0xff]
    %v2767 = vld [vmem:[%s2577 + $0x5e8] sm:$0xff]
    %v2768 = vld [vmem:[%s2577 + $0x5f0] sm:$0xff]
    %v2769 = vld [vmem:[%s2577 + $0x5f8] sm:$0xff]
    %v2770 = vld [vmem:[%s2577 + $0x600] sm:$0xff]
    %v2771 = vld [vmem:[%s2577 + $0x608] sm:$0xff]
    %v2772 = vld [vmem:[%s2577 + $0x610] sm:$0xff]
    %v2773 = vld [vmem:[%s2577 + $0x618] sm:$0xff]
    %v2774 = vld [vmem:[%s2577 + $0x620] sm:$0xff]
    %v2775 = vld [vmem:[%s2577 + $0x628] sm:$0xff]
    %v2776 = vld [vmem:[%s2577 + $0x630] sm:$0xff]
    %v2777 = vld [vmem:[%s2577 + $0x638] sm:$0xff]
    %v2778 = vld [vmem:[%s2577 + $0x640] sm:$0xff]
    %v2779 = vld [vmem:[%s2577 + $0x648] sm:$0xff]
    %v2780 = vld [vmem:[%s2577 + $0x650] sm:$0xff]
    %v2781 = vld [vmem:[%s2577 + $0x658] sm:$0xff]
    %v2782 = vld [vmem:[%s2577 + $0x660] sm:$0xff]
    %v2783 = vld [vmem:[%s2577 + $0x668] sm:$0xff]
    %v2784 = vld [vmem:[%s2577 + $0x670] sm:$0xff]
    %v2785 = vld [vmem:[%s2577 + $0x678] sm:$0xff]
    %v2786 = vld [vmem:[%s2577 + $0x680] sm:$0xff]
    %v2787 = vld [vmem:[%s2577 + $0x688] sm:$0xff]
    %v2788 = vld [vmem:[%s2577 + $0x690] sm:$0xff]
    %v2789 = vld [vmem:[%s2577 + $0x698] sm:$0xff]
    %v2790 = vld [vmem:[%s2577 + $0x6a0] sm:$0xff]
    %v2791 = vld [vmem:[%s2577 + $0x6a8] sm:$0xff]
    %v2792 = vld [vmem:[%s2577 + $0x6b0] sm:$0xff]
    %v2793 = vld [vmem:[%s2577 + $0x6b8] sm:$0xff]
    %v2794 = vld [vmem:[%s2577 + $0x6c0] sm:$0xff]
    %v2795 = vld [vmem:[%s2577 + $0x6c8] sm:$0xff]
    %v2796 = vld [vmem:[%s2577 + $0x6d0] sm:$0xff]
    %v2797 = vld [vmem:[%s2577 + $0x6d8] sm:$0xff]
    %v2798 = vld [vmem:[%s2577 + $0x6e0] sm:$0xff]
    %v2799 = vld [vmem:[%s2577 + $0x6e8] sm:$0xff]
    %v2800 = vld [vmem:[%s2577 + $0x6f0] sm:$0xff]
    %v2801 = vld [vmem:[%s2577 + $0x6f8] sm:$0xff]
    %v2802 = vld [vmem:[%s2577 + $0x700] sm:$0xff]
    %v2803 = vld [vmem:[%s2577 + $0x708] sm:$0xff]
    %v2804 = vld [vmem:[%s2577 + $0x710] sm:$0xff]
    %v2805 = vld [vmem:[%s2577 + $0x718] sm:$0xff]
    %v2806 = vld [vmem:[%s2577 + $0x720] sm:$0xff]
    %v2807 = vld [vmem:[%s2577 + $0x728] sm:$0xff]
    %v2808 = vld [vmem:[%s2577 + $0x730] sm:$0xff]
    %v2809 = vld [vmem:[%s2577 + $0x738] sm:$0xff]
    %v2810 = vld [vmem:[%s2577 + $0x740] sm:$0xff]
    %v2811 = vld [vmem:[%s2577 + $0x748] sm:$0xff]
    %v2812 = vld [vmem:[%s2577 + $0x750] sm:$0xff]
    %v2813 = vld [vmem:[%s2577 + $0x758] sm:$0xff]
    %v2814 = vld [vmem:[%s2577 + $0x760] sm:$0xff]
    %v2815 = vld [vmem:[%s2577 + $0x768] sm:$0xff]
    %v2816 = vld [vmem:[%s2577 + $0x770] sm:$0xff]
    %v2817 = vld [vmem:[%s2577 + $0x778] sm:$0xff]
    %v2818 = vld [vmem:[%s2577 + $0x780] sm:$0xff]
    %v2819 = vld [vmem:[%s2577 + $0x788] sm:$0xff]
    %v2820 = vld [vmem:[%s2577 + $0x790] sm:$0xff]
    %v2821 = vld [vmem:[%s2577 + $0x798] sm:$0xff]
    %v2822 = vld [vmem:[%s2577 + $0x7a0] sm:$0xff]
    %v2823 = vld [vmem:[%s2577 + $0x7a8] sm:$0xff]
    %v2824 = vld [vmem:[%s2577 + $0x7b0] sm:$0xff]
    %v2825 = vld [vmem:[%s2577 + $0x7b8] sm:$0xff]
    %v2826 = vld [vmem:[%s2577 + $0x7c0] sm:$0xff]
    %v2827 = vld [vmem:[%s2577 + $0x7c8] sm:$0xff]
    %v2828 = vld [vmem:[%s2577 + $0x7d0] sm:$0xff]
    %v2829 = vld [vmem:[%s2577 + $0x7d8] sm:$0xff]
    %v2830 = vld [vmem:[%s2577 + $0x7e0] sm:$0xff]
    %v2831 = vld [vmem:[%s2577 + $0x7e8] sm:$0xff]
    %v2832 = vld [vmem:[%s2577 + $0x7f0] sm:$0xff]
    %v2833 = vld [vmem:[%s2577 + $0x7f8] sm:$0xff]
    %v2834 = vld [vmem:[%s2577 + $0x800] sm:$0xff]
    %v2835 = vld [vmem:[%s2577 + $0x808] sm:$0xff]
    %v2836 = vld [vmem:[%s2577 + $0x810] sm:$0xff]
    %v2837 = vld [vmem:[%s2577 + $0x818] sm:$0xff]
    %v2838 = vld [vmem:[%s2577 + $0x820] sm:$0xff]
    %v2839 = vld [vmem:[%s2577 + $0x828] sm:$0xff]
    %v2840 = vld [vmem:[%s2577 + $0x830] sm:$0xff]
    %v2841 = vld [vmem:[%s2577 + $0x838] sm:$0xff]
    %v2842 = vld [vmem:[%s2577 + $0x840] sm:$0xff]
    %v2843 = vld [vmem:[%s2577 + $0x848] sm:$0xff]
    %v2844 = vld [vmem:[%s2577 + $0x850] sm:$0xff]
    %v2845 = vld [vmem:[%s2577 + $0x858] sm:$0xff]
    %v2846 = vld [vmem:[%s2577 + $0x860] sm:$0xff]
    %v2847 = vld [vmem:[%s2577 + $0x868] sm:$0xff]
    %v2848 = vld [vmem:[%s2577 + $0x870] sm:$0xff]
    %v2849 = vld [vmem:[%s2577 + $0x878] sm:$0xff]
    %v2850 = vld [vmem:[%s2577 + $0x880] sm:$0xff]
    %v2851 = vld [vmem:[%s2577 + $0x888] sm:$0xff]
    %v2852 = vld [vmem:[%s2577 + $0x890] sm:$0xff]
    %v2853 = vld [vmem:[%s2577 + $0x898] sm:$0xff]
    %v2854 = vld [vmem:[%s2577 + $0x8a0] sm:$0xff]
    %v2855 = vld [vmem:[%s2577 + $0x8a8] sm:$0xff]
    %v2856 = vld [vmem:[%s2577 + $0x8b0] sm:$0xff]
    %v2857 = vld [vmem:[%s2577 + $0x8b8] sm:$0xff]
    %v2858 = vld [vmem:[%s2577 + $0x8c0] sm:$0xff]
    %v2859 = vld [vmem:[%s2577 + $0x8c8] sm:$0xff]
    %v2860 = vld [vmem:[%s2577 + $0x8d0] sm:$0xff]
    %v2861 = vld [vmem:[%s2577 + $0x8d8] sm:$0xff]
    %v2862 = vld [vmem:[%s2577 + $0x8e0] sm:$0xff]
    %v2863 = vld [vmem:[%s2577 + $0x8e8] sm:$0xff]
    %v2864 = vld [vmem:[%s2577 + $0x8f0] sm:$0xff]
    %v2865 = vld [vmem:[%s2577 + $0x8f8] sm:$0xff]
    %v2866 = vunpack.c.l.b16 %v2414
    %v2867 = vunpack.c.h.b16 %v2414
    %v2868 = vunpack.c.l.b16 %v2432
    %v2869 = vunpack.c.h.b16 %v2432
    %v2870 = vunpack.c.l.b16 %v2450
    %v2871 = vunpack.c.h.b16 %v2450
    %v2872 = vunpack.c.l.b16 %v2468
    %v2873 = vunpack.c.h.b16 %v2468
    %v2874 = vunpack.c.l.b16 %v2486
    %v2875 = vunpack.c.l.b16 %v2504
    %v2876 = vunpack.c.h.b16 %v2504
    %v2877 = vunpack.c.l.b16 %v2522
    %v2878 = vunpack.c.h.b16 %v2522
    %v2879 = vunpack.c.l.b16 %v2540
    %v2880 = vunpack.c.h.b16 %v2540
    %v2881 = vunpack.c.l.b16 %v2558
    %v2882 = vunpack.c.h.b16 %v2558
    %v2883 = vunpack.c.l.b16 %v2576
    %v2884 = vpack.c.b16 %v2875, %v2866
    %v2885 = vpack.c.b16 %v2876, %v2867
    %v2886 = vpack.c.b16 %v2877, %v2868
    %v2887 = vpack.c.b16 %v2878, %v2869
    %v2888 = vpack.c.b16 %v2879, %v2870
    %v2889 = vpack.c.b16 %v2880, %v2871
    %v2890 = vpack.c.b16 %v2881, %v2872
    %v2891 = vpack.c.b16 %v2882, %v2873
    %v2892 = vpack.c.b16 %v2883, %v2874
    %v3190 = vunpack.c.l.b16 %v2578
    %v3191 = vunpack.c.h.b16 %v2578
    %v3192 = vunpack.c.l.b16 %v2579
    %v3193 = vunpack.c.h.b16 %v2579
    %v3194 = vunpack.c.l.b16 %v2580
    %v3195 = vunpack.c.h.b16 %v2580
    %v3196 = vunpack.c.l.b16 %v2581
    %v3197 = vunpack.c.h.b16 %v2581
    %v3198 = vunpack.c.l.b16 %v2582
    %v3199 = vunpack.c.h.b16 %v2582
    %v3200 = vunpack.c.l.b16 %v2583
    %v3201 = vunpack.c.h.b16 %v2583
    %v3202 = vunpack.c.l.b16 %v2584
    %v3203 = vunpack.c.h.b16 %v2584
    %v3204 = vunpack.c.l.b16 %v2585
    %v3205 = vunpack.c.h.b16 %v2585
    %v3206 = vunpack.c.l.b16 %v2586
    %v3207 = vunpack.c.h.b16 %v2586
    %v3208 = vunpack.c.l.b16 %v2587
    %v3209 = vunpack.c.h.b16 %v2587
    %v3210 = vunpack.c.l.b16 %v2588
    %v3211 = vunpack.c.h.b16 %v2588
    %v3212 = vunpack.c.l.b16 %v2589
    %v3213 = vunpack.c.h.b16 %v2589
    %v3214 = vunpack.c.l.b16 %v2590
    %v3215 = vunpack.c.h.b16 %v2590
    %v3216 = vunpack.c.l.b16 %v2591
    %v3217 = vunpack.c.h.b16 %v2591
    %v3218 = vunpack.c.l.b16 %v2592
    %v3219 = vunpack.c.h.b16 %v2592
    %v3220 = vunpack.c.l.b16 %v2593
    %v3221 = vunpack.c.h.b16 %v2593
    %v3222 = vunpack.c.l.b16 %v2594
    %v3223 = vunpack.c.h.b16 %v2594
    %v3224 = vunpack.c.l.b16 %v2595
    %v3225 = vunpack.c.h.b16 %v2595
    %v3226 = vunpack.c.l.b16 %v2596
    %v3227 = vunpack.c.h.b16 %v2596
    %v3228 = vunpack.c.l.b16 %v2597
    %v3229 = vunpack.c.h.b16 %v2597
    %v3230 = vunpack.c.l.b16 %v2598
    %v3231 = vunpack.c.h.b16 %v2598
    %v3232 = vunpack.c.l.b16 %v2599
    %v3233 = vunpack.c.h.b16 %v2599
    %v3234 = vunpack.c.l.b16 %v2600
    %v3235 = vunpack.c.h.b16 %v2600
    %v3236 = vunpack.c.l.b16 %v2601
    %v3237 = vunpack.c.h.b16 %v2601
    %v3238 = vunpack.c.l.b16 %v2602
    %v3239 = vunpack.c.h.b16 %v2602
    %v3240 = vunpack.c.l.b16 %v2603
    %v3241 = vunpack.c.h.b16 %v2603
    %v3242 = vunpack.c.l.b16 %v2604
    %v3243 = vunpack.c.h.b16 %v2604
    %v3244 = vunpack.c.l.b16 %v2605
    %v3245 = vunpack.c.h.b16 %v2605
    %v3246 = vunpack.c.l.b16 %v2606
    %v3247 = vunpack.c.h.b16 %v2606
    %v3248 = vunpack.c.l.b16 %v2607
    %v3249 = vunpack.c.h.b16 %v2607
    %v3250 = vunpack.c.l.b16 %v2608
    %v3251 = vunpack.c.h.b16 %v2608
    %v3252 = vunpack.c.l.b16 %v2609
    %v3253 = vunpack.c.h.b16 %v2609
    %v3254 = vunpack.c.l.b16 %v2610
    %v3255 = vunpack.c.h.b16 %v2610
    %v3256 = vunpack.c.l.b16 %v2611
    %v3257 = vunpack.c.h.b16 %v2611
    %v3258 = vunpack.c.l.b16 %v2612
    %v3259 = vunpack.c.h.b16 %v2612
    %v3260 = vunpack.c.l.b16 %v2613
    %v3261 = vunpack.c.h.b16 %v2613
    %v3262 = vunpack.c.l.b16 %v2614
    %v3263 = vunpack.c.h.b16 %v2614
    %v3264 = vunpack.c.l.b16 %v2615
    %v3265 = vunpack.c.h.b16 %v2615
    %v3266 = vunpack.c.l.b16 %v2616
    %v3267 = vunpack.c.h.b16 %v2616
    %v3268 = vunpack.c.l.b16 %v2617
    %v3269 = vunpack.c.h.b16 %v2617
    %v3270 = vunpack.c.l.b16 %v2618
    %v3271 = vunpack.c.h.b16 %v2618
    %v3272 = vunpack.c.l.b16 %v2619
    %v3273 = vunpack.c.h.b16 %v2619
    %v3274 = vunpack.c.l.b16 %v2620
    %v3275 = vunpack.c.h.b16 %v2620
    %v3276 = vunpack.c.l.b16 %v2621
    %v3277 = vunpack.c.h.b16 %v2621
    %v3278 = vunpack.c.l.b16 %v2622
    %v3279 = vunpack.c.h.b16 %v2622
    %v3280 = vunpack.c.l.b16 %v2623
    %v3281 = vunpack.c.h.b16 %v2623
    %v3282 = vunpack.c.l.b16 %v2624
    %v3283 = vunpack.c.h.b16 %v2624
    %v3284 = vunpack.c.l.b16 %v2625
    %v3285 = vunpack.c.h.b16 %v2625
    %v3286 = vunpack.c.l.b16 %v2626
    %v3287 = vunpack.c.h.b16 %v2626
    %v3288 = vunpack.c.l.b16 %v2627
    %v3289 = vunpack.c.h.b16 %v2627
    %v3290 = vunpack.c.l.b16 %v2628
    %v3291 = vunpack.c.h.b16 %v2628
    %v3292 = vunpack.c.l.b16 %v2629
    %v3293 = vunpack.c.h.b16 %v2629
    %v3294 = vunpack.c.l.b16 %v2630
    %v3295 = vunpack.c.h.b16 %v2630
    %v3296 = vunpack.c.l.b16 %v2631
    %v3297 = vunpack.c.h.b16 %v2631
    %v3298 = vunpack.c.l.b16 %v2632
    %v3299 = vunpack.c.h.b16 %v2632
    %v3300 = vunpack.c.l.b16 %v2633
    %v3301 = vunpack.c.h.b16 %v2633
    %v3302 = vunpack.c.l.b16 %v2634
    %v3303 = vunpack.c.h.b16 %v2634
    %v3304 = vunpack.c.l.b16 %v2635
    %v3305 = vunpack.c.h.b16 %v2635
    %v3306 = vunpack.c.l.b16 %v2636
    %v3307 = vunpack.c.h.b16 %v2636
    %v3308 = vunpack.c.l.b16 %v2637
    %v3309 = vunpack.c.h.b16 %v2637
    %v3310 = vunpack.c.l.b16 %v2638
    %v3311 = vunpack.c.h.b16 %v2638
    %v3312 = vunpack.c.l.b16 %v2639
    %v3313 = vunpack.c.h.b16 %v2639
    %v3314 = vunpack.c.l.b16 %v2640
    %v3315 = vunpack.c.h.b16 %v2640
    %v3316 = vunpack.c.l.b16 %v2641
    %v3317 = vunpack.c.h.b16 %v2641
    %v3318 = vunpack.c.l.b16 %v2642
    %v3319 = vunpack.c.h.b16 %v2642
    %v3320 = vunpack.c.l.b16 %v2643
    %v3321 = vunpack.c.h.b16 %v2643
    %v3322 = vunpack.c.l.b16 %v2644
    %v3323 = vunpack.c.h.b16 %v2644
    %v3324 = vunpack.c.l.b16 %v2645
    %v3325 = vunpack.c.h.b16 %v2645
    %v3326 = vunpack.c.l.b16 %v2646
    %v3327 = vunpack.c.h.b16 %v2646
    %v3328 = vunpack.c.l.b16 %v2647
    %v3329 = vunpack.c.h.b16 %v2647
    %v3330 = vunpack.c.l.b16 %v2648
    %v3331 = vunpack.c.h.b16 %v2648
    %v3332 = vunpack.c.l.b16 %v2649
    %v3333 = vunpack.c.h.b16 %v2649
    %v3334 = vunpack.c.l.b16 %v2650
    %v3335 = vunpack.c.h.b16 %v2650
    %v3336 = vunpack.c.l.b16 %v2651
    %v3337 = vunpack.c.h.b16 %v2651
    %v3338 = vunpack.c.l.b16 %v2652
    %v3339 = vunpack.c.h.b16 %v2652
    %v3340 = vunpack.c.l.b16 %v2653
    %v3341 = vunpack.c.h.b16 %v2653
    %v3342 = vunpack.c.l.b16 %v2654
    %v3343 = vunpack.c.h.b16 %v2654
    %v3344 = vunpack.c.l.b16 %v2655
    %v3345 = vunpack.c.h.b16 %v2655
    %v3346 = vunpack.c.l.b16 %v2656
    %v3347 = vunpack.c.h.b16 %v2656
    %v3348 = vunpack.c.l.b16 %v2657
    %v3349 = vunpack.c.h.b16 %v2657
    %v3350 = vunpack.c.l.b16 %v2658
    %v3351 = vunpack.c.h.b16 %v2658
    %v3352 = vunpack.c.l.b16 %v2659
    %v3353 = vunpack.c.h.b16 %v2659
    %v3354 = vunpack.c.l.b16 %v2660
    %v3355 = vunpack.c.h.b16 %v2660
    %v3356 = vunpack.c.l.b16 %v2661
    %v3357 = vunpack.c.h.b16 %v2661
    %v3358 = vunpack.c.l.b16 %v2662
    %v3359 = vunpack.c.h.b16 %v2662
    %v3360 = vunpack.c.l.b16 %v2663
    %v3361 = vunpack.c.h.b16 %v2663
    %v3362 = vunpack.c.l.b16 %v2664
    %v3363 = vunpack.c.h.b16 %v2664
    %v3364 = vunpack.c.l.b16 %v2665
    %v3365 = vunpack.c.h.b16 %v2665
    %v3366 = vunpack.c.l.b16 %v2666
    %v3367 = vunpack.c.h.b16 %v2666
    %v3368 = vunpack.c.l.b16 %v2667
    %v3369 = vunpack.c.h.b16 %v2667
    %v3370 = vunpack.c.l.b16 %v2668
    %v3371 = vunpack.c.h.b16 %v2668
    %v3372 = vunpack.c.l.b16 %v2669
    %v3373 = vunpack.c.h.b16 %v2669
    %v3374 = vunpack.c.l.b16 %v2670
    %v3375 = vunpack.c.h.b16 %v2670
    %v3376 = vunpack.c.l.b16 %v2671
    %v3377 = vunpack.c.h.b16 %v2671
    %v3378 = vunpack.c.l.b16 %v2672
    %v3379 = vunpack.c.h.b16 %v2672
    %v3380 = vunpack.c.l.b16 %v2673
    %v3381 = vunpack.c.h.b16 %v2673
    %v3382 = vunpack.c.l.b16 %v2674
    %v3383 = vunpack.c.h.b16 %v2674
    %v3384 = vunpack.c.l.b16 %v2675
    %v3385 = vunpack.c.h.b16 %v2675
    %v3386 = vunpack.c.l.b16 %v2676
    %v3387 = vunpack.c.h.b16 %v2676
    %v3388 = vunpack.c.l.b16 %v2677
    %v3389 = vunpack.c.h.b16 %v2677
    %v3390 = vunpack.c.l.b16 %v2678
    %v3391 = vunpack.c.h.b16 %v2678
    %v3392 = vunpack.c.l.b16 %v2679
    %v3393 = vunpack.c.h.b16 %v2679
    %v3394 = vunpack.c.l.b16 %v2680
    %v3395 = vunpack.c.h.b16 %v2680
    %v3396 = vunpack.c.l.b16 %v2681
    %v3397 = vunpack.c.h.b16 %v2681
    %v3398 = vunpack.c.l.b16 %v2682
    %v3399 = vunpack.c.h.b16 %v2682
    %v3400 = vunpack.c.l.b16 %v2683
    %v3401 = vunpack.c.h.b16 %v2683
    %v3402 = vunpack.c.l.b16 %v2684
    %v3403 = vunpack.c.h.b16 %v2684
    %v3404 = vunpack.c.l.b16 %v2685
    %v3405 = vunpack.c.h.b16 %v2685
    %v3406 = vunpack.c.l.b16 %v2686
    %v3407 = vunpack.c.h.b16 %v2686
    %v3408 = vunpack.c.l.b16 %v2687
    %v3409 = vunpack.c.h.b16 %v2687
    %v3410 = vunpack.c.l.b16 %v2688
    %v3411 = vunpack.c.h.b16 %v2688
    %v3412 = vunpack.c.l.b16 %v2689
    %v3413 = vunpack.c.h.b16 %v2689
    %v3414 = vunpack.c.l.b16 %v2690
    %v3415 = vunpack.c.h.b16 %v2690
    %v3416 = vunpack.c.l.b16 %v2691
    %v3417 = vunpack.c.h.b16 %v2691
    %v3418 = vunpack.c.l.b16 %v2692
    %v3419 = vunpack.c.h.b16 %v2692
    %v3420 = vunpack.c.l.b16 %v2693
    %v3421 = vunpack.c.h.b16 %v2693
    %v3422 = vunpack.c.l.b16 %v2694
    %v3423 = vunpack.c.h.b16 %v2694
    %v3424 = vunpack.c.l.b16 %v2695
    %v3425 = vunpack.c.h.b16 %v2695
    %v3426 = vunpack.c.l.b16 %v2696
    %v3427 = vunpack.c.h.b16 %v2696
    %v3428 = vunpack.c.l.b16 %v2697
    %v3429 = vunpack.c.h.b16 %v2697
    %v3430 = vunpack.c.l.b16 %v2698
    %v3431 = vunpack.c.h.b16 %v2698
    %v3432 = vunpack.c.l.b16 %v2699
    %v3433 = vunpack.c.h.b16 %v2699
    %v3434 = vunpack.c.l.b16 %v2700
    %v3435 = vunpack.c.h.b16 %v2700
    %v3436 = vunpack.c.l.b16 %v2701
    %v3437 = vunpack.c.h.b16 %v2701
    %v3438 = vunpack.c.l.b16 %v2702
    %v3439 = vunpack.c.h.b16 %v2702
    %v3440 = vunpack.c.l.b16 %v2703
    %v3441 = vunpack.c.h.b16 %v2703
    %v3442 = vunpack.c.l.b16 %v2704
    %v3443 = vunpack.c.h.b16 %v2704
    %v3444 = vunpack.c.l.b16 %v2705
    %v3445 = vunpack.c.h.b16 %v2705
    %v3446 = vunpack.c.l.b16 %v2706
    %v3447 = vunpack.c.h.b16 %v2706
    %v3448 = vunpack.c.l.b16 %v2707
    %v3449 = vunpack.c.h.b16 %v2707
    %v3450 = vunpack.c.l.b16 %v2708
    %v3451 = vunpack.c.h.b16 %v2708
    %v3452 = vunpack.c.l.b16 %v2709
    %v3453 = vunpack.c.h.b16 %v2709
    %v3454 = vunpack.c.l.b16 %v2710
    %v3455 = vunpack.c.h.b16 %v2710
    %v3456 = vunpack.c.l.b16 %v2711
    %v3457 = vunpack.c.h.b16 %v2711
    %v3458 = vunpack.c.l.b16 %v2712
    %v3459 = vunpack.c.h.b16 %v2712
    %v3460 = vunpack.c.l.b16 %v2713
    %v3461 = vunpack.c.h.b16 %v2713
    %v3462 = vunpack.c.l.b16 %v2714
    %v3463 = vunpack.c.h.b16 %v2714
    %v3464 = vunpack.c.l.b16 %v2715
    %v3465 = vunpack.c.h.b16 %v2715
    %v3466 = vunpack.c.l.b16 %v2716
    %v3467 = vunpack.c.h.b16 %v2716
    %v3468 = vunpack.c.l.b16 %v2717
    %v3469 = vunpack.c.h.b16 %v2717
    %v3470 = vunpack.c.l.b16 %v2718
    %v3471 = vunpack.c.h.b16 %v2718
    %v3472 = vunpack.c.l.b16 %v2719
    %v3473 = vunpack.c.h.b16 %v2719
    %v3474 = vunpack.c.l.b16 %v2720
    %v3475 = vunpack.c.h.b16 %v2720
    %v3476 = vunpack.c.l.b16 %v2721
    %v3477 = vunpack.c.h.b16 %v2721
    %v3478 = vunpack.c.l.b16 %v2722
    %v3479 = vunpack.c.h.b16 %v2722
    %v3480 = vunpack.c.l.b16 %v2723
    %v3481 = vunpack.c.h.b16 %v2723
    %v3482 = vunpack.c.l.b16 %v2724
    %v3483 = vunpack.c.h.b16 %v2724
    %v3484 = vunpack.c.l.b16 %v2725
    %v3485 = vunpack.c.h.b16 %v2725
    %v3486 = vunpack.c.l.b16 %v2726
    %v3487 = vunpack.c.h.b16 %v2726
    %v3488 = vunpack.c.l.b16 %v2727
    %v3489 = vunpack.c.h.b16 %v2727
    %v3490 = vunpack.c.l.b16 %v2728
    %v3491 = vunpack.c.h.b16 %v2728
    %v3492 = vunpack.c.l.b16 %v2729
    %v3493 = vunpack.c.h.b16 %v2729
    %v3494 = vunpack.c.l.b16 %v2730
    %v3495 = vunpack.c.h.b16 %v2730
    %v3496 = vunpack.c.l.b16 %v2731
    %v3497 = vunpack.c.h.b16 %v2731
    %v3498 = vunpack.c.l.b16 %v2732
    %v3499 = vunpack.c.h.b16 %v2732
    %v3500 = vunpack.c.l.b16 %v2733
    %v3501 = vunpack.c.h.b16 %v2733
    %v3502 = vunpack.c.l.b16 %v2734
    %v3503 = vunpack.c.h.b16 %v2734
    %v3504 = vunpack.c.l.b16 %v2735
    %v3505 = vunpack.c.h.b16 %v2735
    %v3506 = vunpack.c.l.b16 %v2736
    %v3507 = vunpack.c.h.b16 %v2736
    %v3508 = vunpack.c.l.b16 %v2737
    %v3509 = vunpack.c.h.b16 %v2737
    %v3510 = vunpack.c.l.b16 %v2738
    %v3511 = vunpack.c.h.b16 %v2738
    %v3512 = vunpack.c.l.b16 %v2739
    %v3513 = vunpack.c.h.b16 %v2739
    %v3514 = vunpack.c.l.b16 %v2740
    %v3515 = vunpack.c.h.b16 %v2740
    %v3516 = vunpack.c.l.b16 %v2741
    %v3517 = vunpack.c.h.b16 %v2741
    %v3518 = vunpack.c.l.b16 %v2742
    %v3519 = vunpack.c.h.b16 %v2742
    %v3520 = vunpack.c.l.b16 %v2743
    %v3521 = vunpack.c.h.b16 %v2743
    %v3522 = vunpack.c.l.b16 %v2744
    %v3523 = vunpack.c.h.b16 %v2744
    %v3524 = vunpack.c.l.b16 %v2745
    %v3525 = vunpack.c.h.b16 %v2745
    %v3526 = vunpack.c.l.b16 %v2746
    %v3527 = vunpack.c.h.b16 %v2746
    %v3528 = vunpack.c.l.b16 %v2747
    %v3529 = vunpack.c.h.b16 %v2747
    %v3530 = vunpack.c.l.b16 %v2748
    %v3531 = vunpack.c.h.b16 %v2748
    %v3532 = vunpack.c.l.b16 %v2749
    %v3533 = vunpack.c.h.b16 %v2749
    %v3534 = vunpack.c.l.b16 %v2750
    %v3535 = vunpack.c.h.b16 %v2750
    %v3536 = vunpack.c.l.b16 %v2751
    %v3537 = vunpack.c.h.b16 %v2751
    %v3538 = vunpack.c.l.b16 %v2752
    %v3539 = vunpack.c.h.b16 %v2752
    %v3540 = vunpack.c.l.b16 %v2753
    %v3541 = vunpack.c.h.b16 %v2753
    %v3542 = vunpack.c.l.b16 %v2754
    %v3543 = vunpack.c.h.b16 %v2754
    %v3544 = vunpack.c.l.b16 %v2755
    %v3545 = vunpack.c.h.b16 %v2755
    %v3546 = vunpack.c.l.b16 %v2756
    %v3547 = vunpack.c.h.b16 %v2756
    %v3548 = vunpack.c.l.b16 %v2757
    %v3549 = vunpack.c.h.b16 %v2757
    %v3550 = vunpack.c.l.b16 %v2758
    %v3551 = vunpack.c.h.b16 %v2758
    %v3552 = vunpack.c.l.b16 %v2759
    %v3553 = vunpack.c.h.b16 %v2759
    %v3554 = vunpack.c.l.b16 %v2760
    %v3555 = vunpack.c.h.b16 %v2760
    %v3556 = vunpack.c.l.b16 %v2761
    %v3557 = vunpack.c.h.b16 %v2761
    %v3558 = vunpack.c.l.b16 %v2762
    %v3559 = vunpack.c.h.b16 %v2762
    %v3560 = vunpack.c.l.b16 %v2763
    %v3561 = vunpack.c.h.b16 %v2763
    %v3562 = vunpack.c.l.b16 %v2764
    %v3563 = vunpack.c.h.b16 %v2764
    %v3564 = vunpack.c.l.b16 %v2765
    %v3565 = vunpack.c.h.b16 %v2765
    %v3566 = vunpack.c.l.b16 %v2766
    %v3567 = vunpack.c.h.b16 %v2766
    %v3568 = vunpack.c.l.b16 %v2767
    %v3569 = vunpack.c.h.b16 %v2767
    %v3570 = vunpack.c.l.b16 %v2768
    %v3571 = vunpack.c.h.b16 %v2768
    %v3572 = vunpack.c.l.b16 %v2769
    %v3573 = vunpack.c.h.b16 %v2769
    %v3574 = vunpack.c.l.b16 %v2770
    %v3575 = vunpack.c.h.b16 %v2770
    %v3576 = vunpack.c.l.b16 %v2771
    %v3577 = vunpack.c.h.b16 %v2771
    %v3578 = vunpack.c.l.b16 %v2772
    %v3579 = vunpack.c.h.b16 %v2772
    %v3580 = vunpack.c.l.b16 %v2773
    %v3581 = vunpack.c.h.b16 %v2773
    %v3582 = vunpack.c.l.b16 %v2774
    %v3583 = vunpack.c.h.b16 %v2774
    %v3584 = vunpack.c.l.b16 %v2775
    %v3585 = vunpack.c.h.b16 %v2775
    %v3586 = vunpack.c.l.b16 %v2776
    %v3587 = vunpack.c.h.b16 %v2776
    %v3588 = vunpack.c.l.b16 %v2777
    %v3589 = vunpack.c.h.b16 %v2777
    %v3590 = vunpack.c.l.b16 %v2778
    %v3591 = vunpack.c.h.b16 %v2778
    %v3592 = vunpack.c.l.b16 %v2779
    %v3593 = vunpack.c.h.b16 %v2779
    %v3594 = vunpack.c.l.b16 %v2780
    %v3595 = vunpack.c.h.b16 %v2780
    %v3596 = vunpack.c.l.b16 %v2781
    %v3597 = vunpack.c.h.b16 %v2781
    %v3598 = vunpack.c.l.b16 %v2782
    %v3599 = vunpack.c.h.b16 %v2782
    %v3600 = vunpack.c.l.b16 %v2783
    %v3601 = vunpack.c.h.b16 %v2783
    %v3602 = vunpack.c.l.b16 %v2784
    %v3603 = vunpack.c.h.b16 %v2784
    %v3604 = vunpack.c.l.b16 %v2785
    %v3605 = vunpack.c.h.b16 %v2785
    %v3606 = vunpack.c.l.b16 %v2786
    %v3607 = vunpack.c.h.b16 %v2786
    %v3608 = vunpack.c.l.b16 %v2787
    %v3609 = vunpack.c.h.b16 %v2787
    %v3610 = vunpack.c.l.b16 %v2788
    %v3611 = vunpack.c.h.b16 %v2788
    %v3612 = vunpack.c.l.b16 %v2789
    %v3613 = vunpack.c.h.b16 %v2789
    %v3614 = vunpack.c.l.b16 %v2790
    %v3615 = vunpack.c.h.b16 %v2790
    %v3616 = vunpack.c.l.b16 %v2791
    %v3617 = vunpack.c.h.b16 %v2791
    %v3618 = vunpack.c.l.b16 %v2792
    %v3619 = vunpack.c.h.b16 %v2792
    %v3620 = vunpack.c.l.b16 %v2793
    %v3621 = vunpack.c.h.b16 %v2793
    %v3622 = vunpack.c.l.b16 %v2794
    %v3623 = vunpack.c.h.b16 %v2794
    %v3624 = vunpack.c.l.b16 %v2795
    %v3625 = vunpack.c.h.b16 %v2795
    %v3626 = vunpack.c.l.b16 %v2796
    %v3627 = vunpack.c.h.b16 %v2796
    %v3628 = vunpack.c.l.b16 %v2797
    %v3629 = vunpack.c.h.b16 %v2797
    %v3630 = vunpack.c.l.b16 %v2798
    %v3631 = vunpack.c.h.b16 %v2798
    %v3632 = vunpack.c.l.b16 %v2799
    %v3633 = vunpack.c.h.b16 %v2799
    %v3634 = vunpack.c.l.b16 %v2800
    %v3635 = vunpack.c.h.b16 %v2800
    %v3636 = vunpack.c.l.b16 %v2801
    %v3637 = vunpack.c.h.b16 %v2801
    %v3638 = vunpack.c.l.b16 %v2802
    %v3639 = vunpack.c.h.b16 %v2802
    %v3640 = vunpack.c.l.b16 %v2803
    %v3641 = vunpack.c.h.b16 %v2803
    %v3642 = vunpack.c.l.b16 %v2804
    %v3643 = vunpack.c.h.b16 %v2804
    %v3644 = vunpack.c.l.b16 %v2805
    %v3645 = vunpack.c.h.b16 %v2805
    %v3646 = vunpack.c.l.b16 %v2806
    %v3647 = vunpack.c.h.b16 %v2806
    %v3648 = vunpack.c.l.b16 %v2807
    %v3649 = vunpack.c.h.b16 %v2807
    %v3650 = vunpack.c.l.b16 %v2808
    %v3651 = vunpack.c.h.b16 %v2808
    %v3652 = vunpack.c.l.b16 %v2809
    %v3653 = vunpack.c.h.b16 %v2809
    %v3654 = vunpack.c.l.b16 %v2810
    %v3655 = vunpack.c.h.b16 %v2810
    %v3656 = vunpack.c.l.b16 %v2811
    %v3657 = vunpack.c.h.b16 %v2811
    %v3658 = vunpack.c.l.b16 %v2812
    %v3659 = vunpack.c.h.b16 %v2812
    %v3660 = vunpack.c.l.b16 %v2813
    %v3661 = vunpack.c.h.b16 %v2813
    %v3662 = vunpack.c.l.b16 %v2814
    %v3663 = vunpack.c.h.b16 %v2814
    %v3664 = vunpack.c.l.b16 %v2815
    %v3665 = vunpack.c.h.b16 %v2815
    %v3666 = vunpack.c.l.b16 %v2816
    %v3667 = vunpack.c.h.b16 %v2816
    %v3668 = vunpack.c.l.b16 %v2817
    %v3669 = vunpack.c.h.b16 %v2817
    %v3670 = vunpack.c.l.b16 %v2818
    %v3671 = vunpack.c.h.b16 %v2818
    %v3672 = vunpack.c.l.b16 %v2819
    %v3673 = vunpack.c.h.b16 %v2819
    %v3674 = vunpack.c.l.b16 %v2820
    %v3675 = vunpack.c.h.b16 %v2820
    %v3676 = vunpack.c.l.b16 %v2821
    %v3677 = vunpack.c.h.b16 %v2821
    %v3678 = vunpack.c.l.b16 %v2822
    %v3679 = vunpack.c.h.b16 %v2822
    %v3680 = vunpack.c.l.b16 %v2823
    %v3681 = vunpack.c.h.b16 %v2823
    %v3682 = vunpack.c.l.b16 %v2824
    %v3683 = vunpack.c.h.b16 %v2824
    %v3684 = vunpack.c.l.b16 %v2825
    %v3685 = vunpack.c.h.b16 %v2825
    %v3686 = vunpack.c.l.b16 %v2826
    %v3687 = vunpack.c.h.b16 %v2826
    %v3688 = vunpack.c.l.b16 %v2827
    %v3689 = vunpack.c.h.b16 %v2827
    %v3690 = vunpack.c.l.b16 %v2828
    %v3691 = vunpack.c.h.b16 %v2828
    %v3692 = vunpack.c.l.b16 %v2829
    %v3693 = vunpack.c.h.b16 %v2829
    %v3694 = vunpack.c.l.b16 %v2830
    %v3695 = vunpack.c.h.b16 %v2830
    %v3696 = vunpack.c.l.b16 %v2831
    %v3697 = vunpack.c.h.b16 %v2831
    %v3698 = vunpack.c.l.b16 %v2832
    %v3699 = vunpack.c.h.b16 %v2832
    %v3700 = vunpack.c.l.b16 %v2833
    %v3701 = vunpack.c.h.b16 %v2833
    %v3702 = vunpack.c.l.b16 %v2834
    %v3703 = vunpack.c.h.b16 %v2834
    %v3704 = vunpack.c.l.b16 %v2835
    %v3705 = vunpack.c.h.b16 %v2835
    %v3706 = vunpack.c.l.b16 %v2836
    %v3707 = vunpack.c.h.b16 %v2836
    %v3708 = vunpack.c.l.b16 %v2837
    %v3709 = vunpack.c.h.b16 %v2837
    %v3710 = vunpack.c.l.b16 %v2838
    %v3711 = vunpack.c.h.b16 %v2838
    %v3712 = vunpack.c.l.b16 %v2839
    %v3713 = vunpack.c.h.b16 %v2839
    %v3714 = vunpack.c.l.b16 %v2840
    %v3715 = vunpack.c.h.b16 %v2840
    %v3716 = vunpack.c.l.b16 %v2841
    %v3717 = vunpack.c.h.b16 %v2841
    %v3718 = vunpack.c.l.b16 %v2842
    %v3719 = vunpack.c.h.b16 %v2842
    %v3720 = vunpack.c.l.b16 %v2843
    %v3721 = vunpack.c.h.b16 %v2843
    %v3722 = vunpack.c.l.b16 %v2844
    %v3723 = vunpack.c.h.b16 %v2844
    %v3724 = vunpack.c.l.b16 %v2845
    %v3725 = vunpack.c.h.b16 %v2845
    %v3726 = vunpack.c.l.b16 %v2846
    %v3727 = vunpack.c.h.b16 %v2846
    %v3728 = vunpack.c.l.b16 %v2847
    %v3729 = vunpack.c.h.b16 %v2847
    %v3730 = vunpack.c.l.b16 %v2848
    %v3731 = vunpack.c.h.b16 %v2848
    %v3732 = vunpack.c.l.b16 %v2849
    %v3733 = vunpack.c.h.b16 %v2849
    %v3734 = vunpack.c.l.b16 %v2850
    %v3735 = vunpack.c.h.b16 %v2850
    %v3736 = vunpack.c.l.b16 %v2851
    %v3737 = vunpack.c.h.b16 %v2851
    %v3738 = vunpack.c.l.b16 %v2852
    %v3739 = vunpack.c.h.b16 %v2852
    %v3740 = vunpack.c.l.b16 %v2853
    %v3741 = vunpack.c.h.b16 %v2853
    %v3742 = vunpack.c.l.b16 %v2854
    %v3743 = vunpack.c.h.b16 %v2854
    %v3744 = vunpack.c.l.b16 %v2855
    %v3745 = vunpack.c.h.b16 %v2855
    %v3746 = vunpack.c.l.b16 %v2856
    %v3747 = vunpack.c.h.b16 %v2856
    %v3748 = vunpack.c.l.b16 %v2857
    %v3749 = vunpack.c.h.b16 %v2857
    %v3750 = vunpack.c.l.b16 %v2858
    %v3751 = vunpack.c.h.b16 %v2858
    %v3752 = vunpack.c.l.b16 %v2859
    %v3753 = vunpack.c.h.b16 %v2859
    %v3754 = vunpack.c.l.b16 %v2860
    %v3755 = vunpack.c.h.b16 %v2860
    %v3756 = vunpack.c.l.b16 %v2861
    %v3757 = vunpack.c.h.b16 %v2861
    %v3758 = vunpack.c.l.b16 %v2862
    %v3759 = vunpack.c.h.b16 %v2862
    %v3760 = vunpack.c.l.b16 %v2863
    %v3761 = vunpack.c.h.b16 %v2863
    %v3762 = vunpack.c.l.b16 %v2864
    %v3763 = vunpack.c.h.b16 %v2864
    %v3764 = vunpack.c.l.b16 %v2865
    %v3765 = vunpack.c.h.b16 %v2865
    %v3766 = vpack.c.b16 %v3194, %v3190
    %v3767 = vpack.c.b16 %v3195, %v3191
    %v3768 = vpack.c.b16 %v3196, %v3192
    %v3769 = vpack.c.b16 %v3197, %v3193
    %v3770 = vpack.c.b16 %v3202, %v3198
    %v3771 = vpack.c.b16 %v3203, %v3199
    %v3772 = vpack.c.b16 %v3204, %v3200
    %v3773 = vpack.c.b16 %v3205, %v3201
    %v3774 = vpack.c.b16 %v3210, %v3206
    %v3775 = vpack.c.b16 %v3211, %v3207
    %v3776 = vpack.c.b16 %v3212, %v3208
    %v3777 = vpack.c.b16 %v3213, %v3209
    %v3778 = vpack.c.b16 %v3218, %v3214
    %v3779 = vpack.c.b16 %v3219, %v3215
    %v3780 = vpack.c.b16 %v3220, %v3216
    %v3781 = vpack.c.b16 %v3221, %v3217
    %v3782 = vpack.c.b16 %v3226, %v3222
    %v3783 = vpack.c.b16 %v3227, %v3223
    %v3784 = vpack.c.b16 %v3228, %v3224
    %v3785 = vpack.c.b16 %v3229, %v3225
    %v3786 = vpack.c.b16 %v3234, %v3230
    %v3787 = vpack.c.b16 %v3235, %v3231
    %v3788 = vpack.c.b16 %v3236, %v3232
    %v3789 = vpack.c.b16 %v3237, %v3233
    %v3790 = vpack.c.b16 %v3242, %v3238
    %v3791 = vpack.c.b16 %v3243, %v3239
    %v3792 = vpack.c.b16 %v3244, %v3240
    %v3793 = vpack.c.b16 %v3245, %v3241
    %v3794 = vpack.c.b16 %v3250, %v3246
    %v3795 = vpack.c.b16 %v3251, %v3247
    %v3796 = vpack.c.b16 %v3252, %v3248
    %v3797 = vpack.c.b16 %v3253, %v3249
    %v3798 = vpack.c.b16 %v3258, %v3254
    %v3799 = vpack.c.b16 %v3259, %v3255
    %v3800 = vpack.c.b16 %v3260, %v3256
    %v3801 = vpack.c.b16 %v3261, %v3257
    %v3802 = vpack.c.b16 %v3266, %v3262
    %v3803 = vpack.c.b16 %v3267, %v3263
    %v3804 = vpack.c.b16 %v3268, %v3264
    %v3805 = vpack.c.b16 %v3269, %v3265
    %v3806 = vpack.c.b16 %v3274, %v3270
    %v3807 = vpack.c.b16 %v3275, %v3271
    %v3808 = vpack.c.b16 %v3276, %v3272
    %v3809 = vpack.c.b16 %v3277, %v3273
    %v3810 = vpack.c.b16 %v3282, %v3278
    %v3811 = vpack.c.b16 %v3283, %v3279
    %v3812 = vpack.c.b16 %v3284, %v3280
    %v3813 = vpack.c.b16 %v3285, %v3281
    %v3814 = vpack.c.b16 %v3290, %v3286
    %v3815 = vpack.c.b16 %v3291, %v3287
    %v3816 = vpack.c.b16 %v3292, %v3288
    %v3817 = vpack.c.b16 %v3293, %v3289
    %v3818 = vpack.c.b16 %v3298, %v3294
    %v3819 = vpack.c.b16 %v3299, %v3295
    %v3820 = vpack.c.b16 %v3300, %v3296
    %v3821 = vpack.c.b16 %v3301, %v3297
    %v3822 = vpack.c.b16 %v3306, %v3302
    %v3823 = vpack.c.b16 %v3307, %v3303
    %v3824 = vpack.c.b16 %v3308, %v3304
    %v3825 = vpack.c.b16 %v3309, %v3305
    %v3826 = vpack.c.b16 %v3314, %v3310
    %v3827 = vpack.c.b16 %v3315, %v3311
    %v3828 = vpack.c.b16 %v3316, %v3312
    %v3829 = vpack.c.b16 %v3317, %v3313
    %v3830 = vpack.c.b16 %v3322, %v3318
    %v3831 = vpack.c.b16 %v3323, %v3319
    %v3832 = vpack.c.b16 %v3324, %v3320
    %v3833 = vpack.c.b16 %v3325, %v3321
    %v3834 = vpack.c.b16 %v3330, %v3326
    %v3835 = vpack.c.b16 %v3331, %v3327
    %v3836 = vpack.c.b16 %v3332, %v3328
    %v3837 = vpack.c.b16 %v3333, %v3329
    %v3838 = vpack.c.b16 %v3338, %v3334
    %v3839 = vpack.c.b16 %v3339, %v3335
    %v3840 = vpack.c.b16 %v3340, %v3336
    %v3841 = vpack.c.b16 %v3341, %v3337
    %v3842 = vpack.c.b16 %v3346, %v3342
    %v3843 = vpack.c.b16 %v3347, %v3343
    %v3844 = vpack.c.b16 %v3348, %v3344
    %v3845 = vpack.c.b16 %v3349, %v3345
    %v3846 = vpack.c.b16 %v3354, %v3350
    %v3847 = vpack.c.b16 %v3355, %v3351
    %v3848 = vpack.c.b16 %v3356, %v3352
    %v3849 = vpack.c.b16 %v3357, %v3353
    %v3850 = vpack.c.b16 %v3362, %v3358
    %v3851 = vpack.c.b16 %v3363, %v3359
    %v3852 = vpack.c.b16 %v3364, %v3360
    %v3853 = vpack.c.b16 %v3365, %v3361
    %v3854 = vpack.c.b16 %v3370, %v3366
    %v3855 = vpack.c.b16 %v3371, %v3367
    %v3856 = vpack.c.b16 %v3372, %v3368
    %v3857 = vpack.c.b16 %v3373, %v3369
    %v3858 = vpack.c.b16 %v3378, %v3374
    %v3859 = vpack.c.b16 %v3379, %v3375
    %v3860 = vpack.c.b16 %v3380, %v3376
    %v3861 = vpack.c.b16 %v3381, %v3377
    %v3862 = vpack.c.b16 %v3386, %v3382
    %v3863 = vpack.c.b16 %v3387, %v3383
    %v3864 = vpack.c.b16 %v3388, %v3384
    %v3865 = vpack.c.b16 %v3389, %v3385
    %v3866 = vpack.c.b16 %v3394, %v3390
    %v3867 = vpack.c.b16 %v3395, %v3391
    %v3868 = vpack.c.b16 %v3396, %v3392
    %v3869 = vpack.c.b16 %v3397, %v3393
    %v3870 = vpack.c.b16 %v3402, %v3398
    %v3871 = vpack.c.b16 %v3403, %v3399
    %v3872 = vpack.c.b16 %v3404, %v3400
    %v3873 = vpack.c.b16 %v3405, %v3401
    %v3874 = vpack.c.b16 %v3410, %v3406
    %v3875 = vpack.c.b16 %v3411, %v3407
    %v3876 = vpack.c.b16 %v3412, %v3408
    %v3877 = vpack.c.b16 %v3413, %v3409
    %v3878 = vpack.c.b16 %v3418, %v3414
    %v3879 = vpack.c.b16 %v3419, %v3415
    %v3880 = vpack.c.b16 %v3420, %v3416
    %v3881 = vpack.c.b16 %v3421, %v3417
    %v3882 = vpack.c.b16 %v3426, %v3422
    %v3883 = vpack.c.b16 %v3427, %v3423
    %v3884 = vpack.c.b16 %v3428, %v3424
    %v3885 = vpack.c.b16 %v3429, %v3425
    %v3886 = vpack.c.b16 %v3434, %v3430
    %v3887 = vpack.c.b16 %v3435, %v3431
    %v3888 = vpack.c.b16 %v3436, %v3432
    %v3889 = vpack.c.b16 %v3437, %v3433
    %v3890 = vpack.c.b16 %v3442, %v3438
    %v3891 = vpack.c.b16 %v3443, %v3439
    %v3892 = vpack.c.b16 %v3444, %v3440
    %v3893 = vpack.c.b16 %v3445, %v3441
    %v3894 = vpack.c.b16 %v3450, %v3446
    %v3895 = vpack.c.b16 %v3451, %v3447
    %v3896 = vpack.c.b16 %v3452, %v3448
    %v3897 = vpack.c.b16 %v3453, %v3449
    %v3898 = vpack.c.b16 %v3458, %v3454
    %v3899 = vpack.c.b16 %v3459, %v3455
    %v3900 = vpack.c.b16 %v3460, %v3456
    %v3901 = vpack.c.b16 %v3461, %v3457
    %v3902 = vpack.c.b16 %v3466, %v3462
    %v3903 = vpack.c.b16 %v3467, %v3463
    %v3904 = vpack.c.b16 %v3468, %v3464
    %v3905 = vpack.c.b16 %v3469, %v3465
    %v3906 = vpack.c.b16 %v3474, %v3470
    %v3907 = vpack.c.b16 %v3475, %v3471
    %v3908 = vpack.c.b16 %v3476, %v3472
    %v3909 = vpack.c.b16 %v3477, %v3473
    %v3910 = vpack.c.b16 %v3482, %v3478
    %v3911 = vpack.c.b16 %v3483, %v3479
    %v3912 = vpack.c.b16 %v3484, %v3480
    %v3913 = vpack.c.b16 %v3485, %v3481
    %v3914 = vpack.c.b16 %v3490, %v3486
    %v3915 = vpack.c.b16 %v3491, %v3487
    %v3916 = vpack.c.b16 %v3492, %v3488
    %v3917 = vpack.c.b16 %v3493, %v3489
    %v3918 = vpack.c.b16 %v3498, %v3494
    %v3919 = vpack.c.b16 %v3499, %v3495
    %v3920 = vpack.c.b16 %v3500, %v3496
    %v3921 = vpack.c.b16 %v3501, %v3497
    %v3922 = vpack.c.b16 %v3506, %v3502
    %v3923 = vpack.c.b16 %v3507, %v3503
    %v3924 = vpack.c.b16 %v3508, %v3504
    %v3925 = vpack.c.b16 %v3509, %v3505
    %v3926 = vpack.c.b16 %v3514, %v3510
    %v3927 = vpack.c.b16 %v3515, %v3511
    %v3928 = vpack.c.b16 %v3516, %v3512
    %v3929 = vpack.c.b16 %v3517, %v3513
    %v3930 = vpack.c.b16 %v3522, %v3518
    %v3931 = vpack.c.b16 %v3523, %v3519
    %v3932 = vpack.c.b16 %v3524, %v3520
    %v3933 = vpack.c.b16 %v3525, %v3521
    %v3934 = vpack.c.b16 %v3530, %v3526
    %v3935 = vpack.c.b16 %v3531, %v3527
    %v3936 = vpack.c.b16 %v3532, %v3528
    %v3937 = vpack.c.b16 %v3533, %v3529
    %v3938 = vpack.c.b16 %v3538, %v3534
    %v3939 = vpack.c.b16 %v3539, %v3535
    %v3940 = vpack.c.b16 %v3540, %v3536
    %v3941 = vpack.c.b16 %v3541, %v3537
    %v3942 = vpack.c.b16 %v3546, %v3542
    %v3943 = vpack.c.b16 %v3547, %v3543
    %v3944 = vpack.c.b16 %v3548, %v3544
    %v3945 = vpack.c.b16 %v3549, %v3545
    %v3946 = vpack.c.b16 %v3554, %v3550
    %v3947 = vpack.c.b16 %v3555, %v3551
    %v3948 = vpack.c.b16 %v3556, %v3552
    %v3949 = vpack.c.b16 %v3557, %v3553
    %v3950 = vpack.c.b16 %v3562, %v3558
    %v3951 = vpack.c.b16 %v3563, %v3559
    %v3952 = vpack.c.b16 %v3564, %v3560
    %v3953 = vpack.c.b16 %v3565, %v3561
    %v3954 = vpack.c.b16 %v3570, %v3566
    %v3955 = vpack.c.b16 %v3571, %v3567
    %v3956 = vpack.c.b16 %v3572, %v3568
    %v3957 = vpack.c.b16 %v3573, %v3569
    %v3958 = vpack.c.b16 %v3578, %v3574
    %v3959 = vpack.c.b16 %v3579, %v3575
    %v3960 = vpack.c.b16 %v3580, %v3576
    %v3961 = vpack.c.b16 %v3581, %v3577
    %v3962 = vpack.c.b16 %v3586, %v3582
    %v3963 = vpack.c.b16 %v3587, %v3583
    %v3964 = vpack.c.b16 %v3588, %v3584
    %v3965 = vpack.c.b16 %v3589, %v3585
    %v3966 = vpack.c.b16 %v3594, %v3590
    %v3967 = vpack.c.b16 %v3595, %v3591
    %v3968 = vpack.c.b16 %v3596, %v3592
    %v3969 = vpack.c.b16 %v3597, %v3593
    %v3970 = vpack.c.b16 %v3602, %v3598
    %v3971 = vpack.c.b16 %v3603, %v3599
    %v3972 = vpack.c.b16 %v3604, %v3600
    %v3973 = vpack.c.b16 %v3605, %v3601
    %v3974 = vpack.c.b16 %v3610, %v3606
    %v3975 = vpack.c.b16 %v3611, %v3607
    %v3976 = vpack.c.b16 %v3612, %v3608
    %v3977 = vpack.c.b16 %v3613, %v3609
    %v3978 = vpack.c.b16 %v3618, %v3614
    %v3979 = vpack.c.b16 %v3619, %v3615
    %v3980 = vpack.c.b16 %v3620, %v3616
    %v3981 = vpack.c.b16 %v3621, %v3617
    %v3982 = vpack.c.b16 %v3626, %v3622
    %v3983 = vpack.c.b16 %v3627, %v3623
    %v3984 = vpack.c.b16 %v3628, %v3624
    %v3985 = vpack.c.b16 %v3629, %v3625
    %v3986 = vpack.c.b16 %v3634, %v3630
    %v3987 = vpack.c.b16 %v3635, %v3631
    %v3988 = vpack.c.b16 %v3636, %v3632
    %v3989 = vpack.c.b16 %v3637, %v3633
    %v3990 = vpack.c.b16 %v3642, %v3638
    %v3991 = vpack.c.b16 %v3643, %v3639
    %v3992 = vpack.c.b16 %v3644, %v3640
    %v3993 = vpack.c.b16 %v3645, %v3641
    %v3994 = vpack.c.b16 %v3650, %v3646
    %v3995 = vpack.c.b16 %v3651, %v3647
    %v3996 = vpack.c.b16 %v3652, %v3648
    %v3997 = vpack.c.b16 %v3653, %v3649
    %v3998 = vpack.c.b16 %v3658, %v3654
    %v3999 = vpack.c.b16 %v3659, %v3655
    %v4000 = vpack.c.b16 %v3660, %v3656
    %v4001 = vpack.c.b16 %v3661, %v3657
    %v4002 = vpack.c.b16 %v3666, %v3662
    %v4003 = vpack.c.b16 %v3667, %v3663
    %v4004 = vpack.c.b16 %v3668, %v3664
    %v4005 = vpack.c.b16 %v3669, %v3665
    %v4006 = vpack.c.b16 %v3674, %v3670
    %v4007 = vpack.c.b16 %v3675, %v3671
    %v4008 = vpack.c.b16 %v3676, %v3672
    %v4009 = vpack.c.b16 %v3677, %v3673
    %v4010 = vpack.c.b16 %v3682, %v3678
    %v4011 = vpack.c.b16 %v3683, %v3679
    %v4012 = vpack.c.b16 %v3684, %v3680
    %v4013 = vpack.c.b16 %v3685, %v3681
    %v4014 = vpack.c.b16 %v3690, %v3686
    %v4015 = vpack.c.b16 %v3691, %v3687
    %v4016 = vpack.c.b16 %v3692, %v3688
    %v4017 = vpack.c.b16 %v3693, %v3689
    %v4018 = vpack.c.b16 %v3698, %v3694
    %v4019 = vpack.c.b16 %v3699, %v3695
    %v4020 = vpack.c.b16 %v3700, %v3696
    %v4021 = vpack.c.b16 %v3701, %v3697
    %v4022 = vpack.c.b16 %v3706, %v3702
    %v4023 = vpack.c.b16 %v3707, %v3703
    %v4024 = vpack.c.b16 %v3708, %v3704
    %v4025 = vpack.c.b16 %v3709, %v3705
    %v4026 = vpack.c.b16 %v3714, %v3710
    %v4027 = vpack.c.b16 %v3715, %v3711
    %v4028 = vpack.c.b16 %v3716, %v3712
    %v4029 = vpack.c.b16 %v3717, %v3713
    %v4030 = vpack.c.b16 %v3722, %v3718
    %v4031 = vpack.c.b16 %v3723, %v3719
    %v4032 = vpack.c.b16 %v3724, %v3720
    %v4033 = vpack.c.b16 %v3725, %v3721
    %v4034 = vpack.c.b16 %v3730, %v3726
    %v4035 = vpack.c.b16 %v3731, %v3727
    %v4036 = vpack.c.b16 %v3732, %v3728
    %v4037 = vpack.c.b16 %v3733, %v3729
    %v4038 = vpack.c.b16 %v3738, %v3734
    %v4039 = vpack.c.b16 %v3739, %v3735
    %v4040 = vpack.c.b16 %v3740, %v3736
    %v4041 = vpack.c.b16 %v3741, %v3737
    %v4042 = vpack.c.b16 %v3746, %v3742
    %v4043 = vpack.c.b16 %v3747, %v3743
    %v4044 = vpack.c.b16 %v3748, %v3744
    %v4045 = vpack.c.b16 %v3749, %v3745
    %v4046 = vpack.c.b16 %v3754, %v3750
    %v4047 = vpack.c.b16 %v3755, %v3751
    %v4048 = vpack.c.b16 %v3756, %v3752
    %v4049 = vpack.c.b16 %v3757, %v3753
    %v4050 = vpack.c.b16 %v3762, %v3758
    %v4051 = vpack.c.b16 %v3763, %v3759
    %v4052 = vpack.c.b16 %v3764, %v3760
    %v4053 = vpack.c.b16 %v3765, %v3761
    %4342 = vmatprep.subr.bf16.mxu0 %v3767
    %4343 = vmatpush1.bf16.msra.mxu0 %v3766
    %4344 = vmatprep.subr.bf16.mxu0 %v3771
    %4345 = vmatpush1.bf16.msra.mxu0 %v3770
    %4346 = vmatprep.subr.bf16.mxu0 %v3775
    %4347 = vmatpush1.bf16.msra.mxu0 %v3774
    %4348 = vmatprep.subr.bf16.mxu0 %v3779
    %4349 = vmatpush1.bf16.msra.mxu0 %v3778
    %4350 = vmatprep.subr.bf16.mxu0 %v3783
    %4351 = vmatpush1.bf16.msra.mxu0 %v3782
    %4352 = vmatprep.subr.bf16.mxu0 %v3787
    %4353 = vmatpush1.bf16.msra.mxu0 %v3786
    %4354 = vmatprep.subr.bf16.mxu0 %v3791
    %4355 = vmatpush1.bf16.msra.mxu0 %v3790
    %4356 = vmatprep.subr.bf16.mxu0 %v3795
    %4357 = vmatpush1.bf16.msra.mxu0 %v3794
    %4358 = vmatprep.subr.bf16.mxu0 %v3799
    %4359 = vmatpush1.bf16.msra.mxu0 %v3798
    %4360 = vmatprep.subr.bf16.mxu0 %v3803
    %4361 = vmatpush1.bf16.msra.mxu0 %v3802
    %4362 = vmatprep.subr.bf16.mxu0 %v3807
    %4363 = vmatpush1.bf16.msra.mxu0 %v3806
    %4364 = vmatprep.subr.bf16.mxu0 %v3811
    %4365 = vmatpush1.bf16.msra.mxu0 %v3810
    %4366 = vmatprep.subr.bf16.mxu0 %v3815
    %4367 = vmatpush1.bf16.msra.mxu0 %v3814
    %4368 = vmatprep.subr.bf16.mxu0 %v3819
    %4369 = vmatpush1.bf16.msra.mxu0 %v3818
    %4370 = vmatprep.subr.bf16.mxu0 %v3823
    %4371 = vmatpush1.bf16.msra.mxu0 %v3822
    %4372 = vmatprep.subr.bf16.mxu0 %v3827
    %4373 = vmatpush1.bf16.msra.mxu0 %v3826
    %4374 = vmatprep.mubr.bf16.mxu0 %v2885
    %4375 = vmatmul.mubr.bf16.gmra.mrb[0].mxu0 %v2884
    %v4376 = vpop.f32.mrb[0].mxu0
    %v4377 = vadd.f32 0.0, %v4376
    %v4378 = vpop.f32.mrb[0].mxu0
    %v4379 = vadd.f32 0.0, %v4378
    %v4380 = vpop.f32.mrb[0].mxu0
    %v4381 = vadd.f32 0.0, %v4380
    %v4382 = vpop.f32.mrb[0].mxu0
    %v4383 = vadd.f32 0.0, %v4382
    %4384 = vdwg.mxu0
    %4385 = vmatprep.subr.bf16.mxu0 %v3831
    %4386 = vmatpush1.bf16.msra.mxu0 %v3830
    %4387 = vmatprep.subr.bf16.mxu0 %v3835
    %4388 = vmatpush1.bf16.msra.mxu0 %v3834
    %4389 = vmatprep.subr.bf16.mxu0 %v3839
    %4390 = vmatpush1.bf16.msra.mxu0 %v3838
    %4391 = vmatprep.subr.bf16.mxu0 %v3843
    %4392 = vmatpush1.bf16.msra.mxu0 %v3842
    %4393 = vmatprep.subr.bf16.mxu0 %v3847
    %4394 = vmatpush1.bf16.msra.mxu0 %v3846
    %4395 = vmatprep.subr.bf16.mxu0 %v3851
    %4396 = vmatpush1.bf16.msra.mxu0 %v3850
    %4397 = vmatprep.subr.bf16.mxu0 %v3855
    %4398 = vmatpush1.bf16.msra.mxu0 %v3854
    %4399 = vmatprep.subr.bf16.mxu0 %v3859
    %4400 = vmatpush1.bf16.msra.mxu0 %v3858
    %4401 = vmatprep.subr.bf16.mxu0 %v3863
    %4402 = vmatpush1.bf16.msra.mxu0 %v3862
    %4403 = vmatprep.subr.bf16.mxu0 %v3867
    %4404 = vmatpush1.bf16.msra.mxu0 %v3866
    %4405 = vmatprep.subr.bf16.mxu0 %v3871
    %4406 = vmatpush1.bf16.msra.mxu0 %v3870
    %4407 = vmatprep.subr.bf16.mxu0 %v3875
    %4408 = vmatpush1.bf16.msra.mxu0 %v3874
    %4409 = vmatprep.subr.bf16.mxu0 %v3879
    %4410 = vmatpush1.bf16.msra.mxu0 %v3878
    %4411 = vmatprep.subr.bf16.mxu0 %v3883
    %4412 = vmatpush1.bf16.msra.mxu0 %v3882
    %4413 = vmatprep.subr.bf16.mxu0 %v3887
    %4414 = vmatpush1.bf16.msra.mxu0 %v3886
    %4415 = vmatprep.subr.bf16.mxu0 %v3891
    %4416 = vmatpush1.bf16.msra.mxu0 %v3890
    %4417 = vmatprep.mubr.bf16.mxu0 %v2887
    %4418 = vmatmul.mubr.bf16.gmra.mrb[0].mxu0 %v2886
    %v4419 = vpop.f32.mrb[0].mxu0
    %v4420 = vadd.f32 %v4377, %v4419
    %v4421 = vpop.f32.mrb[0].mxu0
    %v4422 = vadd.f32 %v4379, %v4421
    %v4423 = vpop.f32.mrb[0].mxu0
    %v4424 = vadd.f32 %v4381, %v4423
    %v4425 = vpop.f32.mrb[0].mxu0
    %v4426 = vadd.f32 %v4383, %v4425
    %4427 = vdwg.mxu0
    %4428 = vmatprep.subr.bf16.mxu0 %v3895
    %4429 = vmatpush1.bf16.msra.mxu0 %v3894
    %4430 = vmatprep.subr.bf16.mxu0 %v3899
    %4431 = vmatpush1.bf16.msra.mxu0 %v3898
    %4432 = vmatprep.subr.bf16.mxu0 %v3903
    %4433 = vmatpush1.bf16.msra.mxu0 %v3902
    %4434 = vmatprep.subr.bf16.mxu0 %v3907
    %4435 = vmatpush1.bf16.msra.mxu0 %v3906
    %4436 = vmatprep.subr.bf16.mxu0 %v3911
    %4437 = vmatpush1.bf16.msra.mxu0 %v3910
    %4438 = vmatprep.subr.bf16.mxu0 %v3915
    %4439 = vmatpush1.bf16.msra.mxu0 %v3914
    %4440 = vmatprep.subr.bf16.mxu0 %v3919
    %4441 = vmatpush1.bf16.msra.mxu0 %v3918
    %4442 = vmatprep.subr.bf16.mxu0 %v3923
    %4443 = vmatpush1.bf16.msra.mxu0 %v3922
    %4444 = vmatprep.subr.bf16.mxu0 %v3927
    %4445 = vmatpush1.bf16.msra.mxu0 %v3926
    %4446 = vmatprep.subr.bf16.mxu0 %v3931
    %4447 = vmatpush1.bf16.msra.mxu0 %v3930
    %4448 = vmatprep.subr.bf16.mxu0 %v3935
    %4449 = vmatpush1.bf16.msra.mxu0 %v3934
    %4450 = vmatprep.subr.bf16.mxu0 %v3939
    %4451 = vmatpush1.bf16.msra.mxu0 %v3938
    %4452 = vmatprep.subr.bf16.mxu0 %v3943
    %4453 = vmatpush1.bf16.msra.mxu0 %v3942
    %4454 = vmatprep.subr.bf16.mxu0 %v3947
    %4455 = vmatpush1.bf16.msra.mxu0 %v3946
    %4456 = vmatprep.subr.bf16.mxu0 %v3951
    %4457 = vmatpush1.bf16.msra.mxu0 %v3950
    %4458 = vmatprep.subr.bf16.mxu0 %v3955
    %4459 = vmatpush1.bf16.msra.mxu0 %v3954
    %4460 = vmatprep.mubr.bf16.mxu0 %v2889
    %4461 = vmatmul.mubr.bf16.gmra.mrb[0].mxu0 %v2888
    %v4462 = vpop.f32.mrb[0].mxu0
    %v4463 = vadd.f32 %v4420, %v4462
    %v4464 = vpop.f32.mrb[0].mxu0
    %v4465 = vadd.f32 %v4422, %v4464
    %v4466 = vpop.f32.mrb[0].mxu0
    %v4467 = vadd.f32 %v4424, %v4466
    %v4468 = vpop.f32.mrb[0].mxu0
    %v4469 = vadd.f32 %v4426, %v4468
    %4470 = vdwg.mxu0
    %4471 = vmatprep.subr.bf16.mxu0 %v3959
    %4472 = vmatpush1.bf16.msra.mxu0 %v3958
    %4473 = vmatprep.subr.bf16.mxu0 %v3963
    %4474 = vmatpush1.bf16.msra.mxu0 %v3962
    %4475 = vmatprep.subr.bf16.mxu0 %v3967
    %4476 = vmatpush1.bf16.msra.mxu0 %v3966
    %4477 = vmatprep.subr.bf16.mxu0 %v3971
    %4478 = vmatpush1.bf16.msra.mxu0 %v3970
    %4479 = vmatprep.subr.bf16.mxu0 %v3975
    %4480 = vmatpush1.bf16.msra.mxu0 %v3974
    %4481 = vmatprep.subr.bf16.mxu0 %v3979
    %4482 = vmatpush1.bf16.msra.mxu0 %v3978
    %4483 = vmatprep.subr.bf16.mxu0 %v3983
    %4484 = vmatpush1.bf16.msra.mxu0 %v3982
    %4485 = vmatprep.subr.bf16.mxu0 %v3987
    %4486 = vmatpush1.bf16.msra.mxu0 %v3986
    %4487 = vmatprep.subr.bf16.mxu0 %v3991
    %4488 = vmatpush1.bf16.msra.mxu0 %v3990
    %4489 = vmatprep.subr.bf16.mxu0 %v3995
    %4490 = vmatpush1.bf16.msra.mxu0 %v3994
    %4491 = vmatprep.subr.bf16.mxu0 %v3999
    %4492 = vmatpush1.bf16.msra.mxu0 %v3998
    %4493 = vmatprep.subr.bf16.mxu0 %v4003
    %4494 = vmatpush1.bf16.msra.mxu0 %v4002
    %4495 = vmatprep.subr.bf16.mxu0 %v4007
    %4496 = vmatpush1.bf16.msra.mxu0 %v4006
    %4497 = vmatprep.subr.bf16.mxu0 %v4011
    %4498 = vmatpush1.bf16.msra.mxu0 %v4010
    %4499 = vmatprep.subr.bf16.mxu0 %v4015
    %4500 = vmatpush1.bf16.msra.mxu0 %v4014
    %4501 = vmatprep.subr.bf16.mxu0 %v4019
    %4502 = vmatpush1.bf16.msra.mxu0 %v4018
    %4503 = vmatprep.mubr.bf16.mxu0 %v2891
    %4504 = vmatmul.mubr.bf16.gmra.mrb[0].mxu0 %v2890
    %v4505 = vpop.f32.mrb[0].mxu0
    %v4506 = vadd.f32 %v4463, %v4505
    %v4507 = vpop.f32.mrb[0].mxu0
    %v4508 = vadd.f32 %v4465, %v4507
    %v4509 = vpop.f32.mrb[0].mxu0
    %v4510 = vadd.f32 %v4467, %v4509
    %v4511 = vpop.f32.mrb[0].mxu0
    %v4512 = vadd.f32 %v4469, %v4511
    %4513 = vdwg.mxu0
    %4514 = vmatprep.subr.bf16.mxu0 %v4023
    %4515 = vmatpush1.bf16.msra.mxu0 %v4022
    %4516 = vmatprep.subr.bf16.mxu0 %v4027
    %4517 = vmatpush1.bf16.msra.mxu0 %v4026
    %4518 = vmatprep.subr.bf16.mxu0 %v4031
    %4519 = vmatpush1.bf16.msra.mxu0 %v4030
    %4520 = vmatprep.subr.bf16.mxu0 %v4035
    %4521 = vmatpush1.bf16.msra.mxu0 %v4034
    %4522 = vmatprep.subr.bf16.mxu0 %v4039
    %4523 = vmatpush1.bf16.msra.mxu0 %v4038
    %4524 = vmatprep.subr.bf16.mxu0 %v4043
    %4525 = vmatpush1.bf16.msra.mxu0 %v4042
    %4526 = vmatprep.subr.bf16.mxu0 %v4047
    %4527 = vmatpush1.bf16.msra.mxu0 %v4046
    %4528 = vmatprep.subr.bf16.mxu0 %v4051
    %4529 = vmatpush1.bf16.msra.mxu0 %v4050
    %4530 = vmatprep.subr.bf16.mxu0 0
    %4531 = vmatpush1.bf16.msra.mxu0 0
    %4532 = vmatprep.subr.bf16.mxu0 0
    %4533 = vmatpush1.bf16.msra.mxu0 0
    %4534 = vmatprep.subr.bf16.mxu0 0
    %4535 = vmatpush1.bf16.msra.mxu0 0
    %4536 = vmatprep.subr.bf16.mxu0 0
    %4537 = vmatpush1.bf16.msra.mxu0 0
    %4538 = vmatprep.subr.bf16.mxu0 0
    %4539 = vmatpush1.bf16.msra.mxu0 0
    %4540 = vmatprep.subr.bf16.mxu0 0
    %4541 = vmatpush1.bf16.msra.mxu0 0
    %4542 = vmatprep.subr.bf16.mxu0 0
    %4543 = vmatpush1.bf16.msra.mxu0 0
    %4544 = vmatprep.subr.bf16.mxu0 0
    %4545 = vmatpush1.bf16.msra.mxu0 0
    %4546 = vmatprep.mubr.bf16.mxu0 0
    %4547 = vmatmul.mubr.bf16.gmra.mrb[0].mxu0 %v2892
    %v4548 = vpop.f32.mrb[0].mxu0
    %v4549 = vadd.f32 %v4506, %v4548
    %v4550 = vpop.f32.mrb[0].mxu0
    %v4551 = vadd.f32 %v4508, %v4550
    %v4552 = vpop.f32.mrb[0].mxu0
    %v4553 = vadd.f32 %v4510, %v4552
    %v4554 = vpop.f32.mrb[0].mxu0
    %v4555 = vadd.f32 %v4512, %v4554
    %4556 = vdwg.mxu0
    %4557 = vmatprep.subr.bf16.mxu0 %v3769
    %4558 = vmatpush1.bf16.msra.mxu0 %v3768
    %4559 = vmatprep.subr.bf16.mxu0 %v3773
    %4560 = vmatpush1.bf16.msra.mxu0 %v3772
    %4561 = vmatprep.subr.bf16.mxu0 %v3777
    %4562 = vmatpush1.bf16.msra.mxu0 %v3776
    %4563 = vmatprep.subr.bf16.mxu0 %v3781
    %4564 = vmatpush1.bf16.msra.mxu0 %v3780
    %4565 = vmatprep.subr.bf16.mxu0 %v3785
    %4566 = vmatpush1.bf16.msra.mxu0 %v3784
    %4567 = vmatprep.subr.bf16.mxu0 %v3789
    %4568 = vmatpush1.bf16.msra.mxu0 %v3788
    %4569 = vmatprep.subr.bf16.mxu0 %v3793
    %4570 = vmatpush1.bf16.msra.mxu0 %v3792
    %4571 = vmatprep.subr.bf16.mxu0 %v3797
    %4572 = vmatpush1.bf16.msra.mxu0 %v3796
    %4573 = vmatprep.subr.bf16.mxu0 %v3801
    %4574 = vmatpush1.bf16.msra.mxu0 %v3800
    %4575 = vmatprep.subr.bf16.mxu0 %v3805
    %4576 = vmatpush1.bf16.msra.mxu0 %v3804
    %4577 = vmatprep.subr.bf16.mxu0 %v3809
    %4578 = vmatpush1.bf16.msra.mxu0 %v3808
    %4579 = vmatprep.subr.bf16.mxu0 %v3813
    %4580 = vmatpush1.bf16.msra.mxu0 %v3812
    %4581 = vmatprep.subr.bf16.mxu0 %v3817
    %4582 = vmatpush1.bf16.msra.mxu0 %v3816
    %4583 = vmatprep.subr.bf16.mxu0 %v3821
    %4584 = vmatpush1.bf16.msra.mxu0 %v3820
    %4585 = vmatprep.subr.bf16.mxu0 %v3825
    %4586 = vmatpush1.bf16.msra.mxu0 %v3824
    %4587 = vmatprep.subr.bf16.mxu0 %v3829
    %4588 = vmatpush1.bf16.msra.mxu0 %v3828
    %4589 = vmatprep.mubr.bf16.mxu0 %v2885
    %4590 = vmatmul.mubr.bf16.gmra.mrb[0].mxu0 %v2884
    %v4591 = vpop.f32.mrb[0].mxu0
    %v4592 = vadd.f32 0.0, %v4591
    %v4593 = vpop.f32.mrb[0].mxu0
    %v4594 = vadd.f32 0.0, %v4593
    %v4595 = vpop.f32.mrb[0].mxu0
    %v4596 = vadd.f32 0.0, %v4595
    %v4597 = vpop.f32.mrb[0].mxu0
    %v4598 = vadd.f32 0.0, %v4597
    %4599 = vdwg.mxu0
    %4600 = vmatprep.subr.bf16.mxu0 %v3833
    %4601 = vmatpush1.bf16.msra.mxu0 %v3832
    %4602 = vmatprep.subr.bf16.mxu0 %v3837
    %4603 = vmatpush1.bf16.msra.mxu0 %v3836
    %4604 = vmatprep.subr.bf16.mxu0 %v3841
    %4605 = vmatpush1.bf16.msra.mxu0 %v3840
    %4606 = vmatprep.subr.bf16.mxu0 %v3845
    %4607 = vmatpush1.bf16.msra.mxu0 %v3844
    %4608 = vmatprep.subr.bf16.mxu0 %v3849
    %4609 = vmatpush1.bf16.msra.mxu0 %v3848
    %4610 = vmatprep.subr.bf16.mxu0 %v3853
    %4611 = vmatpush1.bf16.msra.mxu0 %v3852
    %4612 = vmatprep.subr.bf16.mxu0 %v3857
    %4613 = vmatpush1.bf16.msra.mxu0 %v3856
    %4614 = vmatprep.subr.bf16.mxu0 %v3861
    %4615 = vmatpush1.bf16.msra.mxu0 %v3860
    %4616 = vmatprep.subr.bf16.mxu0 %v3865
    %4617 = vmatpush1.bf16.msra.mxu0 %v3864
    %4618 = vmatprep.subr.bf16.mxu0 %v3869
    %4619 = vmatpush1.bf16.msra.mxu0 %v3868
    %4620 = vmatprep.subr.bf16.mxu0 %v3873
    %4621 = vmatpush1.bf16.msra.mxu0 %v3872
    %4622 = vmatprep.subr.bf16.mxu0 %v3877
    %4623 = vmatpush1.bf16.msra.mxu0 %v3876
    %4624 = vmatprep.subr.bf16.mxu0 %v3881
    %4625 = vmatpush1.bf16.msra.mxu0 %v3880
    %4626 = vmatprep.subr.bf16.mxu0 %v3885
    %4627 = vmatpush1.bf16.msra.mxu0 %v3884
    %4628 = vmatprep.subr.bf16.mxu0 %v3889
    %4629 = vmatpush1.bf16.msra.mxu0 %v3888
    %4630 = vmatprep.subr.bf16.mxu0 %v3893
    %4631 = vmatpush1.bf16.msra.mxu0 %v3892
    %4632 = vmatprep.mubr.bf16.mxu0 %v2887
    %4633 = vmatmul.mubr.bf16.gmra.mrb[0].mxu0 %v2886
    %v4634 = vpop.f32.mrb[0].mxu0
    %v4635 = vadd.f32 %v4592, %v4634
    %v4636 = vpop.f32.mrb[0].mxu0
    %v4637 = vadd.f32 %v4594, %v4636
    %v4638 = vpop.f32.mrb[0].mxu0
    %v4639 = vadd.f32 %v4596, %v4638
    %v4640 = vpop.f32.mrb[0].mxu0
    %v4641 = vadd.f32 %v4598, %v4640
    %4642 = vdwg.mxu0
    %4643 = vmatprep.subr.bf16.mxu0 %v3897
    %4644 = vmatpush1.bf16.msra.mxu0 %v3896
    %4645 = vmatprep.subr.bf16.mxu0 %v3901
    %4646 = vmatpush1.bf16.msra.mxu0 %v3900
    %4647 = vmatprep.subr.bf16.mxu0 %v3905
    %4648 = vmatpush1.bf16.msra.mxu0 %v3904
    %4649 = vmatprep.subr.bf16.mxu0 %v3909
    %4650 = vmatpush1.bf16.msra.mxu0 %v3908
    %4651 = vmatprep.subr.bf16.mxu0 %v3913
    %4652 = vmatpush1.bf16.msra.mxu0 %v3912
    %4653 = vmatprep.subr.bf16.mxu0 %v3917
    %4654 = vmatpush1.bf16.msra.mxu0 %v3916
    %4655 = vmatprep.subr.bf16.mxu0 %v3921
    %4656 = vmatpush1.bf16.msra.mxu0 %v3920
    %4657 = vmatprep.subr.bf16.mxu0 %v3925
    %4658 = vmatpush1.bf16.msra.mxu0 %v3924
    %4659 = vmatprep.subr.bf16.mxu0 %v3929
    %4660 = vmatpush1.bf16.msra.mxu0 %v3928
    %4661 = vmatprep.subr.bf16.mxu0 %v3933
    %4662 = vmatpush1.bf16.msra.mxu0 %v3932
    %4663 = vmatprep.subr.bf16.mxu0 %v3937
    %4664 = vmatpush1.bf16.msra.mxu0 %v3936
    %4665 = vmatprep.subr.bf16.mxu0 %v3941
    %4666 = vmatpush1.bf16.msra.mxu0 %v3940
    %4667 = vmatprep.subr.bf16.mxu0 %v3945
    %4668 = vmatpush1.bf16.msra.mxu0 %v3944
    %4669 = vmatprep.subr.bf16.mxu0 %v3949
    %4670 = vmatpush1.bf16.msra.mxu0 %v3948
    %4671 = vmatprep.subr.bf16.mxu0 %v3953
    %4672 = vmatpush1.bf16.msra.mxu0 %v3952
    %4673 = vmatprep.subr.bf16.mxu0 %v3957
    %4674 = vmatpush1.bf16.msra.mxu0 %v3956
    %4675 = vmatprep.mubr.bf16.mxu0 %v2889
    %4676 = vmatmul.mubr.bf16.gmra.mrb[0].mxu0 %v2888
    %v4677 = vpop.f32.mrb[0].mxu0
    %v4678 = vadd.f32 %v4635, %v4677
    %v4679 = vpop.f32.mrb[0].mxu0
    %v4680 = vadd.f32 %v4637, %v4679
    %v4681 = vpop.f32.mrb[0].mxu0
    %v4682 = vadd.f32 %v4639, %v4681
    %v4683 = vpop.f32.mrb[0].mxu0
    %v4684 = vadd.f32 %v4641, %v4683
    %4685 = vdwg.mxu0
    %4686 = vmatprep.subr.bf16.mxu0 %v3961
    %4687 = vmatpush1.bf16.msra.mxu0 %v3960
    %4688 = vmatprep.subr.bf16.mxu0 %v3965
    %4689 = vmatpush1.bf16.msra.mxu0 %v3964
    %4690 = vmatprep.subr.bf16.mxu0 %v3969
    %4691 = vmatpush1.bf16.msra.mxu0 %v3968
    %4692 = vmatprep.subr.bf16.mxu0 %v3973
    %4693 = vmatpush1.bf16.msra.mxu0 %v3972
    %4694 = vmatprep.subr.bf16.mxu0 %v3977
    %4695 = vmatpush1.bf16.msra.mxu0 %v3976
    %4696 = vmatprep.subr.bf16.mxu0 %v3981
    %4697 = vmatpush1.bf16.msra.mxu0 %v3980
    %4698 = vmatprep.subr.bf16.mxu0 %v3985
    %4699 = vmatpush1.bf16.msra.mxu0 %v3984
    %4700 = vmatprep.subr.bf16.mxu0 %v3989
    %4701 = vmatpush1.bf16.msra.mxu0 %v3988
    %4702 = vmatprep.subr.bf16.mxu0 %v3993
    %4703 = vmatpush1.bf16.msra.mxu0 %v3992
    %4704 = vmatprep.subr.bf16.mxu0 %v3997
    %4705 = vmatpush1.bf16.msra.mxu0 %v3996
    %4706 = vmatprep.subr.bf16.mxu0 %v4001
    %4707 = vmatpush1.bf16.msra.mxu0 %v4000
    %4708 = vmatprep.subr.bf16.mxu0 %v4005
    %4709 = vmatpush1.bf16.msra.mxu0 %v4004
    %4710 = vmatprep.subr.bf16.mxu0 %v4009
    %4711 = vmatpush1.bf16.msra.mxu0 %v4008
    %4712 = vmatprep.subr.bf16.mxu0 %v4013
    %4713 = vmatpush1.bf16.msra.mxu0 %v4012
    %4714 = vmatprep.subr.bf16.mxu0 %v4017
    %4715 = vmatpush1.bf16.msra.mxu0 %v4016
    %4716 = vmatprep.subr.bf16.mxu0 %v4021
    %4717 = vmatpush1.bf16.msra.mxu0 %v4020
    %4718 = vmatprep.mubr.bf16.mxu0 %v2891
    %4719 = vmatmul.mubr.bf16.gmra.mrb[0].mxu0 %v2890
    %v4720 = vpop.f32.mrb[0].mxu0
    %v4721 = vadd.f32 %v4678, %v4720
    %v4722 = vpop.f32.mrb[0].mxu0
    %v4723 = vadd.f32 %v4680, %v4722
    %v4724 = vpop.f32.mrb[0].mxu0
    %v4725 = vadd.f32 %v4682, %v4724
    %v4726 = vpop.f32.mrb[0].mxu0
    %v4727 = vadd.f32 %v4684, %v4726
    %4728 = vdwg.mxu0
    %4729 = vmatprep.subr.bf16.mxu0 %v4025
    %4730 = vmatpush1.bf16.msra.mxu0 %v4024
    %4731 = vmatprep.subr.bf16.mxu0 %v4029
    %4732 = vmatpush1.bf16.msra.mxu0 %v4028
    %4733 = vmatprep.subr.bf16.mxu0 %v4033
    %4734 = vmatpush1.bf16.msra.mxu0 %v4032
    %4735 = vmatprep.subr.bf16.mxu0 %v4037
    %4736 = vmatpush1.bf16.msra.mxu0 %v4036
    %4737 = vmatprep.subr.bf16.mxu0 %v4041
    %4738 = vmatpush1.bf16.msra.mxu0 %v4040
    %4739 = vmatprep.subr.bf16.mxu0 %v4045
    %4740 = vmatpush1.bf16.msra.mxu0 %v4044
    %4741 = vmatprep.subr.bf16.mxu0 %v4049
    %4742 = vmatpush1.bf16.msra.mxu0 %v4048
    %4743 = vmatprep.subr.bf16.mxu0 %v4053
    %4744 = vmatpush1.bf16.msra.mxu0 %v4052
    %4745 = vmatprep.subr.bf16.mxu0 0
    %4746 = vmatpush1.bf16.msra.mxu0 0
    %4747 = vmatprep.subr.bf16.mxu0 0
    %4748 = vmatpush1.bf16.msra.mxu0 0
    %4749 = vmatprep.subr.bf16.mxu0 0
    %4750 = vmatpush1.bf16.msra.mxu0 0
    %4751 = vmatprep.subr.bf16.mxu0 0
    %4752 = vmatpush1.bf16.msra.mxu0 0
    %4753 = vmatprep.subr.bf16.mxu0 0
    %4754 = vmatpush1.bf16.msra.mxu0 0
    %4755 = vmatprep.subr.bf16.mxu0 0
    %4756 = vmatpush1.bf16.msra.mxu0 0
    %4757 = vmatprep.subr.bf16.mxu0 0
    %4758 = vmatpush1.bf16.msra.mxu0 0
    %4759 = vmatprep.subr.bf16.mxu0 0
    %4760 = vmatpush1.bf16.msra.mxu0 0
    %4761 = vmatprep.mubr.bf16.mxu0 0
    %4762 = vmatmul.mubr.bf16.gmra.mrb[0].mxu0 %v2892
    %v4763 = vpop.f32.mrb[0].mxu0
    %v4764 = vadd.f32 %v4721, %v4763
    %v4765 = vpop.f32.mrb[0].mxu0
    %v4766 = vadd.f32 %v4723, %v4765
    %v4767 = vpop.f32.mrb[0].mxu0
    %v4768 = vadd.f32 %v4725, %v4767
    %v4769 = vpop.f32.mrb[0].mxu0
    %v4770 = vadd.f32 %v4727, %v4769
    %4771 = vdwg.mxu0
    %v4772 = vunpack.c.l.b16 %v1977
    %v4773 = vunpack.c.h.b16 %v1977
    %v4774 = vunpack.c.l.b16 %v1981
    %v4775 = vunpack.c.h.b16 %v1981
    %v4776 = vunpack.c.l.b16 %v1985
    %v4777 = vunpack.c.h.b16 %v1985
    %v4778 = vunpack.c.l.b16 %v1989
    %v4779 = vunpack.c.h.b16 %v1989
    %v4780 = vunpack.c.l.b16 %v1993
    %v4781 = vunpack.c.l.b16 %v1997
    %v4782 = vunpack.c.h.b16 %v1997
    %v4783 = vunpack.c.l.b16 %v2001
    %v4784 = vunpack.c.h.b16 %v2001
    %v4785 = vunpack.c.l.b16 %v2005
    %v4786 = vunpack.c.h.b16 %v2005
    %v4787 = vunpack.c.l.b16 %v2009
    %v4788 = vunpack.c.h.b16 %v2009
    %v4789 = vunpack.c.l.b16 %v2013
    %v4790 = vpack.c.b16 %v4781, %v4772
    %v4791 = vpack.c.b16 %v4782, %v4773
    %v4792 = vpack.c.b16 %v4783, %v4774
    %v4793 = vpack.c.b16 %v4784, %v4775
    %v4794 = vpack.c.b16 %v4785, %v4776
    %v4795 = vpack.c.b16 %v4786, %v4777
    %v4796 = vpack.c.b16 %v4787, %v4778
    %v4797 = vpack.c.b16 %v4788, %v4779
    %v4798 = vpack.c.b16 %v4789, %v4780
    %v5096 = vunpack.c.l.b16 %v2014
    %v5097 = vunpack.c.h.b16 %v2014
    %v5098 = vunpack.c.l.b16 %v2015
    %v5099 = vunpack.c.h.b16 %v2015
    %v5100 = vunpack.c.l.b16 %v2016
    %v5101 = vunpack.c.h.b16 %v2016
    %v5102 = vunpack.c.l.b16 %v2017
    %v5103 = vunpack.c.h.b16 %v2017
    %v5104 = vunpack.c.l.b16 %v2018
    %v5105 = vunpack.c.h.b16 %v2018
    %v5106 = vunpack.c.l.b16 %v2019
    %v5107 = vunpack.c.h.b16 %v2019
    %v5108 = vunpack.c.l.b16 %v2020
    %v5109 = vunpack.c.h.b16 %v2020
    %v5110 = vunpack.c.l.b16 %v2021
    %v5111 = vunpack.c.h.b16 %v2021
    %v5112 = vunpack.c.l.b16 %v2022
    %v5113 = vunpack.c.h.b16 %v2022
    %v5114 = vunpack.c.l.b16 %v2023
    %v5115 = vunpack.c.h.b16 %v2023
    %v5116 = vunpack.c.l.b16 %v2024
    %v5117 = vunpack.c.h.b16 %v2024
    %v5118 = vunpack.c.l.b16 %v2025
    %v5119 = vunpack.c.h.b16 %v2025
    %v5120 = vunpack.c.l.b16 %v2026
    %v5121 = vunpack.c.h.b16 %v2026
    %v5122 = vunpack.c.l.b16 %v2027
    %v5123 = vunpack.c.h.b16 %v2027
    %v5124 = vunpack.c.l.b16 %v2028
    %v5125 = vunpack.c.h.b16 %v2028
    %v5126 = vunpack.c.l.b16 %v2029
    %v5127 = vunpack.c.h.b16 %v2029
    %v5128 = vunpack.c.l.b16 %v2030
    %v5129 = vunpack.c.h.b16 %v2030
    %v5130 = vunpack.c.l.b16 %v2031
    %v5131 = vunpack.c.h.b16 %v2031
    %v5132 = vunpack.c.l.b16 %v2032
    %v5133 = vunpack.c.h.b16 %v2032
    %v5134 = vunpack.c.l.b16 %v2033
    %v5135 = vunpack.c.h.b16 %v2033
    %v5136 = vunpack.c.l.b16 %v2034
    %v5137 = vunpack.c.h.b16 %v2034
    %v5138 = vunpack.c.l.b16 %v2035
    %v5139 = vunpack.c.h.b16 %v2035
    %v5140 = vunpack.c.l.b16 %v2036
    %v5141 = vunpack.c.h.b16 %v2036
    %v5142 = vunpack.c.l.b16 %v2037
    %v5143 = vunpack.c.h.b16 %v2037
    %v5144 = vunpack.c.l.b16 %v2038
    %v5145 = vunpack.c.h.b16 %v2038
    %v5146 = vunpack.c.l.b16 %v2039
    %v5147 = vunpack.c.h.b16 %v2039
    %v5148 = vunpack.c.l.b16 %v2040
    %v5149 = vunpack.c.h.b16 %v2040
    %v5150 = vunpack.c.l.b16 %v2041
    %v5151 = vunpack.c.h.b16 %v2041
    %v5152 = vunpack.c.l.b16 %v2042
    %v5153 = vunpack.c.h.b16 %v2042
    %v5154 = vunpack.c.l.b16 %v2043
    %v5155 = vunpack.c.h.b16 %v2043
    %v5156 = vunpack.c.l.b16 %v2044
    %v5157 = vunpack.c.h.b16 %v2044
    %v5158 = vunpack.c.l.b16 %v2045
    %v5159 = vunpack.c.h.b16 %v2045
    %v5160 = vunpack.c.l.b16 %v2046
    %v5161 = vunpack.c.h.b16 %v2046
    %v5162 = vunpack.c.l.b16 %v2047
    %v5163 = vunpack.c.h.b16 %v2047
    %v5164 = vunpack.c.l.b16 %v2048
    %v5165 = vunpack.c.h.b16 %v2048
    %v5166 = vunpack.c.l.b16 %v2049
    %v5167 = vunpack.c.h.b16 %v2049
    %v5168 = vunpack.c.l.b16 %v2050
    %v5169 = vunpack.c.h.b16 %v2050
    %v5170 = vunpack.c.l.b16 %v2051
    %v5171 = vunpack.c.h.b16 %v2051
    %v5172 = vunpack.c.l.b16 %v2052
    %v5173 = vunpack.c.h.b16 %v2052
    %v5174 = vunpack.c.l.b16 %v2053
    %v5175 = vunpack.c.h.b16 %v2053
    %v5176 = vunpack.c.l.b16 %v2054
    %v5177 = vunpack.c.h.b16 %v2054
    %v5178 = vunpack.c.l.b16 %v2055
    %v5179 = vunpack.c.h.b16 %v2055
    %v5180 = vunpack.c.l.b16 %v2056
    %v5181 = vunpack.c.h.b16 %v2056
    %v5182 = vunpack.c.l.b16 %v2057
    %v5183 = vunpack.c.h.b16 %v2057
    %v5184 = vunpack.c.l.b16 %v2058
    %v5185 = vunpack.c.h.b16 %v2058
    %v5186 = vunpack.c.l.b16 %v2059
    %v5187 = vunpack.c.h.b16 %v2059
    %v5188 = vunpack.c.l.b16 %v2060
    %v5189 = vunpack.c.h.b16 %v2060
    %v5190 = vunpack.c.l.b16 %v2061
    %v5191 = vunpack.c.h.b16 %v2061
    %v5192 = vunpack.c.l.b16 %v2062
    %v5193 = vunpack.c.h.b16 %v2062
    %v5194 = vunpack.c.l.b16 %v2063
    %v5195 = vunpack.c.h.b16 %v2063
    %v5196 = vunpack.c.l.b16 %v2064
    %v5197 = vunpack.c.h.b16 %v2064
    %v5198 = vunpack.c.l.b16 %v2065
    %v5199 = vunpack.c.h.b16 %v2065
    %v5200 = vunpack.c.l.b16 %v2066
    %v5201 = vunpack.c.h.b16 %v2066
    %v5202 = vunpack.c.l.b16 %v2067
    %v5203 = vunpack.c.h.b16 %v2067
    %v5204 = vunpack.c.l.b16 %v2068
    %v5205 = vunpack.c.h.b16 %v2068
    %v5206 = vunpack.c.l.b16 %v2069
    %v5207 = vunpack.c.h.b16 %v2069
    %v5208 = vunpack.c.l.b16 %v2070
    %v5209 = vunpack.c.h.b16 %v2070
    %v5210 = vunpack.c.l.b16 %v2071
    %v5211 = vunpack.c.h.b16 %v2071
    %v5212 = vunpack.c.l.b16 %v2072
    %v5213 = vunpack.c.h.b16 %v2072
    %v5214 = vunpack.c.l.b16 %v2073
    %v5215 = vunpack.c.h.b16 %v2073
    %v5216 = vunpack.c.l.b16 %v2074
    %v5217 = vunpack.c.h.b16 %v2074
    %v5218 = vunpack.c.l.b16 %v2075
    %v5219 = vunpack.c.h.b16 %v2075
    %v5220 = vunpack.c.l.b16 %v2076
    %v5221 = vunpack.c.h.b16 %v2076
    %v5222 = vunpack.c.l.b16 %v2077
    %v5223 = vunpack.c.h.b16 %v2077
    %v5224 = vunpack.c.l.b16 %v2078
    %v5225 = vunpack.c.h.b16 %v2078
    %v5226 = vunpack.c.l.b16 %v2079
    %v5227 = vunpack.c.h.b16 %v2079
    %v5228 = vunpack.c.l.b16 %v2080
    %v5229 = vunpack.c.h.b16 %v2080
    %v5230 = vunpack.c.l.b16 %v2081
    %v5231 = vunpack.c.h.b16 %v2081
    %v5232 = vunpack.c.l.b16 %v2082
    %v5233 = vunpack.c.h.b16 %v2082
    %v5234 = vunpack.c.l.b16 %v2083
    %v5235 = vunpack.c.h.b16 %v2083
    %v5236 = vunpack.c.l.b16 %v2084
    %v5237 = vunpack.c.h.b16 %v2084
    %v5238 = vunpack.c.l.b16 %v2085
    %v5239 = vunpack.c.h.b16 %v2085
    %v5240 = vunpack.c.l.b16 %v2086
    %v5241 = vunpack.c.h.b16 %v2086
    %v5242 = vunpack.c.l.b16 %v2087
    %v5243 = vunpack.c.h.b16 %v2087
    %v5244 = vunpack.c.l.b16 %v2088
    %v5245 = vunpack.c.h.b16 %v2088
    %v5246 = vunpack.c.l.b16 %v2089
    %v5247 = vunpack.c.h.b16 %v2089
    %v5248 = vunpack.c.l.b16 %v2090
    %v5249 = vunpack.c.h.b16 %v2090
    %v5250 = vunpack.c.l.b16 %v2091
    %v5251 = vunpack.c.h.b16 %v2091
    %v5252 = vunpack.c.l.b16 %v2092
    %v5253 = vunpack.c.h.b16 %v2092
    %v5254 = vunpack.c.l.b16 %v2093
    %v5255 = vunpack.c.h.b16 %v2093
    %v5256 = vunpack.c.l.b16 %v2094
    %v5257 = vunpack.c.h.b16 %v2094
    %v5258 = vunpack.c.l.b16 %v2095
    %v5259 = vunpack.c.h.b16 %v2095
    %v5260 = vunpack.c.l.b16 %v2096
    %v5261 = vunpack.c.h.b16 %v2096
    %v5262 = vunpack.c.l.b16 %v2097
    %v5263 = vunpack.c.h.b16 %v2097
    %v5264 = vunpack.c.l.b16 %v2098
    %v5265 = vunpack.c.h.b16 %v2098
    %v5266 = vunpack.c.l.b16 %v2099
    %v5267 = vunpack.c.h.b16 %v2099
    %v5268 = vunpack.c.l.b16 %v2100
    %v5269 = vunpack.c.h.b16 %v2100
    %v5270 = vunpack.c.l.b16 %v2101
    %v5271 = vunpack.c.h.b16 %v2101
    %v5272 = vunpack.c.l.b16 %v2102
    %v5273 = vunpack.c.h.b16 %v2102
    %v5274 = vunpack.c.l.b16 %v2103
    %v5275 = vunpack.c.h.b16 %v2103
    %v5276 = vunpack.c.l.b16 %v2104
    %v5277 = vunpack.c.h.b16 %v2104
    %v5278 = vunpack.c.l.b16 %v2105
    %v5279 = vunpack.c.h.b16 %v2105
    %v5280 = vunpack.c.l.b16 %v2106
    %v5281 = vunpack.c.h.b16 %v2106
    %v5282 = vunpack.c.l.b16 %v2107
    %v5283 = vunpack.c.h.b16 %v2107
    %v5284 = vunpack.c.l.b16 %v2108
    %v5285 = vunpack.c.h.b16 %v2108
    %v5286 = vunpack.c.l.b16 %v2109
    %v5287 = vunpack.c.h.b16 %v2109
    %v5288 = vunpack.c.l.b16 %v2110
    %v5289 = vunpack.c.h.b16 %v2110
    %v5290 = vunpack.c.l.b16 %v2111
    %v5291 = vunpack.c.h.b16 %v2111
    %v5292 = vunpack.c.l.b16 %v2112
    %v5293 = vunpack.c.h.b16 %v2112
    %v5294 = vunpack.c.l.b16 %v2113
    %v5295 = vunpack.c.h.b16 %v2113
    %v5296 = vunpack.c.l.b16 %v2114
    %v5297 = vunpack.c.h.b16 %v2114
    %v5298 = vunpack.c.l.b16 %v2115
    %v5299 = vunpack.c.h.b16 %v2115
    %v5300 = vunpack.c.l.b16 %v2116
    %v5301 = vunpack.c.h.b16 %v2116
    %v5302 = vunpack.c.l.b16 %v2117
    %v5303 = vunpack.c.h.b16 %v2117
    %v5304 = vunpack.c.l.b16 %v2118
    %v5305 = vunpack.c.h.b16 %v2118
    %v5306 = vunpack.c.l.b16 %v2119
    %v5307 = vunpack.c.h.b16 %v2119
    %v5308 = vunpack.c.l.b16 %v2120
    %v5309 = vunpack.c.h.b16 %v2120
    %v5310 = vunpack.c.l.b16 %v2121
    %v5311 = vunpack.c.h.b16 %v2121
    %v5312 = vunpack.c.l.b16 %v2122
    %v5313 = vunpack.c.h.b16 %v2122
    %v5314 = vunpack.c.l.b16 %v2123
    %v5315 = vunpack.c.h.b16 %v2123
    %v5316 = vunpack.c.l.b16 %v2124
    %v5317 = vunpack.c.h.b16 %v2124
    %v5318 = vunpack.c.l.b16 %v2125
    %v5319 = vunpack.c.h.b16 %v2125
    %v5320 = vunpack.c.l.b16 %v2126
    %v5321 = vunpack.c.h.b16 %v2126
    %v5322 = vunpack.c.l.b16 %v2127
    %v5323 = vunpack.c.h.b16 %v2127
    %v5324 = vunpack.c.l.b16 %v2128
    %v5325 = vunpack.c.h.b16 %v2128
    %v5326 = vunpack.c.l.b16 %v2129
    %v5327 = vunpack.c.h.b16 %v2129
    %v5328 = vunpack.c.l.b16 %v2130
    %v5329 = vunpack.c.h.b16 %v2130
    %v5330 = vunpack.c.l.b16 %v2131
    %v5331 = vunpack.c.h.b16 %v2131
    %v5332 = vunpack.c.l.b16 %v2132
    %v5333 = vunpack.c.h.b16 %v2132
    %v5334 = vunpack.c.l.b16 %v2133
    %v5335 = vunpack.c.h.b16 %v2133
    %v5336 = vunpack.c.l.b16 %v2134
    %v5337 = vunpack.c.h.b16 %v2134
    %v5338 = vunpack.c.l.b16 %v2135
    %v5339 = vunpack.c.h.b16 %v2135
    %v5340 = vunpack.c.l.b16 %v2136
    %v5341 = vunpack.c.h.b16 %v2136
    %v5342 = vunpack.c.l.b16 %v2137
    %v5343 = vunpack.c.h.b16 %v2137
    %v5344 = vunpack.c.l.b16 %v2138
    %v5345 = vunpack.c.h.b16 %v2138
    %v5346 = vunpack.c.l.b16 %v2139
    %v5347 = vunpack.c.h.b16 %v2139
    %v5348 = vunpack.c.l.b16 %v2140
    %v5349 = vunpack.c.h.b16 %v2140
    %v5350 = vunpack.c.l.b16 %v2141
    %v5351 = vunpack.c.h.b16 %v2141
    %v5352 = vunpack.c.l.b16 %v2142
    %v5353 = vunpack.c.h.b16 %v2142
    %v5354 = vunpack.c.l.b16 %v2143
    %v5355 = vunpack.c.h.b16 %v2143
    %v5356 = vunpack.c.l.b16 %v2144
    %v5357 = vunpack.c.h.b16 %v2144
    %v5358 = vunpack.c.l.b16 %v2145
    %v5359 = vunpack.c.h.b16 %v2145
    %v5360 = vunpack.c.l.b16 %v2146
    %v5361 = vunpack.c.h.b16 %v2146
    %v5362 = vunpack.c.l.b16 %v2147
    %v5363 = vunpack.c.h.b16 %v2147
    %v5364 = vunpack.c.l.b16 %v2148
    %v5365 = vunpack.c.h.b16 %v2148
    %v5366 = vunpack.c.l.b16 %v2149
    %v5367 = vunpack.c.h.b16 %v2149
    %v5368 = vunpack.c.l.b16 %v2150
    %v5369 = vunpack.c.h.b16 %v2150
    %v5370 = vunpack.c.l.b16 %v2151
    %v5371 = vunpack.c.h.b16 %v2151
    %v5372 = vunpack.c.l.b16 %v2152
    %v5373 = vunpack.c.h.b16 %v2152
    %v5374 = vunpack.c.l.b16 %v2153
    %v5375 = vunpack.c.h.b16 %v2153
    %v5376 = vunpack.c.l.b16 %v2154
    %v5377 = vunpack.c.h.b16 %v2154
    %v5378 = vunpack.c.l.b16 %v2155
    %v5379 = vunpack.c.h.b16 %v2155
    %v5380 = vunpack.c.l.b16 %v2156
    %v5381 = vunpack.c.h.b16 %v2156
    %v5382 = vunpack.c.l.b16 %v2157
    %v5383 = vunpack.c.h.b16 %v2157
    %v5384 = vunpack.c.l.b16 %v2158
    %v5385 = vunpack.c.h.b16 %v2158
    %v5386 = vunpack.c.l.b16 %v2159
    %v5387 = vunpack.c.h.b16 %v2159
    %v5388 = vunpack.c.l.b16 %v2160
    %v5389 = vunpack.c.h.b16 %v2160
    %v5390 = vunpack.c.l.b16 %v2161
    %v5391 = vunpack.c.h.b16 %v2161
    %v5392 = vunpack.c.l.b16 %v2162
    %v5393 = vunpack.c.h.b16 %v2162
    %v5394 = vunpack.c.l.b16 %v2163
    %v5395 = vunpack.c.h.b16 %v2163
    %v5396 = vunpack.c.l.b16 %v2164
    %v5397 = vunpack.c.h.b16 %v2164
    %v5398 = vunpack.c.l.b16 %v2165
    %v5399 = vunpack.c.h.b16 %v2165
    %v5400 = vunpack.c.l.b16 %v2166
    %v5401 = vunpack.c.h.b16 %v2166
    %v5402 = vunpack.c.l.b16 %v2167
    %v5403 = vunpack.c.h.b16 %v2167
    %v5404 = vunpack.c.l.b16 %v2168
    %v5405 = vunpack.c.h.b16 %v2168
    %v5406 = vunpack.c.l.b16 %v2169
    %v5407 = vunpack.c.h.b16 %v2169
    %v5408 = vunpack.c.l.b16 %v2170
    %v5409 = vunpack.c.h.b16 %v2170
    %v5410 = vunpack.c.l.b16 %v2171
    %v5411 = vunpack.c.h.b16 %v2171
    %v5412 = vunpack.c.l.b16 %v2172
    %v5413 = vunpack.c.h.b16 %v2172
    %v5414 = vunpack.c.l.b16 %v2173
    %v5415 = vunpack.c.h.b16 %v2173
    %v5416 = vunpack.c.l.b16 %v2174
    %v5417 = vunpack.c.h.b16 %v2174
    %v5418 = vunpack.c.l.b16 %v2175
    %v5419 = vunpack.c.h.b16 %v2175
    %v5420 = vunpack.c.l.b16 %v2176
    %v5421 = vunpack.c.h.b16 %v2176
    %v5422 = vunpack.c.l.b16 %v2177
    %v5423 = vunpack.c.h.b16 %v2177
    %v5424 = vunpack.c.l.b16 %v2178
    %v5425 = vunpack.c.h.b16 %v2178
    %v5426 = vunpack.c.l.b16 %v2179
    %v5427 = vunpack.c.h.b16 %v2179
    %v5428 = vunpack.c.l.b16 %v2180
    %v5429 = vunpack.c.h.b16 %v2180
    %v5430 = vunpack.c.l.b16 %v2181
    %v5431 = vunpack.c.h.b16 %v2181
    %v5432 = vunpack.c.l.b16 %v2182
    %v5433 = vunpack.c.h.b16 %v2182
    %v5434 = vunpack.c.l.b16 %v2183
    %v5435 = vunpack.c.h.b16 %v2183
    %v5436 = vunpack.c.l.b16 %v2184
    %v5437 = vunpack.c.h.b16 %v2184
    %v5438 = vunpack.c.l.b16 %v2185
    %v5439 = vunpack.c.h.b16 %v2185
    %v5440 = vunpack.c.l.b16 %v2186
    %v5441 = vunpack.c.h.b16 %v2186
    %v5442 = vunpack.c.l.b16 %v2187
    %v5443 = vunpack.c.h.b16 %v2187
    %v5444 = vunpack.c.l.b16 %v2188
    %v5445 = vunpack.c.h.b16 %v2188
    %v5446 = vunpack.c.l.b16 %v2189
    %v5447 = vunpack.c.h.b16 %v2189
    %v5448 = vunpack.c.l.b16 %v2190
    %v5449 = vunpack.c.h.b16 %v2190
    %v5450 = vunpack.c.l.b16 %v2191
    %v5451 = vunpack.c.h.b16 %v2191
    %v5452 = vunpack.c.l.b16 %v2192
    %v5453 = vunpack.c.h.b16 %v2192
    %v5454 = vunpack.c.l.b16 %v2193
    %v5455 = vunpack.c.h.b16 %v2193
    %v5456 = vunpack.c.l.b16 %v2194
    %v5457 = vunpack.c.h.b16 %v2194
    %v5458 = vunpack.c.l.b16 %v2195
    %v5459 = vunpack.c.h.b16 %v2195
    %v5460 = vunpack.c.l.b16 %v2196
    %v5461 = vunpack.c.h.b16 %v2196
    %v5462 = vunpack.c.l.b16 %v2197
    %v5463 = vunpack.c.h.b16 %v2197
    %v5464 = vunpack.c.l.b16 %v2198
    %v5465 = vunpack.c.h.b16 %v2198
    %v5466 = vunpack.c.l.b16 %v2199
    %v5467 = vunpack.c.h.b16 %v2199
    %v5468 = vunpack.c.l.b16 %v2200
    %v5469 = vunpack.c.h.b16 %v2200
    %v5470 = vunpack.c.l.b16 %v2201
    %v5471 = vunpack.c.h.b16 %v2201
    %v5472 = vunpack.c.l.b16 %v2202
    %v5473 = vunpack.c.h.b16 %v2202
    %v5474 = vunpack.c.l.b16 %v2203
    %v5475 = vunpack.c.h.b16 %v2203
    %v5476 = vunpack.c.l.b16 %v2204
    %v5477 = vunpack.c.h.b16 %v2204
    %v5478 = vunpack.c.l.b16 %v2205
    %v5479 = vunpack.c.h.b16 %v2205
    %v5480 = vunpack.c.l.b16 %v2206
    %v5481 = vunpack.c.h.b16 %v2206
    %v5482 = vunpack.c.l.b16 %v2207
    %v5483 = vunpack.c.h.b16 %v2207
    %v5484 = vunpack.c.l.b16 %v2208
    %v5485 = vunpack.c.h.b16 %v2208
    %v5486 = vunpack.c.l.b16 %v2209
    %v5487 = vunpack.c.h.b16 %v2209
    %v5488 = vunpack.c.l.b16 %v2210
    %v5489 = vunpack.c.h.b16 %v2210
    %v5490 = vunpack.c.l.b16 %v2211
    %v5491 = vunpack.c.h.b16 %v2211
    %v5492 = vunpack.c.l.b16 %v2212
    %v5493 = vunpack.c.h.b16 %v2212
    %v5494 = vunpack.c.l.b16 %v2213
    %v5495 = vunpack.c.h.b16 %v2213
    %v5496 = vunpack.c.l.b16 %v2214
    %v5497 = vunpack.c.h.b16 %v2214
    %v5498 = vunpack.c.l.b16 %v2215
    %v5499 = vunpack.c.h.b16 %v2215
    %v5500 = vunpack.c.l.b16 %v2216
    %v5501 = vunpack.c.h.b16 %v2216
    %v5502 = vunpack.c.l.b16 %v2217
    %v5503 = vunpack.c.h.b16 %v2217
    %v5504 = vunpack.c.l.b16 %v2218
    %v5505 = vunpack.c.h.b16 %v2218
    %v5506 = vunpack.c.l.b16 %v2219
    %v5507 = vunpack.c.h.b16 %v2219
    %v5508 = vunpack.c.l.b16 %v2220
    %v5509 = vunpack.c.h.b16 %v2220
    %v5510 = vunpack.c.l.b16 %v2221
    %v5511 = vunpack.c.h.b16 %v2221
    %v5512 = vunpack.c.l.b16 %v2222
    %v5513 = vunpack.c.h.b16 %v2222
    %v5514 = vunpack.c.l.b16 %v2223
    %v5515 = vunpack.c.h.b16 %v2223
    %v5516 = vunpack.c.l.b16 %v2224
    %v5517 = vunpack.c.h.b16 %v2224
    %v5518 = vunpack.c.l.b16 %v2225
    %v5519 = vunpack.c.h.b16 %v2225
    %v5520 = vunpack.c.l.b16 %v2226
    %v5521 = vunpack.c.h.b16 %v2226
    %v5522 = vunpack.c.l.b16 %v2227
    %v5523 = vunpack.c.h.b16 %v2227
    %v5524 = vunpack.c.l.b16 %v2228
    %v5525 = vunpack.c.h.b16 %v2228
    %v5526 = vunpack.c.l.b16 %v2229
    %v5527 = vunpack.c.h.b16 %v2229
    %v5528 = vunpack.c.l.b16 %v2230
    %v5529 = vunpack.c.h.b16 %v2230
    %v5530 = vunpack.c.l.b16 %v2231
    %v5531 = vunpack.c.h.b16 %v2231
    %v5532 = vunpack.c.l.b16 %v2232
    %v5533 = vunpack.c.h.b16 %v2232
    %v5534 = vunpack.c.l.b16 %v2233
    %v5535 = vunpack.c.h.b16 %v2233
    %v5536 = vunpack.c.l.b16 %v2234
    %v5537 = vunpack.c.h.b16 %v2234
    %v5538 = vunpack.c.l.b16 %v2235
    %v5539 = vunpack.c.h.b16 %v2235
    %v5540 = vunpack.c.l.b16 %v2236
    %v5541 = vunpack.c.h.b16 %v2236
    %v5542 = vunpack.c.l.b16 %v2237
    %v5543 = vunpack.c.h.b16 %v2237
    %v5544 = vunpack.c.l.b16 %v2238
    %v5545 = vunpack.c.h.b16 %v2238
    %v5546 = vunpack.c.l.b16 %v2239
    %v5547 = vunpack.c.h.b16 %v2239
    %v5548 = vunpack.c.l.b16 %v2240
    %v5549 = vunpack.c.h.b16 %v2240
    %v5550 = vunpack.c.l.b16 %v2241
    %v5551 = vunpack.c.h.b16 %v2241
    %v5552 = vunpack.c.l.b16 %v2242
    %v5553 = vunpack.c.h.b16 %v2242
    %v5554 = vunpack.c.l.b16 %v2243
    %v5555 = vunpack.c.h.b16 %v2243
    %v5556 = vunpack.c.l.b16 %v2244
    %v5557 = vunpack.c.h.b16 %v2244
    %v5558 = vunpack.c.l.b16 %v2245
    %v5559 = vunpack.c.h.b16 %v2245
    %v5560 = vunpack.c.l.b16 %v2246
    %v5561 = vunpack.c.h.b16 %v2246
    %v5562 = vunpack.c.l.b16 %v2247
    %v5563 = vunpack.c.h.b16 %v2247
    %v5564 = vunpack.c.l.b16 %v2248
    %v5565 = vunpack.c.h.b16 %v2248
    %v5566 = vunpack.c.l.b16 %v2249
    %v5567 = vunpack.c.h.b16 %v2249
    %v5568 = vunpack.c.l.b16 %v2250
    %v5569 = vunpack.c.h.b16 %v2250
    %v5570 = vunpack.c.l.b16 %v2251
    %v5571 = vunpack.c.h.b16 %v2251
    %v5572 = vunpack.c.l.b16 %v2252
    %v5573 = vunpack.c.h.b16 %v2252
    %v5574 = vunpack.c.l.b16 %v2253
    %v5575 = vunpack.c.h.b16 %v2253
    %v5576 = vunpack.c.l.b16 %v2254
    %v5577 = vunpack.c.h.b16 %v2254
    %v5578 = vunpack.c.l.b16 %v2255
    %v5579 = vunpack.c.h.b16 %v2255
    %v5580 = vunpack.c.l.b16 %v2256
    %v5581 = vunpack.c.h.b16 %v2256
    %v5582 = vunpack.c.l.b16 %v2257
    %v5583 = vunpack.c.h.b16 %v2257
    %v5584 = vunpack.c.l.b16 %v2258
    %v5585 = vunpack.c.h.b16 %v2258
    %v5586 = vunpack.c.l.b16 %v2259
    %v5587 = vunpack.c.h.b16 %v2259
    %v5588 = vunpack.c.l.b16 %v2260
    %v5589 = vunpack.c.h.b16 %v2260
    %v5590 = vunpack.c.l.b16 %v2261
    %v5591 = vunpack.c.h.b16 %v2261
    %v5592 = vunpack.c.l.b16 %v2262
    %v5593 = vunpack.c.h.b16 %v2262
    %v5594 = vunpack.c.l.b16 %v2263
    %v5595 = vunpack.c.h.b16 %v2263
    %v5596 = vunpack.c.l.b16 %v2264
    %v5597 = vunpack.c.h.b16 %v2264
    %v5598 = vunpack.c.l.b16 %v2265
    %v5599 = vunpack.c.h.b16 %v2265
    %v5600 = vunpack.c.l.b16 %v2266
    %v5601 = vunpack.c.h.b16 %v2266
    %v5602 = vunpack.c.l.b16 %v2267
    %v5603 = vunpack.c.h.b16 %v2267
    %v5604 = vunpack.c.l.b16 %v2268
    %v5605 = vunpack.c.h.b16 %v2268
    %v5606 = vunpack.c.l.b16 %v2269
    %v5607 = vunpack.c.h.b16 %v2269
    %v5608 = vunpack.c.l.b16 %v2270
    %v5609 = vunpack.c.h.b16 %v2270
    %v5610 = vunpack.c.l.b16 %v2271
    %v5611 = vunpack.c.h.b16 %v2271
    %v5612 = vunpack.c.l.b16 %v2272
    %v5613 = vunpack.c.h.b16 %v2272
    %v5614 = vunpack.c.l.b16 %v2273
    %v5615 = vunpack.c.h.b16 %v2273
    %v5616 = vunpack.c.l.b16 %v2274
    %v5617 = vunpack.c.h.b16 %v2274
    %v5618 = vunpack.c.l.b16 %v2275
    %v5619 = vunpack.c.h.b16 %v2275
    %v5620 = vunpack.c.l.b16 %v2276
    %v5621 = vunpack.c.h.b16 %v2276
    %v5622 = vunpack.c.l.b16 %v2277
    %v5623 = vunpack.c.h.b16 %v2277
    %v5624 = vunpack.c.l.b16 %v2278
    %v5625 = vunpack.c.h.b16 %v2278
    %v5626 = vunpack.c.l.b16 %v2279
    %v5627 = vunpack.c.h.b16 %v2279
    %v5628 = vunpack.c.l.b16 %v2280
    %v5629 = vunpack.c.h.b16 %v2280
    %v5630 = vunpack.c.l.b16 %v2281
    %v5631 = vunpack.c.h.b16 %v2281
    %v5632 = vunpack.c.l.b16 %v2282
    %v5633 = vunpack.c.h.b16 %v2282
    %v5634 = vunpack.c.l.b16 %v2283
    %v5635 = vunpack.c.h.b16 %v2283
    %v5636 = vunpack.c.l.b16 %v2284
    %v5637 = vunpack.c.h.b16 %v2284
    %v5638 = vunpack.c.l.b16 %v2285
    %v5639 = vunpack.c.h.b16 %v2285
    %v5640 = vunpack.c.l.b16 %v2286
    %v5641 = vunpack.c.h.b16 %v2286
    %v5642 = vunpack.c.l.b16 %v2287
    %v5643 = vunpack.c.h.b16 %v2287
    %v5644 = vunpack.c.l.b16 %v2288
    %v5645 = vunpack.c.h.b16 %v2288
    %v5646 = vunpack.c.l.b16 %v2289
    %v5647 = vunpack.c.h.b16 %v2289
    %v5648 = vunpack.c.l.b16 %v2290
    %v5649 = vunpack.c.h.b16 %v2290
    %v5650 = vunpack.c.l.b16 %v2291
    %v5651 = vunpack.c.h.b16 %v2291
    %v5652 = vunpack.c.l.b16 %v2292
    %v5653 = vunpack.c.h.b16 %v2292
    %v5654 = vunpack.c.l.b16 %v2293
    %v5655 = vunpack.c.h.b16 %v2293
    %v5656 = vunpack.c.l.b16 %v2294
    %v5657 = vunpack.c.h.b16 %v2294
    %v5658 = vunpack.c.l.b16 %v2295
    %v5659 = vunpack.c.h.b16 %v2295
    %v5660 = vunpack.c.l.b16 %v2296
    %v5661 = vunpack.c.h.b16 %v2296
    %v5662 = vunpack.c.l.b16 %v2297
    %v5663 = vunpack.c.h.b16 %v2297
    %v5664 = vunpack.c.l.b16 %v2298
    %v5665 = vunpack.c.h.b16 %v2298
    %v5666 = vunpack.c.l.b16 %v2299
    %v5667 = vunpack.c.h.b16 %v2299
    %v5668 = vunpack.c.l.b16 %v2300
    %v5669 = vunpack.c.h.b16 %v2300
    %v5670 = vunpack.c.l.b16 %v2301
    %v5671 = vunpack.c.h.b16 %v2301
    %v5672 = vpack.c.b16 %v5100, %v5096
    %v5673 = vpack.c.b16 %v5101, %v5097
    %v5674 = vpack.c.b16 %v5102, %v5098
    %v5675 = vpack.c.b16 %v5103, %v5099
    %v5676 = vpack.c.b16 %v5108, %v5104
    %v5677 = vpack.c.b16 %v5109, %v5105
    %v5678 = vpack.c.b16 %v5110, %v5106
    %v5679 = vpack.c.b16 %v5111, %v5107
    %v5680 = vpack.c.b16 %v5116, %v5112
    %v5681 = vpack.c.b16 %v5117, %v5113
    %v5682 = vpack.c.b16 %v5118, %v5114
    %v5683 = vpack.c.b16 %v5119, %v5115
    %v5684 = vpack.c.b16 %v5124, %v5120
    %v5685 = vpack.c.b16 %v5125, %v5121
    %v5686 = vpack.c.b16 %v5126, %v5122
    %v5687 = vpack.c.b16 %v5127, %v5123
    %v5688 = vpack.c.b16 %v5132, %v5128
    %v5689 = vpack.c.b16 %v5133, %v5129
    %v5690 = vpack.c.b16 %v5134, %v5130
    %v5691 = vpack.c.b16 %v5135, %v5131
    %v5692 = vpack.c.b16 %v5140, %v5136
    %v5693 = vpack.c.b16 %v5141, %v5137
    %v5694 = vpack.c.b16 %v5142, %v5138
    %v5695 = vpack.c.b16 %v5143, %v5139
    %v5696 = vpack.c.b16 %v5148, %v5144
    %v5697 = vpack.c.b16 %v5149, %v5145
    %v5698 = vpack.c.b16 %v5150, %v5146
    %v5699 = vpack.c.b16 %v5151, %v5147
    %v5700 = vpack.c.b16 %v5156, %v5152
    %v5701 = vpack.c.b16 %v5157, %v5153
    %v5702 = vpack.c.b16 %v5158, %v5154
    %v5703 = vpack.c.b16 %v5159, %v5155
    %v5704 = vpack.c.b16 %v5164, %v5160
    %v5705 = vpack.c.b16 %v5165, %v5161
    %v5706 = vpack.c.b16 %v5166, %v5162
    %v5707 = vpack.c.b16 %v5167, %v5163
    %v5708 = vpack.c.b16 %v5172, %v5168
    %v5709 = vpack.c.b16 %v5173, %v5169
    %v5710 = vpack.c.b16 %v5174, %v5170
    %v5711 = vpack.c.b16 %v5175, %v5171
    %v5712 = vpack.c.b16 %v5180, %v5176
    %v5713 = vpack.c.b16 %v5181, %v5177
    %v5714 = vpack.c.b16 %v5182, %v5178
    %v5715 = vpack.c.b16 %v5183, %v5179
    %v5716 = vpack.c.b16 %v5188, %v5184
    %v5717 = vpack.c.b16 %v5189, %v5185
    %v5718 = vpack.c.b16 %v5190, %v5186
    %v5719 = vpack.c.b16 %v5191, %v5187
    %v5720 = vpack.c.b16 %v5196, %v5192
    %v5721 = vpack.c.b16 %v5197, %v5193
    %v5722 = vpack.c.b16 %v5198, %v5194
    %v5723 = vpack.c.b16 %v5199, %v5195
    %v5724 = vpack.c.b16 %v5204, %v5200
    %v5725 = vpack.c.b16 %v5205, %v5201
    %v5726 = vpack.c.b16 %v5206, %v5202
    %v5727 = vpack.c.b16 %v5207, %v5203
    %v5728 = vpack.c.b16 %v5212, %v5208
    %v5729 = vpack.c.b16 %v5213, %v5209
    %v5730 = vpack.c.b16 %v5214, %v5210
    %v5731 = vpack.c.b16 %v5215, %v5211
    %v5732 = vpack.c.b16 %v5220, %v5216
    %v5733 = vpack.c.b16 %v5221, %v5217
    %v5734 = vpack.c.b16 %v5222, %v5218
    %v5735 = vpack.c.b16 %v5223, %v5219
    %v5736 = vpack.c.b16 %v5228, %v5224
    %v5737 = vpack.c.b16 %v5229, %v5225
    %v5738 = vpack.c.b16 %v5230, %v5226
    %v5739 = vpack.c.b16 %v5231, %v5227
    %v5740 = vpack.c.b16 %v5236, %v5232
    %v5741 = vpack.c.b16 %v5237, %v5233
    %v5742 = vpack.c.b16 %v5238, %v5234
    %v5743 = vpack.c.b16 %v5239, %v5235
    %v5744 = vpack.c.b16 %v5244, %v5240
    %v5745 = vpack.c.b16 %v5245, %v5241
    %v5746 = vpack.c.b16 %v5246, %v5242
    %v5747 = vpack.c.b16 %v5247, %v5243
    %v5748 = vpack.c.b16 %v5252, %v5248
    %v5749 = vpack.c.b16 %v5253, %v5249
    %v5750 = vpack.c.b16 %v5254, %v5250
    %v5751 = vpack.c.b16 %v5255, %v5251
    %v5752 = vpack.c.b16 %v5260, %v5256
    %v5753 = vpack.c.b16 %v5261, %v5257
    %v5754 = vpack.c.b16 %v5262, %v5258
    %v5755 = vpack.c.b16 %v5263, %v5259
    %v5756 = vpack.c.b16 %v5268, %v5264
    %v5757 = vpack.c.b16 %v5269, %v5265
    %v5758 = vpack.c.b16 %v5270, %v5266
    %v5759 = vpack.c.b16 %v5271, %v5267
    %v5760 = vpack.c.b16 %v5276, %v5272
    %v5761 = vpack.c.b16 %v5277, %v5273
    %v5762 = vpack.c.b16 %v5278, %v5274
    %v5763 = vpack.c.b16 %v5279, %v5275
    %v5764 = vpack.c.b16 %v5284, %v5280
    %v5765 = vpack.c.b16 %v5285, %v5281
    %v5766 = vpack.c.b16 %v5286, %v5282
    %v5767 = vpack.c.b16 %v5287, %v5283
    %v5768 = vpack.c.b16 %v5292, %v5288
    %v5769 = vpack.c.b16 %v5293, %v5289
    %v5770 = vpack.c.b16 %v5294, %v5290
    %v5771 = vpack.c.b16 %v5295, %v5291
    %v5772 = vpack.c.b16 %v5300, %v5296
    %v5773 = vpack.c.b16 %v5301, %v5297
    %v5774 = vpack.c.b16 %v5302, %v5298
    %v5775 = vpack.c.b16 %v5303, %v5299
    %v5776 = vpack.c.b16 %v5308, %v5304
    %v5777 = vpack.c.b16 %v5309, %v5305
    %v5778 = vpack.c.b16 %v5310, %v5306
    %v5779 = vpack.c.b16 %v5311, %v5307
    %v5780 = vpack.c.b16 %v5316, %v5312
    %v5781 = vpack.c.b16 %v5317, %v5313
    %v5782 = vpack.c.b16 %v5318, %v5314
    %v5783 = vpack.c.b16 %v5319, %v5315
    %v5784 = vpack.c.b16 %v5324, %v5320
    %v5785 = vpack.c.b16 %v5325, %v5321
    %v5786 = vpack.c.b16 %v5326, %v5322
    %v5787 = vpack.c.b16 %v5327, %v5323
    %v5788 = vpack.c.b16 %v5332, %v5328
    %v5789 = vpack.c.b16 %v5333, %v5329
    %v5790 = vpack.c.b16 %v5334, %v5330
    %v5791 = vpack.c.b16 %v5335, %v5331
    %v5792 = vpack.c.b16 %v5340, %v5336
    %v5793 = vpack.c.b16 %v5341, %v5337
    %v5794 = vpack.c.b16 %v5342, %v5338
    %v5795 = vpack.c.b16 %v5343, %v5339
    %v5796 = vpack.c.b16 %v5348, %v5344
    %v5797 = vpack.c.b16 %v5349, %v5345
    %v5798 = vpack.c.b16 %v5350, %v5346
    %v5799 = vpack.c.b16 %v5351, %v5347
    %v5800 = vpack.c.b16 %v5356, %v5352
    %v5801 = vpack.c.b16 %v5357, %v5353
    %v5802 = vpack.c.b16 %v5358, %v5354
    %v5803 = vpack.c.b16 %v5359, %v5355
    %v5804 = vpack.c.b16 %v5364, %v5360
    %v5805 = vpack.c.b16 %v5365, %v5361
    %v5806 = vpack.c.b16 %v5366, %v5362
    %v5807 = vpack.c.b16 %v5367, %v5363
    %v5808 = vpack.c.b16 %v5372, %v5368
    %v5809 = vpack.c.b16 %v5373, %v5369
    %v5810 = vpack.c.b16 %v5374, %v5370
    %v5811 = vpack.c.b16 %v5375, %v5371
    %v5812 = vpack.c.b16 %v5380, %v5376
    %v5813 = vpack.c.b16 %v5381, %v5377
    %v5814 = vpack.c.b16 %v5382, %v5378
    %v5815 = vpack.c.b16 %v5383, %v5379
    %v5816 = vpack.c.b16 %v5388, %v5384
    %v5817 = vpack.c.b16 %v5389, %v5385
    %v5818 = vpack.c.b16 %v5390, %v5386
    %v5819 = vpack.c.b16 %v5391, %v5387
    %v5820 = vpack.c.b16 %v5396, %v5392
    %v5821 = vpack.c.b16 %v5397, %v5393
    %v5822 = vpack.c.b16 %v5398, %v5394
    %v5823 = vpack.c.b16 %v5399, %v5395
    %v5824 = vpack.c.b16 %v5404, %v5400
    %v5825 = vpack.c.b16 %v5405, %v5401
    %v5826 = vpack.c.b16 %v5406, %v5402
    %v5827 = vpack.c.b16 %v5407, %v5403
    %v5828 = vpack.c.b16 %v5412, %v5408
    %v5829 = vpack.c.b16 %v5413, %v5409
    %v5830 = vpack.c.b16 %v5414, %v5410
    %v5831 = vpack.c.b16 %v5415, %v5411
    %v5832 = vpack.c.b16 %v5420, %v5416
    %v5833 = vpack.c.b16 %v5421, %v5417
    %v5834 = vpack.c.b16 %v5422, %v5418
    %v5835 = vpack.c.b16 %v5423, %v5419
    %v5836 = vpack.c.b16 %v5428, %v5424
    %v5837 = vpack.c.b16 %v5429, %v5425
    %v5838 = vpack.c.b16 %v5430, %v5426
    %v5839 = vpack.c.b16 %v5431, %v5427
    %v5840 = vpack.c.b16 %v5436, %v5432
    %v5841 = vpack.c.b16 %v5437, %v5433
    %v5842 = vpack.c.b16 %v5438, %v5434
    %v5843 = vpack.c.b16 %v5439, %v5435
    %v5844 = vpack.c.b16 %v5444, %v5440
    %v5845 = vpack.c.b16 %v5445, %v5441
    %v5846 = vpack.c.b16 %v5446, %v5442
    %v5847 = vpack.c.b16 %v5447, %v5443
    %v5848 = vpack.c.b16 %v5452, %v5448
    %v5849 = vpack.c.b16 %v5453, %v5449
    %v5850 = vpack.c.b16 %v5454, %v5450
    %v5851 = vpack.c.b16 %v5455, %v5451
    %v5852 = vpack.c.b16 %v5460, %v5456
    %v5853 = vpack.c.b16 %v5461, %v5457
    %v5854 = vpack.c.b16 %v5462, %v5458
    %v5855 = vpack.c.b16 %v5463, %v5459
    %v5856 = vpack.c.b16 %v5468, %v5464
    %v5857 = vpack.c.b16 %v5469, %v5465
    %v5858 = vpack.c.b16 %v5470, %v5466
    %v5859 = vpack.c.b16 %v5471, %v5467
    %v5860 = vpack.c.b16 %v5476, %v5472
    %v5861 = vpack.c.b16 %v5477, %v5473
    %v5862 = vpack.c.b16 %v5478, %v5474
    %v5863 = vpack.c.b16 %v5479, %v5475
    %v5864 = vpack.c.b16 %v5484, %v5480
    %v5865 = vpack.c.b16 %v5485, %v5481
    %v5866 = vpack.c.b16 %v5486, %v5482
    %v5867 = vpack.c.b16 %v5487, %v5483
    %v5868 = vpack.c.b16 %v5492, %v5488
    %v5869 = vpack.c.b16 %v5493, %v5489
    %v5870 = vpack.c.b16 %v5494, %v5490
    %v5871 = vpack.c.b16 %v5495, %v5491
    %v5872 = vpack.c.b16 %v5500, %v5496
    %v5873 = vpack.c.b16 %v5501, %v5497
    %v5874 = vpack.c.b16 %v5502, %v5498
    %v5875 = vpack.c.b16 %v5503, %v5499
    %v5876 = vpack.c.b16 %v5508, %v5504
    %v5877 = vpack.c.b16 %v5509, %v5505
    %v5878 = vpack.c.b16 %v5510, %v5506
    %v5879 = vpack.c.b16 %v5511, %v5507
    %v5880 = vpack.c.b16 %v5516, %v5512
    %v5881 = vpack.c.b16 %v5517, %v5513
    %v5882 = vpack.c.b16 %v5518, %v5514
    %v5883 = vpack.c.b16 %v5519, %v5515
    %v5884 = vpack.c.b16 %v5524, %v5520
    %v5885 = vpack.c.b16 %v5525, %v5521
    %v5886 = vpack.c.b16 %v5526, %v5522
    %v5887 = vpack.c.b16 %v5527, %v5523
    %v5888 = vpack.c.b16 %v5532, %v5528
    %v5889 = vpack.c.b16 %v5533, %v5529
    %v5890 = vpack.c.b16 %v5534, %v5530
    %v5891 = vpack.c.b16 %v5535, %v5531
    %v5892 = vpack.c.b16 %v5540, %v5536
    %v5893 = vpack.c.b16 %v5541, %v5537
    %v5894 = vpack.c.b16 %v5542, %v5538
    %v5895 = vpack.c.b16 %v5543, %v5539
    %v5896 = vpack.c.b16 %v5548, %v5544
    %v5897 = vpack.c.b16 %v5549, %v5545
    %v5898 = vpack.c.b16 %v5550, %v5546
    %v5899 = vpack.c.b16 %v5551, %v5547
    %v5900 = vpack.c.b16 %v5556, %v5552
    %v5901 = vpack.c.b16 %v5557, %v5553
    %v5902 = vpack.c.b16 %v5558, %v5554
    %v5903 = vpack.c.b16 %v5559, %v5555
    %v5904 = vpack.c.b16 %v5564, %v5560
    %v5905 = vpack.c.b16 %v5565, %v5561
    %v5906 = vpack.c.b16 %v5566, %v5562
    %v5907 = vpack.c.b16 %v5567, %v5563
    %v5908 = vpack.c.b16 %v5572, %v5568
    %v5909 = vpack.c.b16 %v5573, %v5569
    %v5910 = vpack.c.b16 %v5574, %v5570
    %v5911 = vpack.c.b16 %v5575, %v5571
    %v5912 = vpack.c.b16 %v5580, %v5576
    %v5913 = vpack.c.b16 %v5581, %v5577
    %v5914 = vpack.c.b16 %v5582, %v5578
    %v5915 = vpack.c.b16 %v5583, %v5579
    %v5916 = vpack.c.b16 %v5588, %v5584
    %v5917 = vpack.c.b16 %v5589, %v5585
    %v5918 = vpack.c.b16 %v5590, %v5586
    %v5919 = vpack.c.b16 %v5591, %v5587
    %v5920 = vpack.c.b16 %v5596, %v5592
    %v5921 = vpack.c.b16 %v5597, %v5593
    %v5922 = vpack.c.b16 %v5598, %v5594
    %v5923 = vpack.c.b16 %v5599, %v5595
    %v5924 = vpack.c.b16 %v5604, %v5600
    %v5925 = vpack.c.b16 %v5605, %v5601
    %v5926 = vpack.c.b16 %v5606, %v5602
    %v5927 = vpack.c.b16 %v5607, %v5603
    %v5928 = vpack.c.b16 %v5612, %v5608
    %v5929 = vpack.c.b16 %v5613, %v5609
    %v5930 = vpack.c.b16 %v5614, %v5610
    %v5931 = vpack.c.b16 %v5615, %v5611
    %v5932 = vpack.c.b16 %v5620, %v5616
    %v5933 = vpack.c.b16 %v5621, %v5617
    %v5934 = vpack.c.b16 %v5622, %v5618
    %v5935 = vpack.c.b16 %v5623, %v5619
    %v5936 = vpack.c.b16 %v5628, %v5624
    %v5937 = vpack.c.b16 %v5629, %v5625
    %v5938 = vpack.c.b16 %v5630, %v5626
    %v5939 = vpack.c.b16 %v5631, %v5627
    %v5940 = vpack.c.b16 %v5636, %v5632
    %v5941 = vpack.c.b16 %v5637, %v5633
    %v5942 = vpack.c.b16 %v5638, %v5634
    %v5943 = vpack.c.b16 %v5639, %v5635
    %v5944 = vpack.c.b16 %v5644, %v5640
    %v5945 = vpack.c.b16 %v5645, %v5641
    %v5946 = vpack.c.b16 %v5646, %v5642
    %v5947 = vpack.c.b16 %v5647, %v5643
    %v5948 = vpack.c.b16 %v5652, %v5648
    %v5949 = vpack.c.b16 %v5653, %v5649
    %v5950 = vpack.c.b16 %v5654, %v5650
    %v5951 = vpack.c.b16 %v5655, %v5651
    %v5952 = vpack.c.b16 %v5660, %v5656
    %v5953 = vpack.c.b16 %v5661, %v5657
    %v5954 = vpack.c.b16 %v5662, %v5658
    %v5955 = vpack.c.b16 %v5663, %v5659
    %v5956 = vpack.c.b16 %v5668, %v5664
    %v5957 = vpack.c.b16 %v5669, %v5665
    %v5958 = vpack.c.b16 %v5670, %v5666
    %v5959 = vpack.c.b16 %v5671, %v5667
    %6248 = vmatprep.subr.bf16.mxu0 %v5673
    %6249 = vmatpush1.bf16.msra.mxu0 %v5672
    %6250 = vmatprep.subr.bf16.mxu0 %v5677
    %6251 = vmatpush1.bf16.msra.mxu0 %v5676
    %6252 = vmatprep.subr.bf16.mxu0 %v5681
    %6253 = vmatpush1.bf16.msra.mxu0 %v5680
    %6254 = vmatprep.subr.bf16.mxu0 %v5685
    %6255 = vmatpush1.bf16.msra.mxu0 %v5684
    %6256 = vmatprep.subr.bf16.mxu0 %v5689
    %6257 = vmatpush1.bf16.msra.mxu0 %v5688
    %6258 = vmatprep.subr.bf16.mxu0 %v5693
    %6259 = vmatpush1.bf16.msra.mxu0 %v5692
    %6260 = vmatprep.subr.bf16.mxu0 %v5697
    %6261 = vmatpush1.bf16.msra.mxu0 %v5696
    %6262 = vmatprep.subr.bf16.mxu0 %v5701
    %6263 = vmatpush1.bf16.msra.mxu0 %v5700
    %6264 = vmatprep.subr.bf16.mxu0 %v5705
    %6265 = vmatpush1.bf16.msra.mxu0 %v5704
    %6266 = vmatprep.subr.bf16.mxu0 %v5709
    %6267 = vmatpush1.bf16.msra.mxu0 %v5708
    %6268 = vmatprep.subr.bf16.mxu0 %v5713
    %6269 = vmatpush1.bf16.msra.mxu0 %v5712
    %6270 = vmatprep.subr.bf16.mxu0 %v5717
    %6271 = vmatpush1.bf16.msra.mxu0 %v5716
    %6272 = vmatprep.subr.bf16.mxu0 %v5721
    %6273 = vmatpush1.bf16.msra.mxu0 %v5720
    %6274 = vmatprep.subr.bf16.mxu0 %v5725
    %6275 = vmatpush1.bf16.msra.mxu0 %v5724
    %6276 = vmatprep.subr.bf16.mxu0 %v5729
    %6277 = vmatpush1.bf16.msra.mxu0 %v5728
    %6278 = vmatprep.subr.bf16.mxu0 %v5733
    %6279 = vmatpush1.bf16.msra.mxu0 %v5732
    %6280 = vmatprep.mubr.bf16.mxu0 %v4791
    %6281 = vmatmul.mubr.bf16.gmra.mrb[0].mxu0 %v4790
    %v6282 = vpop.f32.mrb[0].mxu0
    %v6283 = vadd.f32 %v4549, %v6282
    %v6284 = vpop.f32.mrb[0].mxu0
    %v6285 = vadd.f32 %v4551, %v6284
    %v6286 = vpop.f32.mrb[0].mxu0
    %v6287 = vadd.f32 %v4553, %v6286
    %v6288 = vpop.f32.mrb[0].mxu0
    %v6289 = vadd.f32 %v4555, %v6288
    %6290 = vdwg.mxu0
    %6291 = vmatprep.subr.bf16.mxu0 %v5737
    %6292 = vmatpush1.bf16.msra.mxu0 %v5736
    %6293 = vmatprep.subr.bf16.mxu0 %v5741
    %6294 = vmatpush1.bf16.msra.mxu0 %v5740
    %6295 = vmatprep.subr.bf16.mxu0 %v5745
    %6296 = vmatpush1.bf16.msra.mxu0 %v5744
    %6297 = vmatprep.subr.bf16.mxu0 %v5749
    %6298 = vmatpush1.bf16.msra.mxu0 %v5748
    %6299 = vmatprep.subr.bf16.mxu0 %v5753
    %6300 = vmatpush1.bf16.msra.mxu0 %v5752
    %6301 = vmatprep.subr.bf16.mxu0 %v5757
    %6302 = vmatpush1.bf16.msra.mxu0 %v5756
    %6303 = vmatprep.subr.bf16.mxu0 %v5761
    %6304 = vmatpush1.bf16.msra.mxu0 %v5760
    %6305 = vmatprep.subr.bf16.mxu0 %v5765
    %6306 = vmatpush1.bf16.msra.mxu0 %v5764
    %6307 = vmatprep.subr.bf16.mxu0 %v5769
    %6308 = vmatpush1.bf16.msra.mxu0 %v5768
    %6309 = vmatprep.subr.bf16.mxu0 %v5773
    %6310 = vmatpush1.bf16.msra.mxu0 %v5772
    %6311 = vmatprep.subr.bf16.mxu0 %v5777
    %6312 = vmatpush1.bf16.msra.mxu0 %v5776
    %6313 = vmatprep.subr.bf16.mxu0 %v5781
    %6314 = vmatpush1.bf16.msra.mxu0 %v5780
    %6315 = vmatprep.subr.bf16.mxu0 %v5785
    %6316 = vmatpush1.bf16.msra.mxu0 %v5784
    %6317 = vmatprep.subr.bf16.mxu0 %v5789
    %6318 = vmatpush1.bf16.msra.mxu0 %v5788
    %6319 = vmatprep.subr.bf16.mxu0 %v5793
    %6320 = vmatpush1.bf16.msra.mxu0 %v5792
    %6321 = vmatprep.subr.bf16.mxu0 %v5797
    %6322 = vmatpush1.bf16.msra.mxu0 %v5796
    %6323 = vmatprep.mubr.bf16.mxu0 %v4793
    %6324 = vmatmul.mubr.bf16.gmra.mrb[0].mxu0 %v4792
    %v6325 = vpop.f32.mrb[0].mxu0
    %v6326 = vadd.f32 %v6283, %v6325
    %v6327 = vpop.f32.mrb[0].mxu0
    %v6328 = vadd.f32 %v6285, %v6327
    %v6329 = vpop.f32.mrb[0].mxu0
    %v6330 = vadd.f32 %v6287, %v6329
    %v6331 = vpop.f32.mrb[0].mxu0
    %v6332 = vadd.f32 %v6289, %v6331
    %6333 = vdwg.mxu0
    %6334 = vmatprep.subr.bf16.mxu0 %v5801
    %6335 = vmatpush1.bf16.msra.mxu0 %v5800
    %6336 = vmatprep.subr.bf16.mxu0 %v5805
    %6337 = vmatpush1.bf16.msra.mxu0 %v5804
    %6338 = vmatprep.subr.bf16.mxu0 %v5809
    %6339 = vmatpush1.bf16.msra.mxu0 %v5808
    %6340 = vmatprep.subr.bf16.mxu0 %v5813
    %6341 = vmatpush1.bf16.msra.mxu0 %v5812
    %6342 = vmatprep.subr.bf16.mxu0 %v5817
    %6343 = vmatpush1.bf16.msra.mxu0 %v5816
    %6344 = vmatprep.subr.bf16.mxu0 %v5821
    %6345 = vmatpush1.bf16.msra.mxu0 %v5820
    %6346 = vmatprep.subr.bf16.mxu0 %v5825
    %6347 = vmatpush1.bf16.msra.mxu0 %v5824
    %6348 = vmatprep.subr.bf16.mxu0 %v5829
    %6349 = vmatpush1.bf16.msra.mxu0 %v5828
    %6350 = vmatprep.subr.bf16.mxu0 %v5833
    %6351 = vmatpush1.bf16.msra.mxu0 %v5832
    %6352 = vmatprep.subr.bf16.mxu0 %v5837
    %6353 = vmatpush1.bf16.msra.mxu0 %v5836
    %6354 = vmatprep.subr.bf16.mxu0 %v5841
    %6355 = vmatpush1.bf16.msra.mxu0 %v5840
    %6356 = vmatprep.subr.bf16.mxu0 %v5845
    %6357 = vmatpush1.bf16.msra.mxu0 %v5844
    %6358 = vmatprep.subr.bf16.mxu0 %v5849
    %6359 = vmatpush1.bf16.msra.mxu0 %v5848
    %6360 = vmatprep.subr.bf16.mxu0 %v5853
    %6361 = vmatpush1.bf16.msra.mxu0 %v5852
    %6362 = vmatprep.subr.bf16.mxu0 %v5857
    %6363 = vmatpush1.bf16.msra.mxu0 %v5856
    %6364 = vmatprep.subr.bf16.mxu0 %v5861
    %6365 = vmatpush1.bf16.msra.mxu0 %v5860
    %6366 = vmatprep.mubr.bf16.mxu0 %v4795
    %6367 = vmatmul.mubr.bf16.gmra.mrb[0].mxu0 %v4794
    %v6368 = vpop.f32.mrb[0].mxu0
    %v6369 = vadd.f32 %v6326, %v6368
    %v6370 = vpop.f32.mrb[0].mxu0
    %v6371 = vadd.f32 %v6328, %v6370
    %v6372 = vpop.f32.mrb[0].mxu0
    %v6373 = vadd.f32 %v6330, %v6372
    %v6374 = vpop.f32.mrb[0].mxu0
    %v6375 = vadd.f32 %v6332, %v6374
    %6376 = vdwg.mxu0
    %6377 = vmatprep.subr.bf16.mxu0 %v5865
    %6378 = vmatpush1.bf16.msra.mxu0 %v5864
    %6379 = vmatprep.subr.bf16.mxu0 %v5869
    %6380 = vmatpush1.bf16.msra.mxu0 %v5868
    %6381 = vmatprep.subr.bf16.mxu0 %v5873
    %6382 = vmatpush1.bf16.msra.mxu0 %v5872
    %6383 = vmatprep.subr.bf16.mxu0 %v5877
    %6384 = vmatpush1.bf16.msra.mxu0 %v5876
    %6385 = vmatprep.subr.bf16.mxu0 %v5881
    %6386 = vmatpush1.bf16.msra.mxu0 %v5880
    %6387 = vmatprep.subr.bf16.mxu0 %v5885
    %6388 = vmatpush1.bf16.msra.mxu0 %v5884
    %6389 = vmatprep.subr.bf16.mxu0 %v5889
    %6390 = vmatpush1.bf16.msra.mxu0 %v5888
    %6391 = vmatprep.subr.bf16.mxu0 %v5893
    %6392 = vmatpush1.bf16.msra.mxu0 %v5892
    %6393 = vmatprep.subr.bf16.mxu0 %v5897
    %6394 = vmatpush1.bf16.msra.mxu0 %v5896
    %6395 = vmatprep.subr.bf16.mxu0 %v5901
    %6396 = vmatpush1.bf16.msra.mxu0 %v5900
    %6397 = vmatprep.subr.bf16.mxu0 %v5905
    %6398 = vmatpush1.bf16.msra.mxu0 %v5904
    %6399 = vmatprep.subr.bf16.mxu0 %v5909
    %6400 = vmatpush1.bf16.msra.mxu0 %v5908
    %6401 = vmatprep.subr.bf16.mxu0 %v5913
    %6402 = vmatpush1.bf16.msra.mxu0 %v5912
    %6403 = vmatprep.subr.bf16.mxu0 %v5917
    %6404 = vmatpush1.bf16.msra.mxu0 %v5916
    %6405 = vmatprep.subr.bf16.mxu0 %v5921
    %6406 = vmatpush1.bf16.msra.mxu0 %v5920
    %6407 = vmatprep.subr.bf16.mxu0 %v5925
    %6408 = vmatpush1.bf16.msra.mxu0 %v5924
    %6409 = vmatprep.mubr.bf16.mxu0 %v4797
    %6410 = vmatmul.mubr.bf16.gmra.mrb[0].mxu0 %v4796
    %v6411 = vpop.f32.mrb[0].mxu0
    %v6412 = vadd.f32 %v6369, %v6411
    %v6413 = vpop.f32.mrb[0].mxu0
    %v6414 = vadd.f32 %v6371, %v6413
    %v6415 = vpop.f32.mrb[0].mxu0
    %v6416 = vadd.f32 %v6373, %v6415
    %v6417 = vpop.f32.mrb[0].mxu0
    %v6418 = vadd.f32 %v6375, %v6417
    %6419 = vdwg.mxu0
    %6420 = vmatprep.subr.bf16.mxu0 %v5929
    %6421 = vmatpush1.bf16.msra.mxu0 %v5928
    %6422 = vmatprep.subr.bf16.mxu0 %v5933
    %6423 = vmatpush1.bf16.msra.mxu0 %v5932
    %6424 = vmatprep.subr.bf16.mxu0 %v5937
    %6425 = vmatpush1.bf16.msra.mxu0 %v5936
    %6426 = vmatprep.subr.bf16.mxu0 %v5941
    %6427 = vmatpush1.bf16.msra.mxu0 %v5940
    %6428 = vmatprep.subr.bf16.mxu0 %v5945
    %6429 = vmatpush1.bf16.msra.mxu0 %v5944
    %6430 = vmatprep.subr.bf16.mxu0 %v5949
    %6431 = vmatpush1.bf16.msra.mxu0 %v5948
    %6432 = vmatprep.subr.bf16.mxu0 %v5953
    %6433 = vmatpush1.bf16.msra.mxu0 %v5952
    %6434 = vmatprep.subr.bf16.mxu0 %v5957
    %6435 = vmatpush1.bf16.msra.mxu0 %v5956
    %6436 = vmatprep.subr.bf16.mxu0 0
    %6437 = vmatpush1.bf16.msra.mxu0 0
    %6438 = vmatprep.subr.bf16.mxu0 0
    %6439 = vmatpush1.bf16.msra.mxu0 0
    %6440 = vmatprep.subr.bf16.mxu0 0
    %6441 = vmatpush1.bf16.msra.mxu0 0
    %6442 = vmatprep.subr.bf16.mxu0 0
    %6443 = vmatpush1.bf16.msra.mxu0 0
    %6444 = vmatprep.subr.bf16.mxu0 0
    %6445 = vmatpush1.bf16.msra.mxu0 0
    %6446 = vmatprep.subr.bf16.mxu0 0
    %6447 = vmatpush1.bf16.msra.mxu0 0
    %6448 = vmatprep.subr.bf16.mxu0 0
    %6449 = vmatpush1.bf16.msra.mxu0 0
    %6450 = vmatprep.subr.bf16.mxu0 0
    %6451 = vmatpush1.bf16.msra.mxu0 0
    %6452 = vmatprep.mubr.bf16.mxu0 0
    %6453 = vmatmul.mubr.bf16.gmra.mrb[0].mxu0 %v4798
    %v6454 = vpop.f32.mrb[0].mxu0
    %v6455 = vadd.f32 %v6412, %v6454
    %v6456 = vpop.f32.mrb[0].mxu0
    %v6457 = vadd.f32 %v6414, %v6456
    %v6458 = vpop.f32.mrb[0].mxu0
    %v6459 = vadd.f32 %v6416, %v6458
    %v6460 = vpop.f32.mrb[0].mxu0
    %v6461 = vadd.f32 %v6418, %v6460
    %6462 = vdwg.mxu0
    %6463 = vmatprep.subr.bf16.mxu0 %v5675
    %6464 = vmatpush1.bf16.msra.mxu0 %v5674
    %6465 = vmatprep.subr.bf16.mxu0 %v5679
    %6466 = vmatpush1.bf16.msra.mxu0 %v5678
    %6467 = vmatprep.subr.bf16.mxu0 %v5683
    %6468 = vmatpush1.bf16.msra.mxu0 %v5682
    %6469 = vmatprep.subr.bf16.mxu0 %v5687
    %6470 = vmatpush1.bf16.msra.mxu0 %v5686
    %6471 = vmatprep.subr.bf16.mxu0 %v5691
    %6472 = vmatpush1.bf16.msra.mxu0 %v5690
    %6473 = vmatprep.subr.bf16.mxu0 %v5695
    %6474 = vmatpush1.bf16.msra.mxu0 %v5694
    %6475 = vmatprep.subr.bf16.mxu0 %v5699
    %6476 = vmatpush1.bf16.msra.mxu0 %v5698
    %6477 = vmatprep.subr.bf16.mxu0 %v5703
    %6478 = vmatpush1.bf16.msra.mxu0 %v5702
    %6479 = vmatprep.subr.bf16.mxu0 %v5707
    %6480 = vmatpush1.bf16.msra.mxu0 %v5706
    %6481 = vmatprep.subr.bf16.mxu0 %v5711
    %6482 = vmatpush1.bf16.msra.mxu0 %v5710
    %6483 = vmatprep.subr.bf16.mxu0 %v5715
    %6484 = vmatpush1.bf16.msra.mxu0 %v5714
    %6485 = vmatprep.subr.bf16.mxu0 %v5719
    %6486 = vmatpush1.bf16.msra.mxu0 %v5718
    %6487 = vmatprep.subr.bf16.mxu0 %v5723
    %6488 = vmatpush1.bf16.msra.mxu0 %v5722
    %6489 = vmatprep.subr.bf16.mxu0 %v5727
    %6490 = vmatpush1.bf16.msra.mxu0 %v5726
    %6491 = vmatprep.subr.bf16.mxu0 %v5731
    %6492 = vmatpush1.bf16.msra.mxu0 %v5730
    %6493 = vmatprep.subr.bf16.mxu0 %v5735
    %6494 = vmatpush1.bf16.msra.mxu0 %v5734
    %6495 = vmatprep.mubr.bf16.mxu0 %v4791
    %6496 = vmatmul.mubr.bf16.gmra.mrb[0].mxu0 %v4790
    %v6497 = vpop.f32.mrb[0].mxu0
    %v6498 = vadd.f32 %v4764, %v6497
    %v6499 = vpop.f32.mrb[0].mxu0
    %v6500 = vadd.f32 %v4766, %v6499
    %v6501 = vpop.f32.mrb[0].mxu0
    %v6502 = vadd.f32 %v4768, %v6501
    %v6503 = vpop.f32.mrb[0].mxu0
    %v6504 = vadd.f32 %v4770, %v6503
    %6505 = vdwg.mxu0
    %6506 = vmatprep.subr.bf16.mxu0 %v5739
    %6507 = vmatpush1.bf16.msra.mxu0 %v5738
    %6508 = vmatprep.subr.bf16.mxu0 %v5743
    %6509 = vmatpush1.bf16.msra.mxu0 %v5742
    %6510 = vmatprep.subr.bf16.mxu0 %v5747
    %6511 = vmatpush1.bf16.msra.mxu0 %v5746
    %6512 = vmatprep.subr.bf16.mxu0 %v5751
    %6513 = vmatpush1.bf16.msra.mxu0 %v5750
    %6514 = vmatprep.subr.bf16.mxu0 %v5755
    %6515 = vmatpush1.bf16.msra.mxu0 %v5754
    %6516 = vmatprep.subr.bf16.mxu0 %v5759
    %6517 = vmatpush1.bf16.msra.mxu0 %v5758
    %6518 = vmatprep.subr.bf16.mxu0 %v5763
    %6519 = vmatpush1.bf16.msra.mxu0 %v5762
    %6520 = vmatprep.subr.bf16.mxu0 %v5767
    %6521 = vmatpush1.bf16.msra.mxu0 %v5766
    %6522 = vmatprep.subr.bf16.mxu0 %v5771
    %6523 = vmatpush1.bf16.msra.mxu0 %v5770
    %6524 = vmatprep.subr.bf16.mxu0 %v5775
    %6525 = vmatpush1.bf16.msra.mxu0 %v5774
    %6526 = vmatprep.subr.bf16.mxu0 %v5779
    %6527 = vmatpush1.bf16.msra.mxu0 %v5778
    %6528 = vmatprep.subr.bf16.mxu0 %v5783
    %6529 = vmatpush1.bf16.msra.mxu0 %v5782
    %6530 = vmatprep.subr.bf16.mxu0 %v5787
    %6531 = vmatpush1.bf16.msra.mxu0 %v5786
    %6532 = vmatprep.subr.bf16.mxu0 %v5791
    %6533 = vmatpush1.bf16.msra.mxu0 %v5790
    %6534 = vmatprep.subr.bf16.mxu0 %v5795
    %6535 = vmatpush1.bf16.msra.mxu0 %v5794
    %6536 = vmatprep.subr.bf16.mxu0 %v5799
    %6537 = vmatpush1.bf16.msra.mxu0 %v5798
    %6538 = vmatprep.mubr.bf16.mxu0 %v4793
    %6539 = vmatmul.mubr.bf16.gmra.mrb[0].mxu0 %v4792
    %v6540 = vpop.f32.mrb[0].mxu0
    %v6541 = vadd.f32 %v6498, %v6540
    %v6542 = vpop.f32.mrb[0].mxu0
    %v6543 = vadd.f32 %v6500, %v6542
    %v6544 = vpop.f32.mrb[0].mxu0
    %v6545 = vadd.f32 %v6502, %v6544
    %v6546 = vpop.f32.mrb[0].mxu0
    %v6547 = vadd.f32 %v6504, %v6546
    %6548 = vdwg.mxu0
    %6549 = vmatprep.subr.bf16.mxu0 %v5803
    %6550 = vmatpush1.bf16.msra.mxu0 %v5802
    %6551 = vmatprep.subr.bf16.mxu0 %v5807
    %6552 = vmatpush1.bf16.msra.mxu0 %v5806
    %6553 = vmatprep.subr.bf16.mxu0 %v5811
    %6554 = vmatpush1.bf16.msra.mxu0 %v5810
    %6555 = vmatprep.subr.bf16.mxu0 %v5815
    %6556 = vmatpush1.bf16.msra.mxu0 %v5814
    %6557 = vmatprep.subr.bf16.mxu0 %v5819
    %6558 = vmatpush1.bf16.msra.mxu0 %v5818
    %6559 = vmatprep.subr.bf16.mxu0 %v5823
    %6560 = vmatpush1.bf16.msra.mxu0 %v5822
    %6561 = vmatprep.subr.bf16.mxu0 %v5827
    %6562 = vmatpush1.bf16.msra.mxu0 %v5826
    %6563 = vmatprep.subr.bf16.mxu0 %v5831
    %6564 = vmatpush1.bf16.msra.mxu0 %v5830
    %6565 = vmatprep.subr.bf16.mxu0 %v5835
    %6566 = vmatpush1.bf16.msra.mxu0 %v5834
    %6567 = vmatprep.subr.bf16.mxu0 %v5839
    %6568 = vmatpush1.bf16.msra.mxu0 %v5838
    %6569 = vmatprep.subr.bf16.mxu0 %v5843
    %6570 = vmatpush1.bf16.msra.mxu0 %v5842
    %6571 = vmatprep.subr.bf16.mxu0 %v5847
    %6572 = vmatpush1.bf16.msra.mxu0 %v5846
    %6573 = vmatprep.subr.bf16.mxu0 %v5851
    %6574 = vmatpush1.bf16.msra.mxu0 %v5850
    %6575 = vmatprep.subr.bf16.mxu0 %v5855
    %6576 = vmatpush1.bf16.msra.mxu0 %v5854
    %6577 = vmatprep.subr.bf16.mxu0 %v5859
    %6578 = vmatpush1.bf16.msra.mxu0 %v5858
    %6579 = vmatprep.subr.bf16.mxu0 %v5863
    %6580 = vmatpush1.bf16.msra.mxu0 %v5862
    %6581 = vmatprep.mubr.bf16.mxu0 %v4795
    %6582 = vmatmul.mubr.bf16.gmra.mrb[0].mxu0 %v4794
    %v6583 = vpop.f32.mrb[0].mxu0
    %v6584 = vadd.f32 %v6541, %v6583
    %v6585 = vpop.f32.mrb[0].mxu0
    %v6586 = vadd.f32 %v6543, %v6585
    %v6587 = vpop.f32.mrb[0].mxu0
    %v6588 = vadd.f32 %v6545, %v6587
    %v6589 = vpop.f32.mrb[0].mxu0
    %v6590 = vadd.f32 %v6547, %v6589
    %6591 = vdwg.mxu0
    %6592 = vmatprep.subr.bf16.mxu0 %v5867
    %6593 = vmatpush1.bf16.msra.mxu0 %v5866
    %6594 = vmatprep.subr.bf16.mxu0 %v5871
    %6595 = vmatpush1.bf16.msra.mxu0 %v5870
    %6596 = vmatprep.subr.bf16.mxu0 %v5875
    %6597 = vmatpush1.bf16.msra.mxu0 %v5874
    %6598 = vmatprep.subr.bf16.mxu0 %v5879
    %6599 = vmatpush1.bf16.msra.mxu0 %v5878
    %6600 = vmatprep.subr.bf16.mxu0 %v5883
    %6601 = vmatpush1.bf16.msra.mxu0 %v5882
    %6602 = vmatprep.subr.bf16.mxu0 %v5887
    %6603 = vmatpush1.bf16.msra.mxu0 %v5886
    %6604 = vmatprep.subr.bf16.mxu0 %v5891
    %6605 = vmatpush1.bf16.msra.mxu0 %v5890
    %6606 = vmatprep.subr.bf16.mxu0 %v5895
    %6607 = vmatpush1.bf16.msra.mxu0 %v5894
    %6608 = vmatprep.subr.bf16.mxu0 %v5899
    %6609 = vmatpush1.bf16.msra.mxu0 %v5898
    %6610 = vmatprep.subr.bf16.mxu0 %v5903
    %6611 = vmatpush1.bf16.msra.mxu0 %v5902
    %6612 = vmatprep.subr.bf16.mxu0 %v5907
    %6613 = vmatpush1.bf16.msra.mxu0 %v5906
    %6614 = vmatprep.subr.bf16.mxu0 %v5911
    %6615 = vmatpush1.bf16.msra.mxu0 %v5910
    %6616 = vmatprep.subr.bf16.mxu0 %v5915
    %6617 = vmatpush1.bf16.msra.mxu0 %v5914
    %6618 = vmatprep.subr.bf16.mxu0 %v5919
    %6619 = vmatpush1.bf16.msra.mxu0 %v5918
    %6620 = vmatprep.subr.bf16.mxu0 %v5923
    %6621 = vmatpush1.bf16.msra.mxu0 %v5922
    %6622 = vmatprep.subr.bf16.mxu0 %v5927
    %6623 = vmatpush1.bf16.msra.mxu0 %v5926
    %6624 = vmatprep.mubr.bf16.mxu0 %v4797
    %6625 = vmatmul.mubr.bf16.gmra.mrb[0].mxu0 %v4796
    %v6626 = vpop.f32.mrb[0].mxu0
    %v6627 = vadd.f32 %v6584, %v6626
    %v6628 = vpop.f32.mrb[0].mxu0
    %v6629 = vadd.f32 %v6586, %v6628
    %v6630 = vpop.f32.mrb[0].mxu0
    %v6631 = vadd.f32 %v6588, %v6630
    %v6632 = vpop.f32.mrb[0].mxu0
    %v6633 = vadd.f32 %v6590, %v6632
    %6634 = vdwg.mxu0
    %6635 = vmatprep.subr.bf16.mxu0 %v5931
    %6636 = vmatpush1.bf16.msra.mxu0 %v5930
    %6637 = vmatprep.subr.bf16.mxu0 %v5935
    %6638 = vmatpush1.bf16.msra.mxu0 %v5934
    %6639 = vmatprep.subr.bf16.mxu0 %v5939
    %6640 = vmatpush1.bf16.msra.mxu0 %v5938
    %6641 = vmatprep.subr.bf16.mxu0 %v5943
    %6642 = vmatpush1.bf16.msra.mxu0 %v5942
    %6643 = vmatprep.subr.bf16.mxu0 %v5947
    %6644 = vmatpush1.bf16.msra.mxu0 %v5946
    %6645 = vmatprep.subr.bf16.mxu0 %v5951
    %6646 = vmatpush1.bf16.msra.mxu0 %v5950
    %6647 = vmatprep.subr.bf16.mxu0 %v5955
    %6648 = vmatpush1.bf16.msra.mxu0 %v5954
    %6649 = vmatprep.subr.bf16.mxu0 %v5959
    %6650 = vmatpush1.bf16.msra.mxu0 %v5958
    %6651 = vmatprep.subr.bf16.mxu0 0
    %6652 = vmatpush1.bf16.msra.mxu0 0
    %6653 = vmatprep.subr.bf16.mxu0 0
    %6654 = vmatpush1.bf16.msra.mxu0 0
    %6655 = vmatprep.subr.bf16.mxu0 0
    %6656 = vmatpush1.bf16.msra.mxu0 0
    %6657 = vmatprep.subr.bf16.mxu0 0
    %6658 = vmatpush1.bf16.msra.mxu0 0
    %6659 = vmatprep.subr.bf16.mxu0 0
    %6660 = vmatpush1.bf16.msra.mxu0 0
    %6661 = vmatprep.subr.bf16.mxu0 0
    %6662 = vmatpush1.bf16.msra.mxu0 0
    %6663 = vmatprep.subr.bf16.mxu0 0
    %6664 = vmatpush1.bf16.msra.mxu0 0
    %6665 = vmatprep.subr.bf16.mxu0 0
    %6666 = vmatpush1.bf16.msra.mxu0 0
    %6667 = vmatprep.mubr.bf16.mxu0 0
    %6668 = vmatmul.mubr.bf16.gmra.mrb[0].mxu0 %v4798
    %v6669 = vpop.f32.mrb[0].mxu0
    %v6670 = vadd.f32 %v6627, %v6669
    %v6671 = vpop.f32.mrb[0].mxu0
    %v6672 = vadd.f32 %v6629, %v6671
    %v6673 = vpop.f32.mrb[0].mxu0
    %v6674 = vadd.f32 %v6631, %v6673
    %v6675 = vpop.f32.mrb[0].mxu0
    %v6676 = vadd.f32 %v6633, %v6675
    %6677 = vdwg.mxu0
    %v6678 = vld [vmem:[#allocation2] sm:$0x78]
    %v6679 = vld [vmem:[#allocation2 + $0x8] sm:$0x78]
    %v6680 = vld [vmem:[#allocation2 + $0x10] sm:$0x78]
    %v6681 = vld [vmem:[#allocation2 + $0x18] sm:$0x78]
    %v6682 = vld [vmem:[#allocation2 + $0x20] sm:$0x78]
    %v6683 = vld [vmem:[#allocation2 + $0x28] sm:$0x78]
    %v6684 = vld [vmem:[#allocation2 + $0x30] sm:$0x78]
    %v6685 = vld [vmem:[#allocation2 + $0x38] sm:$0x78]
    %v6686 = vld [vmem:[#allocation2 + $0x40] sm:$0x78]
    %v6687 = vld [vmem:[#allocation2 + $0x48] sm:$0x78]
    %v6688 = vld [vmem:[#allocation2 + $0x50] sm:$0x78]
    %v6689 = vld [vmem:[#allocation2 + $0x58] sm:$0x78]
    %v6690 = vld [vmem:[#allocation2 + $0x60] sm:$0x78]
    %v6691 = vld [vmem:[#allocation2 + $0x68] sm:$0x78]
    %v6692 = vld [vmem:[#allocation2 + $0x70] sm:$0x78]
    %v6693 = vld [vmem:[#allocation2 + $0x78] sm:$0x78]
    %v6694 = vld [vmem:[#allocation2 + $0x80] sm:$0x78]
    %v6695 = vld [vmem:[#allocation2 + $0x88] sm:$0x78]
    %v6714 = vunpack.c.l.b16 %v6678
    %v6715 = vunpack.c.l.b16 %v6679
    %v6716 = vunpack.c.l.b16 %v6680
    %v6717 = vunpack.c.l.b16 %v6681
    %v6718 = vunpack.c.l.b16 %v6682
    %v6719 = vunpack.c.l.b16 %v6683
    %v6720 = vunpack.c.l.b16 %v6684
    %v6721 = vunpack.c.l.b16 %v6685
    %v6722 = vunpack.c.l.b16 %v6686
    %v6723 = vunpack.c.h.b16 %v6678
    %v6724 = vunpack.c.h.b16 %v6679
    %v6725 = vunpack.c.h.b16 %v6680
    %v6726 = vunpack.c.h.b16 %v6681
    %v6727 = vunpack.c.h.b16 %v6682
    %v6728 = vunpack.c.h.b16 %v6683
    %v6729 = vunpack.c.h.b16 %v6684
    %v6730 = vunpack.c.h.b16 %v6685
    %v6731 = vunpack.c.h.b16 %v6686
    %v6732 = vunpack.c.l.b16 %v6687
    %v6733 = vunpack.c.l.b16 %v6688
    %v6734 = vunpack.c.l.b16 %v6689
    %v6735 = vunpack.c.l.b16 %v6690
    %v6736 = vunpack.c.l.b16 %v6691
    %v6737 = vunpack.c.l.b16 %v6692
    %v6738 = vunpack.c.l.b16 %v6693
    %v6739 = vunpack.c.l.b16 %v6694
    %v6740 = vunpack.c.l.b16 %v6695
    %v6741 = vunpack.c.h.b16 %v6687
    %v6742 = vunpack.c.h.b16 %v6688
    %v6743 = vunpack.c.h.b16 %v6689
    %v6744 = vunpack.c.h.b16 %v6690
    %v6745 = vunpack.c.h.b16 %v6691
    %v6746 = vunpack.c.h.b16 %v6692
    %v6747 = vunpack.c.h.b16 %v6693
    %v6748 = vunpack.c.h.b16 %v6694
    %v6749 = vunpack.c.h.b16 %v6695
    %v6750 = vpack.c.b16 %v6715, %v6714
    %v6751 = vpack.c.b16 %v6717, %v6716
    %v6752 = vpack.c.b16 %v6719, %v6718
    %v6753 = vpack.c.b16 %v6721, %v6720
    %v6754 = vpack.c.b16 %v6722, %v6722
    %v6755 = vpack.c.b16 %v6724, %v6723
    %v6756 = vpack.c.b16 %v6726, %v6725
    %v6757 = vpack.c.b16 %v6728, %v6727
    %v6758 = vpack.c.b16 %v6730, %v6729
    %v6759 = vpack.c.b16 %v6731, %v6731
    %v6760 = vpack.c.b16 %v6733, %v6732
    %v6761 = vpack.c.b16 %v6735, %v6734
    %v6762 = vpack.c.b16 %v6737, %v6736
    %v6763 = vpack.c.b16 %v6739, %v6738
    %v6764 = vpack.c.b16 %v6740, %v6740
    %v6765 = vpack.c.b16 %v6742, %v6741
    %v6766 = vpack.c.b16 %v6744, %v6743
    %v6767 = vpack.c.b16 %v6746, %v6745
    %v6768 = vpack.c.b16 %v6748, %v6747
    %v6769 = vpack.c.b16 %v6749, %v6749
    %vm6770 = vcmask 1040384
    %vm6771 = vcmask 1044484
    %vm6772 = vmor %vm6770, %vm6771
    %v6773 = vrot.slane %v6750, 7
    %v6774 = vrot.slane %v6773, 4
    %v6775 = vrot.slane %v6755, 7
    %v6776 = vsel %vm6772, %v6774, %v6775
    %v6777 = vrot.slane %v6751, 7
    %v6778 = vrot.slane %v6777, 4
    %v6779 = vrot.slane %v6756, 7
    %v6780 = vsel %vm6772, %v6778, %v6779
    %v6781 = vrot.slane %v6752, 7
    %v6782 = vrot.slane %v6781, 4
    %v6783 = vrot.slane %v6757, 7
    %v6784 = vsel %vm6772, %v6782, %v6783
    %v6785 = vrot.slane %v6753, 7
    %v6786 = vrot.slane %v6785, 4
    %v6787 = vrot.slane %v6758, 7
    %v6788 = vsel %vm6772, %v6786, %v6787
    %v6789 = vrot.slane %v6754, 7
    %v6790 = vrot.slane %v6789, 4
    %v6791 = vrot.slane %v6759, 7
    %v6792 = vsel %vm6772, %v6790, %v6791
    %v6793 = vrot.slane %v6760, 7
    %v6794 = vrot.slane %v6793, 4
    %v6795 = vrot.slane %v6765, 7
    %v6796 = vsel %vm6772, %v6794, %v6795
    %v6797 = vrot.slane %v6761, 7
    %v6798 = vrot.slane %v6797, 4
    %v6799 = vrot.slane %v6766, 7
    %v6800 = vsel %vm6772, %v6798, %v6799
    %v6801 = vrot.slane %v6762, 7
    %v6802 = vrot.slane %v6801, 4
    %v6803 = vrot.slane %v6767, 7
    %v6804 = vsel %vm6772, %v6802, %v6803
    %v6805 = vrot.slane %v6763, 7
    %v6806 = vrot.slane %v6805, 4
    %v6807 = vrot.slane %v6768, 7
    %v6808 = vsel %vm6772, %v6806, %v6807
    %v6809 = vrot.slane %v6764, 7
    %v6810 = vrot.slane %v6809, 4
    %v6811 = vrot.slane %v6769, 7
    %v6812 = vsel %vm6772, %v6810, %v6811
    %s6813 = scalar_lea.vmem [#allocation13], 4608
    %v6814 = vld [vmem:[%s6813] sm:$0xff]
    %v6815 = vld [vmem:[%s6813 + $0x8] sm:$0xff]
    %v6816 = vld [vmem:[%s6813 + $0x10] sm:$0xff]
    %v6817 = vld [vmem:[%s6813 + $0x18] sm:$0xff]
    %v6818 = vld [vmem:[%s6813 + $0x20] sm:$0xff]
    %v6819 = vld [vmem:[%s6813 + $0x28] sm:$0xff]
    %v6820 = vld [vmem:[%s6813 + $0x30] sm:$0xff]
    %v6821 = vld [vmem:[%s6813 + $0x38] sm:$0xff]
    %v6822 = vld [vmem:[%s6813 + $0x40] sm:$0xff]
    %v6823 = vld [vmem:[%s6813 + $0x48] sm:$0xff]
    %v6824 = vld [vmem:[%s6813 + $0x50] sm:$0xff]
    %v6825 = vld [vmem:[%s6813 + $0x58] sm:$0xff]
    %v6826 = vld [vmem:[%s6813 + $0x60] sm:$0xff]
    %v6827 = vld [vmem:[%s6813 + $0x68] sm:$0xff]
    %v6828 = vld [vmem:[%s6813 + $0x70] sm:$0xff]
    %v6829 = vld [vmem:[%s6813 + $0x78] sm:$0xff]
    %v6830 = vld [vmem:[%s6813 + $0x80] sm:$0xff]
    %v6831 = vld [vmem:[%s6813 + $0x88] sm:$0xff]
    %v6832 = vld [vmem:[%s6813 + $0x90] sm:$0xff]
    %v6833 = vld [vmem:[%s6813 + $0x98] sm:$0xff]
    %v6834 = vld [vmem:[%s6813 + $0xa0] sm:$0xff]
    %v6835 = vld [vmem:[%s6813 + $0xa8] sm:$0xff]
    %v6836 = vld [vmem:[%s6813 + $0xb0] sm:$0xff]
    %v6837 = vld [vmem:[%s6813 + $0xb8] sm:$0xff]
    %v6838 = vld [vmem:[%s6813 + $0xc0] sm:$0xff]
    %v6839 = vld [vmem:[%s6813 + $0xc8] sm:$0xff]
    %v6840 = vld [vmem:[%s6813 + $0xd0] sm:$0xff]
    %v6841 = vld [vmem:[%s6813 + $0xd8] sm:$0xff]
    %v6842 = vld [vmem:[%s6813 + $0xe0] sm:$0xff]
    %v6843 = vld [vmem:[%s6813 + $0xe8] sm:$0xff]
    %v6844 = vld [vmem:[%s6813 + $0xf0] sm:$0xff]
    %v6845 = vld [vmem:[%s6813 + $0xf8] sm:$0xff]
    %v6846 = vld [vmem:[%s6813 + $0x100] sm:$0xff]
    %v6847 = vld [vmem:[%s6813 + $0x108] sm:$0xff]
    %v6848 = vld [vmem:[%s6813 + $0x110] sm:$0xff]
    %v6849 = vld [vmem:[%s6813 + $0x118] sm:$0xff]
    %v6850 = vld [vmem:[%s6813 + $0x120] sm:$0xff]
    %v6851 = vld [vmem:[%s6813 + $0x128] sm:$0xff]
    %v6852 = vld [vmem:[%s6813 + $0x130] sm:$0xff]
    %v6853 = vld [vmem:[%s6813 + $0x138] sm:$0xff]
    %v6854 = vld [vmem:[%s6813 + $0x140] sm:$0xff]
    %v6855 = vld [vmem:[%s6813 + $0x148] sm:$0xff]
    %v6856 = vld [vmem:[%s6813 + $0x150] sm:$0xff]
    %v6857 = vld [vmem:[%s6813 + $0x158] sm:$0xff]
    %v6858 = vld [vmem:[%s6813 + $0x160] sm:$0xff]
    %v6859 = vld [vmem:[%s6813 + $0x168] sm:$0xff]
    %v6860 = vld [vmem:[%s6813 + $0x170] sm:$0xff]
    %v6861 = vld [vmem:[%s6813 + $0x178] sm:$0xff]
    %v6862 = vld [vmem:[%s6813 + $0x180] sm:$0xff]
    %v6863 = vld [vmem:[%s6813 + $0x188] sm:$0xff]
    %v6864 = vld [vmem:[%s6813 + $0x190] sm:$0xff]
    %v6865 = vld [vmem:[%s6813 + $0x198] sm:$0xff]
    %v6866 = vld [vmem:[%s6813 + $0x1a0] sm:$0xff]
    %v6867 = vld [vmem:[%s6813 + $0x1a8] sm:$0xff]
    %v6868 = vld [vmem:[%s6813 + $0x1b0] sm:$0xff]
    %v6869 = vld [vmem:[%s6813 + $0x1b8] sm:$0xff]
    %v6870 = vld [vmem:[%s6813 + $0x1c0] sm:$0xff]
    %v6871 = vld [vmem:[%s6813 + $0x1c8] sm:$0xff]
    %v6872 = vld [vmem:[%s6813 + $0x1d0] sm:$0xff]
    %v6873 = vld [vmem:[%s6813 + $0x1d8] sm:$0xff]
    %v6874 = vld [vmem:[%s6813 + $0x1e0] sm:$0xff]
    %v6875 = vld [vmem:[%s6813 + $0x1e8] sm:$0xff]
    %v6876 = vld [vmem:[%s6813 + $0x1f0] sm:$0xff]
    %v6877 = vld [vmem:[%s6813 + $0x1f8] sm:$0xff]
    %v6878 = vld [vmem:[%s6813 + $0x200] sm:$0xff]
    %v6879 = vld [vmem:[%s6813 + $0x208] sm:$0xff]
    %v6880 = vld [vmem:[%s6813 + $0x210] sm:$0xff]
    %v6881 = vld [vmem:[%s6813 + $0x218] sm:$0xff]
    %v6882 = vld [vmem:[%s6813 + $0x220] sm:$0xff]
    %v6883 = vld [vmem:[%s6813 + $0x228] sm:$0xff]
    %v6884 = vld [vmem:[%s6813 + $0x230] sm:$0xff]
    %v6885 = vld [vmem:[%s6813 + $0x238] sm:$0xff]
    %v6886 = vld [vmem:[%s6813 + $0x240] sm:$0xff]
    %v6887 = vld [vmem:[%s6813 + $0x248] sm:$0xff]
    %v6888 = vld [vmem:[%s6813 + $0x250] sm:$0xff]
    %v6889 = vld [vmem:[%s6813 + $0x258] sm:$0xff]
    %v6890 = vld [vmem:[%s6813 + $0x260] sm:$0xff]
    %v6891 = vld [vmem:[%s6813 + $0x268] sm:$0xff]
    %v6892 = vld [vmem:[%s6813 + $0x270] sm:$0xff]
    %v6893 = vld [vmem:[%s6813 + $0x278] sm:$0xff]
    %v6894 = vld [vmem:[%s6813 + $0x280] sm:$0xff]
    %v6895 = vld [vmem:[%s6813 + $0x288] sm:$0xff]
    %v6896 = vld [vmem:[%s6813 + $0x290] sm:$0xff]
    %v6897 = vld [vmem:[%s6813 + $0x298] sm:$0xff]
    %v6898 = vld [vmem:[%s6813 + $0x2a0] sm:$0xff]
    %v6899 = vld [vmem:[%s6813 + $0x2a8] sm:$0xff]
    %v6900 = vld [vmem:[%s6813 + $0x2b0] sm:$0xff]
    %v6901 = vld [vmem:[%s6813 + $0x2b8] sm:$0xff]
    %v6902 = vld [vmem:[%s6813 + $0x2c0] sm:$0xff]
    %v6903 = vld [vmem:[%s6813 + $0x2c8] sm:$0xff]
    %v6904 = vld [vmem:[%s6813 + $0x2d0] sm:$0xff]
    %v6905 = vld [vmem:[%s6813 + $0x2d8] sm:$0xff]
    %v6906 = vld [vmem:[%s6813 + $0x2e0] sm:$0xff]
    %v6907 = vld [vmem:[%s6813 + $0x2e8] sm:$0xff]
    %v6908 = vld [vmem:[%s6813 + $0x2f0] sm:$0xff]
    %v6909 = vld [vmem:[%s6813 + $0x2f8] sm:$0xff]
    %v6910 = vld [vmem:[%s6813 + $0x300] sm:$0xff]
    %v6911 = vld [vmem:[%s6813 + $0x308] sm:$0xff]
    %v6912 = vld [vmem:[%s6813 + $0x310] sm:$0xff]
    %v6913 = vld [vmem:[%s6813 + $0x318] sm:$0xff]
    %v6914 = vld [vmem:[%s6813 + $0x320] sm:$0xff]
    %v6915 = vld [vmem:[%s6813 + $0x328] sm:$0xff]
    %v6916 = vld [vmem:[%s6813 + $0x330] sm:$0xff]
    %v6917 = vld [vmem:[%s6813 + $0x338] sm:$0xff]
    %v6918 = vld [vmem:[%s6813 + $0x340] sm:$0xff]
    %v6919 = vld [vmem:[%s6813 + $0x348] sm:$0xff]
    %v6920 = vld [vmem:[%s6813 + $0x350] sm:$0xff]
    %v6921 = vld [vmem:[%s6813 + $0x358] sm:$0xff]
    %v6922 = vld [vmem:[%s6813 + $0x360] sm:$0xff]
    %v6923 = vld [vmem:[%s6813 + $0x368] sm:$0xff]
    %v6924 = vld [vmem:[%s6813 + $0x370] sm:$0xff]
    %v6925 = vld [vmem:[%s6813 + $0x378] sm:$0xff]
    %v6926 = vld [vmem:[%s6813 + $0x380] sm:$0xff]
    %v6927 = vld [vmem:[%s6813 + $0x388] sm:$0xff]
    %v6928 = vld [vmem:[%s6813 + $0x390] sm:$0xff]
    %v6929 = vld [vmem:[%s6813 + $0x398] sm:$0xff]
    %v6930 = vld [vmem:[%s6813 + $0x3a0] sm:$0xff]
    %v6931 = vld [vmem:[%s6813 + $0x3a8] sm:$0xff]
    %v6932 = vld [vmem:[%s6813 + $0x3b0] sm:$0xff]
    %v6933 = vld [vmem:[%s6813 + $0x3b8] sm:$0xff]
    %v6934 = vld [vmem:[%s6813 + $0x3c0] sm:$0xff]
    %v6935 = vld [vmem:[%s6813 + $0x3c8] sm:$0xff]
    %v6936 = vld [vmem:[%s6813 + $0x3d0] sm:$0xff]
    %v6937 = vld [vmem:[%s6813 + $0x3d8] sm:$0xff]
    %v6938 = vld [vmem:[%s6813 + $0x3e0] sm:$0xff]
    %v6939 = vld [vmem:[%s6813 + $0x3e8] sm:$0xff]
    %v6940 = vld [vmem:[%s6813 + $0x3f0] sm:$0xff]
    %v6941 = vld [vmem:[%s6813 + $0x3f8] sm:$0xff]
    %v6942 = vld [vmem:[%s6813 + $0x400] sm:$0xff]
    %v6943 = vld [vmem:[%s6813 + $0x408] sm:$0xff]
    %v6944 = vld [vmem:[%s6813 + $0x410] sm:$0xff]
    %v6945 = vld [vmem:[%s6813 + $0x418] sm:$0xff]
    %v6946 = vld [vmem:[%s6813 + $0x420] sm:$0xff]
    %v6947 = vld [vmem:[%s6813 + $0x428] sm:$0xff]
    %v6948 = vld [vmem:[%s6813 + $0x430] sm:$0xff]
    %v6949 = vld [vmem:[%s6813 + $0x438] sm:$0xff]
    %v6950 = vld [vmem:[%s6813 + $0x440] sm:$0xff]
    %v6951 = vld [vmem:[%s6813 + $0x448] sm:$0xff]
    %v6952 = vld [vmem:[%s6813 + $0x450] sm:$0xff]
    %v6953 = vld [vmem:[%s6813 + $0x458] sm:$0xff]
    %v6954 = vld [vmem:[%s6813 + $0x460] sm:$0xff]
    %v6955 = vld [vmem:[%s6813 + $0x468] sm:$0xff]
    %v6956 = vld [vmem:[%s6813 + $0x470] sm:$0xff]
    %v6957 = vld [vmem:[%s6813 + $0x478] sm:$0xff]
    %v6958 = vld [vmem:[%s6813 + $0x480] sm:$0xff]
    %v6959 = vld [vmem:[%s6813 + $0x488] sm:$0xff]
    %v6960 = vld [vmem:[%s6813 + $0x490] sm:$0xff]
    %v6961 = vld [vmem:[%s6813 + $0x498] sm:$0xff]
    %v6962 = vld [vmem:[%s6813 + $0x4a0] sm:$0xff]
    %v6963 = vld [vmem:[%s6813 + $0x4a8] sm:$0xff]
    %v6964 = vld [vmem:[%s6813 + $0x4b0] sm:$0xff]
    %v6965 = vld [vmem:[%s6813 + $0x4b8] sm:$0xff]
    %v6966 = vld [vmem:[%s6813 + $0x4c0] sm:$0xff]
    %v6967 = vld [vmem:[%s6813 + $0x4c8] sm:$0xff]
    %v6968 = vld [vmem:[%s6813 + $0x4d0] sm:$0xff]
    %v6969 = vld [vmem:[%s6813 + $0x4d8] sm:$0xff]
    %v6970 = vld [vmem:[%s6813 + $0x4e0] sm:$0xff]
    %v6971 = vld [vmem:[%s6813 + $0x4e8] sm:$0xff]
    %v6972 = vld [vmem:[%s6813 + $0x4f0] sm:$0xff]
    %v6973 = vld [vmem:[%s6813 + $0x4f8] sm:$0xff]
    %v6974 = vld [vmem:[%s6813 + $0x500] sm:$0xff]
    %v6975 = vld [vmem:[%s6813 + $0x508] sm:$0xff]
    %v6976 = vld [vmem:[%s6813 + $0x510] sm:$0xff]
    %v6977 = vld [vmem:[%s6813 + $0x518] sm:$0xff]
    %v6978 = vld [vmem:[%s6813 + $0x520] sm:$0xff]
    %v6979 = vld [vmem:[%s6813 + $0x528] sm:$0xff]
    %v6980 = vld [vmem:[%s6813 + $0x530] sm:$0xff]
    %v6981 = vld [vmem:[%s6813 + $0x538] sm:$0xff]
    %v6982 = vld [vmem:[%s6813 + $0x540] sm:$0xff]
    %v6983 = vld [vmem:[%s6813 + $0x548] sm:$0xff]
    %v6984 = vld [vmem:[%s6813 + $0x550] sm:$0xff]
    %v6985 = vld [vmem:[%s6813 + $0x558] sm:$0xff]
    %v6986 = vld [vmem:[%s6813 + $0x560] sm:$0xff]
    %v6987 = vld [vmem:[%s6813 + $0x568] sm:$0xff]
    %v6988 = vld [vmem:[%s6813 + $0x570] sm:$0xff]
    %v6989 = vld [vmem:[%s6813 + $0x578] sm:$0xff]
    %v6990 = vld [vmem:[%s6813 + $0x580] sm:$0xff]
    %v6991 = vld [vmem:[%s6813 + $0x588] sm:$0xff]
    %v6992 = vld [vmem:[%s6813 + $0x590] sm:$0xff]
    %v6993 = vld [vmem:[%s6813 + $0x598] sm:$0xff]
    %v6994 = vld [vmem:[%s6813 + $0x5a0] sm:$0xff]
    %v6995 = vld [vmem:[%s6813 + $0x5a8] sm:$0xff]
    %v6996 = vld [vmem:[%s6813 + $0x5b0] sm:$0xff]
    %v6997 = vld [vmem:[%s6813 + $0x5b8] sm:$0xff]
    %v6998 = vld [vmem:[%s6813 + $0x5c0] sm:$0xff]
    %v6999 = vld [vmem:[%s6813 + $0x5c8] sm:$0xff]
    %v7000 = vld [vmem:[%s6813 + $0x5d0] sm:$0xff]
    %v7001 = vld [vmem:[%s6813 + $0x5d8] sm:$0xff]
    %v7002 = vld [vmem:[%s6813 + $0x5e0] sm:$0xff]
    %v7003 = vld [vmem:[%s6813 + $0x5e8] sm:$0xff]
    %v7004 = vld [vmem:[%s6813 + $0x5f0] sm:$0xff]
    %v7005 = vld [vmem:[%s6813 + $0x5f8] sm:$0xff]
    %v7006 = vld [vmem:[%s6813 + $0x600] sm:$0xff]
    %v7007 = vld [vmem:[%s6813 + $0x608] sm:$0xff]
    %v7008 = vld [vmem:[%s6813 + $0x610] sm:$0xff]
    %v7009 = vld [vmem:[%s6813 + $0x618] sm:$0xff]
    %v7010 = vld [vmem:[%s6813 + $0x620] sm:$0xff]
    %v7011 = vld [vmem:[%s6813 + $0x628] sm:$0xff]
    %v7012 = vld [vmem:[%s6813 + $0x630] sm:$0xff]
    %v7013 = vld [vmem:[%s6813 + $0x638] sm:$0xff]
    %v7014 = vld [vmem:[%s6813 + $0x640] sm:$0xff]
    %v7015 = vld [vmem:[%s6813 + $0x648] sm:$0xff]
    %v7016 = vld [vmem:[%s6813 + $0x650] sm:$0xff]
    %v7017 = vld [vmem:[%s6813 + $0x658] sm:$0xff]
    %v7018 = vld [vmem:[%s6813 + $0x660] sm:$0xff]
    %v7019 = vld [vmem:[%s6813 + $0x668] sm:$0xff]
    %v7020 = vld [vmem:[%s6813 + $0x670] sm:$0xff]
    %v7021 = vld [vmem:[%s6813 + $0x678] sm:$0xff]
    %v7022 = vld [vmem:[%s6813 + $0x680] sm:$0xff]
    %v7023 = vld [vmem:[%s6813 + $0x688] sm:$0xff]
    %v7024 = vld [vmem:[%s6813 + $0x690] sm:$0xff]
    %v7025 = vld [vmem:[%s6813 + $0x698] sm:$0xff]
    %v7026 = vld [vmem:[%s6813 + $0x6a0] sm:$0xff]
    %v7027 = vld [vmem:[%s6813 + $0x6a8] sm:$0xff]
    %v7028 = vld [vmem:[%s6813 + $0x6b0] sm:$0xff]
    %v7029 = vld [vmem:[%s6813 + $0x6b8] sm:$0xff]
    %v7030 = vld [vmem:[%s6813 + $0x6c0] sm:$0xff]
    %v7031 = vld [vmem:[%s6813 + $0x6c8] sm:$0xff]
    %v7032 = vld [vmem:[%s6813 + $0x6d0] sm:$0xff]
    %v7033 = vld [vmem:[%s6813 + $0x6d8] sm:$0xff]
    %v7034 = vld [vmem:[%s6813 + $0x6e0] sm:$0xff]
    %v7035 = vld [vmem:[%s6813 + $0x6e8] sm:$0xff]
    %v7036 = vld [vmem:[%s6813 + $0x6f0] sm:$0xff]
    %v7037 = vld [vmem:[%s6813 + $0x6f8] sm:$0xff]
    %v7038 = vld [vmem:[%s6813 + $0x700] sm:$0xff]
    %v7039 = vld [vmem:[%s6813 + $0x708] sm:$0xff]
    %v7040 = vld [vmem:[%s6813 + $0x710] sm:$0xff]
    %v7041 = vld [vmem:[%s6813 + $0x718] sm:$0xff]
    %v7042 = vld [vmem:[%s6813 + $0x720] sm:$0xff]
    %v7043 = vld [vmem:[%s6813 + $0x728] sm:$0xff]
    %v7044 = vld [vmem:[%s6813 + $0x730] sm:$0xff]
    %v7045 = vld [vmem:[%s6813 + $0x738] sm:$0xff]
    %v7046 = vld [vmem:[%s6813 + $0x740] sm:$0xff]
    %v7047 = vld [vmem:[%s6813 + $0x748] sm:$0xff]
    %v7048 = vld [vmem:[%s6813 + $0x750] sm:$0xff]
    %v7049 = vld [vmem:[%s6813 + $0x758] sm:$0xff]
    %v7050 = vld [vmem:[%s6813 + $0x760] sm:$0xff]
    %v7051 = vld [vmem:[%s6813 + $0x768] sm:$0xff]
    %v7052 = vld [vmem:[%s6813 + $0x770] sm:$0xff]
    %v7053 = vld [vmem:[%s6813 + $0x778] sm:$0xff]
    %v7054 = vld [vmem:[%s6813 + $0x780] sm:$0xff]
    %v7055 = vld [vmem:[%s6813 + $0x788] sm:$0xff]
    %v7056 = vld [vmem:[%s6813 + $0x790] sm:$0xff]
    %v7057 = vld [vmem:[%s6813 + $0x798] sm:$0xff]
    %v7058 = vld [vmem:[%s6813 + $0x7a0] sm:$0xff]
    %v7059 = vld [vmem:[%s6813 + $0x7a8] sm:$0xff]
    %v7060 = vld [vmem:[%s6813 + $0x7b0] sm:$0xff]
    %v7061 = vld [vmem:[%s6813 + $0x7b8] sm:$0xff]
    %v7062 = vld [vmem:[%s6813 + $0x7c0] sm:$0xff]
    %v7063 = vld [vmem:[%s6813 + $0x7c8] sm:$0xff]
    %v7064 = vld [vmem:[%s6813 + $0x7d0] sm:$0xff]
    %v7065 = vld [vmem:[%s6813 + $0x7d8] sm:$0xff]
    %v7066 = vld [vmem:[%s6813 + $0x7e0] sm:$0xff]
    %v7067 = vld [vmem:[%s6813 + $0x7e8] sm:$0xff]
    %v7068 = vld [vmem:[%s6813 + $0x7f0] sm:$0xff]
    %v7069 = vld [vmem:[%s6813 + $0x7f8] sm:$0xff]
    %v7070 = vld [vmem:[%s6813 + $0x800] sm:$0xff]
    %v7071 = vld [vmem:[%s6813 + $0x808] sm:$0xff]
    %v7072 = vld [vmem:[%s6813 + $0x810] sm:$0xff]
    %v7073 = vld [vmem:[%s6813 + $0x818] sm:$0xff]
    %v7074 = vld [vmem:[%s6813 + $0x820] sm:$0xff]
    %v7075 = vld [vmem:[%s6813 + $0x828] sm:$0xff]
    %v7076 = vld [vmem:[%s6813 + $0x830] sm:$0xff]
    %v7077 = vld [vmem:[%s6813 + $0x838] sm:$0xff]
    %v7078 = vld [vmem:[%s6813 + $0x840] sm:$0xff]
    %v7079 = vld [vmem:[%s6813 + $0x848] sm:$0xff]
    %v7080 = vld [vmem:[%s6813 + $0x850] sm:$0xff]
    %v7081 = vld [vmem:[%s6813 + $0x858] sm:$0xff]
    %v7082 = vld [vmem:[%s6813 + $0x860] sm:$0xff]
    %v7083 = vld [vmem:[%s6813 + $0x868] sm:$0xff]
    %v7084 = vld [vmem:[%s6813 + $0x870] sm:$0xff]
    %v7085 = vld [vmem:[%s6813 + $0x878] sm:$0xff]
    %v7086 = vld [vmem:[%s6813 + $0x880] sm:$0xff]
    %v7087 = vld [vmem:[%s6813 + $0x888] sm:$0xff]
    %v7088 = vld [vmem:[%s6813 + $0x890] sm:$0xff]
    %v7089 = vld [vmem:[%s6813 + $0x898] sm:$0xff]
    %v7090 = vld [vmem:[%s6813 + $0x8a0] sm:$0xff]
    %v7091 = vld [vmem:[%s6813 + $0x8a8] sm:$0xff]
    %v7092 = vld [vmem:[%s6813 + $0x8b0] sm:$0xff]
    %v7093 = vld [vmem:[%s6813 + $0x8b8] sm:$0xff]
    %v7094 = vld [vmem:[%s6813 + $0x8c0] sm:$0xff]
    %v7095 = vld [vmem:[%s6813 + $0x8c8] sm:$0xff]
    %v7096 = vld [vmem:[%s6813 + $0x8d0] sm:$0xff]
    %v7097 = vld [vmem:[%s6813 + $0x8d8] sm:$0xff]
    %v7098 = vld [vmem:[%s6813 + $0x8e0] sm:$0xff]
    %v7099 = vld [vmem:[%s6813 + $0x8e8] sm:$0xff]
    %v7100 = vld [vmem:[%s6813 + $0x8f0] sm:$0xff]
    %v7101 = vld [vmem:[%s6813 + $0x8f8] sm:$0xff]
    %v7102 = vunpack.c.l.b16 %v6776
    %v7103 = vunpack.c.h.b16 %v6776
    %v7104 = vunpack.c.l.b16 %v6780
    %v7105 = vunpack.c.h.b16 %v6780
    %v7106 = vunpack.c.l.b16 %v6784
    %v7107 = vunpack.c.h.b16 %v6784
    %v7108 = vunpack.c.l.b16 %v6788
    %v7109 = vunpack.c.h.b16 %v6788
    %v7110 = vunpack.c.l.b16 %v6792
    %v7111 = vunpack.c.l.b16 %v6796
    %v7112 = vunpack.c.h.b16 %v6796
    %v7113 = vunpack.c.l.b16 %v6800
    %v7114 = vunpack.c.h.b16 %v6800
    %v7115 = vunpack.c.l.b16 %v6804
    %v7116 = vunpack.c.h.b16 %v6804
    %v7117 = vunpack.c.l.b16 %v6808
    %v7118 = vunpack.c.h.b16 %v6808
    %v7119 = vunpack.c.l.b16 %v6812
    %v7120 = vpack.c.b16 %v7111, %v7102
    %v7121 = vpack.c.b16 %v7112, %v7103
    %v7122 = vpack.c.b16 %v7113, %v7104
    %v7123 = vpack.c.b16 %v7114, %v7105
    %v7124 = vpack.c.b16 %v7115, %v7106
    %v7125 = vpack.c.b16 %v7116, %v7107
    %v7126 = vpack.c.b16 %v7117, %v7108
    %v7127 = vpack.c.b16 %v7118, %v7109
    %v7128 = vpack.c.b16 %v7119, %v7110
    %v7426 = vunpack.c.l.b16 %v6814
    %v7427 = vunpack.c.h.b16 %v6814
    %v7428 = vunpack.c.l.b16 %v6815
    %v7429 = vunpack.c.h.b16 %v6815
    %v7430 = vunpack.c.l.b16 %v6816
    %v7431 = vunpack.c.h.b16 %v6816
    %v7432 = vunpack.c.l.b16 %v6817
    %v7433 = vunpack.c.h.b16 %v6817
    %v7434 = vunpack.c.l.b16 %v6818
    %v7435 = vunpack.c.h.b16 %v6818
    %v7436 = vunpack.c.l.b16 %v6819
    %v7437 = vunpack.c.h.b16 %v6819
    %v7438 = vunpack.c.l.b16 %v6820
    %v7439 = vunpack.c.h.b16 %v6820
    %v7440 = vunpack.c.l.b16 %v6821
    %v7441 = vunpack.c.h.b16 %v6821
    %v7442 = vunpack.c.l.b16 %v6822
    %v7443 = vunpack.c.h.b16 %v6822
    %v7444 = vunpack.c.l.b16 %v6823
    %v7445 = vunpack.c.h.b16 %v6823
    %v7446 = vunpack.c.l.b16 %v6824
    %v7447 = vunpack.c.h.b16 %v6824
    %v7448 = vunpack.c.l.b16 %v6825
    %v7449 = vunpack.c.h.b16 %v6825
    %v7450 = vunpack.c.l.b16 %v6826
    %v7451 = vunpack.c.h.b16 %v6826
    %v7452 = vunpack.c.l.b16 %v6827
    %v7453 = vunpack.c.h.b16 %v6827
    %v7454 = vunpack.c.l.b16 %v6828
    %v7455 = vunpack.c.h.b16 %v6828
    %v7456 = vunpack.c.l.b16 %v6829
    %v7457 = vunpack.c.h.b16 %v6829
    %v7458 = vunpack.c.l.b16 %v6830
    %v7459 = vunpack.c.h.b16 %v6830
    %v7460 = vunpack.c.l.b16 %v6831
    %v7461 = vunpack.c.h.b16 %v6831
    %v7462 = vunpack.c.l.b16 %v6832
    %v7463 = vunpack.c.h.b16 %v6832
    %v7464 = vunpack.c.l.b16 %v6833
    %v7465 = vunpack.c.h.b16 %v6833
    %v7466 = vunpack.c.l.b16 %v6834
    %v7467 = vunpack.c.h.b16 %v6834
    %v7468 = vunpack.c.l.b16 %v6835
    %v7469 = vunpack.c.h.b16 %v6835
    %v7470 = vunpack.c.l.b16 %v6836
    %v7471 = vunpack.c.h.b16 %v6836
    %v7472 = vunpack.c.l.b16 %v6837
    %v7473 = vunpack.c.h.b16 %v6837
    %v7474 = vunpack.c.l.b16 %v6838
    %v7475 = vunpack.c.h.b16 %v6838
    %v7476 = vunpack.c.l.b16 %v6839
    %v7477 = vunpack.c.h.b16 %v6839
    %v7478 = vunpack.c.l.b16 %v6840
    %v7479 = vunpack.c.h.b16 %v6840
    %v7480 = vunpack.c.l.b16 %v6841
    %v7481 = vunpack.c.h.b16 %v6841
    %v7482 = vunpack.c.l.b16 %v6842
    %v7483 = vunpack.c.h.b16 %v6842
    %v7484 = vunpack.c.l.b16 %v6843
    %v7485 = vunpack.c.h.b16 %v6843
    %v7486 = vunpack.c.l.b16 %v6844
    %v7487 = vunpack.c.h.b16 %v6844
    %v7488 = vunpack.c.l.b16 %v6845
    %v7489 = vunpack.c.h.b16 %v6845
    %v7490 = vunpack.c.l.b16 %v6846
    %v7491 = vunpack.c.h.b16 %v6846
    %v7492 = vunpack.c.l.b16 %v6847
    %v7493 = vunpack.c.h.b16 %v6847
    %v7494 = vunpack.c.l.b16 %v6848
    %v7495 = vunpack.c.h.b16 %v6848
    %v7496 = vunpack.c.l.b16 %v6849
    %v7497 = vunpack.c.h.b16 %v6849
    %v7498 = vunpack.c.l.b16 %v6850
    %v7499 = vunpack.c.h.b16 %v6850
    %v7500 = vunpack.c.l.b16 %v6851
    %v7501 = vunpack.c.h.b16 %v6851
    %v7502 = vunpack.c.l.b16 %v6852
    %v7503 = vunpack.c.h.b16 %v6852
    %v7504 = vunpack.c.l.b16 %v6853
    %v7505 = vunpack.c.h.b16 %v6853
    %v7506 = vunpack.c.l.b16 %v6854
    %v7507 = vunpack.c.h.b16 %v6854
    %v7508 = vunpack.c.l.b16 %v6855
    %v7509 = vunpack.c.h.b16 %v6855
    %v7510 = vunpack.c.l.b16 %v6856
    %v7511 = vunpack.c.h.b16 %v6856
    %v7512 = vunpack.c.l.b16 %v6857
    %v7513 = vunpack.c.h.b16 %v6857
    %v7514 = vunpack.c.l.b16 %v6858
    %v7515 = vunpack.c.h.b16 %v6858
    %v7516 = vunpack.c.l.b16 %v6859
    %v7517 = vunpack.c.h.b16 %v6859
    %v7518 = vunpack.c.l.b16 %v6860
    %v7519 = vunpack.c.h.b16 %v6860
    %v7520 = vunpack.c.l.b16 %v6861
    %v7521 = vunpack.c.h.b16 %v6861
    %v7522 = vunpack.c.l.b16 %v6862
    %v7523 = vunpack.c.h.b16 %v6862
    %v7524 = vunpack.c.l.b16 %v6863
    %v7525 = vunpack.c.h.b16 %v6863
    %v7526 = vunpack.c.l.b16 %v6864
    %v7527 = vunpack.c.h.b16 %v6864
    %v7528 = vunpack.c.l.b16 %v6865
    %v7529 = vunpack.c.h.b16 %v6865
    %v7530 = vunpack.c.l.b16 %v6866
    %v7531 = vunpack.c.h.b16 %v6866
    %v7532 = vunpack.c.l.b16 %v6867
    %v7533 = vunpack.c.h.b16 %v6867
    %v7534 = vunpack.c.l.b16 %v6868
    %v7535 = vunpack.c.h.b16 %v6868
    %v7536 = vunpack.c.l.b16 %v6869
    %v7537 = vunpack.c.h.b16 %v6869
    %v7538 = vunpack.c.l.b16 %v6870
    %v7539 = vunpack.c.h.b16 %v6870
    %v7540 = vunpack.c.l.b16 %v6871
    %v7541 = vunpack.c.h.b16 %v6871
    %v7542 = vunpack.c.l.b16 %v6872
    %v7543 = vunpack.c.h.b16 %v6872
    %v7544 = vunpack.c.l.b16 %v6873
    %v7545 = vunpack.c.h.b16 %v6873
    %v7546 = vunpack.c.l.b16 %v6874
    %v7547 = vunpack.c.h.b16 %v6874
    %v7548 = vunpack.c.l.b16 %v6875
    %v7549 = vunpack.c.h.b16 %v6875
    %v7550 = vunpack.c.l.b16 %v6876
    %v7551 = vunpack.c.h.b16 %v6876
    %v7552 = vunpack.c.l.b16 %v6877
    %v7553 = vunpack.c.h.b16 %v6877
    %v7554 = vunpack.c.l.b16 %v6878
    %v7555 = vunpack.c.h.b16 %v6878
    %v7556 = vunpack.c.l.b16 %v6879
    %v7557 = vunpack.c.h.b16 %v6879
    %v7558 = vunpack.c.l.b16 %v6880
    %v7559 = vunpack.c.h.b16 %v6880
    %v7560 = vunpack.c.l.b16 %v6881
    %v7561 = vunpack.c.h.b16 %v6881
    %v7562 = vunpack.c.l.b16 %v6882
    %v7563 = vunpack.c.h.b16 %v6882
    %v7564 = vunpack.c.l.b16 %v6883
    %v7565 = vunpack.c.h.b16 %v6883
    %v7566 = vunpack.c.l.b16 %v6884
    %v7567 = vunpack.c.h.b16 %v6884
    %v7568 = vunpack.c.l.b16 %v6885
    %v7569 = vunpack.c.h.b16 %v6885
    %v7570 = vunpack.c.l.b16 %v6886
    %v7571 = vunpack.c.h.b16 %v6886
    %v7572 = vunpack.c.l.b16 %v6887
    %v7573 = vunpack.c.h.b16 %v6887
    %v7574 = vunpack.c.l.b16 %v6888
    %v7575 = vunpack.c.h.b16 %v6888
    %v7576 = vunpack.c.l.b16 %v6889
    %v7577 = vunpack.c.h.b16 %v6889
    %v7578 = vunpack.c.l.b16 %v6890
    %v7579 = vunpack.c.h.b16 %v6890
    %v7580 = vunpack.c.l.b16 %v6891
    %v7581 = vunpack.c.h.b16 %v6891
    %v7582 = vunpack.c.l.b16 %v6892
    %v7583 = vunpack.c.h.b16 %v6892
    %v7584 = vunpack.c.l.b16 %v6893
    %v7585 = vunpack.c.h.b16 %v6893
    %v7586 = vunpack.c.l.b16 %v6894
    %v7587 = vunpack.c.h.b16 %v6894
    %v7588 = vunpack.c.l.b16 %v6895
    %v7589 = vunpack.c.h.b16 %v6895
    %v7590 = vunpack.c.l.b16 %v6896
    %v7591 = vunpack.c.h.b16 %v6896
    %v7592 = vunpack.c.l.b16 %v6897
    %v7593 = vunpack.c.h.b16 %v6897
    %v7594 = vunpack.c.l.b16 %v6898
    %v7595 = vunpack.c.h.b16 %v6898
    %v7596 = vunpack.c.l.b16 %v6899
    %v7597 = vunpack.c.h.b16 %v6899
    %v7598 = vunpack.c.l.b16 %v6900
    %v7599 = vunpack.c.h.b16 %v6900
    %v7600 = vunpack.c.l.b16 %v6901
    %v7601 = vunpack.c.h.b16 %v6901
    %v7602 = vunpack.c.l.b16 %v6902
    %v7603 = vunpack.c.h.b16 %v6902
    %v7604 = vunpack.c.l.b16 %v6903
    %v7605 = vunpack.c.h.b16 %v6903
    %v7606 = vunpack.c.l.b16 %v6904
    %v7607 = vunpack.c.h.b16 %v6904
    %v7608 = vunpack.c.l.b16 %v6905
    %v7609 = vunpack.c.h.b16 %v6905
    %v7610 = vunpack.c.l.b16 %v6906
    %v7611 = vunpack.c.h.b16 %v6906
    %v7612 = vunpack.c.l.b16 %v6907
    %v7613 = vunpack.c.h.b16 %v6907
    %v7614 = vunpack.c.l.b16 %v6908
    %v7615 = vunpack.c.h.b16 %v6908
    %v7616 = vunpack.c.l.b16 %v6909
    %v7617 = vunpack.c.h.b16 %v6909
    %v7618 = vunpack.c.l.b16 %v6910
    %v7619 = vunpack.c.h.b16 %v6910
    %v7620 = vunpack.c.l.b16 %v6911
    %v7621 = vunpack.c.h.b16 %v6911
    %v7622 = vunpack.c.l.b16 %v6912
    %v7623 = vunpack.c.h.b16 %v6912
    %v7624 = vunpack.c.l.b16 %v6913
    %v7625 = vunpack.c.h.b16 %v6913
    %v7626 = vunpack.c.l.b16 %v6914
    %v7627 = vunpack.c.h.b16 %v6914
    %v7628 = vunpack.c.l.b16 %v6915
    %v7629 = vunpack.c.h.b16 %v6915
    %v7630 = vunpack.c.l.b16 %v6916
    %v7631 = vunpack.c.h.b16 %v6916
    %v7632 = vunpack.c.l.b16 %v6917
    %v7633 = vunpack.c.h.b16 %v6917
    %v7634 = vunpack.c.l.b16 %v6918
    %v7635 = vunpack.c.h.b16 %v6918
    %v7636 = vunpack.c.l.b16 %v6919
    %v7637 = vunpack.c.h.b16 %v6919
    %v7638 = vunpack.c.l.b16 %v6920
    %v7639 = vunpack.c.h.b16 %v6920
    %v7640 = vunpack.c.l.b16 %v6921
    %v7641 = vunpack.c.h.b16 %v6921
    %v7642 = vunpack.c.l.b16 %v6922
    %v7643 = vunpack.c.h.b16 %v6922
    %v7644 = vunpack.c.l.b16 %v6923
    %v7645 = vunpack.c.h.b16 %v6923
    %v7646 = vunpack.c.l.b16 %v6924
    %v7647 = vunpack.c.h.b16 %v6924
    %v7648 = vunpack.c.l.b16 %v6925
    %v7649 = vunpack.c.h.b16 %v6925
    %v7650 = vunpack.c.l.b16 %v6926
    %v7651 = vunpack.c.h.b16 %v6926
    %v7652 = vunpack.c.l.b16 %v6927
    %v7653 = vunpack.c.h.b16 %v6927
    %v7654 = vunpack.c.l.b16 %v6928
    %v7655 = vunpack.c.h.b16 %v6928
    %v7656 = vunpack.c.l.b16 %v6929
    %v7657 = vunpack.c.h.b16 %v6929
    %v7658 = vunpack.c.l.b16 %v6930
    %v7659 = vunpack.c.h.b16 %v6930
    %v7660 = vunpack.c.l.b16 %v6931
    %v7661 = vunpack.c.h.b16 %v6931
    %v7662 = vunpack.c.l.b16 %v6932
    %v7663 = vunpack.c.h.b16 %v6932
    %v7664 = vunpack.c.l.b16 %v6933
    %v7665 = vunpack.c.h.b16 %v6933
    %v7666 = vunpack.c.l.b16 %v6934
    %v7667 = vunpack.c.h.b16 %v6934
    %v7668 = vunpack.c.l.b16 %v6935
    %v7669 = vunpack.c.h.b16 %v6935
    %v7670 = vunpack.c.l.b16 %v6936
    %v7671 = vunpack.c.h.b16 %v6936
    %v7672 = vunpack.c.l.b16 %v6937
    %v7673 = vunpack.c.h.b16 %v6937
    %v7674 = vunpack.c.l.b16 %v6938
    %v7675 = vunpack.c.h.b16 %v6938
    %v7676 = vunpack.c.l.b16 %v6939
    %v7677 = vunpack.c.h.b16 %v6939
    %v7678 = vunpack.c.l.b16 %v6940
    %v7679 = vunpack.c.h.b16 %v6940
    %v7680 = vunpack.c.l.b16 %v6941
    %v7681 = vunpack.c.h.b16 %v6941
    %v7682 = vunpack.c.l.b16 %v6942
    %v7683 = vunpack.c.h.b16 %v6942
    %v7684 = vunpack.c.l.b16 %v6943
    %v7685 = vunpack.c.h.b16 %v6943
    %v7686 = vunpack.c.l.b16 %v6944
    %v7687 = vunpack.c.h.b16 %v6944
    %v7688 = vunpack.c.l.b16 %v6945
    %v7689 = vunpack.c.h.b16 %v6945
    %v7690 = vunpack.c.l.b16 %v6946
    %v7691 = vunpack.c.h.b16 %v6946
    %v7692 = vunpack.c.l.b16 %v6947
    %v7693 = vunpack.c.h.b16 %v6947
    %v7694 = vunpack.c.l.b16 %v6948
    %v7695 = vunpack.c.h.b16 %v6948
    %v7696 = vunpack.c.l.b16 %v6949
    %v7697 = vunpack.c.h.b16 %v6949
    %v7698 = vunpack.c.l.b16 %v6950
    %v7699 = vunpack.c.h.b16 %v6950
    %v7700 = vunpack.c.l.b16 %v6951
    %v7701 = vunpack.c.h.b16 %v6951
    %v7702 = vunpack.c.l.b16 %v6952
    %v7703 = vunpack.c.h.b16 %v6952
    %v7704 = vunpack.c.l.b16 %v6953
    %v7705 = vunpack.c.h.b16 %v6953
    %v7706 = vunpack.c.l.b16 %v6954
    %v7707 = vunpack.c.h.b16 %v6954
    %v7708 = vunpack.c.l.b16 %v6955
    %v7709 = vunpack.c.h.b16 %v6955
    %v7710 = vunpack.c.l.b16 %v6956
    %v7711 = vunpack.c.h.b16 %v6956
    %v7712 = vunpack.c.l.b16 %v6957
    %v7713 = vunpack.c.h.b16 %v6957
    %v7714 = vunpack.c.l.b16 %v6958
    %v7715 = vunpack.c.h.b16 %v6958
    %v7716 = vunpack.c.l.b16 %v6959
    %v7717 = vunpack.c.h.b16 %v6959
    %v7718 = vunpack.c.l.b16 %v6960
    %v7719 = vunpack.c.h.b16 %v6960
    %v7720 = vunpack.c.l.b16 %v6961
    %v7721 = vunpack.c.h.b16 %v6961
    %v7722 = vunpack.c.l.b16 %v6962
    %v7723 = vunpack.c.h.b16 %v6962
    %v7724 = vunpack.c.l.b16 %v6963
    %v7725 = vunpack.c.h.b16 %v6963
    %v7726 = vunpack.c.l.b16 %v6964
    %v7727 = vunpack.c.h.b16 %v6964
    %v7728 = vunpack.c.l.b16 %v6965
    %v7729 = vunpack.c.h.b16 %v6965
    %v7730 = vunpack.c.l.b16 %v6966
    %v7731 = vunpack.c.h.b16 %v6966
    %v7732 = vunpack.c.l.b16 %v6967
    %v7733 = vunpack.c.h.b16 %v6967
    %v7734 = vunpack.c.l.b16 %v6968
    %v7735 = vunpack.c.h.b16 %v6968
    %v7736 = vunpack.c.l.b16 %v6969
    %v7737 = vunpack.c.h.b16 %v6969
    %v7738 = vunpack.c.l.b16 %v6970
    %v7739 = vunpack.c.h.b16 %v6970
    %v7740 = vunpack.c.l.b16 %v6971
    %v7741 = vunpack.c.h.b16 %v6971
    %v7742 = vunpack.c.l.b16 %v6972
    %v7743 = vunpack.c.h.b16 %v6972
    %v7744 = vunpack.c.l.b16 %v6973
    %v7745 = vunpack.c.h.b16 %v6973
    %v7746 = vunpack.c.l.b16 %v6974
    %v7747 = vunpack.c.h.b16 %v6974
    %v7748 = vunpack.c.l.b16 %v6975
    %v7749 = vunpack.c.h.b16 %v6975
    %v7750 = vunpack.c.l.b16 %v6976
    %v7751 = vunpack.c.h.b16 %v6976
    %v7752 = vunpack.c.l.b16 %v6977
    %v7753 = vunpack.c.h.b16 %v6977
    %v7754 = vunpack.c.l.b16 %v6978
    %v7755 = vunpack.c.h.b16 %v6978
    %v7756 = vunpack.c.l.b16 %v6979
    %v7757 = vunpack.c.h.b16 %v6979
    %v7758 = vunpack.c.l.b16 %v6980
    %v7759 = vunpack.c.h.b16 %v6980
    %v7760 = vunpack.c.l.b16 %v6981
    %v7761 = vunpack.c.h.b16 %v6981
    %v7762 = vunpack.c.l.b16 %v6982
    %v7763 = vunpack.c.h.b16 %v6982
    %v7764 = vunpack.c.l.b16 %v6983
    %v7765 = vunpack.c.h.b16 %v6983
    %v7766 = vunpack.c.l.b16 %v6984
    %v7767 = vunpack.c.h.b16 %v6984
    %v7768 = vunpack.c.l.b16 %v6985
    %v7769 = vunpack.c.h.b16 %v6985
    %v7770 = vunpack.c.l.b16 %v6986
    %v7771 = vunpack.c.h.b16 %v6986
    %v7772 = vunpack.c.l.b16 %v6987
    %v7773 = vunpack.c.h.b16 %v6987
    %v7774 = vunpack.c.l.b16 %v6988
    %v7775 = vunpack.c.h.b16 %v6988
    %v7776 = vunpack.c.l.b16 %v6989
    %v7777 = vunpack.c.h.b16 %v6989
    %v7778 = vunpack.c.l.b16 %v6990
    %v7779 = vunpack.c.h.b16 %v6990
    %v7780 = vunpack.c.l.b16 %v6991
    %v7781 = vunpack.c.h.b16 %v6991
    %v7782 = vunpack.c.l.b16 %v6992
    %v7783 = vunpack.c.h.b16 %v6992
    %v7784 = vunpack.c.l.b16 %v6993
    %v7785 = vunpack.c.h.b16 %v6993
    %v7786 = vunpack.c.l.b16 %v6994
    %v7787 = vunpack.c.h.b16 %v6994
    %v7788 = vunpack.c.l.b16 %v6995
    %v7789 = vunpack.c.h.b16 %v6995
    %v7790 = vunpack.c.l.b16 %v6996
    %v7791 = vunpack.c.h.b16 %v6996
    %v7792 = vunpack.c.l.b16 %v6997
    %v7793 = vunpack.c.h.b16 %v6997
    %v7794 = vunpack.c.l.b16 %v6998
    %v7795 = vunpack.c.h.b16 %v6998
    %v7796 = vunpack.c.l.b16 %v6999
    %v7797 = vunpack.c.h.b16 %v6999
    %v7798 = vunpack.c.l.b16 %v7000
    %v7799 = vunpack.c.h.b16 %v7000
    %v7800 = vunpack.c.l.b16 %v7001
    %v7801 = vunpack.c.h.b16 %v7001
    %v7802 = vunpack.c.l.b16 %v7002
    %v7803 = vunpack.c.h.b16 %v7002
    %v7804 = vunpack.c.l.b16 %v7003
    %v7805 = vunpack.c.h.b16 %v7003
    %v7806 = vunpack.c.l.b16 %v7004
    %v7807 = vunpack.c.h.b16 %v7004
    %v7808 = vunpack.c.l.b16 %v7005
    %v7809 = vunpack.c.h.b16 %v7005
    %v7810 = vunpack.c.l.b16 %v7006
    %v7811 = vunpack.c.h.b16 %v7006
    %v7812 = vunpack.c.l.b16 %v7007
    %v7813 = vunpack.c.h.b16 %v7007
    %v7814 = vunpack.c.l.b16 %v7008
    %v7815 = vunpack.c.h.b16 %v7008
    %v7816 = vunpack.c.l.b16 %v7009
    %v7817 = vunpack.c.h.b16 %v7009
    %v7818 = vunpack.c.l.b16 %v7010
    %v7819 = vunpack.c.h.b16 %v7010
    %v7820 = vunpack.c.l.b16 %v7011
    %v7821 = vunpack.c.h.b16 %v7011
    %v7822 = vunpack.c.l.b16 %v7012
    %v7823 = vunpack.c.h.b16 %v7012
    %v7824 = vunpack.c.l.b16 %v7013
    %v7825 = vunpack.c.h.b16 %v7013
    %v7826 = vunpack.c.l.b16 %v7014
    %v7827 = vunpack.c.h.b16 %v7014
    %v7828 = vunpack.c.l.b16 %v7015
    %v7829 = vunpack.c.h.b16 %v7015
    %v7830 = vunpack.c.l.b16 %v7016
    %v7831 = vunpack.c.h.b16 %v7016
    %v7832 = vunpack.c.l.b16 %v7017
    %v7833 = vunpack.c.h.b16 %v7017
    %v7834 = vunpack.c.l.b16 %v7018
    %v7835 = vunpack.c.h.b16 %v7018
    %v7836 = vunpack.c.l.b16 %v7019
    %v7837 = vunpack.c.h.b16 %v7019
    %v7838 = vunpack.c.l.b16 %v7020
    %v7839 = vunpack.c.h.b16 %v7020
    %v7840 = vunpack.c.l.b16 %v7021
    %v7841 = vunpack.c.h.b16 %v7021
    %v7842 = vunpack.c.l.b16 %v7022
    %v7843 = vunpack.c.h.b16 %v7022
    %v7844 = vunpack.c.l.b16 %v7023
    %v7845 = vunpack.c.h.b16 %v7023
    %v7846 = vunpack.c.l.b16 %v7024
    %v7847 = vunpack.c.h.b16 %v7024
    %v7848 = vunpack.c.l.b16 %v7025
    %v7849 = vunpack.c.h.b16 %v7025
    %v7850 = vunpack.c.l.b16 %v7026
    %v7851 = vunpack.c.h.b16 %v7026
    %v7852 = vunpack.c.l.b16 %v7027
    %v7853 = vunpack.c.h.b16 %v7027
    %v7854 = vunpack.c.l.b16 %v7028
    %v7855 = vunpack.c.h.b16 %v7028
    %v7856 = vunpack.c.l.b16 %v7029
    %v7857 = vunpack.c.h.b16 %v7029
    %v7858 = vunpack.c.l.b16 %v7030
    %v7859 = vunpack.c.h.b16 %v7030
    %v7860 = vunpack.c.l.b16 %v7031
    %v7861 = vunpack.c.h.b16 %v7031
    %v7862 = vunpack.c.l.b16 %v7032
    %v7863 = vunpack.c.h.b16 %v7032
    %v7864 = vunpack.c.l.b16 %v7033
    %v7865 = vunpack.c.h.b16 %v7033
    %v7866 = vunpack.c.l.b16 %v7034
    %v7867 = vunpack.c.h.b16 %v7034
    %v7868 = vunpack.c.l.b16 %v7035
    %v7869 = vunpack.c.h.b16 %v7035
    %v7870 = vunpack.c.l.b16 %v7036
    %v7871 = vunpack.c.h.b16 %v7036
    %v7872 = vunpack.c.l.b16 %v7037
    %v7873 = vunpack.c.h.b16 %v7037
    %v7874 = vunpack.c.l.b16 %v7038
    %v7875 = vunpack.c.h.b16 %v7038
    %v7876 = vunpack.c.l.b16 %v7039
    %v7877 = vunpack.c.h.b16 %v7039
    %v7878 = vunpack.c.l.b16 %v7040
    %v7879 = vunpack.c.h.b16 %v7040
    %v7880 = vunpack.c.l.b16 %v7041
    %v7881 = vunpack.c.h.b16 %v7041
    %v7882 = vunpack.c.l.b16 %v7042
    %v7883 = vunpack.c.h.b16 %v7042
    %v7884 = vunpack.c.l.b16 %v7043
    %v7885 = vunpack.c.h.b16 %v7043
    %v7886 = vunpack.c.l.b16 %v7044
    %v7887 = vunpack.c.h.b16 %v7044
    %v7888 = vunpack.c.l.b16 %v7045
    %v7889 = vunpack.c.h.b16 %v7045
    %v7890 = vunpack.c.l.b16 %v7046
    %v7891 = vunpack.c.h.b16 %v7046
    %v7892 = vunpack.c.l.b16 %v7047
    %v7893 = vunpack.c.h.b16 %v7047
    %v7894 = vunpack.c.l.b16 %v7048
    %v7895 = vunpack.c.h.b16 %v7048
    %v7896 = vunpack.c.l.b16 %v7049
    %v7897 = vunpack.c.h.b16 %v7049
    %v7898 = vunpack.c.l.b16 %v7050
    %v7899 = vunpack.c.h.b16 %v7050
    %v7900 = vunpack.c.l.b16 %v7051
    %v7901 = vunpack.c.h.b16 %v7051
    %v7902 = vunpack.c.l.b16 %v7052
    %v7903 = vunpack.c.h.b16 %v7052
    %v7904 = vunpack.c.l.b16 %v7053
    %v7905 = vunpack.c.h.b16 %v7053
    %v7906 = vunpack.c.l.b16 %v7054
    %v7907 = vunpack.c.h.b16 %v7054
    %v7908 = vunpack.c.l.b16 %v7055
    %v7909 = vunpack.c.h.b16 %v7055
    %v7910 = vunpack.c.l.b16 %v7056
    %v7911 = vunpack.c.h.b16 %v7056
    %v7912 = vunpack.c.l.b16 %v7057
    %v7913 = vunpack.c.h.b16 %v7057
    %v7914 = vunpack.c.l.b16 %v7058
    %v7915 = vunpack.c.h.b16 %v7058
    %v7916 = vunpack.c.l.b16 %v7059
    %v7917 = vunpack.c.h.b16 %v7059
    %v7918 = vunpack.c.l.b16 %v7060
    %v7919 = vunpack.c.h.b16 %v7060
    %v7920 = vunpack.c.l.b16 %v7061
    %v7921 = vunpack.c.h.b16 %v7061
    %v7922 = vunpack.c.l.b16 %v7062
    %v7923 = vunpack.c.h.b16 %v7062
    %v7924 = vunpack.c.l.b16 %v7063
    %v7925 = vunpack.c.h.b16 %v7063
    %v7926 = vunpack.c.l.b16 %v7064
    %v7927 = vunpack.c.h.b16 %v7064
    %v7928 = vunpack.c.l.b16 %v7065
    %v7929 = vunpack.c.h.b16 %v7065
    %v7930 = vunpack.c.l.b16 %v7066
    %v7931 = vunpack.c.h.b16 %v7066
    %v7932 = vunpack.c.l.b16 %v7067
    %v7933 = vunpack.c.h.b16 %v7067
    %v7934 = vunpack.c.l.b16 %v7068
    %v7935 = vunpack.c.h.b16 %v7068
    %v7936 = vunpack.c.l.b16 %v7069
    %v7937 = vunpack.c.h.b16 %v7069
    %v7938 = vunpack.c.l.b16 %v7070
    %v7939 = vunpack.c.h.b16 %v7070
    %v7940 = vunpack.c.l.b16 %v7071
    %v7941 = vunpack.c.h.b16 %v7071
    %v7942 = vunpack.c.l.b16 %v7072
    %v7943 = vunpack.c.h.b16 %v7072
    %v7944 = vunpack.c.l.b16 %v7073
    %v7945 = vunpack.c.h.b16 %v7073
    %v7946 = vunpack.c.l.b16 %v7074
    %v7947 = vunpack.c.h.b16 %v7074
    %v7948 = vunpack.c.l.b16 %v7075
    %v7949 = vunpack.c.h.b16 %v7075
    %v7950 = vunpack.c.l.b16 %v7076
    %v7951 = vunpack.c.h.b16 %v7076
    %v7952 = vunpack.c.l.b16 %v7077
    %v7953 = vunpack.c.h.b16 %v7077
    %v7954 = vunpack.c.l.b16 %v7078
    %v7955 = vunpack.c.h.b16 %v7078
    %v7956 = vunpack.c.l.b16 %v7079
    %v7957 = vunpack.c.h.b16 %v7079
    %v7958 = vunpack.c.l.b16 %v7080
    %v7959 = vunpack.c.h.b16 %v7080
    %v7960 = vunpack.c.l.b16 %v7081
    %v7961 = vunpack.c.h.b16 %v7081
    %v7962 = vunpack.c.l.b16 %v7082
    %v7963 = vunpack.c.h.b16 %v7082
    %v7964 = vunpack.c.l.b16 %v7083
    %v7965 = vunpack.c.h.b16 %v7083
    %v7966 = vunpack.c.l.b16 %v7084
    %v7967 = vunpack.c.h.b16 %v7084
    %v7968 = vunpack.c.l.b16 %v7085
    %v7969 = vunpack.c.h.b16 %v7085
    %v7970 = vunpack.c.l.b16 %v7086
    %v7971 = vunpack.c.h.b16 %v7086
    %v7972 = vunpack.c.l.b16 %v7087
    %v7973 = vunpack.c.h.b16 %v7087
    %v7974 = vunpack.c.l.b16 %v7088
    %v7975 = vunpack.c.h.b16 %v7088
    %v7976 = vunpack.c.l.b16 %v7089
    %v7977 = vunpack.c.h.b16 %v7089
    %v7978 = vunpack.c.l.b16 %v7090
    %v7979 = vunpack.c.h.b16 %v7090
    %v7980 = vunpack.c.l.b16 %v7091
    %v7981 = vunpack.c.h.b16 %v7091
    %v7982 = vunpack.c.l.b16 %v7092
    %v7983 = vunpack.c.h.b16 %v7092
    %v7984 = vunpack.c.l.b16 %v7093
    %v7985 = vunpack.c.h.b16 %v7093
    %v7986 = vunpack.c.l.b16 %v7094
    %v7987 = vunpack.c.h.b16 %v7094
    %v7988 = vunpack.c.l.b16 %v7095
    %v7989 = vunpack.c.h.b16 %v7095
    %v7990 = vunpack.c.l.b16 %v7096
    %v7991 = vunpack.c.h.b16 %v7096
    %v7992 = vunpack.c.l.b16 %v7097
    %v7993 = vunpack.c.h.b16 %v7097
    %v7994 = vunpack.c.l.b16 %v7098
    %v7995 = vunpack.c.h.b16 %v7098
    %v7996 = vunpack.c.l.b16 %v7099
    %v7997 = vunpack.c.h.b16 %v7099
    %v7998 = vunpack.c.l.b16 %v7100
    %v7999 = vunpack.c.h.b16 %v7100
    %v8000 = vunpack.c.l.b16 %v7101
    %v8001 = vunpack.c.h.b16 %v7101
    %v8002 = vpack.c.b16 %v7430, %v7426
    %v8003 = vpack.c.b16 %v7431, %v7427
    %v8004 = vpack.c.b16 %v7432, %v7428
    %v8005 = vpack.c.b16 %v7433, %v7429
    %v8006 = vpack.c.b16 %v7438, %v7434
    %v8007 = vpack.c.b16 %v7439, %v7435
    %v8008 = vpack.c.b16 %v7440, %v7436
    %v8009 = vpack.c.b16 %v7441, %v7437
    %v8010 = vpack.c.b16 %v7446, %v7442
    %v8011 = vpack.c.b16 %v7447, %v7443
    %v8012 = vpack.c.b16 %v7448, %v7444
    %v8013 = vpack.c.b16 %v7449, %v7445
    %v8014 = vpack.c.b16 %v7454, %v7450
    %v8015 = vpack.c.b16 %v7455, %v7451
    %v8016 = vpack.c.b16 %v7456, %v7452
    %v8017 = vpack.c.b16 %v7457, %v7453
    %v8018 = vpack.c.b16 %v7462, %v7458
    %v8019 = vpack.c.b16 %v7463, %v7459
    %v8020 = vpack.c.b16 %v7464, %v7460
    %v8021 = vpack.c.b16 %v7465, %v7461
    %v8022 = vpack.c.b16 %v7470, %v7466
    %v8023 = vpack.c.b16 %v7471, %v7467
    %v8024 = vpack.c.b16 %v7472, %v7468
    %v8025 = vpack.c.b16 %v7473, %v7469
    %v8026 = vpack.c.b16 %v7478, %v7474
    %v8027 = vpack.c.b16 %v7479, %v7475
    %v8028 = vpack.c.b16 %v7480, %v7476
    %v8029 = vpack.c.b16 %v7481, %v7477
    %v8030 = vpack.c.b16 %v7486, %v7482
    %v8031 = vpack.c.b16 %v7487, %v7483
    %v8032 = vpack.c.b16 %v7488, %v7484
    %v8033 = vpack.c.b16 %v7489, %v7485
    %v8034 = vpack.c.b16 %v7494, %v7490
    %v8035 = vpack.c.b16 %v7495, %v7491
    %v8036 = vpack.c.b16 %v7496, %v7492
    %v8037 = vpack.c.b16 %v7497, %v7493
    %v8038 = vpack.c.b16 %v7502, %v7498
    %v8039 = vpack.c.b16 %v7503, %v7499
    %v8040 = vpack.c.b16 %v7504, %v7500
    %v8041 = vpack.c.b16 %v7505, %v7501
    %v8042 = vpack.c.b16 %v7510, %v7506
    %v8043 = vpack.c.b16 %v7511, %v7507
    %v8044 = vpack.c.b16 %v7512, %v7508
    %v8045 = vpack.c.b16 %v7513, %v7509
    %v8046 = vpack.c.b16 %v7518, %v7514
    %v8047 = vpack.c.b16 %v7519, %v7515
    %v8048 = vpack.c.b16 %v7520, %v7516
    %v8049 = vpack.c.b16 %v7521, %v7517
    %v8050 = vpack.c.b16 %v7526, %v7522
    %v8051 = vpack.c.b16 %v7527, %v7523
    %v8052 = vpack.c.b16 %v7528, %v7524
    %v8053 = vpack.c.b16 %v7529, %v7525
    %v8054 = vpack.c.b16 %v7534, %v7530
    %v8055 = vpack.c.b16 %v7535, %v7531
    %v8056 = vpack.c.b16 %v7536, %v7532
    %v8057 = vpack.c.b16 %v7537, %v7533
    %v8058 = vpack.c.b16 %v7542, %v7538
    %v8059 = vpack.c.b16 %v7543, %v7539
    %v8060 = vpack.c.b16 %v7544, %v7540
    %v8061 = vpack.c.b16 %v7545, %v7541
    %v8062 = vpack.c.b16 %v7550, %v7546
    %v8063 = vpack.c.b16 %v7551, %v7547
    %v8064 = vpack.c.b16 %v7552, %v7548
    %v8065 = vpack.c.b16 %v7553, %v7549
    %v8066 = vpack.c.b16 %v7558, %v7554
    %v8067 = vpack.c.b16 %v7559, %v7555
    %v8068 = vpack.c.b16 %v7560, %v7556
    %v8069 = vpack.c.b16 %v7561, %v7557
    %v8070 = vpack.c.b16 %v7566, %v7562
    %v8071 = vpack.c.b16 %v7567, %v7563
    %v8072 = vpack.c.b16 %v7568, %v7564
    %v8073 = vpack.c.b16 %v7569, %v7565
    %v8074 = vpack.c.b16 %v7574, %v7570
    %v8075 = vpack.c.b16 %v7575, %v7571
    %v8076 = vpack.c.b16 %v7576, %v7572
    %v8077 = vpack.c.b16 %v7577, %v7573
    %v8078 = vpack.c.b16 %v7582, %v7578
    %v8079 = vpack.c.b16 %v7583, %v7579
    %v8080 = vpack.c.b16 %v7584, %v7580
    %v8081 = vpack.c.b16 %v7585, %v7581
    %v8082 = vpack.c.b16 %v7590, %v7586
    %v8083 = vpack.c.b16 %v7591, %v7587
    %v8084 = vpack.c.b16 %v7592, %v7588
    %v8085 = vpack.c.b16 %v7593, %v7589
    %v8086 = vpack.c.b16 %v7598, %v7594
    %v8087 = vpack.c.b16 %v7599, %v7595
    %v8088 = vpack.c.b16 %v7600, %v7596
    %v8089 = vpack.c.b16 %v7601, %v7597
    %v8090 = vpack.c.b16 %v7606, %v7602
    %v8091 = vpack.c.b16 %v7607, %v7603
    %v8092 = vpack.c.b16 %v7608, %v7604
    %v8093 = vpack.c.b16 %v7609, %v7605
    %v8094 = vpack.c.b16 %v7614, %v7610
    %v8095 = vpack.c.b16 %v7615, %v7611
    %v8096 = vpack.c.b16 %v7616, %v7612
    %v8097 = vpack.c.b16 %v7617, %v7613
    %v8098 = vpack.c.b16 %v7622, %v7618
    %v8099 = vpack.c.b16 %v7623, %v7619
    %v8100 = vpack.c.b16 %v7624, %v7620
    %v8101 = vpack.c.b16 %v7625, %v7621
    %v8102 = vpack.c.b16 %v7630, %v7626
    %v8103 = vpack.c.b16 %v7631, %v7627
    %v8104 = vpack.c.b16 %v7632, %v7628
    %v8105 = vpack.c.b16 %v7633, %v7629
    %v8106 = vpack.c.b16 %v7638, %v7634
    %v8107 = vpack.c.b16 %v7639, %v7635
    %v8108 = vpack.c.b16 %v7640, %v7636
    %v8109 = vpack.c.b16 %v7641, %v7637
    %v8110 = vpack.c.b16 %v7646, %v7642
    %v8111 = vpack.c.b16 %v7647, %v7643
    %v8112 = vpack.c.b16 %v7648, %v7644
    %v8113 = vpack.c.b16 %v7649, %v7645
    %v8114 = vpack.c.b16 %v7654, %v7650
    %v8115 = vpack.c.b16 %v7655, %v7651
    %v8116 = vpack.c.b16 %v7656, %v7652
    %v8117 = vpack.c.b16 %v7657, %v7653
    %v8118 = vpack.c.b16 %v7662, %v7658
    %v8119 = vpack.c.b16 %v7663, %v7659
    %v8120 = vpack.c.b16 %v7664, %v7660
    %v8121 = vpack.c.b16 %v7665, %v7661
    %v8122 = vpack.c.b16 %v7670, %v7666
    %v8123 = vpack.c.b16 %v7671, %v7667
    %v8124 = vpack.c.b16 %v7672, %v7668
    %v8125 = vpack.c.b16 %v7673, %v7669
    %v8126 = vpack.c.b16 %v7678, %v7674
    %v8127 = vpack.c.b16 %v7679, %v7675
    %v8128 = vpack.c.b16 %v7680, %v7676
    %v8129 = vpack.c.b16 %v7681, %v7677
    %v8130 = vpack.c.b16 %v7686, %v7682
    %v8131 = vpack.c.b16 %v7687, %v7683
    %v8132 = vpack.c.b16 %v7688, %v7684
    %v8133 = vpack.c.b16 %v7689, %v7685
    %v8134 = vpack.c.b16 %v7694, %v7690
    %v8135 = vpack.c.b16 %v7695, %v7691
    %v8136 = vpack.c.b16 %v7696, %v7692
    %v8137 = vpack.c.b16 %v7697, %v7693
    %v8138 = vpack.c.b16 %v7702, %v7698
    %v8139 = vpack.c.b16 %v7703, %v7699
    %v8140 = vpack.c.b16 %v7704, %v7700
    %v8141 = vpack.c.b16 %v7705, %v7701
    %v8142 = vpack.c.b16 %v7710, %v7706
    %v8143 = vpack.c.b16 %v7711, %v7707
    %v8144 = vpack.c.b16 %v7712, %v7708
    %v8145 = vpack.c.b16 %v7713, %v7709
    %v8146 = vpack.c.b16 %v7718, %v7714
    %v8147 = vpack.c.b16 %v7719, %v7715
    %v8148 = vpack.c.b16 %v7720, %v7716
    %v8149 = vpack.c.b16 %v7721, %v7717
    %v8150 = vpack.c.b16 %v7726, %v7722
    %v8151 = vpack.c.b16 %v7727, %v7723
    %v8152 = vpack.c.b16 %v7728, %v7724
    %v8153 = vpack.c.b16 %v7729, %v7725
    %v8154 = vpack.c.b16 %v7734, %v7730
    %v8155 = vpack.c.b16 %v7735, %v7731
    %v8156 = vpack.c.b16 %v7736, %v7732
    %v8157 = vpack.c.b16 %v7737, %v7733
    %v8158 = vpack.c.b16 %v7742, %v7738
    %v8159 = vpack.c.b16 %v7743, %v7739
    %v8160 = vpack.c.b16 %v7744, %v7740
    %v8161 = vpack.c.b16 %v7745, %v7741
    %v8162 = vpack.c.b16 %v7750, %v7746
    %v8163 = vpack.c.b16 %v7751, %v7747
    %v8164 = vpack.c.b16 %v7752, %v7748
    %v8165 = vpack.c.b16 %v7753, %v7749
    %v8166 = vpack.c.b16 %v7758, %v7754
    %v8167 = vpack.c.b16 %v7759, %v7755
    %v8168 = vpack.c.b16 %v7760, %v7756
    %v8169 = vpack.c.b16 %v7761, %v7757
    %v8170 = vpack.c.b16 %v7766, %v7762
    %v8171 = vpack.c.b16 %v7767, %v7763
    %v8172 = vpack.c.b16 %v7768, %v7764
    %v8173 = vpack.c.b16 %v7769, %v7765
    %v8174 = vpack.c.b16 %v7774, %v7770
    %v8175 = vpack.c.b16 %v7775, %v7771
    %v8176 = vpack.c.b16 %v7776, %v7772
    %v8177 = vpack.c.b16 %v7777, %v7773
    %v8178 = vpack.c.b16 %v7782, %v7778
    %v8179 = vpack.c.b16 %v7783, %v7779
    %v8180 = vpack.c.b16 %v7784, %v7780
    %v8181 = vpack.c.b16 %v7785, %v7781
    %v8182 = vpack.c.b16 %v7790, %v7786
    %v8183 = vpack.c.b16 %v7791, %v7787
    %v8184 = vpack.c.b16 %v7792, %v7788
    %v8185 = vpack.c.b16 %v7793, %v7789
    %v8186 = vpack.c.b16 %v7798, %v7794
    %v8187 = vpack.c.b16 %v7799, %v7795
    %v8188 = vpack.c.b16 %v7800, %v7796
    %v8189 = vpack.c.b16 %v7801, %v7797
    %v8190 = vpack.c.b16 %v7806, %v7802
    %v8191 = vpack.c.b16 %v7807, %v7803
    %v8192 = vpack.c.b16 %v7808, %v7804
    %v8193 = vpack.c.b16 %v7809, %v7805
    %v8194 = vpack.c.b16 %v7814, %v7810
    %v8195 = vpack.c.b16 %v7815, %v7811
    %v8196 = vpack.c.b16 %v7816, %v7812
    %v8197 = vpack.c.b16 %v7817, %v7813
    %v8198 = vpack.c.b16 %v7822, %v7818
    %v8199 = vpack.c.b16 %v7823, %v7819
    %v8200 = vpack.c.b16 %v7824, %v7820
    %v8201 = vpack.c.b16 %v7825, %v7821
    %v8202 = vpack.c.b16 %v7830, %v7826
    %v8203 = vpack.c.b16 %v7831, %v7827
    %v8204 = vpack.c.b16 %v7832, %v7828
    %v8205 = vpack.c.b16 %v7833, %v7829
    %v8206 = vpack.c.b16 %v7838, %v7834
    %v8207 = vpack.c.b16 %v7839, %v7835
    %v8208 = vpack.c.b16 %v7840, %v7836
    %v8209 = vpack.c.b16 %v7841, %v7837
    %v8210 = vpack.c.b16 %v7846, %v7842
    %v8211 = vpack.c.b16 %v7847, %v7843
    %v8212 = vpack.c.b16 %v7848, %v7844
    %v8213 = vpack.c.b16 %v7849, %v7845
    %v8214 = vpack.c.b16 %v7854, %v7850
    %v8215 = vpack.c.b16 %v7855, %v7851
    %v8216 = vpack.c.b16 %v7856, %v7852
    %v8217 = vpack.c.b16 %v7857, %v7853
    %v8218 = vpack.c.b16 %v7862, %v7858
    %v8219 = vpack.c.b16 %v7863, %v7859
    %v8220 = vpack.c.b16 %v7864, %v7860
    %v8221 = vpack.c.b16 %v7865, %v7861
    %v8222 = vpack.c.b16 %v7870, %v7866
    %v8223 = vpack.c.b16 %v7871, %v7867
    %v8224 = vpack.c.b16 %v7872, %v7868
    %v8225 = vpack.c.b16 %v7873, %v7869
    %v8226 = vpack.c.b16 %v7878, %v7874
    %v8227 = vpack.c.b16 %v7879, %v7875
    %v8228 = vpack.c.b16 %v7880, %v7876
    %v8229 = vpack.c.b16 %v7881, %v7877
    %v8230 = vpack.c.b16 %v7886, %v7882
    %v8231 = vpack.c.b16 %v7887, %v7883
    %v8232 = vpack.c.b16 %v7888, %v7884
    %v8233 = vpack.c.b16 %v7889, %v7885
    %v8234 = vpack.c.b16 %v7894, %v7890
    %v8235 = vpack.c.b16 %v7895, %v7891
    %v8236 = vpack.c.b16 %v7896, %v7892
    %v8237 = vpack.c.b16 %v7897, %v7893
    %v8238 = vpack.c.b16 %v7902, %v7898
    %v8239 = vpack.c.b16 %v7903, %v7899
    %v8240 = vpack.c.b16 %v7904, %v7900
    %v8241 = vpack.c.b16 %v7905, %v7901
    %v8242 = vpack.c.b16 %v7910, %v7906
    %v8243 = vpack.c.b16 %v7911, %v7907
    %v8244 = vpack.c.b16 %v7912, %v7908
    %v8245 = vpack.c.b16 %v7913, %v7909
    %v8246 = vpack.c.b16 %v7918, %v7914
    %v8247 = vpack.c.b16 %v7919, %v7915
    %v8248 = vpack.c.b16 %v7920, %v7916
    %v8249 = vpack.c.b16 %v7921, %v7917
    %v8250 = vpack.c.b16 %v7926, %v7922
    %v8251 = vpack.c.b16 %v7927, %v7923
    %v8252 = vpack.c.b16 %v7928, %v7924
    %v8253 = vpack.c.b16 %v7929, %v7925
    %v8254 = vpack.c.b16 %v7934, %v7930
    %v8255 = vpack.c.b16 %v7935, %v7931
    %v8256 = vpack.c.b16 %v7936, %v7932
    %v8257 = vpack.c.b16 %v7937, %v7933
    %v8258 = vpack.c.b16 %v7942, %v7938
    %v8259 = vpack.c.b16 %v7943, %v7939
    %v8260 = vpack.c.b16 %v7944, %v7940
    %v8261 = vpack.c.b16 %v7945, %v7941
    %v8262 = vpack.c.b16 %v7950, %v7946
    %v8263 = vpack.c.b16 %v7951, %v7947
    %v8264 = vpack.c.b16 %v7952, %v7948
    %v8265 = vpack.c.b16 %v7953, %v7949
    %v8266 = vpack.c.b16 %v7958, %v7954
    %v8267 = vpack.c.b16 %v7959, %v7955
    %v8268 = vpack.c.b16 %v7960, %v7956
    %v8269 = vpack.c.b16 %v7961, %v7957
    %v8270 = vpack.c.b16 %v7966, %v7962
    %v8271 = vpack.c.b16 %v7967, %v7963
    %v8272 = vpack.c.b16 %v7968, %v7964
    %v8273 = vpack.c.b16 %v7969, %v7965
    %v8274 = vpack.c.b16 %v7974, %v7970
    %v8275 = vpack.c.b16 %v7975, %v7971
    %v8276 = vpack.c.b16 %v7976, %v7972
    %v8277 = vpack.c.b16 %v7977, %v7973
    %v8278 = vpack.c.b16 %v7982, %v7978
    %v8279 = vpack.c.b16 %v7983, %v7979
    %v8280 = vpack.c.b16 %v7984, %v7980
    %v8281 = vpack.c.b16 %v7985, %v7981
    %v8282 = vpack.c.b16 %v7990, %v7986
    %v8283 = vpack.c.b16 %v7991, %v7987
    %v8284 = vpack.c.b16 %v7992, %v7988
    %v8285 = vpack.c.b16 %v7993, %v7989
    %v8286 = vpack.c.b16 %v7998, %v7994
    %v8287 = vpack.c.b16 %v7999, %v7995
    %v8288 = vpack.c.b16 %v8000, %v7996
    %v8289 = vpack.c.b16 %v8001, %v7997
    %8578 = vmatprep.subr.bf16.mxu0 %v8003
    %8579 = vmatpush1.bf16.msra.mxu0 %v8002
    %8580 = vmatprep.subr.bf16.mxu0 %v8007
    %8581 = vmatpush1.bf16.msra.mxu0 %v8006
    %8582 = vmatprep.subr.bf16.mxu0 %v8011
    %8583 = vmatpush1.bf16.msra.mxu0 %v8010
    %8584 = vmatprep.subr.bf16.mxu0 %v8015
    %8585 = vmatpush1.bf16.msra.mxu0 %v8014
    %8586 = vmatprep.subr.bf16.mxu0 %v8019
    %8587 = vmatpush1.bf16.msra.mxu0 %v8018
    %8588 = vmatprep.subr.bf16.mxu0 %v8023
    %8589 = vmatpush1.bf16.msra.mxu0 %v8022
    %8590 = vmatprep.subr.bf16.mxu0 %v8027
    %8591 = vmatpush1.bf16.msra.mxu0 %v8026
    %8592 = vmatprep.subr.bf16.mxu0 %v8031
    %8593 = vmatpush1.bf16.msra.mxu0 %v8030
    %8594 = vmatprep.subr.bf16.mxu0 %v8035
    %8595 = vmatpush1.bf16.msra.mxu0 %v8034
    %8596 = vmatprep.subr.bf16.mxu0 %v8039
    %8597 = vmatpush1.bf16.msra.mxu0 %v8038
    %8598 = vmatprep.subr.bf16.mxu0 %v8043
    %8599 = vmatpush1.bf16.msra.mxu0 %v8042
    %8600 = vmatprep.subr.bf16.mxu0 %v8047
    %8601 = vmatpush1.bf16.msra.mxu0 %v8046
    %8602 = vmatprep.subr.bf16.mxu0 %v8051
    %8603 = vmatpush1.bf16.msra.mxu0 %v8050
    %8604 = vmatprep.subr.bf16.mxu0 %v8055
    %8605 = vmatpush1.bf16.msra.mxu0 %v8054
    %8606 = vmatprep.subr.bf16.mxu0 %v8059
    %8607 = vmatpush1.bf16.msra.mxu0 %v8058
    %8608 = vmatprep.subr.bf16.mxu0 %v8063
    %8609 = vmatpush1.bf16.msra.mxu0 %v8062
    %8610 = vmatprep.mubr.bf16.mxu0 %v7121
    %8611 = vmatmul.mubr.bf16.gmra.mrb[0].mxu0 %v7120
    %v8612 = vpop.f32.mrb[0].mxu0
    %v8613 = vadd.f32 0.0, %v8612
    %v8614 = vpop.f32.mrb[0].mxu0
    %v8615 = vadd.f32 0.0, %v8614
    %v8616 = vpop.f32.mrb[0].mxu0
    %v8617 = vadd.f32 0.0, %v8616
    %v8618 = vpop.f32.mrb[0].mxu0
    %v8619 = vadd.f32 0.0, %v8618
    %8620 = vdwg.mxu0
    %8621 = vmatprep.subr.bf16.mxu0 %v8067
    %8622 = vmatpush1.bf16.msra.mxu0 %v8066
    %8623 = vmatprep.subr.bf16.mxu0 %v8071
    %8624 = vmatpush1.bf16.msra.mxu0 %v8070
    %8625 = vmatprep.subr.bf16.mxu0 %v8075
    %8626 = vmatpush1.bf16.msra.mxu0 %v8074
    %8627 = vmatprep.subr.bf16.mxu0 %v8079
    %8628 = vmatpush1.bf16.msra.mxu0 %v8078
    %8629 = vmatprep.subr.bf16.mxu0 %v8083
    %8630 = vmatpush1.bf16.msra.mxu0 %v8082
    %8631 = vmatprep.subr.bf16.mxu0 %v8087
    %8632 = vmatpush1.bf16.msra.mxu0 %v8086
    %8633 = vmatprep.subr.bf16.mxu0 %v8091
    %8634 = vmatpush1.bf16.msra.mxu0 %v8090
    %8635 = vmatprep.subr.bf16.mxu0 %v8095
    %8636 = vmatpush1.bf16.msra.mxu0 %v8094
    %8637 = vmatprep.subr.bf16.mxu0 %v8099
    %8638 = vmatpush1.bf16.msra.mxu0 %v8098
    %8639 = vmatprep.subr.bf16.mxu0 %v8103
    %8640 = vmatpush1.bf16.msra.mxu0 %v8102
    %8641 = vmatprep.subr.bf16.mxu0 %v8107
    %8642 = vmatpush1.bf16.msra.mxu0 %v8106
    %8643 = vmatprep.subr.bf16.mxu0 %v8111
    %8644 = vmatpush1.bf16.msra.mxu0 %v8110
    %8645 = vmatprep.subr.bf16.mxu0 %v8115
    %8646 = vmatpush1.bf16.msra.mxu0 %v8114
    %8647 = vmatprep.subr.bf16.mxu0 %v8119
    %8648 = vmatpush1.bf16.msra.mxu0 %v8118
    %8649 = vmatprep.subr.bf16.mxu0 %v8123
    %8650 = vmatpush1.bf16.msra.mxu0 %v8122
    %8651 = vmatprep.subr.bf16.mxu0 %v8127
    %8652 = vmatpush1.bf16.msra.mxu0 %v8126
    %8653 = vmatprep.mubr.bf16.mxu0 %v7123
    %8654 = vmatmul.mubr.bf16.gmra.mrb[0].mxu0 %v7122
    %v8655 = vpop.f32.mrb[0].mxu0
    %v8656 = vadd.f32 %v8613, %v8655
    %v8657 = vpop.f32.mrb[0].mxu0
    %v8658 = vadd.f32 %v8615, %v8657
    %v8659 = vpop.f32.mrb[0].mxu0
    %v8660 = vadd.f32 %v8617, %v8659
    %v8661 = vpop.f32.mrb[0].mxu0
    %v8662 = vadd.f32 %v8619, %v8661
    %8663 = vdwg.mxu0
    %8664 = vmatprep.subr.bf16.mxu0 %v8131
    %8665 = vmatpush1.bf16.msra.mxu0 %v8130
    %8666 = vmatprep.subr.bf16.mxu0 %v8135
    %8667 = vmatpush1.bf16.msra.mxu0 %v8134
    %8668 = vmatprep.subr.bf16.mxu0 %v8139
    %8669 = vmatpush1.bf16.msra.mxu0 %v8138
    %8670 = vmatprep.subr.bf16.mxu0 %v8143
    %8671 = vmatpush1.bf16.msra.mxu0 %v8142
    %8672 = vmatprep.subr.bf16.mxu0 %v8147
    %8673 = vmatpush1.bf16.msra.mxu0 %v8146
    %8674 = vmatprep.subr.bf16.mxu0 %v8151
    %8675 = vmatpush1.bf16.msra.mxu0 %v8150
    %8676 = vmatprep.subr.bf16.mxu0 %v8155
    %8677 = vmatpush1.bf16.msra.mxu0 %v8154
    %8678 = vmatprep.subr.bf16.mxu0 %v8159
    %8679 = vmatpush1.bf16.msra.mxu0 %v8158
    %8680 = vmatprep.subr.bf16.mxu0 %v8163
    %8681 = vmatpush1.bf16.msra.mxu0 %v8162
    %8682 = vmatprep.subr.bf16.mxu0 %v8167
    %8683 = vmatpush1.bf16.msra.mxu0 %v8166
    %8684 = vmatprep.subr.bf16.mxu0 %v8171
    %8685 = vmatpush1.bf16.msra.mxu0 %v8170
    %8686 = vmatprep.subr.bf16.mxu0 %v8175
    %8687 = vmatpush1.bf16.msra.mxu0 %v8174
    %8688 = vmatprep.subr.bf16.mxu0 %v8179
    %8689 = vmatpush1.bf16.msra.mxu0 %v8178
    %8690 = vmatprep.subr.bf16.mxu0 %v8183
    %8691 = vmatpush1.bf16.msra.mxu0 %v8182
    %8692 = vmatprep.subr.bf16.mxu0 %v8187
    %8693 = vmatpush1.bf16.msra.mxu0 %v8186
    %8694 = vmatprep.subr.bf16.mxu0 %v8191
    %8695 = vmatpush1.bf16.msra.mxu0 %v8190
    %8696 = vmatprep.mubr.bf16.mxu0 %v7125
    %8697 = vmatmul.mubr.bf16.gmra.mrb[0].mxu0 %v7124
    %v8698 = vpop.f32.mrb[0].mxu0
    %v8699 = vadd.f32 %v8656, %v8698
    %v8700 = vpop.f32.mrb[0].mxu0
    %v8701 = vadd.f32 %v8658, %v8700
    %v8702 = vpop.f32.mrb[0].mxu0
    %v8703 = vadd.f32 %v8660, %v8702
    %v8704 = vpop.f32.mrb[0].mxu0
    %v8705 = vadd.f32 %v8662, %v8704
    %8706 = vdwg.mxu0
    %8707 = vmatprep.subr.bf16.mxu0 %v8195
    %8708 = vmatpush1.bf16.msra.mxu0 %v8194
    %8709 = vmatprep.subr.bf16.mxu0 %v8199
    %8710 = vmatpush1.bf16.msra.mxu0 %v8198
    %8711 = vmatprep.subr.bf16.mxu0 %v8203
    %8712 = vmatpush1.bf16.msra.mxu0 %v8202
    %8713 = vmatprep.subr.bf16.mxu0 %v8207
    %8714 = vmatpush1.bf16.msra.mxu0 %v8206
    %8715 = vmatprep.subr.bf16.mxu0 %v8211
    %8716 = vmatpush1.bf16.msra.mxu0 %v8210
    %8717 = vmatprep.subr.bf16.mxu0 %v8215
    %8718 = vmatpush1.bf16.msra.mxu0 %v8214
    %8719 = vmatprep.subr.bf16.mxu0 %v8219
    %8720 = vmatpush1.bf16.msra.mxu0 %v8218
    %8721 = vmatprep.subr.bf16.mxu0 %v8223
    %8722 = vmatpush1.bf16.msra.mxu0 %v8222
    %8723 = vmatprep.subr.bf16.mxu0 %v8227
    %8724 = vmatpush1.bf16.msra.mxu0 %v8226
    %8725 = vmatprep.subr.bf16.mxu0 %v8231
    %8726 = vmatpush1.bf16.msra.mxu0 %v8230
    %8727 = vmatprep.subr.bf16.mxu0 %v8235
    %8728 = vmatpush1.bf16.msra.mxu0 %v8234
    %8729 = vmatprep.subr.bf16.mxu0 %v8239
    %8730 = vmatpush1.bf16.msra.mxu0 %v8238
    %8731 = vmatprep.subr.bf16.mxu0 %v8243
    %8732 = vmatpush1.bf16.msra.mxu0 %v8242
    %8733 = vmatprep.subr.bf16.mxu0 %v8247
    %8734 = vmatpush1.bf16.msra.mxu0 %v8246
    %8735 = vmatprep.subr.bf16.mxu0 %v8251
    %8736 = vmatpush1.bf16.msra.mxu0 %v8250
    %8737 = vmatprep.subr.bf16.mxu0 %v8255
    %8738 = vmatpush1.bf16.msra.mxu0 %v8254
    %8739 = vmatprep.mubr.bf16.mxu0 %v7127
    %8740 = vmatmul.mubr.bf16.gmra.mrb[0].mxu0 %v7126
    %v8741 = vpop.f32.mrb[0].mxu0
    %v8742 = vadd.f32 %v8699, %v8741
    %v8743 = vpop.f32.mrb[0].mxu0
    %v8744 = vadd.f32 %v8701, %v8743
    %v8745 = vpop.f32.mrb[0].mxu0
    %v8746 = vadd.f32 %v8703, %v8745
    %v8747 = vpop.f32.mrb[0].mxu0
    %v8748 = vadd.f32 %v8705, %v8747
    %8749 = vdwg.mxu0
    %8750 = vmatprep.subr.bf16.mxu0 %v8259
    %8751 = vmatpush1.bf16.msra.mxu0 %v8258
    %8752 = vmatprep.subr.bf16.mxu0 %v8263
    %8753 = vmatpush1.bf16.msra.mxu0 %v8262
    %8754 = vmatprep.subr.bf16.mxu0 %v8267
    %8755 = vmatpush1.bf16.msra.mxu0 %v8266
    %8756 = vmatprep.subr.bf16.mxu0 %v8271
    %8757 = vmatpush1.bf16.msra.mxu0 %v8270
    %8758 = vmatprep.subr.bf16.mxu0 %v8275
    %8759 = vmatpush1.bf16.msra.mxu0 %v8274
    %8760 = vmatprep.subr.bf16.mxu0 %v8279
    %8761 = vmatpush1.bf16.msra.mxu0 %v8278
    %8762 = vmatprep.subr.bf16.mxu0 %v8283
    %8763 = vmatpush1.bf16.msra.mxu0 %v8282
    %8764 = vmatprep.subr.bf16.mxu0 %v8287
    %8765 = vmatpush1.bf16.msra.mxu0 %v8286
    %8766 = vmatprep.subr.bf16.mxu0 0
    %8767 = vmatpush1.bf16.msra.mxu0 0
    %8768 = vmatprep.subr.bf16.mxu0 0
    %8769 = vmatpush1.bf16.msra.mxu0 0
    %8770 = vmatprep.subr.bf16.mxu0 0
    %8771 = vmatpush1.bf16.msra.mxu0 0
    %8772 = vmatprep.subr.bf16.mxu0 0
    %8773 = vmatpush1.bf16.msra.mxu0 0
    %8774 = vmatprep.subr.bf16.mxu0 0
    %8775 = vmatpush1.bf16.msra.mxu0 0
    %8776 = vmatprep.subr.bf16.mxu0 0
    %8777 = vmatpush1.bf16.msra.mxu0 0
    %8778 = vmatprep.subr.bf16.mxu0 0
    %8779 = vmatpush1.bf16.msra.mxu0 0
    %8780 = vmatprep.subr.bf16.mxu0 0
    %8781 = vmatpush1.bf16.msra.mxu0 0
    %8782 = vmatprep.mubr.bf16.mxu0 0
    %8783 = vmatmul.mubr.bf16.gmra.mrb[0].mxu0 %v7128
    %v8784 = vpop.f32.mrb[0].mxu0
    %v8785 = vadd.f32 %v8742, %v8784
    %v8786 = vpop.f32.mrb[0].mxu0
    %v8787 = vadd.f32 %v8744, %v8786
    %v8788 = vpop.f32.mrb[0].mxu0
    %v8789 = vadd.f32 %v8746, %v8788
    %v8790 = vpop.f32.mrb[0].mxu0
    %v8791 = vadd.f32 %v8748, %v8790
    %8792 = vdwg.mxu0
    %8793 = vmatprep.subr.bf16.mxu0 %v8005
    %8794 = vmatpush1.bf16.msra.mxu0 %v8004
    %8795 = vmatprep.subr.bf16.mxu0 %v8009
    %8796 = vmatpush1.bf16.msra.mxu0 %v8008
    %8797 = vmatprep.subr.bf16.mxu0 %v8013
    %8798 = vmatpush1.bf16.msra.mxu0 %v8012
    %8799 = vmatprep.subr.bf16.mxu0 %v8017
    %8800 = vmatpush1.bf16.msra.mxu0 %v8016
    %8801 = vmatprep.subr.bf16.mxu0 %v8021
    %8802 = vmatpush1.bf16.msra.mxu0 %v8020
    %8803 = vmatprep.subr.bf16.mxu0 %v8025
    %8804 = vmatpush1.bf16.msra.mxu0 %v8024
    %8805 = vmatprep.subr.bf16.mxu0 %v8029
    %8806 = vmatpush1.bf16.msra.mxu0 %v8028
    %8807 = vmatprep.subr.bf16.mxu0 %v8033
    %8808 = vmatpush1.bf16.msra.mxu0 %v8032
    %8809 = vmatprep.subr.bf16.mxu0 %v8037
    %8810 = vmatpush1.bf16.msra.mxu0 %v8036
    %8811 = vmatprep.subr.bf16.mxu0 %v8041
    %8812 = vmatpush1.bf16.msra.mxu0 %v8040
    %8813 = vmatprep.subr.bf16.mxu0 %v8045
    %8814 = vmatpush1.bf16.msra.mxu0 %v8044
    %8815 = vmatprep.subr.bf16.mxu0 %v8049
    %8816 = vmatpush1.bf16.msra.mxu0 %v8048
    %8817 = vmatprep.subr.bf16.mxu0 %v8053
    %8818 = vmatpush1.bf16.msra.mxu0 %v8052
    %8819 = vmatprep.subr.bf16.mxu0 %v8057
    %8820 = vmatpush1.bf16.msra.mxu0 %v8056
    %8821 = vmatprep.subr.bf16.mxu0 %v8061
    %8822 = vmatpush1.bf16.msra.mxu0 %v8060
    %8823 = vmatprep.subr.bf16.mxu0 %v8065
    %8824 = vmatpush1.bf16.msra.mxu0 %v8064
    %8825 = vmatprep.mubr.bf16.mxu0 %v7121
    %8826 = vmatmul.mubr.bf16.gmra.mrb[0].mxu0 %v7120
    %v8827 = vpop.f32.mrb[0].mxu0
    %v8828 = vadd.f32 0.0, %v8827
    %v8829 = vpop.f32.mrb[0].mxu0
    %v8830 = vadd.f32 0.0, %v8829
    %v8831 = vpop.f32.mrb[0].mxu0
    %v8832 = vadd.f32 0.0, %v8831
    %v8833 = vpop.f32.mrb[0].mxu0
    %v8834 = vadd.f32 0.0, %v8833
    %8835 = vdwg.mxu0
    %8836 = vmatprep.subr.bf16.mxu0 %v8069
    %8837 = vmatpush1.bf16.msra.mxu0 %v8068
    %8838 = vmatprep.subr.bf16.mxu0 %v8073
    %8839 = vmatpush1.bf16.msra.mxu0 %v8072
    %8840 = vmatprep.subr.bf16.mxu0 %v8077
    %8841 = vmatpush1.bf16.msra.mxu0 %v8076
    %8842 = vmatprep.subr.bf16.mxu0 %v8081
    %8843 = vmatpush1.bf16.msra.mxu0 %v8080
    %8844 = vmatprep.subr.bf16.mxu0 %v8085
    %8845 = vmatpush1.bf16.msra.mxu0 %v8084
    %8846 = vmatprep.subr.bf16.mxu0 %v8089
    %8847 = vmatpush1.bf16.msra.mxu0 %v8088
    %8848 = vmatprep.subr.bf16.mxu0 %v8093
    %8849 = vmatpush1.bf16.msra.mxu0 %v8092
    %8850 = vmatprep.subr.bf16.mxu0 %v8097
    %8851 = vmatpush1.bf16.msra.mxu0 %v8096
    %8852 = vmatprep.subr.bf16.mxu0 %v8101
    %8853 = vmatpush1.bf16.msra.mxu0 %v8100
    %8854 = vmatprep.subr.bf16.mxu0 %v8105
    %8855 = vmatpush1.bf16.msra.mxu0 %v8104
    %8856 = vmatprep.subr.bf16.mxu0 %v8109
    %8857 = vmatpush1.bf16.msra.mxu0 %v8108
    %8858 = vmatprep.subr.bf16.mxu0 %v8113
    %8859 = vmatpush1.bf16.msra.mxu0 %v8112
    %8860 = vmatprep.subr.bf16.mxu0 %v8117
    %8861 = vmatpush1.bf16.msra.mxu0 %v8116
    %8862 = vmatprep.subr.bf16.mxu0 %v8121
    %8863 = vmatpush1.bf16.msra.mxu0 %v8120
    %8864 = vmatprep.subr.bf16.mxu0 %v8125
    %8865 = vmatpush1.bf16.msra.mxu0 %v8124
    %8866 = vmatprep.subr.bf16.mxu0 %v8129
    %8867 = vmatpush1.bf16.msra.mxu0 %v8128
    %8868 = vmatprep.mubr.bf16.mxu0 %v7123
    %8869 = vmatmul.mubr.bf16.gmra.mrb[0].mxu0 %v7122
    %v8870 = vpop.f32.mrb[0].mxu0
    %v8871 = vadd.f32 %v8828, %v8870
    %v8872 = vpop.f32.mrb[0].mxu0
    %v8873 = vadd.f32 %v8830, %v8872
    %v8874 = vpop.f32.mrb[0].mxu0
    %v8875 = vadd.f32 %v8832, %v8874
    %v8876 = vpop.f32.mrb[0].mxu0
    %v8877 = vadd.f32 %v8834, %v8876
    %8878 = vdwg.mxu0
    %8879 = vmatprep.subr.bf16.mxu0 %v8133
    %8880 = vmatpush1.bf16.msra.mxu0 %v8132
    %8881 = vmatprep.subr.bf16.mxu0 %v8137
    %8882 = vmatpush1.bf16.msra.mxu0 %v8136
    %8883 = vmatprep.subr.bf16.mxu0 %v8141
    %8884 = vmatpush1.bf16.msra.mxu0 %v8140
    %8885 = vmatprep.subr.bf16.mxu0 %v8145
    %8886 = vmatpush1.bf16.msra.mxu0 %v8144
    %8887 = vmatprep.subr.bf16.mxu0 %v8149
    %8888 = vmatpush1.bf16.msra.mxu0 %v8148
    %8889 = vmatprep.subr.bf16.mxu0 %v8153
    %8890 = vmatpush1.bf16.msra.mxu0 %v8152
    %8891 = vmatprep.subr.bf16.mxu0 %v8157
    %8892 = vmatpush1.bf16.msra.mxu0 %v8156
    %8893 = vmatprep.subr.bf16.mxu0 %v8161
    %8894 = vmatpush1.bf16.msra.mxu0 %v8160
    %8895 = vmatprep.subr.bf16.mxu0 %v8165
    %8896 = vmatpush1.bf16.msra.mxu0 %v8164
    %8897 = vmatprep.subr.bf16.mxu0 %v8169
    %8898 = vmatpush1.bf16.msra.mxu0 %v8168
    %8899 = vmatprep.subr.bf16.mxu0 %v8173
    %8900 = vmatpush1.bf16.msra.mxu0 %v8172
    %8901 = vmatprep.subr.bf16.mxu0 %v8177
    %8902 = vmatpush1.bf16.msra.mxu0 %v8176
    %8903 = vmatprep.subr.bf16.mxu0 %v8181
    %8904 = vmatpush1.bf16.msra.mxu0 %v8180
    %8905 = vmatprep.subr.bf16.mxu0 %v8185
    %8906 = vmatpush1.bf16.msra.mxu0 %v8184
    %8907 = vmatprep.subr.bf16.mxu0 %v8189
    %8908 = vmatpush1.bf16.msra.mxu0 %v8188
    %8909 = vmatprep.subr.bf16.mxu0 %v8193
    %8910 = vmatpush1.bf16.msra.mxu0 %v8192
    %8911 = vmatprep.mubr.bf16.mxu0 %v7125
    %8912 = vmatmul.mubr.bf16.gmra.mrb[0].mxu0 %v7124
    %v8913 = vpop.f32.mrb[0].mxu0
    %v8914 = vadd.f32 %v8871, %v8913
    %v8915 = vpop.f32.mrb[0].mxu0
    %v8916 = vadd.f32 %v8873, %v8915
    %v8917 = vpop.f32.mrb[0].mxu0
    %v8918 = vadd.f32 %v8875, %v8917
    %v8919 = vpop.f32.mrb[0].mxu0
    %v8920 = vadd.f32 %v8877, %v8919
    %8921 = vdwg.mxu0
    %8922 = vmatprep.subr.bf16.mxu0 %v8197
    %8923 = vmatpush1.bf16.msra.mxu0 %v8196
    %8924 = vmatprep.subr.bf16.mxu0 %v8201
    %8925 = vmatpush1.bf16.msra.mxu0 %v8200
    %8926 = vmatprep.subr.bf16.mxu0 %v8205
    %8927 = vmatpush1.bf16.msra.mxu0 %v8204
    %8928 = vmatprep.subr.bf16.mxu0 %v8209
    %8929 = vmatpush1.bf16.msra.mxu0 %v8208
    %8930 = vmatprep.subr.bf16.mxu0 %v8213
    %8931 = vmatpush1.bf16.msra.mxu0 %v8212
    %8932 = vmatprep.subr.bf16.mxu0 %v8217
    %8933 = vmatpush1.bf16.msra.mxu0 %v8216
    %8934 = vmatprep.subr.bf16.mxu0 %v8221
    %8935 = vmatpush1.bf16.msra.mxu0 %v8220
    %8936 = vmatprep.subr.bf16.mxu0 %v8225
    %8937 = vmatpush1.bf16.msra.mxu0 %v8224
    %8938 = vmatprep.subr.bf16.mxu0 %v8229
    %8939 = vmatpush1.bf16.msra.mxu0 %v8228
    %8940 = vmatprep.subr.bf16.mxu0 %v8233
    %8941 = vmatpush1.bf16.msra.mxu0 %v8232
    %8942 = vmatprep.subr.bf16.mxu0 %v8237
    %8943 = vmatpush1.bf16.msra.mxu0 %v8236
    %8944 = vmatprep.subr.bf16.mxu0 %v8241
    %8945 = vmatpush1.bf16.msra.mxu0 %v8240
    %8946 = vmatprep.subr.bf16.mxu0 %v8245
    %8947 = vmatpush1.bf16.msra.mxu0 %v8244
    %8948 = vmatprep.subr.bf16.mxu0 %v8249
    %8949 = vmatpush1.bf16.msra.mxu0 %v8248
    %8950 = vmatprep.subr.bf16.mxu0 %v8253
    %8951 = vmatpush1.bf16.msra.mxu0 %v8252
    %8952 = vmatprep.subr.bf16.mxu0 %v8257
    %8953 = vmatpush1.bf16.msra.mxu0 %v8256
    %8954 = vmatprep.mubr.bf16.mxu0 %v7127
    %8955 = vmatmul.mubr.bf16.gmra.mrb[0].mxu0 %v7126
    %v8956 = vpop.f32.mrb[0].mxu0
    %v8957 = vadd.f32 %v8914, %v8956
    %v8958 = vpop.f32.mrb[0].mxu0
    %v8959 = vadd.f32 %v8916, %v8958
    %v8960 = vpop.f32.mrb[0].mxu0
    %v8961 = vadd.f32 %v8918, %v8960
    %v8962 = vpop.f32.mrb[0].mxu0
    %v8963 = vadd.f32 %v8920, %v8962
    %8964 = vdwg.mxu0
    %8965 = vmatprep.subr.bf16.mxu0 %v8261
    %8966 = vmatpush1.bf16.msra.mxu0 %v8260
    %8967 = vmatprep.subr.bf16.mxu0 %v8265
    %8968 = vmatpush1.bf16.msra.mxu0 %v8264
    %8969 = vmatprep.subr.bf16.mxu0 %v8269
    %8970 = vmatpush1.bf16.msra.mxu0 %v8268
    %8971 = vmatprep.subr.bf16.mxu0 %v8273
    %8972 = vmatpush1.bf16.msra.mxu0 %v8272
    %8973 = vmatprep.subr.bf16.mxu0 %v8277
    %8974 = vmatpush1.bf16.msra.mxu0 %v8276
    %8975 = vmatprep.subr.bf16.mxu0 %v8281
    %8976 = vmatpush1.bf16.msra.mxu0 %v8280
    %8977 = vmatprep.subr.bf16.mxu0 %v8285
    %8978 = vmatpush1.bf16.msra.mxu0 %v8284
    %8979 = vmatprep.subr.bf16.mxu0 %v8289
    %8980 = vmatpush1.bf16.msra.mxu0 %v8288
    %8981 = vmatprep.subr.bf16.mxu0 0
    %8982 = vmatpush1.bf16.msra.mxu0 0
    %8983 = vmatprep.subr.bf16.mxu0 0
    %8984 = vmatpush1.bf16.msra.mxu0 0
    %8985 = vmatprep.subr.bf16.mxu0 0
    %8986 = vmatpush1.bf16.msra.mxu0 0
    %8987 = vmatprep.subr.bf16.mxu0 0
    %8988 = vmatpush1.bf16.msra.mxu0 0
    %8989 = vmatprep.subr.bf16.mxu0 0
    %8990 = vmatpush1.bf16.msra.mxu0 0
    %8991 = vmatprep.subr.bf16.mxu0 0
    %8992 = vmatpush1.bf16.msra.mxu0 0
    %8993 = vmatprep.subr.bf16.mxu0 0
    %8994 = vmatpush1.bf16.msra.mxu0 0
    %8995 = vmatprep.subr.bf16.mxu0 0
    %8996 = vmatpush1.bf16.msra.mxu0 0
    %8997 = vmatprep.mubr.bf16.mxu0 0
    %8998 = vmatmul.mubr.bf16.gmra.mrb[0].mxu0 %v7128
    %v8999 = vpop.f32.mrb[0].mxu0
    %v9000 = vadd.f32 %v8957, %v8999
    %v9001 = vpop.f32.mrb[0].mxu0
    %v9002 = vadd.f32 %v8959, %v9001
    %v9003 = vpop.f32.mrb[0].mxu0
    %v9004 = vadd.f32 %v8961, %v9003
    %v9005 = vpop.f32.mrb[0].mxu0
    %v9006 = vadd.f32 %v8963, %v9005
    %9007 = vdwg.mxu0
    %v9008 = vadd.f32 %v6455, %v8785
    %v9009 = vadd.f32 %v6457, %v8787
    %v9010 = vadd.f32 %v6670, %v9000
    %v9011 = vadd.f32 %v6672, %v9002
    %v9012 = vadd.f32 %v6459, %v8789
    %v9013 = vadd.f32 %v6461, %v8791
    %v9014 = vadd.f32 %v6674, %v9004
    %v9015 = vadd.f32 %v6676, %v9006
    %v9016 = vld [vmem:[#allocation2] sm:$0xf8]
    %v9017 = vld [vmem:[#allocation2 + $0x8] sm:$0xf8]
    %v9018 = vld [vmem:[#allocation2 + $0x10] sm:$0xf8]
    %v9019 = vld [vmem:[#allocation2 + $0x18] sm:$0xf8]
    %v9020 = vld [vmem:[#allocation2 + $0x20] sm:$0xf8]
    %v9021 = vld [vmem:[#allocation2 + $0x28] sm:$0xf8]
    %v9022 = vld [vmem:[#allocation2 + $0x30] sm:$0xf8]
    %v9023 = vld [vmem:[#allocation2 + $0x38] sm:$0xf8]
    %v9024 = vld [vmem:[#allocation2 + $0x40] sm:$0xf8]
    %v9025 = vld [vmem:[#allocation2 + $0x48] sm:$0xf8]
    %v9026 = vld [vmem:[#allocation2 + $0x50] sm:$0xf8]
    %v9027 = vld [vmem:[#allocation2 + $0x58] sm:$0xf8]
    %v9028 = vld [vmem:[#allocation2 + $0x60] sm:$0xf8]
    %v9029 = vld [vmem:[#allocation2 + $0x68] sm:$0xf8]
    %v9030 = vld [vmem:[#allocation2 + $0x70] sm:$0xf8]
    %v9031 = vld [vmem:[#allocation2 + $0x78] sm:$0xf8]
    %v9032 = vld [vmem:[#allocation2 + $0x80] sm:$0xf8]
    %v9033 = vld [vmem:[#allocation2 + $0x88] sm:$0xf8]
    %v9052 = vunpack.c.l.b16 %v9016
    %v9053 = vunpack.c.l.b16 %v9017
    %v9054 = vunpack.c.l.b16 %v9018
    %v9055 = vunpack.c.l.b16 %v9019
    %v9056 = vunpack.c.l.b16 %v9020
    %v9057 = vunpack.c.l.b16 %v9021
    %v9058 = vunpack.c.l.b16 %v9022
    %v9059 = vunpack.c.l.b16 %v9023
    %v9060 = vunpack.c.l.b16 %v9024
    %v9061 = vunpack.c.h.b16 %v9016
    %v9062 = vunpack.c.h.b16 %v9017
    %v9063 = vunpack.c.h.b16 %v9018
    %v9064 = vunpack.c.h.b16 %v9019
    %v9065 = vunpack.c.h.b16 %v9020
    %v9066 = vunpack.c.h.b16 %v9021
    %v9067 = vunpack.c.h.b16 %v9022
    %v9068 = vunpack.c.h.b16 %v9023
    %v9069 = vunpack.c.h.b16 %v9024
    %v9070 = vunpack.c.l.b16 %v9025
    %v9071 = vunpack.c.l.b16 %v9026
    %v9072 = vunpack.c.l.b16 %v9027
    %v9073 = vunpack.c.l.b16 %v9028
    %v9074 = vunpack.c.l.b16 %v9029
    %v9075 = vunpack.c.l.b16 %v9030
    %v9076 = vunpack.c.l.b16 %v9031
    %v9077 = vunpack.c.l.b16 %v9032
    %v9078 = vunpack.c.l.b16 %v9033
    %v9079 = vunpack.c.h.b16 %v9025
    %v9080 = vunpack.c.h.b16 %v9026
    %v9081 = vunpack.c.h.b16 %v9027
    %v9082 = vunpack.c.h.b16 %v9028
    %v9083 = vunpack.c.h.b16 %v9029
    %v9084 = vunpack.c.h.b16 %v9030
    %v9085 = vunpack.c.h.b16 %v9031
    %v9086 = vunpack.c.h.b16 %v9032
    %v9087 = vunpack.c.h.b16 %v9033
    %v9088 = vpack.c.b16 %v9053, %v9052
    %v9089 = vpack.c.b16 %v9055, %v9054
    %v9090 = vpack.c.b16 %v9057, %v9056
    %v9091 = vpack.c.b16 %v9059, %v9058
    %v9092 = vpack.c.b16 %v9060, %v9060
    %v9093 = vpack.c.b16 %v9062, %v9061
    %v9094 = vpack.c.b16 %v9064, %v9063
    %v9095 = vpack.c.b16 %v9066, %v9065
    %v9096 = vpack.c.b16 %v9068, %v9067
    %v9097 = vpack.c.b16 %v9069, %v9069
    %v9098 = vpack.c.b16 %v9071, %v9070
    %v9099 = vpack.c.b16 %v9073, %v9072
    %v9100 = vpack.c.b16 %v9075, %v9074
    %v9101 = vpack.c.b16 %v9077, %v9076
    %v9102 = vpack.c.b16 %v9078, %v9078
    %v9103 = vpack.c.b16 %v9080, %v9079
    %v9104 = vpack.c.b16 %v9082, %v9081
    %v9105 = vpack.c.b16 %v9084, %v9083
    %v9106 = vpack.c.b16 %v9086, %v9085
    %v9107 = vpack.c.b16 %v9087, %v9087
    %vm9108 = vsmask.f32 256
    %vm9109 = vsmask.f32 4368
    %vm9110 = vmor %vm9108, %vm9109
    %v9112 = vshrl.u32 %v9088, 16
    %v9114 = vrot.slane %v9112, 7
    %v9115 = vrot.slane %v9114, 4
    %v9117 = vshrl.u32 %v9093, 16
    %v9119 = vrot.slane %v9117, 7
    %v9120 = vshll.u32 %v9093, 16
    %v9122 = vor.u32 %v9119, %v9120
    %v9123 = vsel %vm9110, %v9115, %v9122
    %v9125 = vshrl.u32 %v9089, 16
    %v9127 = vrot.slane %v9125, 7
    %v9128 = vrot.slane %v9127, 4
    %v9130 = vshrl.u32 %v9094, 16
    %v9132 = vrot.slane %v9130, 7
    %v9133 = vshll.u32 %v9094, 16
    %v9135 = vor.u32 %v9132, %v9133
    %v9136 = vsel %vm9110, %v9128, %v9135
    %v9138 = vshrl.u32 %v9090, 16
    %v9140 = vrot.slane %v9138, 7
    %v9141 = vrot.slane %v9140, 4
    %v9143 = vshrl.u32 %v9095, 16
    %v9145 = vrot.slane %v9143, 7
    %v9146 = vshll.u32 %v9095, 16
    %v9148 = vor.u32 %v9145, %v9146
    %v9149 = vsel %vm9110, %v9141, %v9148
    %v9151 = vshrl.u32 %v9091, 16
    %v9153 = vrot.slane %v9151, 7
    %v9154 = vrot.slane %v9153, 4
    %v9156 = vshrl.u32 %v9096, 16
    %v9158 = vrot.slane %v9156, 7
    %v9159 = vshll.u32 %v9096, 16
    %v9161 = vor.u32 %v9158, %v9159
    %v9162 = vsel %vm9110, %v9154, %v9161
    %v9164 = vshrl.u32 %v9092, 16
    %v9166 = vrot.slane %v9164, 7
    %v9167 = vrot.slane %v9166, 4
    %v9169 = vshrl.u32 %v9097, 16
    %v9171 = vrot.slane %v9169, 7
    %v9172 = vshll.u32 %v9097, 16
    %v9174 = vor.u32 %v9171, %v9172
    %v9175 = vsel %vm9110, %v9167, %v9174
    %v9177 = vshrl.u32 %v9098, 16
    %v9179 = vrot.slane %v9177, 7
    %v9180 = vrot.slane %v9179, 4
    %v9182 = vshrl.u32 %v9103, 16
    %v9184 = vrot.slane %v9182, 7
    %v9185 = vshll.u32 %v9103, 16
    %v9187 = vor.u32 %v9184, %v9185
    %v9188 = vsel %vm9110, %v9180, %v9187
    %v9190 = vshrl.u32 %v9099, 16
    %v9192 = vrot.slane %v9190, 7
    %v9193 = vrot.slane %v9192, 4
    %v9195 = vshrl.u32 %v9104, 16
    %v9197 = vrot.slane %v9195, 7
    %v9198 = vshll.u32 %v9104, 16
    %v9200 = vor.u32 %v9197, %v9198
    %v9201 = vsel %vm9110, %v9193, %v9200
    %v9203 = vshrl.u32 %v9100, 16
    %v9205 = vrot.slane %v9203, 7
    %v9206 = vrot.slane %v9205, 4
    %v9208 = vshrl.u32 %v9105, 16
    %v9210 = vrot.slane %v9208, 7
    %v9211 = vshll.u32 %v9105, 16
    %v9213 = vor.u32 %v9210, %v9211
    %v9214 = vsel %vm9110, %v9206, %v9213
    %v9216 = vshrl.u32 %v9101, 16
    %v9218 = vrot.slane %v9216, 7
    %v9219 = vrot.slane %v9218, 4
    %v9221 = vshrl.u32 %v9106, 16
    %v9223 = vrot.slane %v9221, 7
    %v9224 = vshll.u32 %v9106, 16
    %v9226 = vor.u32 %v9223, %v9224
    %v9227 = vsel %vm9110, %v9219, %v9226
    %v9229 = vshrl.u32 %v9102, 16
    %v9231 = vrot.slane %v9229, 7
    %v9232 = vrot.slane %v9231, 4
    %v9234 = vshrl.u32 %v9107, 16
    %v9236 = vrot.slane %v9234, 7
    %v9237 = vshll.u32 %v9107, 16
    %v9239 = vor.u32 %v9236, %v9237
    %v9240 = vsel %vm9110, %v9232, %v9239
    %s9241 = scalar_lea.vmem [#allocation13], 6912
    %v9242 = vld [vmem:[%s9241] sm:$0xff]
    %v9243 = vld [vmem:[%s9241 + $0x8] sm:$0xff]
    %v9244 = vld [vmem:[%s9241 + $0x10] sm:$0xff]
    %v9245 = vld [vmem:[%s9241 + $0x18] sm:$0xff]
    %v9246 = vld [vmem:[%s9241 + $0x20] sm:$0xff]
    %v9247 = vld [vmem:[%s9241 + $0x28] sm:$0xff]
    %v9248 = vld [vmem:[%s9241 + $0x30] sm:$0xff]
    %v9249 = vld [vmem:[%s9241 + $0x38] sm:$0xff]
    %v9250 = vld [vmem:[%s9241 + $0x40] sm:$0xff]
    %v9251 = vld [vmem:[%s9241 + $0x48] sm:$0xff]
    %v9252 = vld [vmem:[%s9241 + $0x50] sm:$0xff]
    %v9253 = vld [vmem:[%s9241 + $0x58] sm:$0xff]
    %v9254 = vld [vmem:[%s9241 + $0x60] sm:$0xff]
    %v9255 = vld [vmem:[%s9241 + $0x68] sm:$0xff]
    %v9256 = vld [vmem:[%s9241 + $0x70] sm:$0xff]
    %v9257 = vld [vmem:[%s9241 + $0x78] sm:$0xff]
    %v9258 = vld [vmem:[%s9241 + $0x80] sm:$0xff]
    %v9259 = vld [vmem:[%s9241 + $0x88] sm:$0xff]
    %v9260 = vld [vmem:[%s9241 + $0x90] sm:$0xff]
    %v9261 = vld [vmem:[%s9241 + $0x98] sm:$0xff]
    %v9262 = vld [vmem:[%s9241 + $0xa0] sm:$0xff]
    %v9263 = vld [vmem:[%s9241 + $0xa8] sm:$0xff]
    %v9264 = vld [vmem:[%s9241 + $0xb0] sm:$0xff]
    %v9265 = vld [vmem:[%s9241 + $0xb8] sm:$0xff]
    %v9266 = vld [vmem:[%s9241 + $0xc0] sm:$0xff]
    %v9267 = vld [vmem:[%s9241 + $0xc8] sm:$0xff]
    %v9268 = vld [vmem:[%s9241 + $0xd0] sm:$0xff]
    %v9269 = vld [vmem:[%s9241 + $0xd8] sm:$0xff]
    %v9270 = vld [vmem:[%s9241 + $0xe0] sm:$0xff]
    %v9271 = vld [vmem:[%s9241 + $0xe8] sm:$0xff]
    %v9272 = vld [vmem:[%s9241 + $0xf0] sm:$0xff]
    %v9273 = vld [vmem:[%s9241 + $0xf8] sm:$0xff]
    %v9274 = vld [vmem:[%s9241 + $0x100] sm:$0xff]
    %v9275 = vld [vmem:[%s9241 + $0x108] sm:$0xff]
    %v9276 = vld [vmem:[%s9241 + $0x110] sm:$0xff]
    %v9277 = vld [vmem:[%s9241 + $0x118] sm:$0xff]
    %v9278 = vld [vmem:[%s9241 + $0x120] sm:$0xff]
    %v9279 = vld [vmem:[%s9241 + $0x128] sm:$0xff]
    %v9280 = vld [vmem:[%s9241 + $0x130] sm:$0xff]
    %v9281 = vld [vmem:[%s9241 + $0x138] sm:$0xff]
    %v9282 = vld [vmem:[%s9241 + $0x140] sm:$0xff]
    %v9283 = vld [vmem:[%s9241 + $0x148] sm:$0xff]
    %v9284 = vld [vmem:[%s9241 + $0x150] sm:$0xff]
    %v9285 = vld [vmem:[%s9241 + $0x158] sm:$0xff]
    %v9286 = vld [vmem:[%s9241 + $0x160] sm:$0xff]
    %v9287 = vld [vmem:[%s9241 + $0x168] sm:$0xff]
    %v9288 = vld [vmem:[%s9241 + $0x170] sm:$0xff]
    %v9289 = vld [vmem:[%s9241 + $0x178] sm:$0xff]
    %v9290 = vld [vmem:[%s9241 + $0x180] sm:$0xff]
    %v9291 = vld [vmem:[%s9241 + $0x188] sm:$0xff]
    %v9292 = vld [vmem:[%s9241 + $0x190] sm:$0xff]
    %v9293 = vld [vmem:[%s9241 + $0x198] sm:$0xff]
    %v9294 = vld [vmem:[%s9241 + $0x1a0] sm:$0xff]
    %v9295 = vld [vmem:[%s9241 + $0x1a8] sm:$0xff]
    %v9296 = vld [vmem:[%s9241 + $0x1b0] sm:$0xff]
    %v9297 = vld [vmem:[%s9241 + $0x1b8] sm:$0xff]
    %v9298 = vld [vmem:[%s9241 + $0x1c0] sm:$0xff]
    %v9299 = vld [vmem:[%s9241 + $0x1c8] sm:$0xff]
    %v9300 = vld [vmem:[%s9241 + $0x1d0] sm:$0xff]
    %v9301 = vld [vmem:[%s9241 + $0x1d8] sm:$0xff]
    %v9302 = vld [vmem:[%s9241 + $0x1e0] sm:$0xff]
    %v9303 = vld [vmem:[%s9241 + $0x1e8] sm:$0xff]
    %v9304 = vld [vmem:[%s9241 + $0x1f0] sm:$0xff]
    %v9305 = vld [vmem:[%s9241 + $0x1f8] sm:$0xff]
    %v9306 = vld [vmem:[%s9241 + $0x200] sm:$0xff]
    %v9307 = vld [vmem:[%s9241 + $0x208] sm:$0xff]
    %v9308 = vld [vmem:[%s9241 + $0x210] sm:$0xff]
    %v9309 = vld [vmem:[%s9241 + $0x218] sm:$0xff]
    %v9310 = vld [vmem:[%s9241 + $0x220] sm:$0xff]
    %v9311 = vld [vmem:[%s9241 + $0x228] sm:$0xff]
    %v9312 = vld [vmem:[%s9241 + $0x230] sm:$0xff]
    %v9313 = vld [vmem:[%s9241 + $0x238] sm:$0xff]
    %v9314 = vld [vmem:[%s9241 + $0x240] sm:$0xff]
    %v9315 = vld [vmem:[%s9241 + $0x248] sm:$0xff]
    %v9316 = vld [vmem:[%s9241 + $0x250] sm:$0xff]
    %v9317 = vld [vmem:[%s9241 + $0x258] sm:$0xff]
    %v9318 = vld [vmem:[%s9241 + $0x260] sm:$0xff]
    %v9319 = vld [vmem:[%s9241 + $0x268] sm:$0xff]
    %v9320 = vld [vmem:[%s9241 + $0x270] sm:$0xff]
    %v9321 = vld [vmem:[%s9241 + $0x278] sm:$0xff]
    %v9322 = vld [vmem:[%s9241 + $0x280] sm:$0xff]
    %v9323 = vld [vmem:[%s9241 + $0x288] sm:$0xff]
    %v9324 = vld [vmem:[%s9241 + $0x290] sm:$0xff]
    %v9325 = vld [vmem:[%s9241 + $0x298] sm:$0xff]
    %v9326 = vld [vmem:[%s9241 + $0x2a0] sm:$0xff]
    %v9327 = vld [vmem:[%s9241 + $0x2a8] sm:$0xff]
    %v9328 = vld [vmem:[%s9241 + $0x2b0] sm:$0xff]
    %v9329 = vld [vmem:[%s9241 + $0x2b8] sm:$0xff]
    %v9330 = vld [vmem:[%s9241 + $0x2c0] sm:$0xff]
    %v9331 = vld [vmem:[%s9241 + $0x2c8] sm:$0xff]
    %v9332 = vld [vmem:[%s9241 + $0x2d0] sm:$0xff]
    %v9333 = vld [vmem:[%s9241 + $0x2d8] sm:$0xff]
    %v9334 = vld [vmem:[%s9241 + $0x2e0] sm:$0xff]
    %v9335 = vld [vmem:[%s9241 + $0x2e8] sm:$0xff]
    %v9336 = vld [vmem:[%s9241 + $0x2f0] sm:$0xff]
    %v9337 = vld [vmem:[%s9241 + $0x2f8] sm:$0xff]
    %v9338 = vld [vmem:[%s9241 + $0x300] sm:$0xff]
    %v9339 = vld [vmem:[%s9241 + $0x308] sm:$0xff]
    %v9340 = vld [vmem:[%s9241 + $0x310] sm:$0xff]
    %v9341 = vld [vmem:[%s9241 + $0x318] sm:$0xff]
    %v9342 = vld [vmem:[%s9241 + $0x320] sm:$0xff]
    %v9343 = vld [vmem:[%s9241 + $0x328] sm:$0xff]
    %v9344 = vld [vmem:[%s9241 + $0x330] sm:$0xff]
    %v9345 = vld [vmem:[%s9241 + $0x338] sm:$0xff]
    %v9346 = vld [vmem:[%s9241 + $0x340] sm:$0xff]
    %v9347 = vld [vmem:[%s9241 + $0x348] sm:$0xff]
    %v9348 = vld [vmem:[%s9241 + $0x350] sm:$0xff]
    %v9349 = vld [vmem:[%s9241 + $0x358] sm:$0xff]
    %v9350 = vld [vmem:[%s9241 + $0x360] sm:$0xff]
    %v9351 = vld [vmem:[%s9241 + $0x368] sm:$0xff]
    %v9352 = vld [vmem:[%s9241 + $0x370] sm:$0xff]
    %v9353 = vld [vmem:[%s9241 + $0x378] sm:$0xff]
    %v9354 = vld [vmem:[%s9241 + $0x380] sm:$0xff]
    %v9355 = vld [vmem:[%s9241 + $0x388] sm:$0xff]
    %v9356 = vld [vmem:[%s9241 + $0x390] sm:$0xff]
    %v9357 = vld [vmem:[%s9241 + $0x398] sm:$0xff]
    %v9358 = vld [vmem:[%s9241 + $0x3a0] sm:$0xff]
    %v9359 = vld [vmem:[%s9241 + $0x3a8] sm:$0xff]
    %v9360 = vld [vmem:[%s9241 + $0x3b0] sm:$0xff]
    %v9361 = vld [vmem:[%s9241 + $0x3b8] sm:$0xff]
    %v9362 = vld [vmem:[%s9241 + $0x3c0] sm:$0xff]
    %v9363 = vld [vmem:[%s9241 + $0x3c8] sm:$0xff]
    %v9364 = vld [vmem:[%s9241 + $0x3d0] sm:$0xff]
    %v9365 = vld [vmem:[%s9241 + $0x3d8] sm:$0xff]
    %v9366 = vld [vmem:[%s9241 + $0x3e0] sm:$0xff]
    %v9367 = vld [vmem:[%s9241 + $0x3e8] sm:$0xff]
    %v9368 = vld [vmem:[%s9241 + $0x3f0] sm:$0xff]
    %v9369 = vld [vmem:[%s9241 + $0x3f8] sm:$0xff]
    %v9370 = vld [vmem:[%s9241 + $0x400] sm:$0xff]
    %v9371 = vld [vmem:[%s9241 + $0x408] sm:$0xff]
    %v9372 = vld [vmem:[%s9241 + $0x410] sm:$0xff]
    %v9373 = vld [vmem:[%s9241 + $0x418] sm:$0xff]
    %v9374 = vld [vmem:[%s9241 + $0x420] sm:$0xff]
    %v9375 = vld [vmem:[%s9241 + $0x428] sm:$0xff]
    %v9376 = vld [vmem:[%s9241 + $0x430] sm:$0xff]
    %v9377 = vld [vmem:[%s9241 + $0x438] sm:$0xff]
    %v9378 = vld [vmem:[%s9241 + $0x440] sm:$0xff]
    %v9379 = vld [vmem:[%s9241 + $0x448] sm:$0xff]
    %v9380 = vld [vmem:[%s9241 + $0x450] sm:$0xff]
    %v9381 = vld [vmem:[%s9241 + $0x458] sm:$0xff]
    %v9382 = vld [vmem:[%s9241 + $0x460] sm:$0xff]
    %v9383 = vld [vmem:[%s9241 + $0x468] sm:$0xff]
    %v9384 = vld [vmem:[%s9241 + $0x470] sm:$0xff]
    %v9385 = vld [vmem:[%s9241 + $0x478] sm:$0xff]
    %v9386 = vld [vmem:[%s9241 + $0x480] sm:$0xff]
    %v9387 = vld [vmem:[%s9241 + $0x488] sm:$0xff]
    %v9388 = vld [vmem:[%s9241 + $0x490] sm:$0xff]
    %v9389 = vld [vmem:[%s9241 + $0x498] sm:$0xff]
    %v9390 = vld [vmem:[%s9241 + $0x4a0] sm:$0xff]
    %v9391 = vld [vmem:[%s9241 + $0x4a8] sm:$0xff]
    %v9392 = vld [vmem:[%s9241 + $0x4b0] sm:$0xff]
    %v9393 = vld [vmem:[%s9241 + $0x4b8] sm:$0xff]
    %v9394 = vld [vmem:[%s9241 + $0x4c0] sm:$0xff]
    %v9395 = vld [vmem:[%s9241 + $0x4c8] sm:$0xff]
    %v9396 = vld [vmem:[%s9241 + $0x4d0] sm:$0xff]
    %v9397 = vld [vmem:[%s9241 + $0x4d8] sm:$0xff]
    %v9398 = vld [vmem:[%s9241 + $0x4e0] sm:$0xff]
    %v9399 = vld [vmem:[%s9241 + $0x4e8] sm:$0xff]
    %v9400 = vld [vmem:[%s9241 + $0x4f0] sm:$0xff]
    %v9401 = vld [vmem:[%s9241 + $0x4f8] sm:$0xff]
    %v9402 = vld [vmem:[%s9241 + $0x500] sm:$0xff]
    %v9403 = vld [vmem:[%s9241 + $0x508] sm:$0xff]
    %v9404 = vld [vmem:[%s9241 + $0x510] sm:$0xff]
    %v9405 = vld [vmem:[%s9241 + $0x518] sm:$0xff]
    %v9406 = vld [vmem:[%s9241 + $0x520] sm:$0xff]
    %v9407 = vld [vmem:[%s9241 + $0x528] sm:$0xff]
    %v9408 = vld [vmem:[%s9241 + $0x530] sm:$0xff]
    %v9409 = vld [vmem:[%s9241 + $0x538] sm:$0xff]
    %v9410 = vld [vmem:[%s9241 + $0x540] sm:$0xff]
    %v9411 = vld [vmem:[%s9241 + $0x548] sm:$0xff]
    %v9412 = vld [vmem:[%s9241 + $0x550] sm:$0xff]
    %v9413 = vld [vmem:[%s9241 + $0x558] sm:$0xff]
    %v9414 = vld [vmem:[%s9241 + $0x560] sm:$0xff]
    %v9415 = vld [vmem:[%s9241 + $0x568] sm:$0xff]
    %v9416 = vld [vmem:[%s9241 + $0x570] sm:$0xff]
    %v9417 = vld [vmem:[%s9241 + $0x578] sm:$0xff]
    %v9418 = vld [vmem:[%s9241 + $0x580] sm:$0xff]
    %v9419 = vld [vmem:[%s9241 + $0x588] sm:$0xff]
    %v9420 = vld [vmem:[%s9241 + $0x590] sm:$0xff]
    %v9421 = vld [vmem:[%s9241 + $0x598] sm:$0xff]
    %v9422 = vld [vmem:[%s9241 + $0x5a0] sm:$0xff]
    %v9423 = vld [vmem:[%s9241 + $0x5a8] sm:$0xff]
    %v9424 = vld [vmem:[%s9241 + $0x5b0] sm:$0xff]
    %v9425 = vld [vmem:[%s9241 + $0x5b8] sm:$0xff]
    %v9426 = vld [vmem:[%s9241 + $0x5c0] sm:$0xff]
    %v9427 = vld [vmem:[%s9241 + $0x5c8] sm:$0xff]
    %v9428 = vld [vmem:[%s9241 + $0x5d0] sm:$0xff]
    %v9429 = vld [vmem:[%s9241 + $0x5d8] sm:$0xff]
    %v9430 = vld [vmem:[%s9241 + $0x5e0] sm:$0xff]
    %v9431 = vld [vmem:[%s9241 + $0x5e8] sm:$0xff]
    %v9432 = vld [vmem:[%s9241 + $0x5f0] sm:$0xff]
    %v9433 = vld [vmem:[%s9241 + $0x5f8] sm:$0xff]
    %v9434 = vld [vmem:[%s9241 + $0x600] sm:$0xff]
    %v9435 = vld [vmem:[%s9241 + $0x608] sm:$0xff]
    %v9436 = vld [vmem:[%s9241 + $0x610] sm:$0xff]
    %v9437 = vld [vmem:[%s9241 + $0x618] sm:$0xff]
    %v9438 = vld [vmem:[%s9241 + $0x620] sm:$0xff]
    %v9439 = vld [vmem:[%s9241 + $0x628] sm:$0xff]
    %v9440 = vld [vmem:[%s9241 + $0x630] sm:$0xff]
    %v9441 = vld [vmem:[%s9241 + $0x638] sm:$0xff]
    %v9442 = vld [vmem:[%s9241 + $0x640] sm:$0xff]
    %v9443 = vld [vmem:[%s9241 + $0x648] sm:$0xff]
    %v9444 = vld [vmem:[%s9241 + $0x650] sm:$0xff]
    %v9445 = vld [vmem:[%s9241 + $0x658] sm:$0xff]
    %v9446 = vld [vmem:[%s9241 + $0x660] sm:$0xff]
    %v9447 = vld [vmem:[%s9241 + $0x668] sm:$0xff]
    %v9448 = vld [vmem:[%s9241 + $0x670] sm:$0xff]
    %v9449 = vld [vmem:[%s9241 + $0x678] sm:$0xff]
    %v9450 = vld [vmem:[%s9241 + $0x680] sm:$0xff]
    %v9451 = vld [vmem:[%s9241 + $0x688] sm:$0xff]
    %v9452 = vld [vmem:[%s9241 + $0x690] sm:$0xff]
    %v9453 = vld [vmem:[%s9241 + $0x698] sm:$0xff]
    %v9454 = vld [vmem:[%s9241 + $0x6a0] sm:$0xff]
    %v9455 = vld [vmem:[%s9241 + $0x6a8] sm:$0xff]
    %v9456 = vld [vmem:[%s9241 + $0x6b0] sm:$0xff]
    %v9457 = vld [vmem:[%s9241 + $0x6b8] sm:$0xff]
    %v9458 = vld [vmem:[%s9241 + $0x6c0] sm:$0xff]
    %v9459 = vld [vmem:[%s9241 + $0x6c8] sm:$0xff]
    %v9460 = vld [vmem:[%s9241 + $0x6d0] sm:$0xff]
    %v9461 = vld [vmem:[%s9241 + $0x6d8] sm:$0xff]
    %v9462 = vld [vmem:[%s9241 + $0x6e0] sm:$0xff]
    %v9463 = vld [vmem:[%s9241 + $0x6e8] sm:$0xff]
    %v9464 = vld [vmem:[%s9241 + $0x6f0] sm:$0xff]
    %v9465 = vld [vmem:[%s9241 + $0x6f8] sm:$0xff]
    %v9466 = vld [vmem:[%s9241 + $0x700] sm:$0xff]
    %v9467 = vld [vmem:[%s9241 + $0x708] sm:$0xff]
    %v9468 = vld [vmem:[%s9241 + $0x710] sm:$0xff]
    %v9469 = vld [vmem:[%s9241 + $0x718] sm:$0xff]
    %v9470 = vld [vmem:[%s9241 + $0x720] sm:$0xff]
    %v9471 = vld [vmem:[%s9241 + $0x728] sm:$0xff]
    %v9472 = vld [vmem:[%s9241 + $0x730] sm:$0xff]
    %v9473 = vld [vmem:[%s9241 + $0x738] sm:$0xff]
    %v9474 = vld [vmem:[%s9241 + $0x740] sm:$0xff]
    %v9475 = vld [vmem:[%s9241 + $0x748] sm:$0xff]
    %v9476 = vld [vmem:[%s9241 + $0x750] sm:$0xff]
    %v9477 = vld [vmem:[%s9241 + $0x758] sm:$0xff]
    %v9478 = vld [vmem:[%s9241 + $0x760] sm:$0xff]
    %v9479 = vld [vmem:[%s9241 + $0x768] sm:$0xff]
    %v9480 = vld [vmem:[%s9241 + $0x770] sm:$0xff]
    %v9481 = vld [vmem:[%s9241 + $0x778] sm:$0xff]
    %v9482 = vld [vmem:[%s9241 + $0x780] sm:$0xff]
    %v9483 = vld [vmem:[%s9241 + $0x788] sm:$0xff]
    %v9484 = vld [vmem:[%s9241 + $0x790] sm:$0xff]
    %v9485 = vld [vmem:[%s9241 + $0x798] sm:$0xff]
    %v9486 = vld [vmem:[%s9241 + $0x7a0] sm:$0xff]
    %v9487 = vld [vmem:[%s9241 + $0x7a8] sm:$0xff]
    %v9488 = vld [vmem:[%s9241 + $0x7b0] sm:$0xff]
    %v9489 = vld [vmem:[%s9241 + $0x7b8] sm:$0xff]
    %v9490 = vld [vmem:[%s9241 + $0x7c0] sm:$0xff]
    %v9491 = vld [vmem:[%s9241 + $0x7c8] sm:$0xff]
    %v9492 = vld [vmem:[%s9241 + $0x7d0] sm:$0xff]
    %v9493 = vld [vmem:[%s9241 + $0x7d8] sm:$0xff]
    %v9494 = vld [vmem:[%s9241 + $0x7e0] sm:$0xff]
    %v9495 = vld [vmem:[%s9241 + $0x7e8] sm:$0xff]
    %v9496 = vld [vmem:[%s9241 + $0x7f0] sm:$0xff]
    %v9497 = vld [vmem:[%s9241 + $0x7f8] sm:$0xff]
    %v9498 = vld [vmem:[%s9241 + $0x800] sm:$0xff]
    %v9499 = vld [vmem:[%s9241 + $0x808] sm:$0xff]
    %v9500 = vld [vmem:[%s9241 + $0x810] sm:$0xff]
    %v9501 = vld [vmem:[%s9241 + $0x818] sm:$0xff]
    %v9502 = vld [vmem:[%s9241 + $0x820] sm:$0xff]
    %v9503 = vld [vmem:[%s9241 + $0x828] sm:$0xff]
    %v9504 = vld [vmem:[%s9241 + $0x830] sm:$0xff]
    %v9505 = vld [vmem:[%s9241 + $0x838] sm:$0xff]
    %v9506 = vld [vmem:[%s9241 + $0x840] sm:$0xff]
    %v9507 = vld [vmem:[%s9241 + $0x848] sm:$0xff]
    %v9508 = vld [vmem:[%s9241 + $0x850] sm:$0xff]
    %v9509 = vld [vmem:[%s9241 + $0x858] sm:$0xff]
    %v9510 = vld [vmem:[%s9241 + $0x860] sm:$0xff]
    %v9511 = vld [vmem:[%s9241 + $0x868] sm:$0xff]
    %v9512 = vld [vmem:[%s9241 + $0x870] sm:$0xff]
    %v9513 = vld [vmem:[%s9241 + $0x878] sm:$0xff]
    %v9514 = vld [vmem:[%s9241 + $0x880] sm:$0xff]
    %v9515 = vld [vmem:[%s9241 + $0x888] sm:$0xff]
    %v9516 = vld [vmem:[%s9241 + $0x890] sm:$0xff]
    %v9517 = vld [vmem:[%s9241 + $0x898] sm:$0xff]
    %v9518 = vld [vmem:[%s9241 + $0x8a0] sm:$0xff]
    %v9519 = vld [vmem:[%s9241 + $0x8a8] sm:$0xff]
    %v9520 = vld [vmem:[%s9241 + $0x8b0] sm:$0xff]
    %v9521 = vld [vmem:[%s9241 + $0x8b8] sm:$0xff]
    %v9522 = vld [vmem:[%s9241 + $0x8c0] sm:$0xff]
    %v9523 = vld [vmem:[%s9241 + $0x8c8] sm:$0xff]
    %v9524 = vld [vmem:[%s9241 + $0x8d0] sm:$0xff]
    %v9525 = vld [vmem:[%s9241 + $0x8d8] sm:$0xff]
    %v9526 = vld [vmem:[%s9241 + $0x8e0] sm:$0xff]
    %v9527 = vld [vmem:[%s9241 + $0x8e8] sm:$0xff]
    %v9528 = vld [vmem:[%s9241 + $0x8f0] sm:$0xff]
    %v9529 = vld [vmem:[%s9241 + $0x8f8] sm:$0xff]
    %v9530 = vunpack.c.l.b16 %v9123
    %v9531 = vunpack.c.h.b16 %v9123
    %v9532 = vunpack.c.l.b16 %v9136
    %v9533 = vunpack.c.h.b16 %v9136
    %v9534 = vunpack.c.l.b16 %v9149
    %v9535 = vunpack.c.h.b16 %v9149
    %v9536 = vunpack.c.l.b16 %v9162
    %v9537 = vunpack.c.h.b16 %v9162
    %v9538 = vunpack.c.l.b16 %v9175
    %v9539 = vunpack.c.l.b16 %v9188
    %v9540 = vunpack.c.h.b16 %v9188
    %v9541 = vunpack.c.l.b16 %v9201
    %v9542 = vunpack.c.h.b16 %v9201
    %v9543 = vunpack.c.l.b16 %v9214
    %v9544 = vunpack.c.h.b16 %v9214
    %v9545 = vunpack.c.l.b16 %v9227
    %v9546 = vunpack.c.h.b16 %v9227
    %v9547 = vunpack.c.l.b16 %v9240
    %v9548 = vpack.c.b16 %v9539, %v9530
    %v9549 = vpack.c.b16 %v9540, %v9531
    %v9550 = vpack.c.b16 %v9541, %v9532
    %v9551 = vpack.c.b16 %v9542, %v9533
    %v9552 = vpack.c.b16 %v9543, %v9534
    %v9553 = vpack.c.b16 %v9544, %v9535
    %v9554 = vpack.c.b16 %v9545, %v9536
    %v9555 = vpack.c.b16 %v9546, %v9537
    %v9556 = vpack.c.b16 %v9547, %v9538
    %v9854 = vunpack.c.l.b16 %v9242
    %v9855 = vunpack.c.h.b16 %v9242
    %v9856 = vunpack.c.l.b16 %v9243
    %v9857 = vunpack.c.h.b16 %v9243
    %v9858 = vunpack.c.l.b16 %v9244
    %v9859 = vunpack.c.h.b16 %v9244
    %v9860 = vunpack.c.l.b16 %v9245
    %v9861 = vunpack.c.h.b16 %v9245
    %v9862 = vunpack.c.l.b16 %v9246
    %v9863 = vunpack.c.h.b16 %v9246
    %v9864 = vunpack.c.l.b16 %v9247
    %v9865 = vunpack.c.h.b16 %v9247
    %v9866 = vunpack.c.l.b16 %v9248
    %v9867 = vunpack.c.h.b16 %v9248
    %v9868 = vunpack.c.l.b16 %v9249
    %v9869 = vunpack.c.h.b16 %v9249
    %v9870 = vunpack.c.l.b16 %v9250
    %v9871 = vunpack.c.h.b16 %v9250
    %v9872 = vunpack.c.l.b16 %v9251
    %v9873 = vunpack.c.h.b16 %v9251
    %v9874 = vunpack.c.l.b16 %v9252
    %v9875 = vunpack.c.h.b16 %v9252
    %v9876 = vunpack.c.l.b16 %v9253
    %v9877 = vunpack.c.h.b16 %v9253
    %v9878 = vunpack.c.l.b16 %v9254
    %v9879 = vunpack.c.h.b16 %v9254
    %v9880 = vunpack.c.l.b16 %v9255
    %v9881 = vunpack.c.h.b16 %v9255
    %v9882 = vunpack.c.l.b16 %v9256
    %v9883 = vunpack.c.h.b16 %v9256
    %v9884 = vunpack.c.l.b16 %v9257
    %v9885 = vunpack.c.h.b16 %v9257
    %v9886 = vunpack.c.l.b16 %v9258
    %v9887 = vunpack.c.h.b16 %v9258
    %v9888 = vunpack.c.l.b16 %v9259
    %v9889 = vunpack.c.h.b16 %v9259
    %v9890 = vunpack.c.l.b16 %v9260
    %v9891 = vunpack.c.h.b16 %v9260
    %v9892 = vunpack.c.l.b16 %v9261
    %v9893 = vunpack.c.h.b16 %v9261
    %v9894 = vunpack.c.l.b16 %v9262
    %v9895 = vunpack.c.h.b16 %v9262
    %v9896 = vunpack.c.l.b16 %v9263
    %v9897 = vunpack.c.h.b16 %v9263
    %v9898 = vunpack.c.l.b16 %v9264
    %v9899 = vunpack.c.h.b16 %v9264
    %v9900 = vunpack.c.l.b16 %v9265
    %v9901 = vunpack.c.h.b16 %v9265
    %v9902 = vunpack.c.l.b16 %v9266
    %v9903 = vunpack.c.h.b16 %v9266
    %v9904 = vunpack.c.l.b16 %v9267
    %v9905 = vunpack.c.h.b16 %v9267
    %v9906 = vunpack.c.l.b16 %v9268
    %v9907 = vunpack.c.h.b16 %v9268
    %v9908 = vunpack.c.l.b16 %v9269
    %v9909 = vunpack.c.h.b16 %v9269
    %v9910 = vunpack.c.l.b16 %v9270
    %v9911 = vunpack.c.h.b16 %v9270
    %v9912 = vunpack.c.l.b16 %v9271
    %v9913 = vunpack.c.h.b16 %v9271
    %v9914 = vunpack.c.l.b16 %v9272
    %v9915 = vunpack.c.h.b16 %v9272
    %v9916 = vunpack.c.l.b16 %v9273
    %v9917 = vunpack.c.h.b16 %v9273
    %v9918 = vunpack.c.l.b16 %v9274
    %v9919 = vunpack.c.h.b16 %v9274
    %v9920 = vunpack.c.l.b16 %v9275
    %v9921 = vunpack.c.h.b16 %v9275
    %v9922 = vunpack.c.l.b16 %v9276
    %v9923 = vunpack.c.h.b16 %v9276
    %v9924 = vunpack.c.l.b16 %v9277
    %v9925 = vunpack.c.h.b16 %v9277
    %v9926 = vunpack.c.l.b16 %v9278
    %v9927 = vunpack.c.h.b16 %v9278
    %v9928 = vunpack.c.l.b16 %v9279
    %v9929 = vunpack.c.h.b16 %v9279
    %v9930 = vunpack.c.l.b16 %v9280
    %v9931 = vunpack.c.h.b16 %v9280
    %v9932 = vunpack.c.l.b16 %v9281
    %v9933 = vunpack.c.h.b16 %v9281
    %v9934 = vunpack.c.l.b16 %v9282
    %v9935 = vunpack.c.h.b16 %v9282
    %v9936 = vunpack.c.l.b16 %v9283
    %v9937 = vunpack.c.h.b16 %v9283
    %v9938 = vunpack.c.l.b16 %v9284
    %v9939 = vunpack.c.h.b16 %v9284
    %v9940 = vunpack.c.l.b16 %v9285
    %v9941 = vunpack.c.h.b16 %v9285
    %v9942 = vunpack.c.l.b16 %v9286
    %v9943 = vunpack.c.h.b16 %v9286
    %v9944 = vunpack.c.l.b16 %v9287
    %v9945 = vunpack.c.h.b16 %v9287
    %v9946 = vunpack.c.l.b16 %v9288
    %v9947 = vunpack.c.h.b16 %v9288
    %v9948 = vunpack.c.l.b16 %v9289
    %v9949 = vunpack.c.h.b16 %v9289
    %v9950 = vunpack.c.l.b16 %v9290
    %v9951 = vunpack.c.h.b16 %v9290
    %v9952 = vunpack.c.l.b16 %v9291
    %v9953 = vunpack.c.h.b16 %v9291
    %v9954 = vunpack.c.l.b16 %v9292
    %v9955 = vunpack.c.h.b16 %v9292
    %v9956 = vunpack.c.l.b16 %v9293
    %v9957 = vunpack.c.h.b16 %v9293
    %v9958 = vunpack.c.l.b16 %v9294
    %v9959 = vunpack.c.h.b16 %v9294
    %v9960 = vunpack.c.l.b16 %v9295
    %v9961 = vunpack.c.h.b16 %v9295
    %v9962 = vunpack.c.l.b16 %v9296
    %v9963 = vunpack.c.h.b16 %v9296
    %v9964 = vunpack.c.l.b16 %v9297
    %v9965 = vunpack.c.h.b16 %v9297
    %v9966 = vunpack.c.l.b16 %v9298
    %v9967 = vunpack.c.h.b16 %v9298
    %v9968 = vunpack.c.l.b16 %v9299
    %v9969 = vunpack.c.h.b16 %v9299
    %v9970 = vunpack.c.l.b16 %v9300
    %v9971 = vunpack.c.h.b16 %v9300
    %v9972 = vunpack.c.l.b16 %v9301
    %v9973 = vunpack.c.h.b16 %v9301
    %v9974 = vunpack.c.l.b16 %v9302
    %v9975 = vunpack.c.h.b16 %v9302
    %v9976 = vunpack.c.l.b16 %v9303
    %v9977 = vunpack.c.h.b16 %v9303
    %v9978 = vunpack.c.l.b16 %v9304
    %v9979 = vunpack.c.h.b16 %v9304
    %v9980 = vunpack.c.l.b16 %v9305
    %v9981 = vunpack.c.h.b16 %v9305
    %v9982 = vunpack.c.l.b16 %v9306
    %v9983 = vunpack.c.h.b16 %v9306
    %v9984 = vunpack.c.l.b16 %v9307
    %v9985 = vunpack.c.h.b16 %v9307
    %v9986 = vunpack.c.l.b16 %v9308
    %v9987 = vunpack.c.h.b16 %v9308
    %v9988 = vunpack.c.l.b16 %v9309
    %v9989 = vunpack.c.h.b16 %v9309
    %v9990 = vunpack.c.l.b16 %v9310
    %v9991 = vunpack.c.h.b16 %v9310
    %v9992 = vunpack.c.l.b16 %v9311
    %v9993 = vunpack.c.h.b16 %v9311
    %v9994 = vunpack.c.l.b16 %v9312
    %v9995 = vunpack.c.h.b16 %v9312
    %v9996 = vunpack.c.l.b16 %v9313
    %v9997 = vunpack.c.h.b16 %v9313
    %v9998 = vunpack.c.l.b16 %v9314
    %v9999 = vunpack.c.h.b16 %v9314
    %v10000 = vunpack.c.l.b16 %v9315
    %v10001 = vunpack.c.h.b16 %v9315
    %v10002 = vunpack.c.l.b16 %v9316
    %v10003 = vunpack.c.h.b16 %v9316
    %v10004 = vunpack.c.l.b16 %v9317
    %v10005 = vunpack.c.h.b16 %v9317
    %v10006 = vunpack.c.l.b16 %v9318
    %v10007 = vunpack.c.h.b16 %v9318
    %v10008 = vunpack.c.l.b16 %v9319
    %v10009 = vunpack.c.h.b16 %v9319
    %v10010 = vunpack.c.l.b16 %v9320
    %v10011 = vunpack.c.h.b16 %v9320
    %v10012 = vunpack.c.l.b16 %v9321
    %v10013 = vunpack.c.h.b16 %v9321
    %v10014 = vunpack.c.l.b16 %v9322
    %v10015 = vunpack.c.h.b16 %v9322
    %v10016 = vunpack.c.l.b16 %v9323
    %v10017 = vunpack.c.h.b16 %v9323
    %v10018 = vunpack.c.l.b16 %v9324
    %v10019 = vunpack.c.h.b16 %v9324
    %v10020 = vunpack.c.l.b16 %v9325
    %v10021 = vunpack.c.h.b16 %v9325
    %v10022 = vunpack.c.l.b16 %v9326
    %v10023 = vunpack.c.h.b16 %v9326
    %v10024 = vunpack.c.l.b16 %v9327
    %v10025 = vunpack.c.h.b16 %v9327
    %v10026 = vunpack.c.l.b16 %v9328
    %v10027 = vunpack.c.h.b16 %v9328
    %v10028 = vunpack.c.l.b16 %v9329
    %v10029 = vunpack.c.h.b16 %v9329
    %v10030 = vunpack.c.l.b16 %v9330
    %v10031 = vunpack.c.h.b16 %v9330
    %v10032 = vunpack.c.l.b16 %v9331
    %v10033 = vunpack.c.h.b16 %v9331
    %v10034 = vunpack.c.l.b16 %v9332
    %v10035 = vunpack.c.h.b16 %v9332
    %v10036 = vunpack.c.l.b16 %v9333
    %v10037 = vunpack.c.h.b16 %v9333
    %v10038 = vunpack.c.l.b16 %v9334
    %v10039 = vunpack.c.h.b16 %v9334
    %v10040 = vunpack.c.l.b16 %v9335
    %v10041 = vunpack.c.h.b16 %v9335
    %v10042 = vunpack.c.l.b16 %v9336
    %v10043 = vunpack.c.h.b16 %v9336
    %v10044 = vunpack.c.l.b16 %v9337
    %v10045 = vunpack.c.h.b16 %v9337
    %v10046 = vunpack.c.l.b16 %v9338
    %v10047 = vunpack.c.h.b16 %v9338
    %v10048 = vunpack.c.l.b16 %v9339
    %v10049 = vunpack.c.h.b16 %v9339
    %v10050 = vunpack.c.l.b16 %v9340
    %v10051 = vunpack.c.h.b16 %v9340
    %v10052 = vunpack.c.l.b16 %v9341
    %v10053 = vunpack.c.h.b16 %v9341
    %v10054 = vunpack.c.l.b16 %v9342
    %v10055 = vunpack.c.h.b16 %v9342
    %v10056 = vunpack.c.l.b16 %v9343
    %v10057 = vunpack.c.h.b16 %v9343
    %v10058 = vunpack.c.l.b16 %v9344
    %v10059 = vunpack.c.h.b16 %v9344
    %v10060 = vunpack.c.l.b16 %v9345
    %v10061 = vunpack.c.h.b16 %v9345
    %v10062 = vunpack.c.l.b16 %v9346
    %v10063 = vunpack.c.h.b16 %v9346
    %v10064 = vunpack.c.l.b16 %v9347
    %v10065 = vunpack.c.h.b16 %v9347
    %v10066 = vunpack.c.l.b16 %v9348
    %v10067 = vunpack.c.h.b16 %v9348
    %v10068 = vunpack.c.l.b16 %v9349
    %v10069 = vunpack.c.h.b16 %v9349
    %v10070 = vunpack.c.l.b16 %v9350
    %v10071 = vunpack.c.h.b16 %v9350
    %v10072 = vunpack.c.l.b16 %v9351
    %v10073 = vunpack.c.h.b16 %v9351
    %v10074 = vunpack.c.l.b16 %v9352
    %v10075 = vunpack.c.h.b16 %v9352
    %v10076 = vunpack.c.l.b16 %v9353
    %v10077 = vunpack.c.h.b16 %v9353
    %v10078 = vunpack.c.l.b16 %v9354
    %v10079 = vunpack.c.h.b16 %v9354
    %v10080 = vunpack.c.l.b16 %v9355
    %v10081 = vunpack.c.h.b16 %v9355
    %v10082 = vunpack.c.l.b16 %v9356
    %v10083 = vunpack.c.h.b16 %v9356
    %v10084 = vunpack.c.l.b16 %v9357
    %v10085 = vunpack.c.h.b16 %v9357
    %v10086 = vunpack.c.l.b16 %v9358
    %v10087 = vunpack.c.h.b16 %v9358
    %v10088 = vunpack.c.l.b16 %v9359
    %v10089 = vunpack.c.h.b16 %v9359
    %v10090 = vunpack.c.l.b16 %v9360
    %v10091 = vunpack.c.h.b16 %v9360
    %v10092 = vunpack.c.l.b16 %v9361
    %v10093 = vunpack.c.h.b16 %v9361
    %v10094 = vunpack.c.l.b16 %v9362
    %v10095 = vunpack.c.h.b16 %v9362
    %v10096 = vunpack.c.l.b16 %v9363
    %v10097 = vunpack.c.h.b16 %v9363
    %v10098 = vunpack.c.l.b16 %v9364
    %v10099 = vunpack.c.h.b16 %v9364
    %v10100 = vunpack.c.l.b16 %v9365
    %v10101 = vunpack.c.h.b16 %v9365
    %v10102 = vunpack.c.l.b16 %v9366
    %v10103 = vunpack.c.h.b16 %v9366
    %v10104 = vunpack.c.l.b16 %v9367
    %v10105 = vunpack.c.h.b16 %v9367
    %v10106 = vunpack.c.l.b16 %v9368
    %v10107 = vunpack.c.h.b16 %v9368
    %v10108 = vunpack.c.l.b16 %v9369
    %v10109 = vunpack.c.h.b16 %v9369
    %v10110 = vunpack.c.l.b16 %v9370
    %v10111 = vunpack.c.h.b16 %v9370
    %v10112 = vunpack.c.l.b16 %v9371
    %v10113 = vunpack.c.h.b16 %v9371
    %v10114 = vunpack.c.l.b16 %v9372
    %v10115 = vunpack.c.h.b16 %v9372
    %v10116 = vunpack.c.l.b16 %v9373
    %v10117 = vunpack.c.h.b16 %v9373
    %v10118 = vunpack.c.l.b16 %v9374
    %v10119 = vunpack.c.h.b16 %v9374
    %v10120 = vunpack.c.l.b16 %v9375
    %v10121 = vunpack.c.h.b16 %v9375
    %v10122 = vunpack.c.l.b16 %v9376
    %v10123 = vunpack.c.h.b16 %v9376
    %v10124 = vunpack.c.l.b16 %v9377
    %v10125 = vunpack.c.h.b16 %v9377
    %v10126 = vunpack.c.l.b16 %v9378
    %v10127 = vunpack.c.h.b16 %v9378
    %v10128 = vunpack.c.l.b16 %v9379
    %v10129 = vunpack.c.h.b16 %v9379
    %v10130 = vunpack.c.l.b16 %v9380
    %v10131 = vunpack.c.h.b16 %v9380
    %v10132 = vunpack.c.l.b16 %v9381
    %v10133 = vunpack.c.h.b16 %v9381
    %v10134 = vunpack.c.l.b16 %v9382
    %v10135 = vunpack.c.h.b16 %v9382
    %v10136 = vunpack.c.l.b16 %v9383
    %v10137 = vunpack.c.h.b16 %v9383
    %v10138 = vunpack.c.l.b16 %v9384
    %v10139 = vunpack.c.h.b16 %v9384
    %v10140 = vunpack.c.l.b16 %v9385
    %v10141 = vunpack.c.h.b16 %v9385
    %v10142 = vunpack.c.l.b16 %v9386
    %v10143 = vunpack.c.h.b16 %v9386
    %v10144 = vunpack.c.l.b16 %v9387
    %v10145 = vunpack.c.h.b16 %v9387
    %v10146 = vunpack.c.l.b16 %v9388
    %v10147 = vunpack.c.h.b16 %v9388
    %v10148 = vunpack.c.l.b16 %v9389
    %v10149 = vunpack.c.h.b16 %v9389
    %v10150 = vunpack.c.l.b16 %v9390
    %v10151 = vunpack.c.h.b16 %v9390
    %v10152 = vunpack.c.l.b16 %v9391
    %v10153 = vunpack.c.h.b16 %v9391
    %v10154 = vunpack.c.l.b16 %v9392
    %v10155 = vunpack.c.h.b16 %v9392
    %v10156 = vunpack.c.l.b16 %v9393
    %v10157 = vunpack.c.h.b16 %v9393
    %v10158 = vunpack.c.l.b16 %v9394
    %v10159 = vunpack.c.h.b16 %v9394
    %v10160 = vunpack.c.l.b16 %v9395
    %v10161 = vunpack.c.h.b16 %v9395
    %v10162 = vunpack.c.l.b16 %v9396
    %v10163 = vunpack.c.h.b16 %v9396
    %v10164 = vunpack.c.l.b16 %v9397
    %v10165 = vunpack.c.h.b16 %v9397
    %v10166 = vunpack.c.l.b16 %v9398
    %v10167 = vunpack.c.h.b16 %v9398
    %v10168 = vunpack.c.l.b16 %v9399
    %v10169 = vunpack.c.h.b16 %v9399
    %v10170 = vunpack.c.l.b16 %v9400
    %v10171 = vunpack.c.h.b16 %v9400
    %v10172 = vunpack.c.l.b16 %v9401
    %v10173 = vunpack.c.h.b16 %v9401
    %v10174 = vunpack.c.l.b16 %v9402
    %v10175 = vunpack.c.h.b16 %v9402
    %v10176 = vunpack.c.l.b16 %v9403
    %v10177 = vunpack.c.h.b16 %v9403
    %v10178 = vunpack.c.l.b16 %v9404
    %v10179 = vunpack.c.h.b16 %v9404
    %v10180 = vunpack.c.l.b16 %v9405
    %v10181 = vunpack.c.h.b16 %v9405
    %v10182 = vunpack.c.l.b16 %v9406
    %v10183 = vunpack.c.h.b16 %v9406
    %v10184 = vunpack.c.l.b16 %v9407
    %v10185 = vunpack.c.h.b16 %v9407
    %v10186 = vunpack.c.l.b16 %v9408
    %v10187 = vunpack.c.h.b16 %v9408
    %v10188 = vunpack.c.l.b16 %v9409
    %v10189 = vunpack.c.h.b16 %v9409
    %v10190 = vunpack.c.l.b16 %v9410
    %v10191 = vunpack.c.h.b16 %v9410
    %v10192 = vunpack.c.l.b16 %v9411
    %v10193 = vunpack.c.h.b16 %v9411
    %v10194 = vunpack.c.l.b16 %v9412
    %v10195 = vunpack.c.h.b16 %v9412
    %v10196 = vunpack.c.l.b16 %v9413
    %v10197 = vunpack.c.h.b16 %v9413
    %v10198 = vunpack.c.l.b16 %v9414
    %v10199 = vunpack.c.h.b16 %v9414
    %v10200 = vunpack.c.l.b16 %v9415
    %v10201 = vunpack.c.h.b16 %v9415
    %v10202 = vunpack.c.l.b16 %v9416
    %v10203 = vunpack.c.h.b16 %v9416
    %v10204 = vunpack.c.l.b16 %v9417
    %v10205 = vunpack.c.h.b16 %v9417
    %v10206 = vunpack.c.l.b16 %v9418
    %v10207 = vunpack.c.h.b16 %v9418
    %v10208 = vunpack.c.l.b16 %v9419
    %v10209 = vunpack.c.h.b16 %v9419
    %v10210 = vunpack.c.l.b16 %v9420
    %v10211 = vunpack.c.h.b16 %v9420
    %v10212 = vunpack.c.l.b16 %v9421
    %v10213 = vunpack.c.h.b16 %v9421
    %v10214 = vunpack.c.l.b16 %v9422
    %v10215 = vunpack.c.h.b16 %v9422
    %v10216 = vunpack.c.l.b16 %v9423
    %v10217 = vunpack.c.h.b16 %v9423
    %v10218 = vunpack.c.l.b16 %v9424
    %v10219 = vunpack.c.h.b16 %v9424
    %v10220 = vunpack.c.l.b16 %v9425
    %v10221 = vunpack.c.h.b16 %v9425
    %v10222 = vunpack.c.l.b16 %v9426
    %v10223 = vunpack.c.h.b16 %v9426
    %v10224 = vunpack.c.l.b16 %v9427
    %v10225 = vunpack.c.h.b16 %v9427
    %v10226 = vunpack.c.l.b16 %v9428
    %v10227 = vunpack.c.h.b16 %v9428
    %v10228 = vunpack.c.l.b16 %v9429
    %v10229 = vunpack.c.h.b16 %v9429
    %v10230 = vunpack.c.l.b16 %v9430
    %v10231 = vunpack.c.h.b16 %v9430
    %v10232 = vunpack.c.l.b16 %v9431
    %v10233 = vunpack.c.h.b16 %v9431
    %v10234 = vunpack.c.l.b16 %v9432
    %v10235 = vunpack.c.h.b16 %v9432
    %v10236 = vunpack.c.l.b16 %v9433
    %v10237 = vunpack.c.h.b16 %v9433
    %v10238 = vunpack.c.l.b16 %v9434
    %v10239 = vunpack.c.h.b16 %v9434
    %v10240 = vunpack.c.l.b16 %v9435
    %v10241 = vunpack.c.h.b16 %v9435
    %v10242 = vunpack.c.l.b16 %v9436
    %v10243 = vunpack.c.h.b16 %v9436
    %v10244 = vunpack.c.l.b16 %v9437
    %v10245 = vunpack.c.h.b16 %v9437
    %v10246 = vunpack.c.l.b16 %v9438
    %v10247 = vunpack.c.h.b16 %v9438
    %v10248 = vunpack.c.l.b16 %v9439
    %v10249 = vunpack.c.h.b16 %v9439
    %v10250 = vunpack.c.l.b16 %v9440
    %v10251 = vunpack.c.h.b16 %v9440
    %v10252 = vunpack.c.l.b16 %v9441
    %v10253 = vunpack.c.h.b16 %v9441
    %v10254 = vunpack.c.l.b16 %v9442
    %v10255 = vunpack.c.h.b16 %v9442
    %v10256 = vunpack.c.l.b16 %v9443
    %v10257 = vunpack.c.h.b16 %v9443
    %v10258 = vunpack.c.l.b16 %v9444
    %v10259 = vunpack.c.h.b16 %v9444
    %v10260 = vunpack.c.l.b16 %v9445
    %v10261 = vunpack.c.h.b16 %v9445
    %v10262 = vunpack.c.l.b16 %v9446
    %v10263 = vunpack.c.h.b16 %v9446
    %v10264 = vunpack.c.l.b16 %v9447
    %v10265 = vunpack.c.h.b16 %v9447
    %v10266 = vunpack.c.l.b16 %v9448
    %v10267 = vunpack.c.h.b16 %v9448
    %v10268 = vunpack.c.l.b16 %v9449
    %v10269 = vunpack.c.h.b16 %v9449
    %v10270 = vunpack.c.l.b16 %v9450
    %v10271 = vunpack.c.h.b16 %v9450
    %v10272 = vunpack.c.l.b16 %v9451
    %v10273 = vunpack.c.h.b16 %v9451
    %v10274 = vunpack.c.l.b16 %v9452
    %v10275 = vunpack.c.h.b16 %v9452
    %v10276 = vunpack.c.l.b16 %v9453
    %v10277 = vunpack.c.h.b16 %v9453
    %v10278 = vunpack.c.l.b16 %v9454
    %v10279 = vunpack.c.h.b16 %v9454
    %v10280 = vunpack.c.l.b16 %v9455
    %v10281 = vunpack.c.h.b16 %v9455
    %v10282 = vunpack.c.l.b16 %v9456
    %v10283 = vunpack.c.h.b16 %v9456
    %v10284 = vunpack.c.l.b16 %v9457
    %v10285 = vunpack.c.h.b16 %v9457
    %v10286 = vunpack.c.l.b16 %v9458
    %v10287 = vunpack.c.h.b16 %v9458
    %v10288 = vunpack.c.l.b16 %v9459
    %v10289 = vunpack.c.h.b16 %v9459
    %v10290 = vunpack.c.l.b16 %v9460
    %v10291 = vunpack.c.h.b16 %v9460
    %v10292 = vunpack.c.l.b16 %v9461
    %v10293 = vunpack.c.h.b16 %v9461
    %v10294 = vunpack.c.l.b16 %v9462
    %v10295 = vunpack.c.h.b16 %v9462
    %v10296 = vunpack.c.l.b16 %v9463
    %v10297 = vunpack.c.h.b16 %v9463
    %v10298 = vunpack.c.l.b16 %v9464
    %v10299 = vunpack.c.h.b16 %v9464
    %v10300 = vunpack.c.l.b16 %v9465
    %v10301 = vunpack.c.h.b16 %v9465
    %v10302 = vunpack.c.l.b16 %v9466
    %v10303 = vunpack.c.h.b16 %v9466
    %v10304 = vunpack.c.l.b16 %v9467
    %v10305 = vunpack.c.h.b16 %v9467
    %v10306 = vunpack.c.l.b16 %v9468
    %v10307 = vunpack.c.h.b16 %v9468
    %v10308 = vunpack.c.l.b16 %v9469
    %v10309 = vunpack.c.h.b16 %v9469
    %v10310 = vunpack.c.l.b16 %v9470
    %v10311 = vunpack.c.h.b16 %v9470
    %v10312 = vunpack.c.l.b16 %v9471
    %v10313 = vunpack.c.h.b16 %v9471
    %v10314 = vunpack.c.l.b16 %v9472
    %v10315 = vunpack.c.h.b16 %v9472
    %v10316 = vunpack.c.l.b16 %v9473
    %v10317 = vunpack.c.h.b16 %v9473
    %v10318 = vunpack.c.l.b16 %v9474
    %v10319 = vunpack.c.h.b16 %v9474
    %v10320 = vunpack.c.l.b16 %v9475
    %v10321 = vunpack.c.h.b16 %v9475
    %v10322 = vunpack.c.l.b16 %v9476
    %v10323 = vunpack.c.h.b16 %v9476
    %v10324 = vunpack.c.l.b16 %v9477
    %v10325 = vunpack.c.h.b16 %v9477
    %v10326 = vunpack.c.l.b16 %v9478
    %v10327 = vunpack.c.h.b16 %v9478
    %v10328 = vunpack.c.l.b16 %v9479
    %v10329 = vunpack.c.h.b16 %v9479
    %v10330 = vunpack.c.l.b16 %v9480
    %v10331 = vunpack.c.h.b16 %v9480
    %v10332 = vunpack.c.l.b16 %v9481
    %v10333 = vunpack.c.h.b16 %v9481
    %v10334 = vunpack.c.l.b16 %v9482
    %v10335 = vunpack.c.h.b16 %v9482
    %v10336 = vunpack.c.l.b16 %v9483
    %v10337 = vunpack.c.h.b16 %v9483
    %v10338 = vunpack.c.l.b16 %v9484
    %v10339 = vunpack.c.h.b16 %v9484
    %v10340 = vunpack.c.l.b16 %v9485
    %v10341 = vunpack.c.h.b16 %v9485
    %v10342 = vunpack.c.l.b16 %v9486
    %v10343 = vunpack.c.h.b16 %v9486
    %v10344 = vunpack.c.l.b16 %v9487
    %v10345 = vunpack.c.h.b16 %v9487
    %v10346 = vunpack.c.l.b16 %v9488
    %v10347 = vunpack.c.h.b16 %v9488
    %v10348 = vunpack.c.l.b16 %v9489
    %v10349 = vunpack.c.h.b16 %v9489
    %v10350 = vunpack.c.l.b16 %v9490
    %v10351 = vunpack.c.h.b16 %v9490
    %v10352 = vunpack.c.l.b16 %v9491
    %v10353 = vunpack.c.h.b16 %v9491
    %v10354 = vunpack.c.l.b16 %v9492
    %v10355 = vunpack.c.h.b16 %v9492
    %v10356 = vunpack.c.l.b16 %v9493
    %v10357 = vunpack.c.h.b16 %v9493
    %v10358 = vunpack.c.l.b16 %v9494
    %v10359 = vunpack.c.h.b16 %v9494
    %v10360 = vunpack.c.l.b16 %v9495
    %v10361 = vunpack.c.h.b16 %v9495
    %v10362 = vunpack.c.l.b16 %v9496
    %v10363 = vunpack.c.h.b16 %v9496
    %v10364 = vunpack.c.l.b16 %v9497
    %v10365 = vunpack.c.h.b16 %v9497
    %v10366 = vunpack.c.l.b16 %v9498
    %v10367 = vunpack.c.h.b16 %v9498
    %v10368 = vunpack.c.l.b16 %v9499
    %v10369 = vunpack.c.h.b16 %v9499
    %v10370 = vunpack.c.l.b16 %v9500
    %v10371 = vunpack.c.h.b16 %v9500
    %v10372 = vunpack.c.l.b16 %v9501
    %v10373 = vunpack.c.h.b16 %v9501
    %v10374 = vunpack.c.l.b16 %v9502
    %v10375 = vunpack.c.h.b16 %v9502
    %v10376 = vunpack.c.l.b16 %v9503
    %v10377 = vunpack.c.h.b16 %v9503
    %v10378 = vunpack.c.l.b16 %v9504
    %v10379 = vunpack.c.h.b16 %v9504
    %v10380 = vunpack.c.l.b16 %v9505
    %v10381 = vunpack.c.h.b16 %v9505
    %v10382 = vunpack.c.l.b16 %v9506
    %v10383 = vunpack.c.h.b16 %v9506
    %v10384 = vunpack.c.l.b16 %v9507
    %v10385 = vunpack.c.h.b16 %v9507
    %v10386 = vunpack.c.l.b16 %v9508
    %v10387 = vunpack.c.h.b16 %v9508
    %v10388 = vunpack.c.l.b16 %v9509
    %v10389 = vunpack.c.h.b16 %v9509
    %v10390 = vunpack.c.l.b16 %v9510
    %v10391 = vunpack.c.h.b16 %v9510
    %v10392 = vunpack.c.l.b16 %v9511
    %v10393 = vunpack.c.h.b16 %v9511
    %v10394 = vunpack.c.l.b16 %v9512
    %v10395 = vunpack.c.h.b16 %v9512
    %v10396 = vunpack.c.l.b16 %v9513
    %v10397 = vunpack.c.h.b16 %v9513
    %v10398 = vunpack.c.l.b16 %v9514
    %v10399 = vunpack.c.h.b16 %v9514
    %v10400 = vunpack.c.l.b16 %v9515
    %v10401 = vunpack.c.h.b16 %v9515
    %v10402 = vunpack.c.l.b16 %v9516
    %v10403 = vunpack.c.h.b16 %v9516
    %v10404 = vunpack.c.l.b16 %v9517
    %v10405 = vunpack.c.h.b16 %v9517
    %v10406 = vunpack.c.l.b16 %v9518
    %v10407 = vunpack.c.h.b16 %v9518
    %v10408 = vunpack.c.l.b16 %v9519
    %v10409 = vunpack.c.h.b16 %v9519
    %v10410 = vunpack.c.l.b16 %v9520
    %v10411 = vunpack.c.h.b16 %v9520
    %v10412 = vunpack.c.l.b16 %v9521
    %v10413 = vunpack.c.h.b16 %v9521
    %v10414 = vunpack.c.l.b16 %v9522
    %v10415 = vunpack.c.h.b16 %v9522
    %v10416 = vunpack.c.l.b16 %v9523
    %v10417 = vunpack.c.h.b16 %v9523
    %v10418 = vunpack.c.l.b16 %v9524
    %v10419 = vunpack.c.h.b16 %v9524
    %v10420 = vunpack.c.l.b16 %v9525
    %v10421 = vunpack.c.h.b16 %v9525
    %v10422 = vunpack.c.l.b16 %v9526
    %v10423 = vunpack.c.h.b16 %v9526
    %v10424 = vunpack.c.l.b16 %v9527
    %v10425 = vunpack.c.h.b16 %v9527
    %v10426 = vunpack.c.l.b16 %v9528
    %v10427 = vunpack.c.h.b16 %v9528
    %v10428 = vunpack.c.l.b16 %v9529
    %v10429 = vunpack.c.h.b16 %v9529
    %v10430 = vpack.c.b16 %v9858, %v9854
    %v10431 = vpack.c.b16 %v9859, %v9855
    %v10432 = vpack.c.b16 %v9860, %v9856
    %v10433 = vpack.c.b16 %v9861, %v9857
    %v10434 = vpack.c.b16 %v9866, %v9862
    %v10435 = vpack.c.b16 %v9867, %v9863
    %v10436 = vpack.c.b16 %v9868, %v9864
    %v10437 = vpack.c.b16 %v9869, %v9865
    %v10438 = vpack.c.b16 %v9874, %v9870
    %v10439 = vpack.c.b16 %v9875, %v9871
    %v10440 = vpack.c.b16 %v9876, %v9872
    %v10441 = vpack.c.b16 %v9877, %v9873
    %v10442 = vpack.c.b16 %v9882, %v9878
    %v10443 = vpack.c.b16 %v9883, %v9879
    %v10444 = vpack.c.b16 %v9884, %v9880
    %v10445 = vpack.c.b16 %v9885, %v9881
    %v10446 = vpack.c.b16 %v9890, %v9886
    %v10447 = vpack.c.b16 %v9891, %v9887
    %v10448 = vpack.c.b16 %v9892, %v9888
    %v10449 = vpack.c.b16 %v9893, %v9889
    %v10450 = vpack.c.b16 %v9898, %v9894
    %v10451 = vpack.c.b16 %v9899, %v9895
    %v10452 = vpack.c.b16 %v9900, %v9896
    %v10453 = vpack.c.b16 %v9901, %v9897
    %v10454 = vpack.c.b16 %v9906, %v9902
    %v10455 = vpack.c.b16 %v9907, %v9903
    %v10456 = vpack.c.b16 %v9908, %v9904
    %v10457 = vpack.c.b16 %v9909, %v9905
    %v10458 = vpack.c.b16 %v9914, %v9910
    %v10459 = vpack.c.b16 %v9915, %v9911
    %v10460 = vpack.c.b16 %v9916, %v9912
    %v10461 = vpack.c.b16 %v9917, %v9913
    %v10462 = vpack.c.b16 %v9922, %v9918
    %v10463 = vpack.c.b16 %v9923, %v9919
    %v10464 = vpack.c.b16 %v9924, %v9920
    %v10465 = vpack.c.b16 %v9925, %v9921
    %v10466 = vpack.c.b16 %v9930, %v9926
    %v10467 = vpack.c.b16 %v9931, %v9927
    %v10468 = vpack.c.b16 %v9932, %v9928
    %v10469 = vpack.c.b16 %v9933, %v9929
    %v10470 = vpack.c.b16 %v9938, %v9934
    %v10471 = vpack.c.b16 %v9939, %v9935
    %v10472 = vpack.c.b16 %v9940, %v9936
    %v10473 = vpack.c.b16 %v9941, %v9937
    %v10474 = vpack.c.b16 %v9946, %v9942
    %v10475 = vpack.c.b16 %v9947, %v9943
    %v10476 = vpack.c.b16 %v9948, %v9944
    %v10477 = vpack.c.b16 %v9949, %v9945
    %v10478 = vpack.c.b16 %v9954, %v9950
    %v10479 = vpack.c.b16 %v9955, %v9951
    %v10480 = vpack.c.b16 %v9956, %v9952
    %v10481 = vpack.c.b16 %v9957, %v9953
    %v10482 = vpack.c.b16 %v9962, %v9958
    %v10483 = vpack.c.b16 %v9963, %v9959
    %v10484 = vpack.c.b16 %v9964, %v9960
    %v10485 = vpack.c.b16 %v9965, %v9961
    %v10486 = vpack.c.b16 %v9970, %v9966
    %v10487 = vpack.c.b16 %v9971, %v9967
    %v10488 = vpack.c.b16 %v9972, %v9968
    %v10489 = vpack.c.b16 %v9973, %v9969
    %v10490 = vpack.c.b16 %v9978, %v9974
    %v10491 = vpack.c.b16 %v9979, %v9975
    %v10492 = vpack.c.b16 %v9980, %v9976
    %v10493 = vpack.c.b16 %v9981, %v9977
    %v10494 = vpack.c.b16 %v9986, %v9982
    %v10495 = vpack.c.b16 %v9987, %v9983
    %v10496 = vpack.c.b16 %v9988, %v9984
    %v10497 = vpack.c.b16 %v9989, %v9985
    %v10498 = vpack.c.b16 %v9994, %v9990
    %v10499 = vpack.c.b16 %v9995, %v9991
    %v10500 = vpack.c.b16 %v9996, %v9992
    %v10501 = vpack.c.b16 %v9997, %v9993
    %v10502 = vpack.c.b16 %v10002, %v9998
    %v10503 = vpack.c.b16 %v10003, %v9999
    %v10504 = vpack.c.b16 %v10004, %v10000
    %v10505 = vpack.c.b16 %v10005, %v10001
    %v10506 = vpack.c.b16 %v10010, %v10006
    %v10507 = vpack.c.b16 %v10011, %v10007
    %v10508 = vpack.c.b16 %v10012, %v10008
    %v10509 = vpack.c.b16 %v10013, %v10009
    %v10510 = vpack.c.b16 %v10018, %v10014
    %v10511 = vpack.c.b16 %v10019, %v10015
    %v10512 = vpack.c.b16 %v10020, %v10016
    %v10513 = vpack.c.b16 %v10021, %v10017
    %v10514 = vpack.c.b16 %v10026, %v10022
    %v10515 = vpack.c.b16 %v10027, %v10023
    %v10516 = vpack.c.b16 %v10028, %v10024
    %v10517 = vpack.c.b16 %v10029, %v10025
    %v10518 = vpack.c.b16 %v10034, %v10030
    %v10519 = vpack.c.b16 %v10035, %v10031
    %v10520 = vpack.c.b16 %v10036, %v10032
    %v10521 = vpack.c.b16 %v10037, %v10033
    %v10522 = vpack.c.b16 %v10042, %v10038
    %v10523 = vpack.c.b16 %v10043, %v10039
    %v10524 = vpack.c.b16 %v10044, %v10040
    %v10525 = vpack.c.b16 %v10045, %v10041
    %v10526 = vpack.c.b16 %v10050, %v10046
    %v10527 = vpack.c.b16 %v10051, %v10047
    %v10528 = vpack.c.b16 %v10052, %v10048
    %v10529 = vpack.c.b16 %v10053, %v10049
    %v10530 = vpack.c.b16 %v10058, %v10054
    %v10531 = vpack.c.b16 %v10059, %v10055
    %v10532 = vpack.c.b16 %v10060, %v10056
    %v10533 = vpack.c.b16 %v10061, %v10057
    %v10534 = vpack.c.b16 %v10066, %v10062
    %v10535 = vpack.c.b16 %v10067, %v10063
    %v10536 = vpack.c.b16 %v10068, %v10064
    %v10537 = vpack.c.b16 %v10069, %v10065
    %v10538 = vpack.c.b16 %v10074, %v10070
    %v10539 = vpack.c.b16 %v10075, %v10071
    %v10540 = vpack.c.b16 %v10076, %v10072
    %v10541 = vpack.c.b16 %v10077, %v10073
    %v10542 = vpack.c.b16 %v10082, %v10078
    %v10543 = vpack.c.b16 %v10083, %v10079
    %v10544 = vpack.c.b16 %v10084, %v10080
    %v10545 = vpack.c.b16 %v10085, %v10081
    %v10546 = vpack.c.b16 %v10090, %v10086
    %v10547 = vpack.c.b16 %v10091, %v10087
    %v10548 = vpack.c.b16 %v10092, %v10088
    %v10549 = vpack.c.b16 %v10093, %v10089
    %v10550 = vpack.c.b16 %v10098, %v10094
    %v10551 = vpack.c.b16 %v10099, %v10095
    %v10552 = vpack.c.b16 %v10100, %v10096
    %v10553 = vpack.c.b16 %v10101, %v10097
    %v10554 = vpack.c.b16 %v10106, %v10102
    %v10555 = vpack.c.b16 %v10107, %v10103
    %v10556 = vpack.c.b16 %v10108, %v10104
    %v10557 = vpack.c.b16 %v10109, %v10105
    %v10558 = vpack.c.b16 %v10114, %v10110
    %v10559 = vpack.c.b16 %v10115, %v10111
    %v10560 = vpack.c.b16 %v10116, %v10112
    %v10561 = vpack.c.b16 %v10117, %v10113
    %v10562 = vpack.c.b16 %v10122, %v10118
    %v10563 = vpack.c.b16 %v10123, %v10119
    %v10564 = vpack.c.b16 %v10124, %v10120
    %v10565 = vpack.c.b16 %v10125, %v10121
    %v10566 = vpack.c.b16 %v10130, %v10126
    %v10567 = vpack.c.b16 %v10131, %v10127
    %v10568 = vpack.c.b16 %v10132, %v10128
    %v10569 = vpack.c.b16 %v10133, %v10129
    %v10570 = vpack.c.b16 %v10138, %v10134
    %v10571 = vpack.c.b16 %v10139, %v10135
    %v10572 = vpack.c.b16 %v10140, %v10136
    %v10573 = vpack.c.b16 %v10141, %v10137
    %v10574 = vpack.c.b16 %v10146, %v10142
    %v10575 = vpack.c.b16 %v10147, %v10143
    %v10576 = vpack.c.b16 %v10148, %v10144
    %v10577 = vpack.c.b16 %v10149, %v10145
    %v10578 = vpack.c.b16 %v10154, %v10150
    %v10579 = vpack.c.b16 %v10155, %v10151
    %v10580 = vpack.c.b16 %v10156, %v10152
    %v10581 = vpack.c.b16 %v10157, %v10153
    %v10582 = vpack.c.b16 %v10162, %v10158
    %v10583 = vpack.c.b16 %v10163, %v10159
    %v10584 = vpack.c.b16 %v10164, %v10160
    %v10585 = vpack.c.b16 %v10165, %v10161
    %v10586 = vpack.c.b16 %v10170, %v10166
    %v10587 = vpack.c.b16 %v10171, %v10167
    %v10588 = vpack.c.b16 %v10172, %v10168
    %v10589 = vpack.c.b16 %v10173, %v10169
    %v10590 = vpack.c.b16 %v10178, %v10174
    %v10591 = vpack.c.b16 %v10179, %v10175
    %v10592 = vpack.c.b16 %v10180, %v10176
    %v10593 = vpack.c.b16 %v10181, %v10177
    %v10594 = vpack.c.b16 %v10186, %v10182
    %v10595 = vpack.c.b16 %v10187, %v10183
    %v10596 = vpack.c.b16 %v10188, %v10184
    %v10597 = vpack.c.b16 %v10189, %v10185
    %v10598 = vpack.c.b16 %v10194, %v10190
    %v10599 = vpack.c.b16 %v10195, %v10191
    %v10600 = vpack.c.b16 %v10196, %v10192
    %v10601 = vpack.c.b16 %v10197, %v10193
    %v10602 = vpack.c.b16 %v10202, %v10198
    %v10603 = vpack.c.b16 %v10203, %v10199
    %v10604 = vpack.c.b16 %v10204, %v10200
    %v10605 = vpack.c.b16 %v10205, %v10201
    %v10606 = vpack.c.b16 %v10210, %v10206
    %v10607 = vpack.c.b16 %v10211, %v10207
    %v10608 = vpack.c.b16 %v10212, %v10208
    %v10609 = vpack.c.b16 %v10213, %v10209
    %v10610 = vpack.c.b16 %v10218, %v10214
    %v10611 = vpack.c.b16 %v10219, %v10215
    %v10612 = vpack.c.b16 %v10220, %v10216
    %v10613 = vpack.c.b16 %v10221, %v10217
    %v10614 = vpack.c.b16 %v10226, %v10222
    %v10615 = vpack.c.b16 %v10227, %v10223
    %v10616 = vpack.c.b16 %v10228, %v10224
    %v10617 = vpack.c.b16 %v10229, %v10225
    %v10618 = vpack.c.b16 %v10234, %v10230
    %v10619 = vpack.c.b16 %v10235, %v10231
    %v10620 = vpack.c.b16 %v10236, %v10232
    %v10621 = vpack.c.b16 %v10237, %v10233
    %v10622 = vpack.c.b16 %v10242, %v10238
    %v10623 = vpack.c.b16 %v10243, %v10239
    %v10624 = vpack.c.b16 %v10244, %v10240
    %v10625 = vpack.c.b16 %v10245, %v10241
    %v10626 = vpack.c.b16 %v10250, %v10246
    %v10627 = vpack.c.b16 %v10251, %v10247
    %v10628 = vpack.c.b16 %v10252, %v10248
    %v10629 = vpack.c.b16 %v10253, %v10249
    %v10630 = vpack.c.b16 %v10258, %v10254
    %v10631 = vpack.c.b16 %v10259, %v10255
    %v10632 = vpack.c.b16 %v10260, %v10256
    %v10633 = vpack.c.b16 %v10261, %v10257
    %v10634 = vpack.c.b16 %v10266, %v10262
    %v10635 = vpack.c.b16 %v10267, %v10263
    %v10636 = vpack.c.b16 %v10268, %v10264
    %v10637 = vpack.c.b16 %v10269, %v10265
    %v10638 = vpack.c.b16 %v10274, %v10270
    %v10639 = vpack.c.b16 %v10275, %v10271
    %v10640 = vpack.c.b16 %v10276, %v10272
    %v10641 = vpack.c.b16 %v10277, %v10273
    %v10642 = vpack.c.b16 %v10282, %v10278
    %v10643 = vpack.c.b16 %v10283, %v10279
    %v10644 = vpack.c.b16 %v10284, %v10280
    %v10645 = vpack.c.b16 %v10285, %v10281
    %v10646 = vpack.c.b16 %v10290, %v10286
    %v10647 = vpack.c.b16 %v10291, %v10287
    %v10648 = vpack.c.b16 %v10292, %v10288
    %v10649 = vpack.c.b16 %v10293, %v10289
    %v10650 = vpack.c.b16 %v10298, %v10294
    %v10651 = vpack.c.b16 %v10299, %v10295
    %v10652 = vpack.c.b16 %v10300, %v10296
    %v10653 = vpack.c.b16 %v10301, %v10297
    %v10654 = vpack.c.b16 %v10306, %v10302
    %v10655 = vpack.c.b16 %v10307, %v10303
    %v10656 = vpack.c.b16 %v10308, %v10304
    %v10657 = vpack.c.b16 %v10309, %v10305
    %v10658 = vpack.c.b16 %v10314, %v10310
    %v10659 = vpack.c.b16 %v10315, %v10311
    %v10660 = vpack.c.b16 %v10316, %v10312
    %v10661 = vpack.c.b16 %v10317, %v10313
    %v10662 = vpack.c.b16 %v10322, %v10318
    %v10663 = vpack.c.b16 %v10323, %v10319
    %v10664 = vpack.c.b16 %v10324, %v10320
    %v10665 = vpack.c.b16 %v10325, %v10321
    %v10666 = vpack.c.b16 %v10330, %v10326
    %v10667 = vpack.c.b16 %v10331, %v10327
    %v10668 = vpack.c.b16 %v10332, %v10328
    %v10669 = vpack.c.b16 %v10333, %v10329
    %v10670 = vpack.c.b16 %v10338, %v10334
    %v10671 = vpack.c.b16 %v10339, %v10335
    %v10672 = vpack.c.b16 %v10340, %v10336
    %v10673 = vpack.c.b16 %v10341, %v10337
    %v10674 = vpack.c.b16 %v10346, %v10342
    %v10675 = vpack.c.b16 %v10347, %v10343
    %v10676 = vpack.c.b16 %v10348, %v10344
    %v10677 = vpack.c.b16 %v10349, %v10345
    %v10678 = vpack.c.b16 %v10354, %v10350
    %v10679 = vpack.c.b16 %v10355, %v10351
    %v10680 = vpack.c.b16 %v10356, %v10352
    %v10681 = vpack.c.b16 %v10357, %v10353
    %v10682 = vpack.c.b16 %v10362, %v10358
    %v10683 = vpack.c.b16 %v10363, %v10359
    %v10684 = vpack.c.b16 %v10364, %v10360
    %v10685 = vpack.c.b16 %v10365, %v10361
    %v10686 = vpack.c.b16 %v10370, %v10366
    %v10687 = vpack.c.b16 %v10371, %v10367
    %v10688 = vpack.c.b16 %v10372, %v10368
    %v10689 = vpack.c.b16 %v10373, %v10369
    %v10690 = vpack.c.b16 %v10378, %v10374
    %v10691 = vpack.c.b16 %v10379, %v10375
    %v10692 = vpack.c.b16 %v10380, %v10376
    %v10693 = vpack.c.b16 %v10381, %v10377
    %v10694 = vpack.c.b16 %v10386, %v10382
    %v10695 = vpack.c.b16 %v10387, %v10383
    %v10696 = vpack.c.b16 %v10388, %v10384
    %v10697 = vpack.c.b16 %v10389, %v10385
    %v10698 = vpack.c.b16 %v10394, %v10390
    %v10699 = vpack.c.b16 %v10395, %v10391
    %v10700 = vpack.c.b16 %v10396, %v10392
    %v10701 = vpack.c.b16 %v10397, %v10393
    %v10702 = vpack.c.b16 %v10402, %v10398
    %v10703 = vpack.c.b16 %v10403, %v10399
    %v10704 = vpack.c.b16 %v10404, %v10400
    %v10705 = vpack.c.b16 %v10405, %v10401
    %v10706 = vpack.c.b16 %v10410, %v10406
    %v10707 = vpack.c.b16 %v10411, %v10407
    %v10708 = vpack.c.b16 %v10412, %v10408
    %v10709 = vpack.c.b16 %v10413, %v10409
    %v10710 = vpack.c.b16 %v10418, %v10414
    %v10711 = vpack.c.b16 %v10419, %v10415
    %v10712 = vpack.c.b16 %v10420, %v10416
    %v10713 = vpack.c.b16 %v10421, %v10417
    %v10714 = vpack.c.b16 %v10426, %v10422
    %v10715 = vpack.c.b16 %v10427, %v10423
    %v10716 = vpack.c.b16 %v10428, %v10424
    %v10717 = vpack.c.b16 %v10429, %v10425
    %11006 = vmatprep.subr.bf16.mxu0 %v10431
    %11007 = vmatpush1.bf16.msra.mxu0 %v10430
    %11008 = vmatprep.subr.bf16.mxu0 %v10435
    %11009 = vmatpush1.bf16.msra.mxu0 %v10434
    %11010 = vmatprep.subr.bf16.mxu0 %v10439
    %11011 = vmatpush1.bf16.msra.mxu0 %v10438
    %11012 = vmatprep.subr.bf16.mxu0 %v10443
    %11013 = vmatpush1.bf16.msra.mxu0 %v10442
    %11014 = vmatprep.subr.bf16.mxu0 %v10447
    %11015 = vmatpush1.bf16.msra.mxu0 %v10446
    %11016 = vmatprep.subr.bf16.mxu0 %v10451
    %11017 = vmatpush1.bf16.msra.mxu0 %v10450
    %11018 = vmatprep.subr.bf16.mxu0 %v10455
    %11019 = vmatpush1.bf16.msra.mxu0 %v10454
    %11020 = vmatprep.subr.bf16.mxu0 %v10459
    %11021 = vmatpush1.bf16.msra.mxu0 %v10458
    %11022 = vmatprep.subr.bf16.mxu0 %v10463
    %11023 = vmatpush1.bf16.msra.mxu0 %v10462
    %11024 = vmatprep.subr.bf16.mxu0 %v10467
    %11025 = vmatpush1.bf16.msra.mxu0 %v10466
    %11026 = vmatprep.subr.bf16.mxu0 %v10471
    %11027 = vmatpush1.bf16.msra.mxu0 %v10470
    %11028 = vmatprep.subr.bf16.mxu0 %v10475
    %11029 = vmatpush1.bf16.msra.mxu0 %v10474
    %11030 = vmatprep.subr.bf16.mxu0 %v10479
    %11031 = vmatpush1.bf16.msra.mxu0 %v10478
    %11032 = vmatprep.subr.bf16.mxu0 %v10483
    %11033 = vmatpush1.bf16.msra.mxu0 %v10482
    %11034 = vmatprep.subr.bf16.mxu0 %v10487
    %11035 = vmatpush1.bf16.msra.mxu0 %v10486
    %11036 = vmatprep.subr.bf16.mxu0 %v10491
    %11037 = vmatpush1.bf16.msra.mxu0 %v10490
    %11038 = vmatprep.mubr.bf16.mxu0 %v9549
    %11039 = vmatmul.mubr.bf16.gmra.mrb[0].mxu0 %v9548
    %v11040 = vpop.f32.mrb[0].mxu0
    %v11041 = vadd.f32 0.0, %v11040
    %v11042 = vpop.f32.mrb[0].mxu0
    %v11043 = vadd.f32 0.0, %v11042
    %v11044 = vpop.f32.mrb[0].mxu0
    %v11045 = vadd.f32 0.0, %v11044
    %v11046 = vpop.f32.mrb[0].mxu0
    %v11047 = vadd.f32 0.0, %v11046
    %11048 = vdwg.mxu0
    %11049 = vmatprep.subr.bf16.mxu0 %v10495
    %11050 = vmatpush1.bf16.msra.mxu0 %v10494
    %11051 = vmatprep.subr.bf16.mxu0 %v10499
    %11052 = vmatpush1.bf16.msra.mxu0 %v10498
    %11053 = vmatprep.subr.bf16.mxu0 %v10503
    %11054 = vmatpush1.bf16.msra.mxu0 %v10502
    %11055 = vmatprep.subr.bf16.mxu0 %v10507
    %11056 = vmatpush1.bf16.msra.mxu0 %v10506
    %11057 = vmatprep.subr.bf16.mxu0 %v10511
    %11058 = vmatpush1.bf16.msra.mxu0 %v10510
    %11059 = vmatprep.subr.bf16.mxu0 %v10515
    %11060 = vmatpush1.bf16.msra.mxu0 %v10514
    %11061 = vmatprep.subr.bf16.mxu0 %v10519
    %11062 = vmatpush1.bf16.msra.mxu0 %v10518
    %11063 = vmatprep.subr.bf16.mxu0 %v10523
    %11064 = vmatpush1.bf16.msra.mxu0 %v10522
    %11065 = vmatprep.subr.bf16.mxu0 %v10527
    %11066 = vmatpush1.bf16.msra.mxu0 %v10526
    %11067 = vmatprep.subr.bf16.mxu0 %v10531
    %11068 = vmatpush1.bf16.msra.mxu0 %v10530
    %11069 = vmatprep.subr.bf16.mxu0 %v10535
    %11070 = vmatpush1.bf16.msra.mxu0 %v10534
    %11071 = vmatprep.subr.bf16.mxu0 %v10539
    %11072 = vmatpush1.bf16.msra.mxu0 %v10538
    %11073 = vmatprep.subr.bf16.mxu0 %v10543
    %11074 = vmatpush1.bf16.msra.mxu0 %v10542
    %11075 = vmatprep.subr.bf16.mxu0 %v10547
    %11076 = vmatpush1.bf16.msra.mxu0 %v10546
    %11077 = vmatprep.subr.bf16.mxu0 %v10551
    %11078 = vmatpush1.bf16.msra.mxu0 %v10550
    %11079 = vmatprep.subr.bf16.mxu0 %v10555
    %11080 = vmatpush1.bf16.msra.mxu0 %v10554
    %11081 = vmatprep.mubr.bf16.mxu0 %v9551
    %11082 = vmatmul.mubr.bf16.gmra.mrb[0].mxu0 %v9550
    %v11083 = vpop.f32.mrb[0].mxu0
    %v11084 = vadd.f32 %v11041, %v11083
    %v11085 = vpop.f32.mrb[0].mxu0
    %v11086 = vadd.f32 %v11043, %v11085
    %v11087 = vpop.f32.mrb[0].mxu0
    %v11088 = vadd.f32 %v11045, %v11087
    %v11089 = vpop.f32.mrb[0].mxu0
    %v11090 = vadd.f32 %v11047, %v11089
    %11091 = vdwg.mxu0
    %11092 = vmatprep.subr.bf16.mxu0 %v10559
    %11093 = vmatpush1.bf16.msra.mxu0 %v10558
    %11094 = vmatprep.subr.bf16.mxu0 %v10563
    %11095 = vmatpush1.bf16.msra.mxu0 %v10562
    %11096 = vmatprep.subr.bf16.mxu0 %v10567
    %11097 = vmatpush1.bf16.msra.mxu0 %v10566
    %11098 = vmatprep.subr.bf16.mxu0 %v10571
    %11099 = vmatpush1.bf16.msra.mxu0 %v10570
    %11100 = vmatprep.subr.bf16.mxu0 %v10575
    %11101 = vmatpush1.bf16.msra.mxu0 %v10574
    %11102 = vmatprep.subr.bf16.mxu0 %v10579
    %11103 = vmatpush1.bf16.msra.mxu0 %v10578
    %11104 = vmatprep.subr.bf16.mxu0 %v10583
    %11105 = vmatpush1.bf16.msra.mxu0 %v10582
    %11106 = vmatprep.subr.bf16.mxu0 %v10587
    %11107 = vmatpush1.bf16.msra.mxu0 %v10586
    %11108 = vmatprep.subr.bf16.mxu0 %v10591
    %11109 = vmatpush1.bf16.msra.mxu0 %v10590
    %11110 = vmatprep.subr.bf16.mxu0 %v10595
    %11111 = vmatpush1.bf16.msra.mxu0 %v10594
    %11112 = vmatprep.subr.bf16.mxu0 %v10599
    %11113 = vmatpush1.bf16.msra.mxu0 %v10598
    %11114 = vmatprep.subr.bf16.mxu0 %v10603
    %11115 = vmatpush1.bf16.msra.mxu0 %v10602
    %11116 = vmatprep.subr.bf16.mxu0 %v10607
    %11117 = vmatpush1.bf16.msra.mxu0 %v10606
    %11118 = vmatprep.subr.bf16.mxu0 %v10611
    %11119 = vmatpush1.bf16.msra.mxu0 %v10610
    %11120 = vmatprep.subr.bf16.mxu0 %v10615
    %11121 = vmatpush1.bf16.msra.mxu0 %v10614
    %11122 = vmatprep.subr.bf16.mxu0 %v10619
    %11123 = vmatpush1.bf16.msra.mxu0 %v10618
    %11124 = vmatprep.mubr.bf16.mxu0 %v9553
    %11125 = vmatmul.mubr.bf16.gmra.mrb[0].mxu0 %v9552
    %v11126 = vpop.f32.mrb[0].mxu0
    %v11127 = vadd.f32 %v11084, %v11126
    %v11128 = vpop.f32.mrb[0].mxu0
    %v11129 = vadd.f32 %v11086, %v11128
    %v11130 = vpop.f32.mrb[0].mxu0
    %v11131 = vadd.f32 %v11088, %v11130
    %v11132 = vpop.f32.mrb[0].mxu0
    %v11133 = vadd.f32 %v11090, %v11132
    %11134 = vdwg.mxu0
    %11135 = vmatprep.subr.bf16.mxu0 %v10623
    %11136 = vmatpush1.bf16.msra.mxu0 %v10622
    %11137 = vmatprep.subr.bf16.mxu0 %v10627
    %11138 = vmatpush1.bf16.msra.mxu0 %v10626
    %11139 = vmatprep.subr.bf16.mxu0 %v10631
    %11140 = vmatpush1.bf16.msra.mxu0 %v10630
    %11141 = vmatprep.subr.bf16.mxu0 %v10635
    %11142 = vmatpush1.bf16.msra.mxu0 %v10634
    %11143 = vmatprep.subr.bf16.mxu0 %v10639
    %11144 = vmatpush1.bf16.msra.mxu0 %v10638
    %11145 = vmatprep.subr.bf16.mxu0 %v10643
    %11146 = vmatpush1.bf16.msra.mxu0 %v10642
    %11147 = vmatprep.subr.bf16.mxu0 %v10647
    %11148 = vmatpush1.bf16.msra.mxu0 %v10646
    %11149 = vmatprep.subr.bf16.mxu0 %v10651
    %11150 = vmatpush1.bf16.msra.mxu0 %v10650
    %11151 = vmatprep.subr.bf16.mxu0 %v10655
    %11152 = vmatpush1.bf16.msra.mxu0 %v10654
    %11153 = vmatprep.subr.bf16.mxu0 %v10659
    %11154 = vmatpush1.bf16.msra.mxu0 %v10658
    %11155 = vmatprep.subr.bf16.mxu0 %v10663
    %11156 = vmatpush1.bf16.msra.mxu0 %v10662
    %11157 = vmatprep.subr.bf16.mxu0 %v10667
    %11158 = vmatpush1.bf16.msra.mxu0 %v10666
    %11159 = vmatprep.subr.bf16.mxu0 %v10671
    %11160 = vmatpush1.bf16.msra.mxu0 %v10670
    %11161 = vmatprep.subr.bf16.mxu0 %v10675
    %11162 = vmatpush1.bf16.msra.mxu0 %v10674
    %11163 = vmatprep.subr.bf16.mxu0 %v10679
    %11164 = vmatpush1.bf16.msra.mxu0 %v10678
    %11165 = vmatprep.subr.bf16.mxu0 %v10683
    %11166 = vmatpush1.bf16.msra.mxu0 %v10682
    %11167 = vmatprep.mubr.bf16.mxu0 %v9555
    %11168 = vmatmul.mubr.bf16.gmra.mrb[0].mxu0 %v9554
    %v11169 = vpop.f32.mrb[0].mxu0
    %v11170 = vadd.f32 %v11127, %v11169
    %v11171 = vpop.f32.mrb[0].mxu0
    %v11172 = vadd.f32 %v11129, %v11171
    %v11173 = vpop.f32.mrb[0].mxu0
    %v11174 = vadd.f32 %v11131, %v11173
    %v11175 = vpop.f32.mrb[0].mxu0
    %v11176 = vadd.f32 %v11133, %v11175
    %11177 = vdwg.mxu0
    %11178 = vmatprep.subr.bf16.mxu0 %v10687
    %11179 = vmatpush1.bf16.msra.mxu0 %v10686
    %11180 = vmatprep.subr.bf16.mxu0 %v10691
    %11181 = vmatpush1.bf16.msra.mxu0 %v10690
    %11182 = vmatprep.subr.bf16.mxu0 %v10695
    %11183 = vmatpush1.bf16.msra.mxu0 %v10694
    %11184 = vmatprep.subr.bf16.mxu0 %v10699
    %11185 = vmatpush1.bf16.msra.mxu0 %v10698
    %11186 = vmatprep.subr.bf16.mxu0 %v10703
    %11187 = vmatpush1.bf16.msra.mxu0 %v10702
    %11188 = vmatprep.subr.bf16.mxu0 %v10707
    %11189 = vmatpush1.bf16.msra.mxu0 %v10706
    %11190 = vmatprep.subr.bf16.mxu0 %v10711
    %11191 = vmatpush1.bf16.msra.mxu0 %v10710
    %11192 = vmatprep.subr.bf16.mxu0 %v10715
    %11193 = vmatpush1.bf16.msra.mxu0 %v10714
    %11194 = vmatprep.subr.bf16.mxu0 0
    %11195 = vmatpush1.bf16.msra.mxu0 0
    %11196 = vmatprep.subr.bf16.mxu0 0
    %11197 = vmatpush1.bf16.msra.mxu0 0
    %11198 = vmatprep.subr.bf16.mxu0 0
    %11199 = vmatpush1.bf16.msra.mxu0 0
    %11200 = vmatprep.subr.bf16.mxu0 0
    %11201 = vmatpush1.bf16.msra.mxu0 0
    %11202 = vmatprep.subr.bf16.mxu0 0
    %11203 = vmatpush1.bf16.msra.mxu0 0
    %11204 = vmatprep.subr.bf16.mxu0 0
    %11205 = vmatpush1.bf16.msra.mxu0 0
    %11206 = vmatprep.subr.bf16.mxu0 0
    %11207 = vmatpush1.bf16.msra.mxu0 0
    %11208 = vmatprep.subr.bf16.mxu0 0
    %11209 = vmatpush1.bf16.msra.mxu0 0
    %11210 = vmatprep.mubr.bf16.mxu0 0
    %11211 = vmatmul.mubr.bf16.gmra.mrb[0].mxu0 %v9556
    %v11212 = vpop.f32.mrb[0].mxu0
    %v11213 = vadd.f32 %v11170, %v11212
    %v11214 = vpop.f32.mrb[0].mxu0
    %v11215 = vadd.f32 %v11172, %v11214
    %v11216 = vpop.f32.mrb[0].mxu0
    %v11217 = vadd.f32 %v11174, %v11216
    %v11218 = vpop.f32.mrb[0].mxu0
    %v11219 = vadd.f32 %v11176, %v11218
    %11220 = vdwg.mxu0
    %11221 = vmatprep.subr.bf16.mxu0 %v10433
    %11222 = vmatpush1.bf16.msra.mxu0 %v10432
    %11223 = vmatprep.subr.bf16.mxu0 %v10437
    %11224 = vmatpush1.bf16.msra.mxu0 %v10436
    %11225 = vmatprep.subr.bf16.mxu0 %v10441
    %11226 = vmatpush1.bf16.msra.mxu0 %v10440
    %11227 = vmatprep.subr.bf16.mxu0 %v10445
    %11228 = vmatpush1.bf16.msra.mxu0 %v10444
    %11229 = vmatprep.subr.bf16.mxu0 %v10449
    %11230 = vmatpush1.bf16.msra.mxu0 %v10448
    %11231 = vmatprep.subr.bf16.mxu0 %v10453
    %11232 = vmatpush1.bf16.msra.mxu0 %v10452
    %11233 = vmatprep.subr.bf16.mxu0 %v10457
    %11234 = vmatpush1.bf16.msra.mxu0 %v10456
    %11235 = vmatprep.subr.bf16.mxu0 %v10461
    %11236 = vmatpush1.bf16.msra.mxu0 %v10460
    %11237 = vmatprep.subr.bf16.mxu0 %v10465
    %11238 = vmatpush1.bf16.msra.mxu0 %v10464
    %11239 = vmatprep.subr.bf16.mxu0 %v10469
    %11240 = vmatpush1.bf16.msra.mxu0 %v10468
    %11241 = vmatprep.subr.bf16.mxu0 %v10473
    %11242 = vmatpush1.bf16.msra.mxu0 %v10472
    %11243 = vmatprep.subr.bf16.mxu0 %v10477
    %11244 = vmatpush1.bf16.msra.mxu0 %v10476
    %11245 = vmatprep.subr.bf16.mxu0 %v10481
    %11246 = vmatpush1.bf16.msra.mxu0 %v10480
    %11247 = vmatprep.subr.bf16.mxu0 %v10485
    %11248 = vmatpush1.bf16.msra.mxu0 %v10484
    %11249 = vmatprep.subr.bf16.mxu0 %v10489
    %11250 = vmatpush1.bf16.msra.mxu0 %v10488
    %11251 = vmatprep.subr.bf16.mxu0 %v10493
    %11252 = vmatpush1.bf16.msra.mxu0 %v10492
    %11253 = vmatprep.mubr.bf16.mxu0 %v9549
    %11254 = vmatmul.mubr.bf16.gmra.mrb[0].mxu0 %v9548
    %v11255 = vpop.f32.mrb[0].mxu0
    %v11256 = vadd.f32 0.0, %v11255
    %v11257 = vpop.f32.mrb[0].mxu0
    %v11258 = vadd.f32 0.0, %v11257
    %v11259 = vpop.f32.mrb[0].mxu0
    %v11260 = vadd.f32 0.0, %v11259
    %v11261 = vpop.f32.mrb[0].mxu0
    %v11262 = vadd.f32 0.0, %v11261
    %11263 = vdwg.mxu0
    %11264 = vmatprep.subr.bf16.mxu0 %v10497
    %11265 = vmatpush1.bf16.msra.mxu0 %v10496
    %11266 = vmatprep.subr.bf16.mxu0 %v10501
    %11267 = vmatpush1.bf16.msra.mxu0 %v10500
    %11268 = vmatprep.subr.bf16.mxu0 %v10505
    %11269 = vmatpush1.bf16.msra.mxu0 %v10504
    %11270 = vmatprep.subr.bf16.mxu0 %v10509
    %11271 = vmatpush1.bf16.msra.mxu0 %v10508
    %11272 = vmatprep.subr.bf16.mxu0 %v10513
    %11273 = vmatpush1.bf16.msra.mxu0 %v10512
    %11274 = vmatprep.subr.bf16.mxu0 %v10517
    %11275 = vmatpush1.bf16.msra.mxu0 %v10516
    %11276 = vmatprep.subr.bf16.mxu0 %v10521
    %11277 = vmatpush1.bf16.msra.mxu0 %v10520
    %11278 = vmatprep.subr.bf16.mxu0 %v10525
    %11279 = vmatpush1.bf16.msra.mxu0 %v10524
    %11280 = vmatprep.subr.bf16.mxu0 %v10529
    %11281 = vmatpush1.bf16.msra.mxu0 %v10528
    %11282 = vmatprep.subr.bf16.mxu0 %v10533
    %11283 = vmatpush1.bf16.msra.mxu0 %v10532
    %11284 = vmatprep.subr.bf16.mxu0 %v10537
    %11285 = vmatpush1.bf16.msra.mxu0 %v10536
    %11286 = vmatprep.subr.bf16.mxu0 %v10541
    %11287 = vmatpush1.bf16.msra.mxu0 %v10540
    %11288 = vmatprep.subr.bf16.mxu0 %v10545
    %11289 = vmatpush1.bf16.msra.mxu0 %v10544
    %11290 = vmatprep.subr.bf16.mxu0 %v10549
    %11291 = vmatpush1.bf16.msra.mxu0 %v10548
    %11292 = vmatprep.subr.bf16.mxu0 %v10553
    %11293 = vmatpush1.bf16.msra.mxu0 %v10552
    %11294 = vmatprep.subr.bf16.mxu0 %v10557
    %11295 = vmatpush1.bf16.msra.mxu0 %v10556
    %11296 = vmatprep.mubr.bf16.mxu0 %v9551
    %11297 = vmatmul.mubr.bf16.gmra.mrb[0].mxu0 %v9550
    %v11298 = vpop.f32.mrb[0].mxu0
    %v11299 = vadd.f32 %v11256, %v11298
    %v11300 = vpop.f32.mrb[0].mxu0
    %v11301 = vadd.f32 %v11258, %v11300
    %v11302 = vpop.f32.mrb[0].mxu0
    %v11303 = vadd.f32 %v11260, %v11302
    %v11304 = vpop.f32.mrb[0].mxu0
    %v11305 = vadd.f32 %v11262, %v11304
    %11306 = vdwg.mxu0
    %11307 = vmatprep.subr.bf16.mxu0 %v10561
    %11308 = vmatpush1.bf16.msra.mxu0 %v10560
    %11309 = vmatprep.subr.bf16.mxu0 %v10565
    %11310 = vmatpush1.bf16.msra.mxu0 %v10564
    %11311 = vmatprep.subr.bf16.mxu0 %v10569
    %11312 = vmatpush1.bf16.msra.mxu0 %v10568
    %11313 = vmatprep.subr.bf16.mxu0 %v10573
    %11314 = vmatpush1.bf16.msra.mxu0 %v10572
    %11315 = vmatprep.subr.bf16.mxu0 %v10577
    %11316 = vmatpush1.bf16.msra.mxu0 %v10576
    %11317 = vmatprep.subr.bf16.mxu0 %v10581
    %11318 = vmatpush1.bf16.msra.mxu0 %v10580
    %11319 = vmatprep.subr.bf16.mxu0 %v10585
    %11320 = vmatpush1.bf16.msra.mxu0 %v10584
    %11321 = vmatprep.subr.bf16.mxu0 %v10589
    %11322 = vmatpush1.bf16.msra.mxu0 %v10588
    %11323 = vmatprep.subr.bf16.mxu0 %v10593
    %11324 = vmatpush1.bf16.msra.mxu0 %v10592
    %11325 = vmatprep.subr.bf16.mxu0 %v10597
    %11326 = vmatpush1.bf16.msra.mxu0 %v10596
    %11327 = vmatprep.subr.bf16.mxu0 %v10601
    %11328 = vmatpush1.bf16.msra.mxu0 %v10600
    %11329 = vmatprep.subr.bf16.mxu0 %v10605
    %11330 = vmatpush1.bf16.msra.mxu0 %v10604
    %11331 = vmatprep.subr.bf16.mxu0 %v10609
    %11332 = vmatpush1.bf16.msra.mxu0 %v10608
    %11333 = vmatprep.subr.bf16.mxu0 %v10613
    %11334 = vmatpush1.bf16.msra.mxu0 %v10612
    %11335 = vmatprep.subr.bf16.mxu0 %v10617
    %11336 = vmatpush1.bf16.msra.mxu0 %v10616
    %11337 = vmatprep.subr.bf16.mxu0 %v10621
    %11338 = vmatpush1.bf16.msra.mxu0 %v10620
    %11339 = vmatprep.mubr.bf16.mxu0 %v9553
    %11340 = vmatmul.mubr.bf16.gmra.mrb[0].mxu0 %v9552
    %v11341 = vpop.f32.mrb[0].mxu0
    %v11342 = vadd.f32 %v11299, %v11341
    %v11343 = vpop.f32.mrb[0].mxu0
    %v11344 = vadd.f32 %v11301, %v11343
    %v11345 = vpop.f32.mrb[0].mxu0
    %v11346 = vadd.f32 %v11303, %v11345
    %v11347 = vpop.f32.mrb[0].mxu0
    %v11348 = vadd.f32 %v11305, %v11347
    %11349 = vdwg.mxu0
    %11350 = vmatprep.subr.bf16.mxu0 %v10625
    %11351 = vmatpush1.bf16.msra.mxu0 %v10624
    %11352 = vmatprep.subr.bf16.mxu0 %v10629
    %11353 = vmatpush1.bf16.msra.mxu0 %v10628
    %11354 = vmatprep.subr.bf16.mxu0 %v10633
    %11355 = vmatpush1.bf16.msra.mxu0 %v10632
    %11356 = vmatprep.subr.bf16.mxu0 %v10637
    %11357 = vmatpush1.bf16.msra.mxu0 %v10636
    %11358 = vmatprep.subr.bf16.mxu0 %v10641
    %11359 = vmatpush1.bf16.msra.mxu0 %v10640
    %11360 = vmatprep.subr.bf16.mxu0 %v10645
    %11361 = vmatpush1.bf16.msra.mxu0 %v10644
    %11362 = vmatprep.subr.bf16.mxu0 %v10649
    %11363 = vmatpush1.bf16.msra.mxu0 %v10648
    %11364 = vmatprep.subr.bf16.mxu0 %v10653
    %11365 = vmatpush1.bf16.msra.mxu0 %v10652
    %11366 = vmatprep.subr.bf16.mxu0 %v10657
    %11367 = vmatpush1.bf16.msra.mxu0 %v10656
    %11368 = vmatprep.subr.bf16.mxu0 %v10661
    %11369 = vmatpush1.bf16.msra.mxu0 %v10660
    %11370 = vmatprep.subr.bf16.mxu0 %v10665
    %11371 = vmatpush1.bf16.msra.mxu0 %v10664
    %11372 = vmatprep.subr.bf16.mxu0 %v10669
    %11373 = vmatpush1.bf16.msra.mxu0 %v10668
    %11374 = vmatprep.subr.bf16.mxu0 %v10673
    %11375 = vmatpush1.bf16.msra.mxu0 %v10672
    %11376 = vmatprep.subr.bf16.mxu0 %v10677
    %11377 = vmatpush1.bf16.msra.mxu0 %v10676
    %11378 = vmatprep.subr.bf16.mxu0 %v10681
    %11379 = vmatpush1.bf16.msra.mxu0 %v10680
    %11380 = vmatprep.subr.bf16.mxu0 %v10685
    %11381 = vmatpush1.bf16.msra.mxu0 %v10684
    %11382 = vmatprep.mubr.bf16.mxu0 %v9555
    %11383 = vmatmul.mubr.bf16.gmra.mrb[0].mxu0 %v9554
    %v11384 = vpop.f32.mrb[0].mxu0
    %v11385 = vadd.f32 %v11342, %v11384
    %v11386 = vpop.f32.mrb[0].mxu0
    %v11387 = vadd.f32 %v11344, %v11386
    %v11388 = vpop.f32.mrb[0].mxu0
    %v11389 = vadd.f32 %v11346, %v11388
    %v11390 = vpop.f32.mrb[0].mxu0
    %v11391 = vadd.f32 %v11348, %v11390
    %11392 = vdwg.mxu0
    %11393 = vmatprep.subr.bf16.mxu0 %v10689
    %11394 = vmatpush1.bf16.msra.mxu0 %v10688
    %11395 = vmatprep.subr.bf16.mxu0 %v10693
    %11396 = vmatpush1.bf16.msra.mxu0 %v10692
    %11397 = vmatprep.subr.bf16.mxu0 %v10697
    %11398 = vmatpush1.bf16.msra.mxu0 %v10696
    %11399 = vmatprep.subr.bf16.mxu0 %v10701
    %11400 = vmatpush1.bf16.msra.mxu0 %v10700
    %11401 = vmatprep.subr.bf16.mxu0 %v10705
    %11402 = vmatpush1.bf16.msra.mxu0 %v10704
    %11403 = vmatprep.subr.bf16.mxu0 %v10709
    %11404 = vmatpush1.bf16.msra.mxu0 %v10708
    %11405 = vmatprep.subr.bf16.mxu0 %v10713
    %11406 = vmatpush1.bf16.msra.mxu0 %v10712
    %11407 = vmatprep.subr.bf16.mxu0 %v10717
    %11408 = vmatpush1.bf16.msra.mxu0 %v10716
    %11409 = vmatprep.subr.bf16.mxu0 0
    %11410 = vmatpush1.bf16.msra.mxu0 0
    %11411 = vmatprep.subr.bf16.mxu0 0
    %11412 = vmatpush1.bf16.msra.mxu0 0
    %11413 = vmatprep.subr.bf16.mxu0 0
    %11414 = vmatpush1.bf16.msra.mxu0 0
    %11415 = vmatprep.subr.bf16.mxu0 0
    %11416 = vmatpush1.bf16.msra.mxu0 0
    %11417 = vmatprep.subr.bf16.mxu0 0
    %11418 = vmatpush1.bf16.msra.mxu0 0
    %11419 = vmatprep.subr.bf16.mxu0 0
    %11420 = vmatpush1.bf16.msra.mxu0 0
    %11421 = vmatprep.subr.bf16.mxu0 0
    %11422 = vmatpush1.bf16.msra.mxu0 0
    %11423 = vmatprep.subr.bf16.mxu0 0
    %11424 = vmatpush1.bf16.msra.mxu0 0
    %11425 = vmatprep.mubr.bf16.mxu0 0
    %11426 = vmatmul.mubr.bf16.gmra.mrb[0].mxu0 %v9556
    %v11427 = vpop.f32.mrb[0].mxu0
    %v11428 = vadd.f32 %v11385, %v11427
    %v11429 = vpop.f32.mrb[0].mxu0
    %v11430 = vadd.f32 %v11387, %v11429
    %v11431 = vpop.f32.mrb[0].mxu0
    %v11432 = vadd.f32 %v11389, %v11431
    %v11433 = vpop.f32.mrb[0].mxu0
    %v11434 = vadd.f32 %v11391, %v11433
    %11435 = vdwg.mxu0
    %v11436 = vadd.f32 %v9008, %v11213
    %v11437 = vadd.f32 %v9009, %v11215
    %v11438 = vadd.f32 %v9010, %v11428
    %v11439 = vadd.f32 %v9011, %v11430
    %v11440 = vadd.f32 %v9012, %v11217
    %v11441 = vadd.f32 %v9013, %v11219
    %v11442 = vadd.f32 %v9014, %v11432
    %v11443 = vadd.f32 %v9015, %v11434
    %v11444 = vld [vmem:[#allocation2] sm:$0xf0]
    %v11445 = vld [vmem:[#allocation2 + $0x8] sm:$0xf0]
    %v11446 = vld [vmem:[#allocation2 + $0x10] sm:$0xf0]
    %v11447 = vld [vmem:[#allocation2 + $0x18] sm:$0xf0]
    %v11448 = vld [vmem:[#allocation2 + $0x20] sm:$0xf0]
    %v11449 = vld [vmem:[#allocation2 + $0x28] sm:$0xf0]
    %v11450 = vld [vmem:[#allocation2 + $0x30] sm:$0xf0]
    %v11451 = vld [vmem:[#allocation2 + $0x38] sm:$0xf0]
    %v11452 = vld [vmem:[#allocation2 + $0x40] sm:$0xf0]
    %v11453 = vld [vmem:[#allocation2 + $0x48] sm:$0xf0]
    %v11454 = vld [vmem:[#allocation2 + $0x50] sm:$0xf0]
    %v11455 = vld [vmem:[#allocation2 + $0x58] sm:$0xf0]
    %v11456 = vld [vmem:[#allocation2 + $0x60] sm:$0xf0]
    %v11457 = vld [vmem:[#allocation2 + $0x68] sm:$0xf0]
    %v11458 = vld [vmem:[#allocation2 + $0x70] sm:$0xf0]
    %v11459 = vld [vmem:[#allocation2 + $0x78] sm:$0xf0]
    %v11460 = vld [vmem:[#allocation2 + $0x80] sm:$0xf0]
    %v11461 = vld [vmem:[#allocation2 + $0x88] sm:$0xf0]
    %v11480 = vunpack.c.h.b16 %v11444
    %v11481 = vunpack.c.h.b16 %v11445
    %v11482 = vunpack.c.h.b16 %v11446
    %v11483 = vunpack.c.h.b16 %v11447
    %v11484 = vunpack.c.h.b16 %v11448
    %v11485 = vunpack.c.h.b16 %v11449
    %v11486 = vunpack.c.h.b16 %v11450
    %v11487 = vunpack.c.h.b16 %v11451
    %v11488 = vunpack.c.h.b16 %v11452
    %v11489 = vunpack.c.h.b16 %v11453
    %v11490 = vunpack.c.h.b16 %v11454
    %v11491 = vunpack.c.h.b16 %v11455
    %v11492 = vunpack.c.h.b16 %v11456
    %v11493 = vunpack.c.h.b16 %v11457
    %v11494 = vunpack.c.h.b16 %v11458
    %v11495 = vunpack.c.h.b16 %v11459
    %v11496 = vunpack.c.h.b16 %v11460
    %v11497 = vunpack.c.h.b16 %v11461
    %s11498 = scalar_lea.vmem [#allocation13], 9216
    %v11499 = vld [vmem:[%s11498] sm:$0xff]
    %v11500 = vld [vmem:[%s11498 + $0x8] sm:$0xff]
    %v11501 = vld [vmem:[%s11498 + $0x10] sm:$0xff]
    %v11502 = vld [vmem:[%s11498 + $0x18] sm:$0xff]
    %v11503 = vld [vmem:[%s11498 + $0x20] sm:$0xff]
    %v11504 = vld [vmem:[%s11498 + $0x28] sm:$0xff]
    %v11505 = vld [vmem:[%s11498 + $0x30] sm:$0xff]
    %v11506 = vld [vmem:[%s11498 + $0x38] sm:$0xff]
    %v11507 = vld [vmem:[%s11498 + $0x40] sm:$0xff]
    %v11508 = vld [vmem:[%s11498 + $0x48] sm:$0xff]
    %v11509 = vld [vmem:[%s11498 + $0x50] sm:$0xff]
    %v11510 = vld [vmem:[%s11498 + $0x58] sm:$0xff]
    %v11511 = vld [vmem:[%s11498 + $0x60] sm:$0xff]
    %v11512 = vld [vmem:[%s11498 + $0x68] sm:$0xff]
    %v11513 = vld [vmem:[%s11498 + $0x70] sm:$0xff]
    %v11514 = vld [vmem:[%s11498 + $0x78] sm:$0xff]
    %v11515 = vld [vmem:[%s11498 + $0x80] sm:$0xff]
    %v11516 = vld [vmem:[%s11498 + $0x88] sm:$0xff]
    %v11517 = vld [vmem:[%s11498 + $0x90] sm:$0xff]
    %v11518 = vld [vmem:[%s11498 + $0x98] sm:$0xff]
    %v11519 = vld [vmem:[%s11498 + $0xa0] sm:$0xff]
    %v11520 = vld [vmem:[%s11498 + $0xa8] sm:$0xff]
    %v11521 = vld [vmem:[%s11498 + $0xb0] sm:$0xff]
    %v11522 = vld [vmem:[%s11498 + $0xb8] sm:$0xff]
    %v11523 = vld [vmem:[%s11498 + $0xc0] sm:$0xff]
    %v11524 = vld [vmem:[%s11498 + $0xc8] sm:$0xff]
    %v11525 = vld [vmem:[%s11498 + $0xd0] sm:$0xff]
    %v11526 = vld [vmem:[%s11498 + $0xd8] sm:$0xff]
    %v11527 = vld [vmem:[%s11498 + $0xe0] sm:$0xff]
    %v11528 = vld [vmem:[%s11498 + $0xe8] sm:$0xff]
    %v11529 = vld [vmem:[%s11498 + $0xf0] sm:$0xff]
    %v11530 = vld [vmem:[%s11498 + $0xf8] sm:$0xff]
    %v11531 = vld [vmem:[%s11498 + $0x100] sm:$0xff]
    %v11532 = vld [vmem:[%s11498 + $0x108] sm:$0xff]
    %v11533 = vld [vmem:[%s11498 + $0x110] sm:$0xff]
    %v11534 = vld [vmem:[%s11498 + $0x118] sm:$0xff]
    %v11535 = vld [vmem:[%s11498 + $0x120] sm:$0xff]
    %v11536 = vld [vmem:[%s11498 + $0x128] sm:$0xff]
    %v11537 = vld [vmem:[%s11498 + $0x130] sm:$0xff]
    %v11538 = vld [vmem:[%s11498 + $0x138] sm:$0xff]
    %v11539 = vld [vmem:[%s11498 + $0x140] sm:$0xff]
    %v11540 = vld [vmem:[%s11498 + $0x148] sm:$0xff]
    %v11541 = vld [vmem:[%s11498 + $0x150] sm:$0xff]
    %v11542 = vld [vmem:[%s11498 + $0x158] sm:$0xff]
    %v11543 = vld [vmem:[%s11498 + $0x160] sm:$0xff]
    %v11544 = vld [vmem:[%s11498 + $0x168] sm:$0xff]
    %v11545 = vld [vmem:[%s11498 + $0x170] sm:$0xff]
    %v11546 = vld [vmem:[%s11498 + $0x178] sm:$0xff]
    %v11547 = vld [vmem:[%s11498 + $0x180] sm:$0xff]
    %v11548 = vld [vmem:[%s11498 + $0x188] sm:$0xff]
    %v11549 = vld [vmem:[%s11498 + $0x190] sm:$0xff]
    %v11550 = vld [vmem:[%s11498 + $0x198] sm:$0xff]
    %v11551 = vld [vmem:[%s11498 + $0x1a0] sm:$0xff]
    %v11552 = vld [vmem:[%s11498 + $0x1a8] sm:$0xff]
    %v11553 = vld [vmem:[%s11498 + $0x1b0] sm:$0xff]
    %v11554 = vld [vmem:[%s11498 + $0x1b8] sm:$0xff]
    %v11555 = vld [vmem:[%s11498 + $0x1c0] sm:$0xff]
    %v11556 = vld [vmem:[%s11498 + $0x1c8] sm:$0xff]
    %v11557 = vld [vmem:[%s11498 + $0x1d0] sm:$0xff]
    %v11558 = vld [vmem:[%s11498 + $0x1d8] sm:$0xff]
    %v11559 = vld [vmem:[%s11498 + $0x1e0] sm:$0xff]
    %v11560 = vld [vmem:[%s11498 + $0x1e8] sm:$0xff]
    %v11561 = vld [vmem:[%s11498 + $0x1f0] sm:$0xff]
    %v11562 = vld [vmem:[%s11498 + $0x1f8] sm:$0xff]
    %v11563 = vld [vmem:[%s11498 + $0x200] sm:$0xff]
    %v11564 = vld [vmem:[%s11498 + $0x208] sm:$0xff]
    %v11565 = vld [vmem:[%s11498 + $0x210] sm:$0xff]
    %v11566 = vld [vmem:[%s11498 + $0x218] sm:$0xff]
    %v11567 = vld [vmem:[%s11498 + $0x220] sm:$0xff]
    %v11568 = vld [vmem:[%s11498 + $0x228] sm:$0xff]
    %v11569 = vld [vmem:[%s11498 + $0x230] sm:$0xff]
    %v11570 = vld [vmem:[%s11498 + $0x238] sm:$0xff]
    %v11571 = vld [vmem:[%s11498 + $0x240] sm:$0xff]
    %v11572 = vld [vmem:[%s11498 + $0x248] sm:$0xff]
    %v11573 = vld [vmem:[%s11498 + $0x250] sm:$0xff]
    %v11574 = vld [vmem:[%s11498 + $0x258] sm:$0xff]
    %v11575 = vld [vmem:[%s11498 + $0x260] sm:$0xff]
    %v11576 = vld [vmem:[%s11498 + $0x268] sm:$0xff]
    %v11577 = vld [vmem:[%s11498 + $0x270] sm:$0xff]
    %v11578 = vld [vmem:[%s11498 + $0x278] sm:$0xff]
    %v11579 = vld [vmem:[%s11498 + $0x280] sm:$0xff]
    %v11580 = vld [vmem:[%s11498 + $0x288] sm:$0xff]
    %v11581 = vld [vmem:[%s11498 + $0x290] sm:$0xff]
    %v11582 = vld [vmem:[%s11498 + $0x298] sm:$0xff]
    %v11583 = vld [vmem:[%s11498 + $0x2a0] sm:$0xff]
    %v11584 = vld [vmem:[%s11498 + $0x2a8] sm:$0xff]
    %v11585 = vld [vmem:[%s11498 + $0x2b0] sm:$0xff]
    %v11586 = vld [vmem:[%s11498 + $0x2b8] sm:$0xff]
    %v11587 = vld [vmem:[%s11498 + $0x2c0] sm:$0xff]
    %v11588 = vld [vmem:[%s11498 + $0x2c8] sm:$0xff]
    %v11589 = vld [vmem:[%s11498 + $0x2d0] sm:$0xff]
    %v11590 = vld [vmem:[%s11498 + $0x2d8] sm:$0xff]
    %v11591 = vld [vmem:[%s11498 + $0x2e0] sm:$0xff]
    %v11592 = vld [vmem:[%s11498 + $0x2e8] sm:$0xff]
    %v11593 = vld [vmem:[%s11498 + $0x2f0] sm:$0xff]
    %v11594 = vld [vmem:[%s11498 + $0x2f8] sm:$0xff]
    %v11595 = vld [vmem:[%s11498 + $0x300] sm:$0xff]
    %v11596 = vld [vmem:[%s11498 + $0x308] sm:$0xff]
    %v11597 = vld [vmem:[%s11498 + $0x310] sm:$0xff]
    %v11598 = vld [vmem:[%s11498 + $0x318] sm:$0xff]
    %v11599 = vld [vmem:[%s11498 + $0x320] sm:$0xff]
    %v11600 = vld [vmem:[%s11498 + $0x328] sm:$0xff]
    %v11601 = vld [vmem:[%s11498 + $0x330] sm:$0xff]
    %v11602 = vld [vmem:[%s11498 + $0x338] sm:$0xff]
    %v11603 = vld [vmem:[%s11498 + $0x340] sm:$0xff]
    %v11604 = vld [vmem:[%s11498 + $0x348] sm:$0xff]
    %v11605 = vld [vmem:[%s11498 + $0x350] sm:$0xff]
    %v11606 = vld [vmem:[%s11498 + $0x358] sm:$0xff]
    %v11607 = vld [vmem:[%s11498 + $0x360] sm:$0xff]
    %v11608 = vld [vmem:[%s11498 + $0x368] sm:$0xff]
    %v11609 = vld [vmem:[%s11498 + $0x370] sm:$0xff]
    %v11610 = vld [vmem:[%s11498 + $0x378] sm:$0xff]
    %v11611 = vld [vmem:[%s11498 + $0x380] sm:$0xff]
    %v11612 = vld [vmem:[%s11498 + $0x388] sm:$0xff]
    %v11613 = vld [vmem:[%s11498 + $0x390] sm:$0xff]
    %v11614 = vld [vmem:[%s11498 + $0x398] sm:$0xff]
    %v11615 = vld [vmem:[%s11498 + $0x3a0] sm:$0xff]
    %v11616 = vld [vmem:[%s11498 + $0x3a8] sm:$0xff]
    %v11617 = vld [vmem:[%s11498 + $0x3b0] sm:$0xff]
    %v11618 = vld [vmem:[%s11498 + $0x3b8] sm:$0xff]
    %v11619 = vld [vmem:[%s11498 + $0x3c0] sm:$0xff]
    %v11620 = vld [vmem:[%s11498 + $0x3c8] sm:$0xff]
    %v11621 = vld [vmem:[%s11498 + $0x3d0] sm:$0xff]
    %v11622 = vld [vmem:[%s11498 + $0x3d8] sm:$0xff]
    %v11623 = vld [vmem:[%s11498 + $0x3e0] sm:$0xff]
    %v11624 = vld [vmem:[%s11498 + $0x3e8] sm:$0xff]
    %v11625 = vld [vmem:[%s11498 + $0x3f0] sm:$0xff]
    %v11626 = vld [vmem:[%s11498 + $0x3f8] sm:$0xff]
    %v11627 = vld [vmem:[%s11498 + $0x400] sm:$0xff]
    %v11628 = vld [vmem:[%s11498 + $0x408] sm:$0xff]
    %v11629 = vld [vmem:[%s11498 + $0x410] sm:$0xff]
    %v11630 = vld [vmem:[%s11498 + $0x418] sm:$0xff]
    %v11631 = vld [vmem:[%s11498 + $0x420] sm:$0xff]
    %v11632 = vld [vmem:[%s11498 + $0x428] sm:$0xff]
    %v11633 = vld [vmem:[%s11498 + $0x430] sm:$0xff]
    %v11634 = vld [vmem:[%s11498 + $0x438] sm:$0xff]
    %v11635 = vld [vmem:[%s11498 + $0x440] sm:$0xff]
    %v11636 = vld [vmem:[%s11498 + $0x448] sm:$0xff]
    %v11637 = vld [vmem:[%s11498 + $0x450] sm:$0xff]
    %v11638 = vld [vmem:[%s11498 + $0x458] sm:$0xff]
    %v11639 = vld [vmem:[%s11498 + $0x460] sm:$0xff]
    %v11640 = vld [vmem:[%s11498 + $0x468] sm:$0xff]
    %v11641 = vld [vmem:[%s11498 + $0x470] sm:$0xff]
    %v11642 = vld [vmem:[%s11498 + $0x478] sm:$0xff]
    %v11643 = vld [vmem:[%s11498 + $0x480] sm:$0xff]
    %v11644 = vld [vmem:[%s11498 + $0x488] sm:$0xff]
    %v11645 = vld [vmem:[%s11498 + $0x490] sm:$0xff]
    %v11646 = vld [vmem:[%s11498 + $0x498] sm:$0xff]
    %v11647 = vld [vmem:[%s11498 + $0x4a0] sm:$0xff]
    %v11648 = vld [vmem:[%s11498 + $0x4a8] sm:$0xff]
    %v11649 = vld [vmem:[%s11498 + $0x4b0] sm:$0xff]
    %v11650 = vld [vmem:[%s11498 + $0x4b8] sm:$0xff]
    %v11651 = vld [vmem:[%s11498 + $0x4c0] sm:$0xff]
    %v11652 = vld [vmem:[%s11498 + $0x4c8] sm:$0xff]
    %v11653 = vld [vmem:[%s11498 + $0x4d0] sm:$0xff]
    %v11654 = vld [vmem:[%s11498 + $0x4d8] sm:$0xff]
    %v11655 = vld [vmem:[%s11498 + $0x4e0] sm:$0xff]
    %v11656 = vld [vmem:[%s11498 + $0x4e8] sm:$0xff]
    %v11657 = vld [vmem:[%s11498 + $0x4f0] sm:$0xff]
    %v11658 = vld [vmem:[%s11498 + $0x4f8] sm:$0xff]
    %v11659 = vld [vmem:[%s11498 + $0x500] sm:$0xff]
    %v11660 = vld [vmem:[%s11498 + $0x508] sm:$0xff]
    %v11661 = vld [vmem:[%s11498 + $0x510] sm:$0xff]
    %v11662 = vld [vmem:[%s11498 + $0x518] sm:$0xff]
    %v11663 = vld [vmem:[%s11498 + $0x520] sm:$0xff]
    %v11664 = vld [vmem:[%s11498 + $0x528] sm:$0xff]
    %v11665 = vld [vmem:[%s11498 + $0x530] sm:$0xff]
    %v11666 = vld [vmem:[%s11498 + $0x538] sm:$0xff]
    %v11667 = vld [vmem:[%s11498 + $0x540] sm:$0xff]
    %v11668 = vld [vmem:[%s11498 + $0x548] sm:$0xff]
    %v11669 = vld [vmem:[%s11498 + $0x550] sm:$0xff]
    %v11670 = vld [vmem:[%s11498 + $0x558] sm:$0xff]
    %v11671 = vld [vmem:[%s11498 + $0x560] sm:$0xff]
    %v11672 = vld [vmem:[%s11498 + $0x568] sm:$0xff]
    %v11673 = vld [vmem:[%s11498 + $0x570] sm:$0xff]
    %v11674 = vld [vmem:[%s11498 + $0x578] sm:$0xff]
    %v11675 = vld [vmem:[%s11498 + $0x580] sm:$0xff]
    %v11676 = vld [vmem:[%s11498 + $0x588] sm:$0xff]
    %v11677 = vld [vmem:[%s11498 + $0x590] sm:$0xff]
    %v11678 = vld [vmem:[%s11498 + $0x598] sm:$0xff]
    %v11679 = vld [vmem:[%s11498 + $0x5a0] sm:$0xff]
    %v11680 = vld [vmem:[%s11498 + $0x5a8] sm:$0xff]
    %v11681 = vld [vmem:[%s11498 + $0x5b0] sm:$0xff]
    %v11682 = vld [vmem:[%s11498 + $0x5b8] sm:$0xff]
    %v11683 = vld [vmem:[%s11498 + $0x5c0] sm:$0xff]
    %v11684 = vld [vmem:[%s11498 + $0x5c8] sm:$0xff]
    %v11685 = vld [vmem:[%s11498 + $0x5d0] sm:$0xff]
    %v11686 = vld [vmem:[%s11498 + $0x5d8] sm:$0xff]
    %v11687 = vld [vmem:[%s11498 + $0x5e0] sm:$0xff]
    %v11688 = vld [vmem:[%s11498 + $0x5e8] sm:$0xff]
    %v11689 = vld [vmem:[%s11498 + $0x5f0] sm:$0xff]
    %v11690 = vld [vmem:[%s11498 + $0x5f8] sm:$0xff]
    %v11691 = vld [vmem:[%s11498 + $0x600] sm:$0xff]
    %v11692 = vld [vmem:[%s11498 + $0x608] sm:$0xff]
    %v11693 = vld [vmem:[%s11498 + $0x610] sm:$0xff]
    %v11694 = vld [vmem:[%s11498 + $0x618] sm:$0xff]
    %v11695 = vld [vmem:[%s11498 + $0x620] sm:$0xff]
    %v11696 = vld [vmem:[%s11498 + $0x628] sm:$0xff]
    %v11697 = vld [vmem:[%s11498 + $0x630] sm:$0xff]
    %v11698 = vld [vmem:[%s11498 + $0x638] sm:$0xff]
    %v11699 = vld [vmem:[%s11498 + $0x640] sm:$0xff]
    %v11700 = vld [vmem:[%s11498 + $0x648] sm:$0xff]
    %v11701 = vld [vmem:[%s11498 + $0x650] sm:$0xff]
    %v11702 = vld [vmem:[%s11498 + $0x658] sm:$0xff]
    %v11703 = vld [vmem:[%s11498 + $0x660] sm:$0xff]
    %v11704 = vld [vmem:[%s11498 + $0x668] sm:$0xff]
    %v11705 = vld [vmem:[%s11498 + $0x670] sm:$0xff]
    %v11706 = vld [vmem:[%s11498 + $0x678] sm:$0xff]
    %v11707 = vld [vmem:[%s11498 + $0x680] sm:$0xff]
    %v11708 = vld [vmem:[%s11498 + $0x688] sm:$0xff]
    %v11709 = vld [vmem:[%s11498 + $0x690] sm:$0xff]
    %v11710 = vld [vmem:[%s11498 + $0x698] sm:$0xff]
    %v11711 = vld [vmem:[%s11498 + $0x6a0] sm:$0xff]
    %v11712 = vld [vmem:[%s11498 + $0x6a8] sm:$0xff]
    %v11713 = vld [vmem:[%s11498 + $0x6b0] sm:$0xff]
    %v11714 = vld [vmem:[%s11498 + $0x6b8] sm:$0xff]
    %v11715 = vld [vmem:[%s11498 + $0x6c0] sm:$0xff]
    %v11716 = vld [vmem:[%s11498 + $0x6c8] sm:$0xff]
    %v11717 = vld [vmem:[%s11498 + $0x6d0] sm:$0xff]
    %v11718 = vld [vmem:[%s11498 + $0x6d8] sm:$0xff]
    %v11719 = vld [vmem:[%s11498 + $0x6e0] sm:$0xff]
    %v11720 = vld [vmem:[%s11498 + $0x6e8] sm:$0xff]
    %v11721 = vld [vmem:[%s11498 + $0x6f0] sm:$0xff]
    %v11722 = vld [vmem:[%s11498 + $0x6f8] sm:$0xff]
    %v11723 = vld [vmem:[%s11498 + $0x700] sm:$0xff]
    %v11724 = vld [vmem:[%s11498 + $0x708] sm:$0xff]
    %v11725 = vld [vmem:[%s11498 + $0x710] sm:$0xff]
    %v11726 = vld [vmem:[%s11498 + $0x718] sm:$0xff]
    %v11727 = vld [vmem:[%s11498 + $0x720] sm:$0xff]
    %v11728 = vld [vmem:[%s11498 + $0x728] sm:$0xff]
    %v11729 = vld [vmem:[%s11498 + $0x730] sm:$0xff]
    %v11730 = vld [vmem:[%s11498 + $0x738] sm:$0xff]
    %v11731 = vld [vmem:[%s11498 + $0x740] sm:$0xff]
    %v11732 = vld [vmem:[%s11498 + $0x748] sm:$0xff]
    %v11733 = vld [vmem:[%s11498 + $0x750] sm:$0xff]
    %v11734 = vld [vmem:[%s11498 + $0x758] sm:$0xff]
    %v11735 = vld [vmem:[%s11498 + $0x760] sm:$0xff]
    %v11736 = vld [vmem:[%s11498 + $0x768] sm:$0xff]
    %v11737 = vld [vmem:[%s11498 + $0x770] sm:$0xff]
    %v11738 = vld [vmem:[%s11498 + $0x778] sm:$0xff]
    %v11739 = vld [vmem:[%s11498 + $0x780] sm:$0xff]
    %v11740 = vld [vmem:[%s11498 + $0x788] sm:$0xff]
    %v11741 = vld [vmem:[%s11498 + $0x790] sm:$0xff]
    %v11742 = vld [vmem:[%s11498 + $0x798] sm:$0xff]
    %v11743 = vld [vmem:[%s11498 + $0x7a0] sm:$0xff]
    %v11744 = vld [vmem:[%s11498 + $0x7a8] sm:$0xff]
    %v11745 = vld [vmem:[%s11498 + $0x7b0] sm:$0xff]
    %v11746 = vld [vmem:[%s11498 + $0x7b8] sm:$0xff]
    %v11747 = vld [vmem:[%s11498 + $0x7c0] sm:$0xff]
    %v11748 = vld [vmem:[%s11498 + $0x7c8] sm:$0xff]
    %v11749 = vld [vmem:[%s11498 + $0x7d0] sm:$0xff]
    %v11750 = vld [vmem:[%s11498 + $0x7d8] sm:$0xff]
    %v11751 = vld [vmem:[%s11498 + $0x7e0] sm:$0xff]
    %v11752 = vld [vmem:[%s11498 + $0x7e8] sm:$0xff]
    %v11753 = vld [vmem:[%s11498 + $0x7f0] sm:$0xff]
    %v11754 = vld [vmem:[%s11498 + $0x7f8] sm:$0xff]
    %v11755 = vld [vmem:[%s11498 + $0x800] sm:$0xff]
    %v11756 = vld [vmem:[%s11498 + $0x808] sm:$0xff]
    %v11757 = vld [vmem:[%s11498 + $0x810] sm:$0xff]
    %v11758 = vld [vmem:[%s11498 + $0x818] sm:$0xff]
    %v11759 = vld [vmem:[%s11498 + $0x820] sm:$0xff]
    %v11760 = vld [vmem:[%s11498 + $0x828] sm:$0xff]
    %v11761 = vld [vmem:[%s11498 + $0x830] sm:$0xff]
    %v11762 = vld [vmem:[%s11498 + $0x838] sm:$0xff]
    %v11763 = vld [vmem:[%s11498 + $0x840] sm:$0xff]
    %v11764 = vld [vmem:[%s11498 + $0x848] sm:$0xff]
    %v11765 = vld [vmem:[%s11498 + $0x850] sm:$0xff]
    %v11766 = vld [vmem:[%s11498 + $0x858] sm:$0xff]
    %v11767 = vld [vmem:[%s11498 + $0x860] sm:$0xff]
    %v11768 = vld [vmem:[%s11498 + $0x868] sm:$0xff]
    %v11769 = vld [vmem:[%s11498 + $0x870] sm:$0xff]
    %v11770 = vld [vmem:[%s11498 + $0x878] sm:$0xff]
    %v11771 = vld [vmem:[%s11498 + $0x880] sm:$0xff]
    %v11772 = vld [vmem:[%s11498 + $0x888] sm:$0xff]
    %v11773 = vld [vmem:[%s11498 + $0x890] sm:$0xff]
    %v11774 = vld [vmem:[%s11498 + $0x898] sm:$0xff]
    %v11775 = vld [vmem:[%s11498 + $0x8a0] sm:$0xff]
    %v11776 = vld [vmem:[%s11498 + $0x8a8] sm:$0xff]
    %v11777 = vld [vmem:[%s11498 + $0x8b0] sm:$0xff]
    %v11778 = vld [vmem:[%s11498 + $0x8b8] sm:$0xff]
    %v11779 = vld [vmem:[%s11498 + $0x8c0] sm:$0xff]
    %v11780 = vld [vmem:[%s11498 + $0x8c8] sm:$0xff]
    %v11781 = vld [vmem:[%s11498 + $0x8d0] sm:$0xff]
    %v11782 = vld [vmem:[%s11498 + $0x8d8] sm:$0xff]
    %v11783 = vld [vmem:[%s11498 + $0x8e0] sm:$0xff]
    %v11784 = vld [vmem:[%s11498 + $0x8e8] sm:$0xff]
    %v11785 = vld [vmem:[%s11498 + $0x8f0] sm:$0xff]
    %v11786 = vld [vmem:[%s11498 + $0x8f8] sm:$0xff]
    %v11787 = vpack.c.b16 %v11489, %v11480
    %v11788 = vpack.c.b16 %v11490, %v11481
    %v11789 = vpack.c.b16 %v11491, %v11482
    %v11790 = vpack.c.b16 %v11492, %v11483
    %v11791 = vpack.c.b16 %v11493, %v11484
    %v11792 = vpack.c.b16 %v11494, %v11485
    %v11793 = vpack.c.b16 %v11495, %v11486
    %v11794 = vpack.c.b16 %v11496, %v11487
    %v11795 = vpack.c.b16 %v11497, %v11488
    %v12093 = vunpack.c.l.b16 %v11499
    %v12094 = vunpack.c.h.b16 %v11499
    %v12095 = vunpack.c.l.b16 %v11500
    %v12096 = vunpack.c.h.b16 %v11500
    %v12097 = vunpack.c.l.b16 %v11501
    %v12098 = vunpack.c.h.b16 %v11501
    %v12099 = vunpack.c.l.b16 %v11502
    %v12100 = vunpack.c.h.b16 %v11502
    %v12101 = vunpack.c.l.b16 %v11503
    %v12102 = vunpack.c.h.b16 %v11503
    %v12103 = vunpack.c.l.b16 %v11504
    %v12104 = vunpack.c.h.b16 %v11504
    %v12105 = vunpack.c.l.b16 %v11505
    %v12106 = vunpack.c.h.b16 %v11505
    %v12107 = vunpack.c.l.b16 %v11506
    %v12108 = vunpack.c.h.b16 %v11506
    %v12109 = vunpack.c.l.b16 %v11507
    %v12110 = vunpack.c.h.b16 %v11507
    %v12111 = vunpack.c.l.b16 %v11508
    %v12112 = vunpack.c.h.b16 %v11508
    %v12113 = vunpack.c.l.b16 %v11509
    %v12114 = vunpack.c.h.b16 %v11509
    %v12115 = vunpack.c.l.b16 %v11510
    %v12116 = vunpack.c.h.b16 %v11510
    %v12117 = vunpack.c.l.b16 %v11511
    %v12118 = vunpack.c.h.b16 %v11511
    %v12119 = vunpack.c.l.b16 %v11512
    %v12120 = vunpack.c.h.b16 %v11512
    %v12121 = vunpack.c.l.b16 %v11513
    %v12122 = vunpack.c.h.b16 %v11513
    %v12123 = vunpack.c.l.b16 %v11514
    %v12124 = vunpack.c.h.b16 %v11514
    %v12125 = vunpack.c.l.b16 %v11515
    %v12126 = vunpack.c.h.b16 %v11515
    %v12127 = vunpack.c.l.b16 %v11516
    %v12128 = vunpack.c.h.b16 %v11516
    %v12129 = vunpack.c.l.b16 %v11517
    %v12130 = vunpack.c.h.b16 %v11517
    %v12131 = vunpack.c.l.b16 %v11518
    %v12132 = vunpack.c.h.b16 %v11518
    %v12133 = vunpack.c.l.b16 %v11519
    %v12134 = vunpack.c.h.b16 %v11519
    %v12135 = vunpack.c.l.b16 %v11520
    %v12136 = vunpack.c.h.b16 %v11520
    %v12137 = vunpack.c.l.b16 %v11521
    %v12138 = vunpack.c.h.b16 %v11521
    %v12139 = vunpack.c.l.b16 %v11522
    %v12140 = vunpack.c.h.b16 %v11522
    %v12141 = vunpack.c.l.b16 %v11523
    %v12142 = vunpack.c.h.b16 %v11523
    %v12143 = vunpack.c.l.b16 %v11524
    %v12144 = vunpack.c.h.b16 %v11524
    %v12145 = vunpack.c.l.b16 %v11525
    %v12146 = vunpack.c.h.b16 %v11525
    %v12147 = vunpack.c.l.b16 %v11526
    %v12148 = vunpack.c.h.b16 %v11526
    %v12149 = vunpack.c.l.b16 %v11527
    %v12150 = vunpack.c.h.b16 %v11527
    %v12151 = vunpack.c.l.b16 %v11528
    %v12152 = vunpack.c.h.b16 %v11528
    %v12153 = vunpack.c.l.b16 %v11529
    %v12154 = vunpack.c.h.b16 %v11529
    %v12155 = vunpack.c.l.b16 %v11530
    %v12156 = vunpack.c.h.b16 %v11530
    %v12157 = vunpack.c.l.b16 %v11531
    %v12158 = vunpack.c.h.b16 %v11531
    %v12159 = vunpack.c.l.b16 %v11532
    %v12160 = vunpack.c.h.b16 %v11532
    %v12161 = vunpack.c.l.b16 %v11533
    %v12162 = vunpack.c.h.b16 %v11533
    %v12163 = vunpack.c.l.b16 %v11534
    %v12164 = vunpack.c.h.b16 %v11534
    %v12165 = vunpack.c.l.b16 %v11535
    %v12166 = vunpack.c.h.b16 %v11535
    %v12167 = vunpack.c.l.b16 %v11536
    %v12168 = vunpack.c.h.b16 %v11536
    %v12169 = vunpack.c.l.b16 %v11537
    %v12170 = vunpack.c.h.b16 %v11537
    %v12171 = vunpack.c.l.b16 %v11538
    %v12172 = vunpack.c.h.b16 %v11538
    %v12173 = vunpack.c.l.b16 %v11539
    %v12174 = vunpack.c.h.b16 %v11539
    %v12175 = vunpack.c.l.b16 %v11540
    %v12176 = vunpack.c.h.b16 %v11540
    %v12177 = vunpack.c.l.b16 %v11541
    %v12178 = vunpack.c.h.b16 %v11541
    %v12179 = vunpack.c.l.b16 %v11542
    %v12180 = vunpack.c.h.b16 %v11542
    %v12181 = vunpack.c.l.b16 %v11543
    %v12182 = vunpack.c.h.b16 %v11543
    %v12183 = vunpack.c.l.b16 %v11544
    %v12184 = vunpack.c.h.b16 %v11544
    %v12185 = vunpack.c.l.b16 %v11545
    %v12186 = vunpack.c.h.b16 %v11545
    %v12187 = vunpack.c.l.b16 %v11546
    %v12188 = vunpack.c.h.b16 %v11546
    %v12189 = vunpack.c.l.b16 %v11547
    %v12190 = vunpack.c.h.b16 %v11547
    %v12191 = vunpack.c.l.b16 %v11548
    %v12192 = vunpack.c.h.b16 %v11548
    %v12193 = vunpack.c.l.b16 %v11549
    %v12194 = vunpack.c.h.b16 %v11549
    %v12195 = vunpack.c.l.b16 %v11550
    %v12196 = vunpack.c.h.b16 %v11550
    %v12197 = vunpack.c.l.b16 %v11551
    %v12198 = vunpack.c.h.b16 %v11551
    %v12199 = vunpack.c.l.b16 %v11552
    %v12200 = vunpack.c.h.b16 %v11552
    %v12201 = vunpack.c.l.b16 %v11553
    %v12202 = vunpack.c.h.b16 %v11553
    %v12203 = vunpack.c.l.b16 %v11554
    %v12204 = vunpack.c.h.b16 %v11554
    %v12205 = vunpack.c.l.b16 %v11555
    %v12206 = vunpack.c.h.b16 %v11555
    %v12207 = vunpack.c.l.b16 %v11556
    %v12208 = vunpack.c.h.b16 %v11556
    %v12209 = vunpack.c.l.b16 %v11557
    %v12210 = vunpack.c.h.b16 %v11557
    %v12211 = vunpack.c.l.b16 %v11558
    %v12212 = vunpack.c.h.b16 %v11558
    %v12213 = vunpack.c.l.b16 %v11559
    %v12214 = vunpack.c.h.b16 %v11559
    %v12215 = vunpack.c.l.b16 %v11560
    %v12216 = vunpack.c.h.b16 %v11560
    %v12217 = vunpack.c.l.b16 %v11561
    %v12218 = vunpack.c.h.b16 %v11561
    %v12219 = vunpack.c.l.b16 %v11562
    %v12220 = vunpack.c.h.b16 %v11562
    %v12221 = vunpack.c.l.b16 %v11563
    %v12222 = vunpack.c.h.b16 %v11563
    %v12223 = vunpack.c.l.b16 %v11564
    %v12224 = vunpack.c.h.b16 %v11564
    %v12225 = vunpack.c.l.b16 %v11565
    %v12226 = vunpack.c.h.b16 %v11565
    %v12227 = vunpack.c.l.b16 %v11566
    %v12228 = vunpack.c.h.b16 %v11566
    %v12229 = vunpack.c.l.b16 %v11567
    %v12230 = vunpack.c.h.b16 %v11567
    %v12231 = vunpack.c.l.b16 %v11568
    %v12232 = vunpack.c.h.b16 %v11568
    %v12233 = vunpack.c.l.b16 %v11569
    %v12234 = vunpack.c.h.b16 %v11569
    %v12235 = vunpack.c.l.b16 %v11570
    %v12236 = vunpack.c.h.b16 %v11570
    %v12237 = vunpack.c.l.b16 %v11571
    %v12238 = vunpack.c.h.b16 %v11571
    %v12239 = vunpack.c.l.b16 %v11572
    %v12240 = vunpack.c.h.b16 %v11572
    %v12241 = vunpack.c.l.b16 %v11573
    %v12242 = vunpack.c.h.b16 %v11573
    %v12243 = vunpack.c.l.b16 %v11574
    %v12244 = vunpack.c.h.b16 %v11574
    %v12245 = vunpack.c.l.b16 %v11575
    %v12246 = vunpack.c.h.b16 %v11575
    %v12247 = vunpack.c.l.b16 %v11576
    %v12248 = vunpack.c.h.b16 %v11576
    %v12249 = vunpack.c.l.b16 %v11577
    %v12250 = vunpack.c.h.b16 %v11577
    %v12251 = vunpack.c.l.b16 %v11578
    %v12252 = vunpack.c.h.b16 %v11578
    %v12253 = vunpack.c.l.b16 %v11579
    %v12254 = vunpack.c.h.b16 %v11579
    %v12255 = vunpack.c.l.b16 %v11580
    %v12256 = vunpack.c.h.b16 %v11580
    %v12257 = vunpack.c.l.b16 %v11581
    %v12258 = vunpack.c.h.b16 %v11581
    %v12259 = vunpack.c.l.b16 %v11582
    %v12260 = vunpack.c.h.b16 %v11582
    %v12261 = vunpack.c.l.b16 %v11583
    %v12262 = vunpack.c.h.b16 %v11583
    %v12263 = vunpack.c.l.b16 %v11584
    %v12264 = vunpack.c.h.b16 %v11584
    %v12265 = vunpack.c.l.b16 %v11585
    %v12266 = vunpack.c.h.b16 %v11585
    %v12267 = vunpack.c.l.b16 %v11586
    %v12268 = vunpack.c.h.b16 %v11586
    %v12269 = vunpack.c.l.b16 %v11587
    %v12270 = vunpack.c.h.b16 %v11587
    %v12271 = vunpack.c.l.b16 %v11588
    %v12272 = vunpack.c.h.b16 %v11588
    %v12273 = vunpack.c.l.b16 %v11589
    %v12274 = vunpack.c.h.b16 %v11589
    %v12275 = vunpack.c.l.b16 %v11590
    %v12276 = vunpack.c.h.b16 %v11590
    %v12277 = vunpack.c.l.b16 %v11591
    %v12278 = vunpack.c.h.b16 %v11591
    %v12279 = vunpack.c.l.b16 %v11592
    %v12280 = vunpack.c.h.b16 %v11592
    %v12281 = vunpack.c.l.b16 %v11593
    %v12282 = vunpack.c.h.b16 %v11593
    %v12283 = vunpack.c.l.b16 %v11594
    %v12284 = vunpack.c.h.b16 %v11594
    %v12285 = vunpack.c.l.b16 %v11595
    %v12286 = vunpack.c.h.b16 %v11595
    %v12287 = vunpack.c.l.b16 %v11596
    %v12288 = vunpack.c.h.b16 %v11596
    %v12289 = vunpack.c.l.b16 %v11597
    %v12290 = vunpack.c.h.b16 %v11597
    %v12291 = vunpack.c.l.b16 %v11598
    %v12292 = vunpack.c.h.b16 %v11598
    %v12293 = vunpack.c.l.b16 %v11599
    %v12294 = vunpack.c.h.b16 %v11599
    %v12295 = vunpack.c.l.b16 %v11600
    %v12296 = vunpack.c.h.b16 %v11600
    %v12297 = vunpack.c.l.b16 %v11601
    %v12298 = vunpack.c.h.b16 %v11601
    %v12299 = vunpack.c.l.b16 %v11602
    %v12300 = vunpack.c.h.b16 %v11602
    %v12301 = vunpack.c.l.b16 %v11603
    %v12302 = vunpack.c.h.b16 %v11603
    %v12303 = vunpack.c.l.b16 %v11604
    %v12304 = vunpack.c.h.b16 %v11604
    %v12305 = vunpack.c.l.b16 %v11605
    %v12306 = vunpack.c.h.b16 %v11605
    %v12307 = vunpack.c.l.b16 %v11606
    %v12308 = vunpack.c.h.b16 %v11606
    %v12309 = vunpack.c.l.b16 %v11607
    %v12310 = vunpack.c.h.b16 %v11607
    %v12311 = vunpack.c.l.b16 %v11608
    %v12312 = vunpack.c.h.b16 %v11608
    %v12313 = vunpack.c.l.b16 %v11609
    %v12314 = vunpack.c.h.b16 %v11609
    %v12315 = vunpack.c.l.b16 %v11610
    %v12316 = vunpack.c.h.b16 %v11610
    %v12317 = vunpack.c.l.b16 %v11611
    %v12318 = vunpack.c.h.b16 %v11611
    %v12319 = vunpack.c.l.b16 %v11612
    %v12320 = vunpack.c.h.b16 %v11612
    %v12321 = vunpack.c.l.b16 %v11613
    %v12322 = vunpack.c.h.b16 %v11613
    %v12323 = vunpack.c.l.b16 %v11614
    %v12324 = vunpack.c.h.b16 %v11614
    %v12325 = vunpack.c.l.b16 %v11615
    %v12326 = vunpack.c.h.b16 %v11615
    %v12327 = vunpack.c.l.b16 %v11616
    %v12328 = vunpack.c.h.b16 %v11616
    %v12329 = vunpack.c.l.b16 %v11617
    %v12330 = vunpack.c.h.b16 %v11617
    %v12331 = vunpack.c.l.b16 %v11618
    %v12332 = vunpack.c.h.b16 %v11618
    %v12333 = vunpack.c.l.b16 %v11619
    %v12334 = vunpack.c.h.b16 %v11619
    %v12335 = vunpack.c.l.b16 %v11620
    %v12336 = vunpack.c.h.b16 %v11620
    %v12337 = vunpack.c.l.b16 %v11621
    %v12338 = vunpack.c.h.b16 %v11621
    %v12339 = vunpack.c.l.b16 %v11622
    %v12340 = vunpack.c.h.b16 %v11622
    %v12341 = vunpack.c.l.b16 %v11623
    %v12342 = vunpack.c.h.b16 %v11623
    %v12343 = vunpack.c.l.b16 %v11624
    %v12344 = vunpack.c.h.b16 %v11624
    %v12345 = vunpack.c.l.b16 %v11625
    %v12346 = vunpack.c.h.b16 %v11625
    %v12347 = vunpack.c.l.b16 %v11626
    %v12348 = vunpack.c.h.b16 %v11626
    %v12349 = vunpack.c.l.b16 %v11627
    %v12350 = vunpack.c.h.b16 %v11627
    %v12351 = vunpack.c.l.b16 %v11628
    %v12352 = vunpack.c.h.b16 %v11628
    %v12353 = vunpack.c.l.b16 %v11629
    %v12354 = vunpack.c.h.b16 %v11629
    %v12355 = vunpack.c.l.b16 %v11630
    %v12356 = vunpack.c.h.b16 %v11630
    %v12357 = vunpack.c.l.b16 %v11631
    %v12358 = vunpack.c.h.b16 %v11631
    %v12359 = vunpack.c.l.b16 %v11632
    %v12360 = vunpack.c.h.b16 %v11632
    %v12361 = vunpack.c.l.b16 %v11633
    %v12362 = vunpack.c.h.b16 %v11633
    %v12363 = vunpack.c.l.b16 %v11634
    %v12364 = vunpack.c.h.b16 %v11634
    %v12365 = vunpack.c.l.b16 %v11635
    %v12366 = vunpack.c.h.b16 %v11635
    %v12367 = vunpack.c.l.b16 %v11636
    %v12368 = vunpack.c.h.b16 %v11636
    %v12369 = vunpack.c.l.b16 %v11637
    %v12370 = vunpack.c.h.b16 %v11637
    %v12371 = vunpack.c.l.b16 %v11638
    %v12372 = vunpack.c.h.b16 %v11638
    %v12373 = vunpack.c.l.b16 %v11639
    %v12374 = vunpack.c.h.b16 %v11639
    %v12375 = vunpack.c.l.b16 %v11640
    %v12376 = vunpack.c.h.b16 %v11640
    %v12377 = vunpack.c.l.b16 %v11641
    %v12378 = vunpack.c.h.b16 %v11641
    %v12379 = vunpack.c.l.b16 %v11642
    %v12380 = vunpack.c.h.b16 %v11642
    %v12381 = vunpack.c.l.b16 %v11643
    %v12382 = vunpack.c.h.b16 %v11643
    %v12383 = vunpack.c.l.b16 %v11644
    %v12384 = vunpack.c.h.b16 %v11644
    %v12385 = vunpack.c.l.b16 %v11645
    %v12386 = vunpack.c.h.b16 %v11645
    %v12387 = vunpack.c.l.b16 %v11646
    %v12388 = vunpack.c.h.b16 %v11646
    %v12389 = vunpack.c.l.b16 %v11647
    %v12390 = vunpack.c.h.b16 %v11647
    %v12391 = vunpack.c.l.b16 %v11648
    %v12392 = vunpack.c.h.b16 %v11648
    %v12393 = vunpack.c.l.b16 %v11649
    %v12394 = vunpack.c.h.b16 %v11649
    %v12395 = vunpack.c.l.b16 %v11650
    %v12396 = vunpack.c.h.b16 %v11650
    %v12397 = vunpack.c.l.b16 %v11651
    %v12398 = vunpack.c.h.b16 %v11651
    %v12399 = vunpack.c.l.b16 %v11652
    %v12400 = vunpack.c.h.b16 %v11652
    %v12401 = vunpack.c.l.b16 %v11653
    %v12402 = vunpack.c.h.b16 %v11653
    %v12403 = vunpack.c.l.b16 %v11654
    %v12404 = vunpack.c.h.b16 %v11654
    %v12405 = vunpack.c.l.b16 %v11655
    %v12406 = vunpack.c.h.b16 %v11655
    %v12407 = vunpack.c.l.b16 %v11656
    %v12408 = vunpack.c.h.b16 %v11656
    %v12409 = vunpack.c.l.b16 %v11657
    %v12410 = vunpack.c.h.b16 %v11657
    %v12411 = vunpack.c.l.b16 %v11658
    %v12412 = vunpack.c.h.b16 %v11658
    %v12413 = vunpack.c.l.b16 %v11659
    %v12414 = vunpack.c.h.b16 %v11659
    %v12415 = vunpack.c.l.b16 %v11660
    %v12416 = vunpack.c.h.b16 %v11660
    %v12417 = vunpack.c.l.b16 %v11661
    %v12418 = vunpack.c.h.b16 %v11661
    %v12419 = vunpack.c.l.b16 %v11662
    %v12420 = vunpack.c.h.b16 %v11662
    %v12421 = vunpack.c.l.b16 %v11663
    %v12422 = vunpack.c.h.b16 %v11663
    %v12423 = vunpack.c.l.b16 %v11664
    %v12424 = vunpack.c.h.b16 %v11664
    %v12425 = vunpack.c.l.b16 %v11665
    %v12426 = vunpack.c.h.b16 %v11665
    %v12427 = vunpack.c.l.b16 %v11666
    %v12428 = vunpack.c.h.b16 %v11666
    %v12429 = vunpack.c.l.b16 %v11667
    %v12430 = vunpack.c.h.b16 %v11667
    %v12431 = vunpack.c.l.b16 %v11668
    %v12432 = vunpack.c.h.b16 %v11668
    %v12433 = vunpack.c.l.b16 %v11669
    %v12434 = vunpack.c.h.b16 %v11669
    %v12435 = vunpack.c.l.b16 %v11670
    %v12436 = vunpack.c.h.b16 %v11670
    %v12437 = vunpack.c.l.b16 %v11671
    %v12438 = vunpack.c.h.b16 %v11671
    %v12439 = vunpack.c.l.b16 %v11672
    %v12440 = vunpack.c.h.b16 %v11672
    %v12441 = vunpack.c.l.b16 %v11673
    %v12442 = vunpack.c.h.b16 %v11673
    %v12443 = vunpack.c.l.b16 %v11674
    %v12444 = vunpack.c.h.b16 %v11674
    %v12445 = vunpack.c.l.b16 %v11675
    %v12446 = vunpack.c.h.b16 %v11675
    %v12447 = vunpack.c.l.b16 %v11676
    %v12448 = vunpack.c.h.b16 %v11676
    %v12449 = vunpack.c.l.b16 %v11677
    %v12450 = vunpack.c.h.b16 %v11677
    %v12451 = vunpack.c.l.b16 %v11678
    %v12452 = vunpack.c.h.b16 %v11678
    %v12453 = vunpack.c.l.b16 %v11679
    %v12454 = vunpack.c.h.b16 %v11679
    %v12455 = vunpack.c.l.b16 %v11680
    %v12456 = vunpack.c.h.b16 %v11680
    %v12457 = vunpack.c.l.b16 %v11681
    %v12458 = vunpack.c.h.b16 %v11681
    %v12459 = vunpack.c.l.b16 %v11682
    %v12460 = vunpack.c.h.b16 %v11682
    %v12461 = vunpack.c.l.b16 %v11683
    %v12462 = vunpack.c.h.b16 %v11683
    %v12463 = vunpack.c.l.b16 %v11684
    %v12464 = vunpack.c.h.b16 %v11684
    %v12465 = vunpack.c.l.b16 %v11685
    %v12466 = vunpack.c.h.b16 %v11685
    %v12467 = vunpack.c.l.b16 %v11686
    %v12468 = vunpack.c.h.b16 %v11686
    %v12469 = vunpack.c.l.b16 %v11687
    %v12470 = vunpack.c.h.b16 %v11687
    %v12471 = vunpack.c.l.b16 %v11688
    %v12472 = vunpack.c.h.b16 %v11688
    %v12473 = vunpack.c.l.b16 %v11689
    %v12474 = vunpack.c.h.b16 %v11689
    %v12475 = vunpack.c.l.b16 %v11690
    %v12476 = vunpack.c.h.b16 %v11690
    %v12477 = vunpack.c.l.b16 %v11691
    %v12478 = vunpack.c.h.b16 %v11691
    %v12479 = vunpack.c.l.b16 %v11692
    %v12480 = vunpack.c.h.b16 %v11692
    %v12481 = vunpack.c.l.b16 %v11693
    %v12482 = vunpack.c.h.b16 %v11693
    %v12483 = vunpack.c.l.b16 %v11694
    %v12484 = vunpack.c.h.b16 %v11694
    %v12485 = vunpack.c.l.b16 %v11695
    %v12486 = vunpack.c.h.b16 %v11695
    %v12487 = vunpack.c.l.b16 %v11696
    %v12488 = vunpack.c.h.b16 %v11696
    %v12489 = vunpack.c.l.b16 %v11697
    %v12490 = vunpack.c.h.b16 %v11697
    %v12491 = vunpack.c.l.b16 %v11698
    %v12492 = vunpack.c.h.b16 %v11698
    %v12493 = vunpack.c.l.b16 %v11699
    %v12494 = vunpack.c.h.b16 %v11699
    %v12495 = vunpack.c.l.b16 %v11700
    %v12496 = vunpack.c.h.b16 %v11700
    %v12497 = vunpack.c.l.b16 %v11701
    %v12498 = vunpack.c.h.b16 %v11701
    %v12499 = vunpack.c.l.b16 %v11702
    %v12500 = vunpack.c.h.b16 %v11702
    %v12501 = vunpack.c.l.b16 %v11703
    %v12502 = vunpack.c.h.b16 %v11703
    %v12503 = vunpack.c.l.b16 %v11704
    %v12504 = vunpack.c.h.b16 %v11704
    %v12505 = vunpack.c.l.b16 %v11705
    %v12506 = vunpack.c.h.b16 %v11705
    %v12507 = vunpack.c.l.b16 %v11706
    %v12508 = vunpack.c.h.b16 %v11706
    %v12509 = vunpack.c.l.b16 %v11707
    %v12510 = vunpack.c.h.b16 %v11707
    %v12511 = vunpack.c.l.b16 %v11708
    %v12512 = vunpack.c.h.b16 %v11708
    %v12513 = vunpack.c.l.b16 %v11709
    %v12514 = vunpack.c.h.b16 %v11709
    %v12515 = vunpack.c.l.b16 %v11710
    %v12516 = vunpack.c.h.b16 %v11710
    %v12517 = vunpack.c.l.b16 %v11711
    %v12518 = vunpack.c.h.b16 %v11711
    %v12519 = vunpack.c.l.b16 %v11712
    %v12520 = vunpack.c.h.b16 %v11712
    %v12521 = vunpack.c.l.b16 %v11713
    %v12522 = vunpack.c.h.b16 %v11713
    %v12523 = vunpack.c.l.b16 %v11714
    %v12524 = vunpack.c.h.b16 %v11714
    %v12525 = vunpack.c.l.b16 %v11715
    %v12526 = vunpack.c.h.b16 %v11715
    %v12527 = vunpack.c.l.b16 %v11716
    %v12528 = vunpack.c.h.b16 %v11716
    %v12529 = vunpack.c.l.b16 %v11717
    %v12530 = vunpack.c.h.b16 %v11717
    %v12531 = vunpack.c.l.b16 %v11718
    %v12532 = vunpack.c.h.b16 %v11718
    %v12533 = vunpack.c.l.b16 %v11719
    %v12534 = vunpack.c.h.b16 %v11719
    %v12535 = vunpack.c.l.b16 %v11720
    %v12536 = vunpack.c.h.b16 %v11720
    %v12537 = vunpack.c.l.b16 %v11721
    %v12538 = vunpack.c.h.b16 %v11721
    %v12539 = vunpack.c.l.b16 %v11722
    %v12540 = vunpack.c.h.b16 %v11722
    %v12541 = vunpack.c.l.b16 %v11723
    %v12542 = vunpack.c.h.b16 %v11723
    %v12543 = vunpack.c.l.b16 %v11724
    %v12544 = vunpack.c.h.b16 %v11724
    %v12545 = vunpack.c.l.b16 %v11725
    %v12546 = vunpack.c.h.b16 %v11725
    %v12547 = vunpack.c.l.b16 %v11726
    %v12548 = vunpack.c.h.b16 %v11726
    %v12549 = vunpack.c.l.b16 %v11727
    %v12550 = vunpack.c.h.b16 %v11727
    %v12551 = vunpack.c.l.b16 %v11728
    %v12552 = vunpack.c.h.b16 %v11728
    %v12553 = vunpack.c.l.b16 %v11729
    %v12554 = vunpack.c.h.b16 %v11729
    %v12555 = vunpack.c.l.b16 %v11730
    %v12556 = vunpack.c.h.b16 %v11730
    %v12557 = vunpack.c.l.b16 %v11731
    %v12558 = vunpack.c.h.b16 %v11731
    %v12559 = vunpack.c.l.b16 %v11732
    %v12560 = vunpack.c.h.b16 %v11732
    %v12561 = vunpack.c.l.b16 %v11733
    %v12562 = vunpack.c.h.b16 %v11733
    %v12563 = vunpack.c.l.b16 %v11734
    %v12564 = vunpack.c.h.b16 %v11734
    %v12565 = vunpack.c.l.b16 %v11735
    %v12566 = vunpack.c.h.b16 %v11735
    %v12567 = vunpack.c.l.b16 %v11736
    %v12568 = vunpack.c.h.b16 %v11736
    %v12569 = vunpack.c.l.b16 %v11737
    %v12570 = vunpack.c.h.b16 %v11737
    %v12571 = vunpack.c.l.b16 %v11738
    %v12572 = vunpack.c.h.b16 %v11738
    %v12573 = vunpack.c.l.b16 %v11739
    %v12574 = vunpack.c.h.b16 %v11739
    %v12575 = vunpack.c.l.b16 %v11740
    %v12576 = vunpack.c.h.b16 %v11740
    %v12577 = vunpack.c.l.b16 %v11741
    %v12578 = vunpack.c.h.b16 %v11741
    %v12579 = vunpack.c.l.b16 %v11742
    %v12580 = vunpack.c.h.b16 %v11742
    %v12581 = vunpack.c.l.b16 %v11743
    %v12582 = vunpack.c.h.b16 %v11743
    %v12583 = vunpack.c.l.b16 %v11744
    %v12584 = vunpack.c.h.b16 %v11744
    %v12585 = vunpack.c.l.b16 %v11745
    %v12586 = vunpack.c.h.b16 %v11745
    %v12587 = vunpack.c.l.b16 %v11746
    %v12588 = vunpack.c.h.b16 %v11746
    %v12589 = vunpack.c.l.b16 %v11747
    %v12590 = vunpack.c.h.b16 %v11747
    %v12591 = vunpack.c.l.b16 %v11748
    %v12592 = vunpack.c.h.b16 %v11748
    %v12593 = vunpack.c.l.b16 %v11749
    %v12594 = vunpack.c.h.b16 %v11749
    %v12595 = vunpack.c.l.b16 %v11750
    %v12596 = vunpack.c.h.b16 %v11750
    %v12597 = vunpack.c.l.b16 %v11751
    %v12598 = vunpack.c.h.b16 %v11751
    %v12599 = vunpack.c.l.b16 %v11752
    %v12600 = vunpack.c.h.b16 %v11752
    %v12601 = vunpack.c.l.b16 %v11753
    %v12602 = vunpack.c.h.b16 %v11753
    %v12603 = vunpack.c.l.b16 %v11754
    %v12604 = vunpack.c.h.b16 %v11754
    %v12605 = vunpack.c.l.b16 %v11755
    %v12606 = vunpack.c.h.b16 %v11755
    %v12607 = vunpack.c.l.b16 %v11756
    %v12608 = vunpack.c.h.b16 %v11756
    %v12609 = vunpack.c.l.b16 %v11757
    %v12610 = vunpack.c.h.b16 %v11757
    %v12611 = vunpack.c.l.b16 %v11758
    %v12612 = vunpack.c.h.b16 %v11758
    %v12613 = vunpack.c.l.b16 %v11759
    %v12614 = vunpack.c.h.b16 %v11759
    %v12615 = vunpack.c.l.b16 %v11760
    %v12616 = vunpack.c.h.b16 %v11760
    %v12617 = vunpack.c.l.b16 %v11761
    %v12618 = vunpack.c.h.b16 %v11761
    %v12619 = vunpack.c.l.b16 %v11762
    %v12620 = vunpack.c.h.b16 %v11762
    %v12621 = vunpack.c.l.b16 %v11763
    %v12622 = vunpack.c.h.b16 %v11763
    %v12623 = vunpack.c.l.b16 %v11764
    %v12624 = vunpack.c.h.b16 %v11764
    %v12625 = vunpack.c.l.b16 %v11765
    %v12626 = vunpack.c.h.b16 %v11765
    %v12627 = vunpack.c.l.b16 %v11766
    %v12628 = vunpack.c.h.b16 %v11766
    %v12629 = vunpack.c.l.b16 %v11767
    %v12630 = vunpack.c.h.b16 %v11767
    %v12631 = vunpack.c.l.b16 %v11768
    %v12632 = vunpack.c.h.b16 %v11768
    %v12633 = vunpack.c.l.b16 %v11769
    %v12634 = vunpack.c.h.b16 %v11769
    %v12635 = vunpack.c.l.b16 %v11770
    %v12636 = vunpack.c.h.b16 %v11770
    %v12637 = vunpack.c.l.b16 %v11771
    %v12638 = vunpack.c.h.b16 %v11771
    %v12639 = vunpack.c.l.b16 %v11772
    %v12640 = vunpack.c.h.b16 %v11772
    %v12641 = vunpack.c.l.b16 %v11773
    %v12642 = vunpack.c.h.b16 %v11773
    %v12643 = vunpack.c.l.b16 %v11774
    %v12644 = vunpack.c.h.b16 %v11774
    %v12645 = vunpack.c.l.b16 %v11775
    %v12646 = vunpack.c.h.b16 %v11775
    %v12647 = vunpack.c.l.b16 %v11776
    %v12648 = vunpack.c.h.b16 %v11776
    %v12649 = vunpack.c.l.b16 %v11777
    %v12650 = vunpack.c.h.b16 %v11777
    %v12651 = vunpack.c.l.b16 %v11778
    %v12652 = vunpack.c.h.b16 %v11778
    %v12653 = vunpack.c.l.b16 %v11779
    %v12654 = vunpack.c.h.b16 %v11779
    %v12655 = vunpack.c.l.b16 %v11780
    %v12656 = vunpack.c.h.b16 %v11780
    %v12657 = vunpack.c.l.b16 %v11781
    %v12658 = vunpack.c.h.b16 %v11781
    %v12659 = vunpack.c.l.b16 %v11782
    %v12660 = vunpack.c.h.b16 %v11782
    %v12661 = vunpack.c.l.b16 %v11783
    %v12662 = vunpack.c.h.b16 %v11783
    %v12663 = vunpack.c.l.b16 %v11784
    %v12664 = vunpack.c.h.b16 %v11784
    %v12665 = vunpack.c.l.b16 %v11785
    %v12666 = vunpack.c.h.b16 %v11785
    %v12667 = vunpack.c.l.b16 %v11786
    %v12668 = vunpack.c.h.b16 %v11786
    %v12669 = vpack.c.b16 %v12097, %v12093
    %v12670 = vpack.c.b16 %v12098, %v12094
    %v12671 = vpack.c.b16 %v12099, %v12095
    %v12672 = vpack.c.b16 %v12100, %v12096
    %v12673 = vpack.c.b16 %v12105, %v12101
    %v12674 = vpack.c.b16 %v12106, %v12102
    %v12675 = vpack.c.b16 %v12107, %v12103
    %v12676 = vpack.c.b16 %v12108, %v12104
    %v12677 = vpack.c.b16 %v12113, %v12109
    %v12678 = vpack.c.b16 %v12114, %v12110
    %v12679 = vpack.c.b16 %v12115, %v12111
    %v12680 = vpack.c.b16 %v12116, %v12112
    %v12681 = vpack.c.b16 %v12121, %v12117
    %v12682 = vpack.c.b16 %v12122, %v12118
    %v12683 = vpack.c.b16 %v12123, %v12119
    %v12684 = vpack.c.b16 %v12124, %v12120
    %v12685 = vpack.c.b16 %v12129, %v12125
    %v12686 = vpack.c.b16 %v12130, %v12126
    %v12687 = vpack.c.b16 %v12131, %v12127
    %v12688 = vpack.c.b16 %v12132, %v12128
    %v12689 = vpack.c.b16 %v12137, %v12133
    %v12690 = vpack.c.b16 %v12138, %v12134
    %v12691 = vpack.c.b16 %v12139, %v12135
    %v12692 = vpack.c.b16 %v12140, %v12136
    %v12693 = vpack.c.b16 %v12145, %v12141
    %v12694 = vpack.c.b16 %v12146, %v12142
    %v12695 = vpack.c.b16 %v12147, %v12143
    %v12696 = vpack.c.b16 %v12148, %v12144
    %v12697 = vpack.c.b16 %v12153, %v12149
    %v12698 = vpack.c.b16 %v12154, %v12150
    %v12699 = vpack.c.b16 %v12155, %v12151
    %v12700 = vpack.c.b16 %v12156, %v12152
    %v12701 = vpack.c.b16 %v12161, %v12157
    %v12702 = vpack.c.b16 %v12162, %v12158
    %v12703 = vpack.c.b16 %v12163, %v12159
    %v12704 = vpack.c.b16 %v12164, %v12160
    %v12705 = vpack.c.b16 %v12169, %v12165
    %v12706 = vpack.c.b16 %v12170, %v12166
    %v12707 = vpack.c.b16 %v12171, %v12167
    %v12708 = vpack.c.b16 %v12172, %v12168
    %v12709 = vpack.c.b16 %v12177, %v12173
    %v12710 = vpack.c.b16 %v12178, %v12174
    %v12711 = vpack.c.b16 %v12179, %v12175
    %v12712 = vpack.c.b16 %v12180, %v12176
    %v12713 = vpack.c.b16 %v12185, %v12181
    %v12714 = vpack.c.b16 %v12186, %v12182
    %v12715 = vpack.c.b16 %v12187, %v12183
    %v12716 = vpack.c.b16 %v12188, %v12184
    %v12717 = vpack.c.b16 %v12193, %v12189
    %v12718 = vpack.c.b16 %v12194, %v12190
    %v12719 = vpack.c.b16 %v12195, %v12191
    %v12720 = vpack.c.b16 %v12196, %v12192
    %v12721 = vpack.c.b16 %v12201, %v12197
    %v12722 = vpack.c.b16 %v12202, %v12198
    %v12723 = vpack.c.b16 %v12203, %v12199
    %v12724 = vpack.c.b16 %v12204, %v12200
    %v12725 = vpack.c.b16 %v12209, %v12205
    %v12726 = vpack.c.b16 %v12210, %v12206
    %v12727 = vpack.c.b16 %v12211, %v12207
    %v12728 = vpack.c.b16 %v12212, %v12208
    %v12729 = vpack.c.b16 %v12217, %v12213
    %v12730 = vpack.c.b16 %v12218, %v12214
    %v12731 = vpack.c.b16 %v12219, %v12215
    %v12732 = vpack.c.b16 %v12220, %v12216
    %v12733 = vpack.c.b16 %v12225, %v12221
    %v12734 = vpack.c.b16 %v12226, %v12222
    %v12735 = vpack.c.b16 %v12227, %v12223
    %v12736 = vpack.c.b16 %v12228, %v12224
    %v12737 = vpack.c.b16 %v12233, %v12229
    %v12738 = vpack.c.b16 %v12234, %v12230
    %v12739 = vpack.c.b16 %v12235, %v12231
    %v12740 = vpack.c.b16 %v12236, %v12232
    %v12741 = vpack.c.b16 %v12241, %v12237
    %v12742 = vpack.c.b16 %v12242, %v12238
    %v12743 = vpack.c.b16 %v12243, %v12239
    %v12744 = vpack.c.b16 %v12244, %v12240
    %v12745 = vpack.c.b16 %v12249, %v12245
    %v12746 = vpack.c.b16 %v12250, %v12246
    %v12747 = vpack.c.b16 %v12251, %v12247
    %v12748 = vpack.c.b16 %v12252, %v12248
    %v12749 = vpack.c.b16 %v12257, %v12253
    %v12750 = vpack.c.b16 %v12258, %v12254
    %v12751 = vpack.c.b16 %v12259, %v12255
    %v12752 = vpack.c.b16 %v12260, %v12256
    %v12753 = vpack.c.b16 %v12265, %v12261
    %v12754 = vpack.c.b16 %v12266, %v12262
    %v12755 = vpack.c.b16 %v12267, %v12263
    %v12756 = vpack.c.b16 %v12268, %v12264
    %v12757 = vpack.c.b16 %v12273, %v12269
    %v12758 = vpack.c.b16 %v12274, %v12270
    %v12759 = vpack.c.b16 %v12275, %v12271
    %v12760 = vpack.c.b16 %v12276, %v12272
    %v12761 = vpack.c.b16 %v12281, %v12277
    %v12762 = vpack.c.b16 %v12282, %v12278
    %v12763 = vpack.c.b16 %v12283, %v12279
    %v12764 = vpack.c.b16 %v12284, %v12280
    %v12765 = vpack.c.b16 %v12289, %v12285
    %v12766 = vpack.c.b16 %v12290, %v12286
    %v12767 = vpack.c.b16 %v12291, %v12287
    %v12768 = vpack.c.b16 %v12292, %v12288
    %v12769 = vpack.c.b16 %v12297, %v12293
    %v12770 = vpack.c.b16 %v12298, %v12294
    %v12771 = vpack.c.b16 %v12299, %v12295
    %v12772 = vpack.c.b16 %v12300, %v12296
    %v12773 = vpack.c.b16 %v12305, %v12301
    %v12774 = vpack.c.b16 %v12306, %v12302
    %v12775 = vpack.c.b16 %v12307, %v12303
    %v12776 = vpack.c.b16 %v12308, %v12304
    %v12777 = vpack.c.b16 %v12313, %v12309
    %v12778 = vpack.c.b16 %v12314, %v12310
    %v12779 = vpack.c.b16 %v12315, %v12311
    %v12780 = vpack.c.b16 %v12316, %v12312
    %v12781 = vpack.c.b16 %v12321, %v12317
    %v12782 = vpack.c.b16 %v12322, %v12318
    %v12783 = vpack.c.b16 %v12323, %v12319
    %v12784 = vpack.c.b16 %v12324, %v12320
    %v12785 = vpack.c.b16 %v12329, %v12325
    %v12786 = vpack.c.b16 %v12330, %v12326
    %v12787 = vpack.c.b16 %v12331, %v12327
    %v12788 = vpack.c.b16 %v12332, %v12328
    %v12789 = vpack.c.b16 %v12337, %v12333
    %v12790 = vpack.c.b16 %v12338, %v12334
    %v12791 = vpack.c.b16 %v12339, %v12335
    %v12792 = vpack.c.b16 %v12340, %v12336
    %v12793 = vpack.c.b16 %v12345, %v12341
    %v12794 = vpack.c.b16 %v12346, %v12342
    %v12795 = vpack.c.b16 %v12347, %v12343
    %v12796 = vpack.c.b16 %v12348, %v12344
    %v12797 = vpack.c.b16 %v12353, %v12349
    %v12798 = vpack.c.b16 %v12354, %v12350
    %v12799 = vpack.c.b16 %v12355, %v12351
    %v12800 = vpack.c.b16 %v12356, %v12352
    %v12801 = vpack.c.b16 %v12361, %v12357
    %v12802 = vpack.c.b16 %v12362, %v12358
    %v12803 = vpack.c.b16 %v12363, %v12359
    %v12804 = vpack.c.b16 %v12364, %v12360
    %v12805 = vpack.c.b16 %v12369, %v12365
    %v12806 = vpack.c.b16 %v12370, %v12366
    %v12807 = vpack.c.b16 %v12371, %v12367
    %v12808 = vpack.c.b16 %v12372, %v12368
    %v12809 = vpack.c.b16 %v12377, %v12373
    %v12810 = vpack.c.b16 %v12378, %v12374
    %v12811 = vpack.c.b16 %v12379, %v12375
    %v12812 = vpack.c.b16 %v12380, %v12376
    %v12813 = vpack.c.b16 %v12385, %v12381
    %v12814 = vpack.c.b16 %v12386, %v12382
    %v12815 = vpack.c.b16 %v12387, %v12383
    %v12816 = vpack.c.b16 %v12388, %v12384
    %v12817 = vpack.c.b16 %v12393, %v12389
    %v12818 = vpack.c.b16 %v12394, %v12390
    %v12819 = vpack.c.b16 %v12395, %v12391
    %v12820 = vpack.c.b16 %v12396, %v12392
    %v12821 = vpack.c.b16 %v12401, %v12397
    %v12822 = vpack.c.b16 %v12402, %v12398
    %v12823 = vpack.c.b16 %v12403, %v12399
    %v12824 = vpack.c.b16 %v12404, %v12400
    %v12825 = vpack.c.b16 %v12409, %v12405
    %v12826 = vpack.c.b16 %v12410, %v12406
    %v12827 = vpack.c.b16 %v12411, %v12407
    %v12828 = vpack.c.b16 %v12412, %v12408
    %v12829 = vpack.c.b16 %v12417, %v12413
    %v12830 = vpack.c.b16 %v12418, %v12414
    %v12831 = vpack.c.b16 %v12419, %v12415
    %v12832 = vpack.c.b16 %v12420, %v12416
    %v12833 = vpack.c.b16 %v12425, %v12421
    %v12834 = vpack.c.b16 %v12426, %v12422
    %v12835 = vpack.c.b16 %v12427, %v12423
    %v12836 = vpack.c.b16 %v12428, %v12424
    %v12837 = vpack.c.b16 %v12433, %v12429
    %v12838 = vpack.c.b16 %v12434, %v12430
    %v12839 = vpack.c.b16 %v12435, %v12431
    %v12840 = vpack.c.b16 %v12436, %v12432
    %v12841 = vpack.c.b16 %v12441, %v12437
    %v12842 = vpack.c.b16 %v12442, %v12438
    %v12843 = vpack.c.b16 %v12443, %v12439
    %v12844 = vpack.c.b16 %v12444, %v12440
    %v12845 = vpack.c.b16 %v12449, %v12445
    %v12846 = vpack.c.b16 %v12450, %v12446
    %v12847 = vpack.c.b16 %v12451, %v12447
    %v12848 = vpack.c.b16 %v12452, %v12448
    %v12849 = vpack.c.b16 %v12457, %v12453
    %v12850 = vpack.c.b16 %v12458, %v12454
    %v12851 = vpack.c.b16 %v12459, %v12455
    %v12852 = vpack.c.b16 %v12460, %v12456
    %v12853 = vpack.c.b16 %v12465, %v12461
    %v12854 = vpack.c.b16 %v12466, %v12462
    %v12855 = vpack.c.b16 %v12467, %v12463
    %v12856 = vpack.c.b16 %v12468, %v12464
    %v12857 = vpack.c.b16 %v12473, %v12469
    %v12858 = vpack.c.b16 %v12474, %v12470
    %v12859 = vpack.c.b16 %v12475, %v12471
    %v12860 = vpack.c.b16 %v12476, %v12472
    %v12861 = vpack.c.b16 %v12481, %v12477
    %v12862 = vpack.c.b16 %v12482, %v12478
    %v12863 = vpack.c.b16 %v12483, %v12479
    %v12864 = vpack.c.b16 %v12484, %v12480
    %v12865 = vpack.c.b16 %v12489, %v12485
    %v12866 = vpack.c.b16 %v12490, %v12486
    %v12867 = vpack.c.b16 %v12491, %v12487
    %v12868 = vpack.c.b16 %v12492, %v12488
    %v12869 = vpack.c.b16 %v12497, %v12493
    %v12870 = vpack.c.b16 %v12498, %v12494
    %v12871 = vpack.c.b16 %v12499, %v12495
    %v12872 = vpack.c.b16 %v12500, %v12496
    %v12873 = vpack.c.b16 %v12505, %v12501
    %v12874 = vpack.c.b16 %v12506, %v12502
    %v12875 = vpack.c.b16 %v12507, %v12503
    %v12876 = vpack.c.b16 %v12508, %v12504
    %v12877 = vpack.c.b16 %v12513, %v12509
    %v12878 = vpack.c.b16 %v12514, %v12510
    %v12879 = vpack.c.b16 %v12515, %v12511
    %v12880 = vpack.c.b16 %v12516, %v12512
    %v12881 = vpack.c.b16 %v12521, %v12517
    %v12882 = vpack.c.b16 %v12522, %v12518
    %v12883 = vpack.c.b16 %v12523, %v12519
    %v12884 = vpack.c.b16 %v12524, %v12520
    %v12885 = vpack.c.b16 %v12529, %v12525
    %v12886 = vpack.c.b16 %v12530, %v12526
    %v12887 = vpack.c.b16 %v12531, %v12527
    %v12888 = vpack.c.b16 %v12532, %v12528
    %v12889 = vpack.c.b16 %v12537, %v12533
    %v12890 = vpack.c.b16 %v12538, %v12534
    %v12891 = vpack.c.b16 %v12539, %v12535
    %v12892 = vpack.c.b16 %v12540, %v12536
    %v12893 = vpack.c.b16 %v12545, %v12541
    %v12894 = vpack.c.b16 %v12546, %v12542
    %v12895 = vpack.c.b16 %v12547, %v12543
    %v12896 = vpack.c.b16 %v12548, %v12544
    %v12897 = vpack.c.b16 %v12553, %v12549
    %v12898 = vpack.c.b16 %v12554, %v12550
    %v12899 = vpack.c.b16 %v12555, %v12551
    %v12900 = vpack.c.b16 %v12556, %v12552
    %v12901 = vpack.c.b16 %v12561, %v12557
    %v12902 = vpack.c.b16 %v12562, %v12558
    %v12903 = vpack.c.b16 %v12563, %v12559
    %v12904 = vpack.c.b16 %v12564, %v12560
    %v12905 = vpack.c.b16 %v12569, %v12565
    %v12906 = vpack.c.b16 %v12570, %v12566
    %v12907 = vpack.c.b16 %v12571, %v12567
    %v12908 = vpack.c.b16 %v12572, %v12568
    %v12909 = vpack.c.b16 %v12577, %v12573
    %v12910 = vpack.c.b16 %v12578, %v12574
    %v12911 = vpack.c.b16 %v12579, %v12575
    %v12912 = vpack.c.b16 %v12580, %v12576
    %v12913 = vpack.c.b16 %v12585, %v12581
    %v12914 = vpack.c.b16 %v12586, %v12582
    %v12915 = vpack.c.b16 %v12587, %v12583
    %v12916 = vpack.c.b16 %v12588, %v12584
    %v12917 = vpack.c.b16 %v12593, %v12589
    %v12918 = vpack.c.b16 %v12594, %v12590
    %v12919 = vpack.c.b16 %v12595, %v12591
    %v12920 = vpack.c.b16 %v12596, %v12592
    %v12921 = vpack.c.b16 %v12601, %v12597
    %v12922 = vpack.c.b16 %v12602, %v12598
    %v12923 = vpack.c.b16 %v12603, %v12599
    %v12924 = vpack.c.b16 %v12604, %v12600
    %v12925 = vpack.c.b16 %v12609, %v12605
    %v12926 = vpack.c.b16 %v12610, %v12606
    %v12927 = vpack.c.b16 %v12611, %v12607
    %v12928 = vpack.c.b16 %v12612, %v12608
    %v12929 = vpack.c.b16 %v12617, %v12613
    %v12930 = vpack.c.b16 %v12618, %v12614
    %v12931 = vpack.c.b16 %v12619, %v12615
    %v12932 = vpack.c.b16 %v12620, %v12616
    %v12933 = vpack.c.b16 %v12625, %v12621
    %v12934 = vpack.c.b16 %v12626, %v12622
    %v12935 = vpack.c.b16 %v12627, %v12623
    %v12936 = vpack.c.b16 %v12628, %v12624
    %v12937 = vpack.c.b16 %v12633, %v12629
    %v12938 = vpack.c.b16 %v12634, %v12630
    %v12939 = vpack.c.b16 %v12635, %v12631
    %v12940 = vpack.c.b16 %v12636, %v12632
    %v12941 = vpack.c.b16 %v12641, %v12637
    %v12942 = vpack.c.b16 %v12642, %v12638
    %v12943 = vpack.c.b16 %v12643, %v12639
    %v12944 = vpack.c.b16 %v12644, %v12640
    %v12945 = vpack.c.b16 %v12649, %v12645
    %v12946 = vpack.c.b16 %v12650, %v12646
    %v12947 = vpack.c.b16 %v12651, %v12647
    %v12948 = vpack.c.b16 %v12652, %v12648
    %v12949 = vpack.c.b16 %v12657, %v12653
    %v12950 = vpack.c.b16 %v12658, %v12654
    %v12951 = vpack.c.b16 %v12659, %v12655
    %v12952 = vpack.c.b16 %v12660, %v12656
    %v12953 = vpack.c.b16 %v12665, %v12661
    %v12954 = vpack.c.b16 %v12666, %v12662
    %v12955 = vpack.c.b16 %v12667, %v12663
    %v12956 = vpack.c.b16 %v12668, %v12664
    %13245 = vmatprep.subr.bf16.mxu0 %v12670
    %13246 = vmatpush1.bf16.msra.mxu0 %v12669
    %13247 = vmatprep.subr.bf16.mxu0 %v12674
    %13248 = vmatpush1.bf16.msra.mxu0 %v12673
    %13249 = vmatprep.subr.bf16.mxu0 %v12678
    %13250 = vmatpush1.bf16.msra.mxu0 %v12677
    %13251 = vmatprep.subr.bf16.mxu0 %v12682
    %13252 = vmatpush1.bf16.msra.mxu0 %v12681
    %13253 = vmatprep.subr.bf16.mxu0 %v12686
    %13254 = vmatpush1.bf16.msra.mxu0 %v12685
    %13255 = vmatprep.subr.bf16.mxu0 %v12690
    %13256 = vmatpush1.bf16.msra.mxu0 %v12689
    %13257 = vmatprep.subr.bf16.mxu0 %v12694
    %13258 = vmatpush1.bf16.msra.mxu0 %v12693
    %13259 = vmatprep.subr.bf16.mxu0 %v12698
    %13260 = vmatpush1.bf16.msra.mxu0 %v12697
    %13261 = vmatprep.subr.bf16.mxu0 %v12702
    %13262 = vmatpush1.bf16.msra.mxu0 %v12701
    %13263 = vmatprep.subr.bf16.mxu0 %v12706
    %13264 = vmatpush1.bf16.msra.mxu0 %v12705
    %13265 = vmatprep.subr.bf16.mxu0 %v12710
    %13266 = vmatpush1.bf16.msra.mxu0 %v12709
    %13267 = vmatprep.subr.bf16.mxu0 %v12714
    %13268 = vmatpush1.bf16.msra.mxu0 %v12713
    %13269 = vmatprep.subr.bf16.mxu0 %v12718
    %13270 = vmatpush1.bf16.msra.mxu0 %v12717
    %13271 = vmatprep.subr.bf16.mxu0 %v12722
    %13272 = vmatpush1.bf16.msra.mxu0 %v12721
    %13273 = vmatprep.subr.bf16.mxu0 %v12726
    %13274 = vmatpush1.bf16.msra.mxu0 %v12725
    %13275 = vmatprep.subr.bf16.mxu0 %v12730
    %13276 = vmatpush1.bf16.msra.mxu0 %v12729
    %13277 = vmatprep.mubr.bf16.mxu0 %v11788
    %13278 = vmatmul.mubr.bf16.gmra.mrb[0].mxu0 %v11787
    %v13279 = vpop.f32.mrb[0].mxu0
    %v13280 = vadd.f32 0.0, %v13279
    %v13281 = vpop.f32.mrb[0].mxu0
    %v13282 = vadd.f32 0.0, %v13281
    %v13283 = vpop.f32.mrb[0].mxu0
    %v13284 = vadd.f32 0.0, %v13283
    %v13285 = vpop.f32.mrb[0].mxu0
    %v13286 = vadd.f32 0.0, %v13285
    %13287 = vdwg.mxu0
    %13288 = vmatprep.subr.bf16.mxu0 %v12734
    %13289 = vmatpush1.bf16.msra.mxu0 %v12733
    %13290 = vmatprep.subr.bf16.mxu0 %v12738
    %13291 = vmatpush1.bf16.msra.mxu0 %v12737
    %13292 = vmatprep.subr.bf16.mxu0 %v12742
    %13293 = vmatpush1.bf16.msra.mxu0 %v12741
    %13294 = vmatprep.subr.bf16.mxu0 %v12746
    %13295 = vmatpush1.bf16.msra.mxu0 %v12745
    %13296 = vmatprep.subr.bf16.mxu0 %v12750
    %13297 = vmatpush1.bf16.msra.mxu0 %v12749
    %13298 = vmatprep.subr.bf16.mxu0 %v12754
    %13299 = vmatpush1.bf16.msra.mxu0 %v12753
    %13300 = vmatprep.subr.bf16.mxu0 %v12758
    %13301 = vmatpush1.bf16.msra.mxu0 %v12757
    %13302 = vmatprep.subr.bf16.mxu0 %v12762
    %13303 = vmatpush1.bf16.msra.mxu0 %v12761
    %13304 = vmatprep.subr.bf16.mxu0 %v12766
    %13305 = vmatpush1.bf16.msra.mxu0 %v12765
    %13306 = vmatprep.subr.bf16.mxu0 %v12770
    %13307 = vmatpush1.bf16.msra.mxu0 %v12769
    %13308 = vmatprep.subr.bf16.mxu0 %v12774
    %13309 = vmatpush1.bf16.msra.mxu0 %v12773
    %13310 = vmatprep.subr.bf16.mxu0 %v12778
    %13311 = vmatpush1.bf16.msra.mxu0 %v12777
    %13312 = vmatprep.subr.bf16.mxu0 %v12782
    %13313 = vmatpush1.bf16.msra.mxu0 %v12781
    %13314 = vmatprep.subr.bf16.mxu0 %v12786
    %13315 = vmatpush1.bf16.msra.mxu0 %v12785
    %13316 = vmatprep.subr.bf16.mxu0 %v12790
    %13317 = vmatpush1.bf16.msra.mxu0 %v12789
    %13318 = vmatprep.subr.bf16.mxu0 %v12794
    %13319 = vmatpush1.bf16.msra.mxu0 %v12793
    %13320 = vmatprep.mubr.bf16.mxu0 %v11790
    %13321 = vmatmul.mubr.bf16.gmra.mrb[0].mxu0 %v11789
    %v13322 = vpop.f32.mrb[0].mxu0
    %v13323 = vadd.f32 %v13280, %v13322
    %v13324 = vpop.f32.mrb[0].mxu0
    %v13325 = vadd.f32 %v13282, %v13324
    %v13326 = vpop.f32.mrb[0].mxu0
    %v13327 = vadd.f32 %v13284, %v13326
    %v13328 = vpop.f32.mrb[0].mxu0
    %v13329 = vadd.f32 %v13286, %v13328
    %13330 = vdwg.mxu0
    %13331 = vmatprep.subr.bf16.mxu0 %v12798
    %13332 = vmatpush1.bf16.msra.mxu0 %v12797
    %13333 = vmatprep.subr.bf16.mxu0 %v12802
    %13334 = vmatpush1.bf16.msra.mxu0 %v12801
    %13335 = vmatprep.subr.bf16.mxu0 %v12806
    %13336 = vmatpush1.bf16.msra.mxu0 %v12805
    %13337 = vmatprep.subr.bf16.mxu0 %v12810
    %13338 = vmatpush1.bf16.msra.mxu0 %v12809
    %13339 = vmatprep.subr.bf16.mxu0 %v12814
    %13340 = vmatpush1.bf16.msra.mxu0 %v12813
    %13341 = vmatprep.subr.bf16.mxu0 %v12818
    %13342 = vmatpush1.bf16.msra.mxu0 %v12817
    %13343 = vmatprep.subr.bf16.mxu0 %v12822
    %13344 = vmatpush1.bf16.msra.mxu0 %v12821
    %13345 = vmatprep.subr.bf16.mxu0 %v12826
    %13346 = vmatpush1.bf16.msra.mxu0 %v12825
    %13347 = vmatprep.subr.bf16.mxu0 %v12830
    %13348 = vmatpush1.bf16.msra.mxu0 %v12829
    %13349 = vmatprep.subr.bf16.mxu0 %v12834
    %13350 = vmatpush1.bf16.msra.mxu0 %v12833
    %13351 = vmatprep.subr.bf16.mxu0 %v12838
    %13352 = vmatpush1.bf16.msra.mxu0 %v12837
    %13353 = vmatprep.subr.bf16.mxu0 %v12842
    %13354 = vmatpush1.bf16.msra.mxu0 %v12841
    %13355 = vmatprep.subr.bf16.mxu0 %v12846
    %13356 = vmatpush1.bf16.msra.mxu0 %v12845
    %13357 = vmatprep.subr.bf16.mxu0 %v12850
    %13358 = vmatpush1.bf16.msra.mxu0 %v12849
    %13359 = vmatprep.subr.bf16.mxu0 %v12854
    %13360 = vmatpush1.bf16.msra.mxu0 %v12853
    %13361 = vmatprep.subr.bf16.mxu0 %v12858
    %13362 = vmatpush1.bf16.msra.mxu0 %v12857
    %13363 = vmatprep.mubr.bf16.mxu0 %v11792
    %13364 = vmatmul.mubr.bf16.gmra.mrb[0].mxu0 %v11791
    %v13365 = vpop.f32.mrb[0].mxu0
    %v13366 = vadd.f32 %v13323, %v13365
    %v13367 = vpop.f32.mrb[0].mxu0
    %v13368 = vadd.f32 %v13325, %v13367
    %v13369 = vpop.f32.mrb[0].mxu0
    %v13370 = vadd.f32 %v13327, %v13369
    %v13371 = vpop.f32.mrb[0].mxu0
    %v13372 = vadd.f32 %v13329, %v13371
    %13373 = vdwg.mxu0
    %13374 = vmatprep.subr.bf16.mxu0 %v12862
    %13375 = vmatpush1.bf16.msra.mxu0 %v12861
    %13376 = vmatprep.subr.bf16.mxu0 %v12866
    %13377 = vmatpush1.bf16.msra.mxu0 %v12865
    %13378 = vmatprep.subr.bf16.mxu0 %v12870
    %13379 = vmatpush1.bf16.msra.mxu0 %v12869
    %13380 = vmatprep.subr.bf16.mxu0 %v12874
    %13381 = vmatpush1.bf16.msra.mxu0 %v12873
    %13382 = vmatprep.subr.bf16.mxu0 %v12878
    %13383 = vmatpush1.bf16.msra.mxu0 %v12877
    %13384 = vmatprep.subr.bf16.mxu0 %v12882
    %13385 = vmatpush1.bf16.msra.mxu0 %v12881
    %13386 = vmatprep.subr.bf16.mxu0 %v12886
    %13387 = vmatpush1.bf16.msra.mxu0 %v12885
    %13388 = vmatprep.subr.bf16.mxu0 %v12890
    %13389 = vmatpush1.bf16.msra.mxu0 %v12889
    %13390 = vmatprep.subr.bf16.mxu0 %v12894
    %13391 = vmatpush1.bf16.msra.mxu0 %v12893
    %13392 = vmatprep.subr.bf16.mxu0 %v12898
    %13393 = vmatpush1.bf16.msra.mxu0 %v12897
    %13394 = vmatprep.subr.bf16.mxu0 %v12902
    %13395 = vmatpush1.bf16.msra.mxu0 %v12901
    %13396 = vmatprep.subr.bf16.mxu0 %v12906
    %13397 = vmatpush1.bf16.msra.mxu0 %v12905
    %13398 = vmatprep.subr.bf16.mxu0 %v12910
    %13399 = vmatpush1.bf16.msra.mxu0 %v12909
    %13400 = vmatprep.subr.bf16.mxu0 %v12914
    %13401 = vmatpush1.bf16.msra.mxu0 %v12913
    %13402 = vmatprep.subr.bf16.mxu0 %v12918
    %13403 = vmatpush1.bf16.msra.mxu0 %v12917
    %13404 = vmatprep.subr.bf16.mxu0 %v12922
    %13405 = vmatpush1.bf16.msra.mxu0 %v12921
    %13406 = vmatprep.mubr.bf16.mxu0 %v11794
    %13407 = vmatmul.mubr.bf16.gmra.mrb[0].mxu0 %v11793
    %v13408 = vpop.f32.mrb[0].mxu0
    %v13409 = vadd.f32 %v13366, %v13408
    %v13410 = vpop.f32.mrb[0].mxu0
    %v13411 = vadd.f32 %v13368, %v13410
    %v13412 = vpop.f32.mrb[0].mxu0
    %v13413 = vadd.f32 %v13370, %v13412
    %v13414 = vpop.f32.mrb[0].mxu0
    %v13415 = vadd.f32 %v13372, %v13414
    %13416 = vdwg.mxu0
    %13417 = vmatprep.subr.bf16.mxu0 %v12926
    %13418 = vmatpush1.bf16.msra.mxu0 %v12925
    %13419 = vmatprep.subr.bf16.mxu0 %v12930
    %13420 = vmatpush1.bf16.msra.mxu0 %v12929
    %13421 = vmatprep.subr.bf16.mxu0 %v12934
    %13422 = vmatpush1.bf16.msra.mxu0 %v12933
    %13423 = vmatprep.subr.bf16.mxu0 %v12938
    %13424 = vmatpush1.bf16.msra.mxu0 %v12937
    %13425 = vmatprep.subr.bf16.mxu0 %v12942
    %13426 = vmatpush1.bf16.msra.mxu0 %v12941
    %13427 = vmatprep.subr.bf16.mxu0 %v12946
    %13428 = vmatpush1.bf16.msra.mxu0 %v12945
    %13429 = vmatprep.subr.bf16.mxu0 %v12950
    %13430 = vmatpush1.bf16.msra.mxu0 %v12949
    %13431 = vmatprep.subr.bf16.mxu0 %v12954
    %13432 = vmatpush1.bf16.msra.mxu0 %v12953
    %13433 = vmatprep.subr.bf16.mxu0 0
    %13434 = vmatpush1.bf16.msra.mxu0 0
    %13435 = vmatprep.subr.bf16.mxu0 0
    %13436 = vmatpush1.bf16.msra.mxu0 0
    %13437 = vmatprep.subr.bf16.mxu0 0
    %13438 = vmatpush1.bf16.msra.mxu0 0
    %13439 = vmatprep.subr.bf16.mxu0 0
    %13440 = vmatpush1.bf16.msra.mxu0 0
    %13441 = vmatprep.subr.bf16.mxu0 0
    %13442 = vmatpush1.bf16.msra.mxu0 0
    %13443 = vmatprep.subr.bf16.mxu0 0
    %13444 = vmatpush1.bf16.msra.mxu0 0
    %13445 = vmatprep.subr.bf16.mxu0 0
    %13446 = vmatpush1.bf16.msra.mxu0 0
    %13447 = vmatprep.subr.bf16.mxu0 0
    %13448 = vmatpush1.bf16.msra.mxu0 0
    %13449 = vmatprep.mubr.bf16.mxu0 0
    %13450 = vmatmul.mubr.bf16.gmra.mrb[0].mxu0 %v11795
    %v13451 = vpop.f32.mrb[0].mxu0
    %v13452 = vadd.f32 %v13409, %v13451
    %v13453 = vpop.f32.mrb[0].mxu0
    %v13454 = vadd.f32 %v13411, %v13453
    %v13455 = vpop.f32.mrb[0].mxu0
    %v13456 = vadd.f32 %v13413, %v13455
    %v13457 = vpop.f32.mrb[0].mxu0
    %v13458 = vadd.f32 %v13415, %v13457
    %13459 = vdwg.mxu0
    %13460 = vmatprep.subr.bf16.mxu0 %v12672
    %13461 = vmatpush1.bf16.msra.mxu0 %v12671
    %13462 = vmatprep.subr.bf16.mxu0 %v12676
    %13463 = vmatpush1.bf16.msra.mxu0 %v12675
    %13464 = vmatprep.subr.bf16.mxu0 %v12680
    %13465 = vmatpush1.bf16.msra.mxu0 %v12679
    %13466 = vmatprep.subr.bf16.mxu0 %v12684
    %13467 = vmatpush1.bf16.msra.mxu0 %v12683
    %13468 = vmatprep.subr.bf16.mxu0 %v12688
    %13469 = vmatpush1.bf16.msra.mxu0 %v12687
    %13470 = vmatprep.subr.bf16.mxu0 %v12692
    %13471 = vmatpush1.bf16.msra.mxu0 %v12691
    %13472 = vmatprep.subr.bf16.mxu0 %v12696
    %13473 = vmatpush1.bf16.msra.mxu0 %v12695
    %13474 = vmatprep.subr.bf16.mxu0 %v12700
    %13475 = vmatpush1.bf16.msra.mxu0 %v12699
    %13476 = vmatprep.subr.bf16.mxu0 %v12704
    %13477 = vmatpush1.bf16.msra.mxu0 %v12703
    %13478 = vmatprep.subr.bf16.mxu0 %v12708
    %13479 = vmatpush1.bf16.msra.mxu0 %v12707
    %13480 = vmatprep.subr.bf16.mxu0 %v12712
    %13481 = vmatpush1.bf16.msra.mxu0 %v12711
    %13482 = vmatprep.subr.bf16.mxu0 %v12716
    %13483 = vmatpush1.bf16.msra.mxu0 %v12715
    %13484 = vmatprep.subr.bf16.mxu0 %v12720
    %13485 = vmatpush1.bf16.msra.mxu0 %v12719
    %13486 = vmatprep.subr.bf16.mxu0 %v12724
    %13487 = vmatpush1.bf16.msra.mxu0 %v12723
    %13488 = vmatprep.subr.bf16.mxu0 %v12728
    %13489 = vmatpush1.bf16.msra.mxu0 %v12727
    %13490 = vmatprep.subr.bf16.mxu0 %v12732
    %13491 = vmatpush1.bf16.msra.mxu0 %v12731
    %13492 = vmatprep.mubr.bf16.mxu0 %v11788
    %13493 = vmatmul.mubr.bf16.gmra.mrb[0].mxu0 %v11787
    %v13494 = vpop.f32.mrb[0].mxu0
    %v13495 = vadd.f32 0.0, %v13494
    %v13496 = vpop.f32.mrb[0].mxu0
    %v13497 = vadd.f32 0.0, %v13496
    %v13498 = vpop.f32.mrb[0].mxu0
    %v13499 = vadd.f32 0.0, %v13498
    %v13500 = vpop.f32.mrb[0].mxu0
    %v13501 = vadd.f32 0.0, %v13500
    %13502 = vdwg.mxu0
    %13503 = vmatprep.subr.bf16.mxu0 %v12736
    %13504 = vmatpush1.bf16.msra.mxu0 %v12735
    %13505 = vmatprep.subr.bf16.mxu0 %v12740
    %13506 = vmatpush1.bf16.msra.mxu0 %v12739
    %13507 = vmatprep.subr.bf16.mxu0 %v12744
    %13508 = vmatpush1.bf16.msra.mxu0 %v12743
    %13509 = vmatprep.subr.bf16.mxu0 %v12748
    %13510 = vmatpush1.bf16.msra.mxu0 %v12747
    %13511 = vmatprep.subr.bf16.mxu0 %v12752
    %13512 = vmatpush1.bf16.msra.mxu0 %v12751
    %13513 = vmatprep.subr.bf16.mxu0 %v12756
    %13514 = vmatpush1.bf16.msra.mxu0 %v12755
    %13515 = vmatprep.subr.bf16.mxu0 %v12760
    %13516 = vmatpush1.bf16.msra.mxu0 %v12759
    %13517 = vmatprep.subr.bf16.mxu0 %v12764
    %13518 = vmatpush1.bf16.msra.mxu0 %v12763
    %13519 = vmatprep.subr.bf16.mxu0 %v12768
    %13520 = vmatpush1.bf16.msra.mxu0 %v12767
    %13521 = vmatprep.subr.bf16.mxu0 %v12772
    %13522 = vmatpush1.bf16.msra.mxu0 %v12771
    %13523 = vmatprep.subr.bf16.mxu0 %v12776
    %13524 = vmatpush1.bf16.msra.mxu0 %v12775
    %13525 = vmatprep.subr.bf16.mxu0 %v12780
    %13526 = vmatpush1.bf16.msra.mxu0 %v12779
    %13527 = vmatprep.subr.bf16.mxu0 %v12784
    %13528 = vmatpush1.bf16.msra.mxu0 %v12783
    %13529 = vmatprep.subr.bf16.mxu0 %v12788
    %13530 = vmatpush1.bf16.msra.mxu0 %v12787
    %13531 = vmatprep.subr.bf16.mxu0 %v12792
    %13532 = vmatpush1.bf16.msra.mxu0 %v12791
    %13533 = vmatprep.subr.bf16.mxu0 %v12796
    %13534 = vmatpush1.bf16.msra.mxu0 %v12795
    %13535 = vmatprep.mubr.bf16.mxu0 %v11790
    %13536 = vmatmul.mubr.bf16.gmra.mrb[0].mxu0 %v11789
    %v13537 = vpop.f32.mrb[0].mxu0
    %v13538 = vadd.f32 %v13495, %v13537
    %v13539 = vpop.f32.mrb[0].mxu0
    %v13540 = vadd.f32 %v13497, %v13539
    %v13541 = vpop.f32.mrb[0].mxu0
    %v13542 = vadd.f32 %v13499, %v13541
    %v13543 = vpop.f32.mrb[0].mxu0
    %v13544 = vadd.f32 %v13501, %v13543
    %13545 = vdwg.mxu0
    %13546 = vmatprep.subr.bf16.mxu0 %v12800
    %13547 = vmatpush1.bf16.msra.mxu0 %v12799
    %13548 = vmatprep.subr.bf16.mxu0 %v12804
    %13549 = vmatpush1.bf16.msra.mxu0 %v12803
    %13550 = vmatprep.subr.bf16.mxu0 %v12808
    %13551 = vmatpush1.bf16.msra.mxu0 %v12807
    %13552 = vmatprep.subr.bf16.mxu0 %v12812
    %13553 = vmatpush1.bf16.msra.mxu0 %v12811
    %13554 = vmatprep.subr.bf16.mxu0 %v12816
    %13555 = vmatpush1.bf16.msra.mxu0 %v12815
    %13556 = vmatprep.subr.bf16.mxu0 %v12820
    %13557 = vmatpush1.bf16.msra.mxu0 %v12819
    %13558 = vmatprep.subr.bf16.mxu0 %v12824
    %13559 = vmatpush1.bf16.msra.mxu0 %v12823
    %13560 = vmatprep.subr.bf16.mxu0 %v12828
    %13561 = vmatpush1.bf16.msra.mxu0 %v12827
    %13562 = vmatprep.subr.bf16.mxu0 %v12832
    %13563 = vmatpush1.bf16.msra.mxu0 %v12831
    %13564 = vmatprep.subr.bf16.mxu0 %v12836
    %13565 = vmatpush1.bf16.msra.mxu0 %v12835
    %13566 = vmatprep.subr.bf16.mxu0 %v12840
    %13567 = vmatpush1.bf16.msra.mxu0 %v12839
    %13568 = vmatprep.subr.bf16.mxu0 %v12844
    %13569 = vmatpush1.bf16.msra.mxu0 %v12843
    %13570 = vmatprep.subr.bf16.mxu0 %v12848
    %13571 = vmatpush1.bf16.msra.mxu0 %v12847
    %13572 = vmatprep.subr.bf16.mxu0 %v12852
    %13573 = vmatpush1.bf16.msra.mxu0 %v12851
    %13574 = vmatprep.subr.bf16.mxu0 %v12856
    %13575 = vmatpush1.bf16.msra.mxu0 %v12855
    %13576 = vmatprep.subr.bf16.mxu0 %v12860
    %13577 = vmatpush1.bf16.msra.mxu0 %v12859
    %13578 = vmatprep.mubr.bf16.mxu0 %v11792
    %13579 = vmatmul.mubr.bf16.gmra.mrb[0].mxu0 %v11791
    %v13580 = vpop.f32.mrb[0].mxu0
    %v13581 = vadd.f32 %v13538, %v13580
    %v13582 = vpop.f32.mrb[0].mxu0
    %v13583 = vadd.f32 %v13540, %v13582
    %v13584 = vpop.f32.mrb[0].mxu0
    %v13585 = vadd.f32 %v13542, %v13584
    %v13586 = vpop.f32.mrb[0].mxu0
    %v13587 = vadd.f32 %v13544, %v13586
    %13588 = vdwg.mxu0
    %13589 = vmatprep.subr.bf16.mxu0 %v12864
    %13590 = vmatpush1.bf16.msra.mxu0 %v12863
    %13591 = vmatprep.subr.bf16.mxu0 %v12868
    %13592 = vmatpush1.bf16.msra.mxu0 %v12867
    %13593 = vmatprep.subr.bf16.mxu0 %v12872
    %13594 = vmatpush1.bf16.msra.mxu0 %v12871
    %13595 = vmatprep.subr.bf16.mxu0 %v12876
    %13596 = vmatpush1.bf16.msra.mxu0 %v12875
    %13597 = vmatprep.subr.bf16.mxu0 %v12880
    %13598 = vmatpush1.bf16.msra.mxu0 %v12879
    %13599 = vmatprep.subr.bf16.mxu0 %v12884
    %13600 = vmatpush1.bf16.msra.mxu0 %v12883
    %13601 = vmatprep.subr.bf16.mxu0 %v12888
    %13602 = vmatpush1.bf16.msra.mxu0 %v12887
    %13603 = vmatprep.subr.bf16.mxu0 %v12892
    %13604 = vmatpush1.bf16.msra.mxu0 %v12891
    %13605 = vmatprep.subr.bf16.mxu0 %v12896
    %13606 = vmatpush1.bf16.msra.mxu0 %v12895
    %13607 = vmatprep.subr.bf16.mxu0 %v12900
    %13608 = vmatpush1.bf16.msra.mxu0 %v12899
    %13609 = vmatprep.subr.bf16.mxu0 %v12904
    %13610 = vmatpush1.bf16.msra.mxu0 %v12903
    %13611 = vmatprep.subr.bf16.mxu0 %v12908
    %13612 = vmatpush1.bf16.msra.mxu0 %v12907
    %13613 = vmatprep.subr.bf16.mxu0 %v12912
    %13614 = vmatpush1.bf16.msra.mxu0 %v12911
    %13615 = vmatprep.subr.bf16.mxu0 %v12916
    %13616 = vmatpush1.bf16.msra.mxu0 %v12915
    %13617 = vmatprep.subr.bf16.mxu0 %v12920
    %13618 = vmatpush1.bf16.msra.mxu0 %v12919
    %13619 = vmatprep.subr.bf16.mxu0 %v12924
    %13620 = vmatpush1.bf16.msra.mxu0 %v12923
    %13621 = vmatprep.mubr.bf16.mxu0 %v11794
    %13622 = vmatmul.mubr.bf16.gmra.mrb[0].mxu0 %v11793
    %v13623 = vpop.f32.mrb[0].mxu0
    %v13624 = vadd.f32 %v13581, %v13623
    %v13625 = vpop.f32.mrb[0].mxu0
    %v13626 = vadd.f32 %v13583, %v13625
    %v13627 = vpop.f32.mrb[0].mxu0
    %v13628 = vadd.f32 %v13585, %v13627
    %v13629 = vpop.f32.mrb[0].mxu0
    %v13630 = vadd.f32 %v13587, %v13629
    %13631 = vdwg.mxu0
    %13632 = vmatprep.subr.bf16.mxu0 %v12928
    %13633 = vmatpush1.bf16.msra.mxu0 %v12927
    %13634 = vmatprep.subr.bf16.mxu0 %v12932
    %13635 = vmatpush1.bf16.msra.mxu0 %v12931
    %13636 = vmatprep.subr.bf16.mxu0 %v12936
    %13637 = vmatpush1.bf16.msra.mxu0 %v12935
    %13638 = vmatprep.subr.bf16.mxu0 %v12940
    %13639 = vmatpush1.bf16.msra.mxu0 %v12939
    %13640 = vmatprep.subr.bf16.mxu0 %v12944
    %13641 = vmatpush1.bf16.msra.mxu0 %v12943
    %13642 = vmatprep.subr.bf16.mxu0 %v12948
    %13643 = vmatpush1.bf16.msra.mxu0 %v12947
    %13644 = vmatprep.subr.bf16.mxu0 %v12952
    %13645 = vmatpush1.bf16.msra.mxu0 %v12951
    %13646 = vmatprep.subr.bf16.mxu0 %v12956
    %13647 = vmatpush1.bf16.msra.mxu0 %v12955
    %13648 = vmatprep.subr.bf16.mxu0 0
    %13649 = vmatpush1.bf16.msra.mxu0 0
    %13650 = vmatprep.subr.bf16.mxu0 0
    %13651 = vmatpush1.bf16.msra.mxu0 0
    %13652 = vmatprep.subr.bf16.mxu0 0
    %13653 = vmatpush1.bf16.msra.mxu0 0
    %13654 = vmatprep.subr.bf16.mxu0 0
    %13655 = vmatpush1.bf16.msra.mxu0 0
    %13656 = vmatprep.subr.bf16.mxu0 0
    %13657 = vmatpush1.bf16.msra.mxu0 0
    %13658 = vmatprep.subr.bf16.mxu0 0
    %13659 = vmatpush1.bf16.msra.mxu0 0
    %13660 = vmatprep.subr.bf16.mxu0 0
    %13661 = vmatpush1.bf16.msra.mxu0 0
    %13662 = vmatprep.subr.bf16.mxu0 0
    %13663 = vmatpush1.bf16.msra.mxu0 0
    %13664 = vmatprep.mubr.bf16.mxu0 0
    %13665 = vmatmul.mubr.bf16.gmra.mrb[0].mxu0 %v11795
    %v13666 = vpop.f32.mrb[0].mxu0
    %v13667 = vadd.f32 %v13624, %v13666
    %v13668 = vpop.f32.mrb[0].mxu0
    %v13669 = vadd.f32 %v13626, %v13668
    %v13670 = vpop.f32.mrb[0].mxu0
    %v13671 = vadd.f32 %v13628, %v13670
    %v13672 = vpop.f32.mrb[0].mxu0
    %v13673 = vadd.f32 %v13630, %v13672
    %13674 = vdwg.mxu0
    %v13675 = vadd.f32 %v11436, %v13452
    %v13676 = vadd.f32 %v11437, %v13454
    %v13677 = vadd.f32 %v11438, %v13667
    %v13678 = vadd.f32 %v11439, %v13669
    %v13679 = vadd.f32 %v11440, %v13456
    %v13680 = vadd.f32 %v11441, %v13458
    %v13681 = vadd.f32 %v11442, %v13671
    %v13682 = vadd.f32 %v11443, %v13673
    %v13683 = vld [vmem:[#allocation14] sm:$0xf]
    %v13685 = vlaneseq
    %v13686 = vshrl.u32 %v13685, 7
    %v13687 = vsub.s32 0, %v13686
    %v13688 = vrot.slane %v13683, %v13687
    %v13689 = vlaneseq
    %v13690 = vshrl.u32 %v13689, 7
    %v13691 = vsub.s32 1, %v13690
    %v13692 = vrot.slane %v13683, %v13691
    %v13693 = vlaneseq
    %v13694 = vshrl.u32 %v13693, 7
    %v13695 = vsub.s32 2, %v13694
    %v13696 = vrot.slane %v13683, %v13695
    %v13697 = vlaneseq
    %v13698 = vshrl.u32 %v13697, 7
    %v13699 = vsub.s32 3, %v13698
    %v13700 = vrot.slane %v13683, %v13699
    %v13705 = vadd.f32 %v13675, %v13688
    %v13706 = vadd.f32 %v13676, %v13692
    %v13707 = vadd.f32 %v13677, %v13696
    %v13708 = vadd.f32 %v13678, %v13700
    %v13709 = vadd.f32 %v13679, %v13688
    %v13710 = vadd.f32 %v13680, %v13692
    %v13711 = vadd.f32 %v13681, %v13696
    %v13712 = vadd.f32 %v13682, %v13700
    %v13713 = vmax.f32 %v13705, 0.0
    %v13714 = vmax.f32 %v13706, 0.0
    %v13715 = vmax.f32 %v13707, 0.0
    %v13716 = vmax.f32 %v13708, 0.0
    %v13717 = vmax.f32 %v13709, 0.0
    %v13718 = vmax.f32 %v13710, 0.0
    %v13719 = vmax.f32 %v13711, 0.0
    %v13720 = vmax.f32 %v13712, 0.0
    %v13721 = vpack.c.bf16 %v13717, %v13713
    %v13722 = vpack.c.bf16 %v13718, %v13714
    %v13723 = vpack.c.bf16 %v13719, %v13715
    %v13724 = vpack.c.bf16 %v13720, %v13716
    %v13725 = vld [vmem:[#allocation16] sm:$0xf]
    %v13726 = vld [vmem:[#allocation16 + $0x4] sm:$0xf]
    %v13727 = vld [vmem:[#allocation16 + $0x8] sm:$0xf]
    %v13728 = vld [vmem:[#allocation16 + $0xc] sm:$0xf]
    %v13729 = vld [vmem:[#allocation16 + $0x10] sm:$0xf]
    %v13730 = vld [vmem:[#allocation16 + $0x14] sm:$0xf]
    %v13731 = vld [vmem:[#allocation16 + $0x18] sm:$0xf]
    %v13732 = vld [vmem:[#allocation16 + $0x1c] sm:$0xf]
    %v13733 = vld [vmem:[#allocation16 + $0x20] sm:$0xf]
    %v13734 = vld [vmem:[#allocation16 + $0x24] sm:$0xf]
    %v13735 = vld [vmem:[#allocation16 + $0x28] sm:$0xf]
    %v13736 = vld [vmem:[#allocation16 + $0x2c] sm:$0xf]
    %v13737 = vld [vmem:[#allocation16 + $0x30] sm:$0xf]
    %v13738 = vld [vmem:[#allocation16 + $0x34] sm:$0xf]
    %v13739 = vld [vmem:[#allocation16 + $0x38] sm:$0xf]
    %v13740 = vld [vmem:[#allocation16 + $0x3c] sm:$0xf]
    %v13741 = vld [vmem:[#allocation16 + $0x40] sm:$0xf]
    %v13742 = vld [vmem:[#allocation16 + $0x44] sm:$0xf]
    %v13743 = vld [vmem:[#allocation16 + $0x48] sm:$0xf]
    %v13744 = vld [vmem:[#allocation16 + $0x4c] sm:$0xf]
    %v13745 = vld [vmem:[#allocation16 + $0x50] sm:$0xf]
    %v13746 = vld [vmem:[#allocation16 + $0x54] sm:$0xf]
    %v13747 = vld [vmem:[#allocation16 + $0x58] sm:$0xf]
    %v13748 = vld [vmem:[#allocation16 + $0x5c] sm:$0xf]
    %v13749 = vld [vmem:[#allocation16 + $0x60] sm:$0xf]
    %v13750 = vld [vmem:[#allocation16 + $0x64] sm:$0xf]
    %v13751 = vld [vmem:[#allocation16 + $0x68] sm:$0xf]
    %v13752 = vld [vmem:[#allocation16 + $0x6c] sm:$0xf]
    %v13753 = vld [vmem:[#allocation16 + $0x70] sm:$0xf]
    %v13754 = vld [vmem:[#allocation16 + $0x74] sm:$0xf]
    %v13755 = vld [vmem:[#allocation16 + $0x78] sm:$0xf]
    %v13756 = vld [vmem:[#allocation16 + $0x7c] sm:$0xf]
    %v13757 = vld [vmem:[#allocation16 + $0x80] sm:$0xf]
    %v13758 = vld [vmem:[#allocation16 + $0x84] sm:$0xf]
    %v13759 = vld [vmem:[#allocation16 + $0x88] sm:$0xf]
    %v13760 = vld [vmem:[#allocation16 + $0x8c] sm:$0xf]
    %v13761 = vld [vmem:[#allocation16 + $0x90] sm:$0xf]
    %v13762 = vld [vmem:[#allocation16 + $0x94] sm:$0xf]
    %v13763 = vld [vmem:[#allocation16 + $0x98] sm:$0xf]
    %v13764 = vld [vmem:[#allocation16 + $0x9c] sm:$0xf]
    %v13765 = vld [vmem:[#allocation16 + $0xa0] sm:$0xf]
    %v13766 = vld [vmem:[#allocation16 + $0xa4] sm:$0xf]
    %v13767 = vld [vmem:[#allocation16 + $0xa8] sm:$0xf]
    %v13768 = vld [vmem:[#allocation16 + $0xac] sm:$0xf]
    %v13769 = vld [vmem:[#allocation16 + $0xb0] sm:$0xf]
    %v13770 = vld [vmem:[#allocation16 + $0xb4] sm:$0xf]
    %v13771 = vld [vmem:[#allocation16 + $0xb8] sm:$0xf]
    %v13772 = vld [vmem:[#allocation16 + $0xbc] sm:$0xf]
    %v13773 = vld [vmem:[#allocation16 + $0xc0] sm:$0xf]
    %v13774 = vld [vmem:[#allocation16 + $0xc4] sm:$0xf]
    %v13775 = vld [vmem:[#allocation16 + $0xc8] sm:$0xf]
    %v13776 = vld [vmem:[#allocation16 + $0xcc] sm:$0xf]
    %v13777 = vld [vmem:[#allocation16 + $0xd0] sm:$0xf]
    %v13778 = vld [vmem:[#allocation16 + $0xd4] sm:$0xf]
    %v13779 = vld [vmem:[#allocation16 + $0xd8] sm:$0xf]
    %v13780 = vld [vmem:[#allocation16 + $0xdc] sm:$0xf]
    %v13781 = vld [vmem:[#allocation16 + $0xe0] sm:$0xf]
    %v13782 = vld [vmem:[#allocation16 + $0xe4] sm:$0xf]
    %v13783 = vld [vmem:[#allocation16 + $0xe8] sm:$0xf]
    %v13784 = vld [vmem:[#allocation16 + $0xec] sm:$0xf]
    %v13785 = vld [vmem:[#allocation16 + $0xf0] sm:$0xf]
    %v13786 = vld [vmem:[#allocation16 + $0xf4] sm:$0xf]
    %v13787 = vld [vmem:[#allocation16 + $0xf8] sm:$0xf]
    %v13788 = vld [vmem:[#allocation16 + $0xfc] sm:$0xf]
    %v13789 = vld [vmem:[#allocation17] sm:$0x1]
    %v13791 = vlaneseq
    %v13792 = vshrl.u32 %v13791, 7
    %v13793 = vsub.s32 0, %v13792
    %v13794 = vrot.slane %v13789, %v13793
    %v13860 = vunpack.c.l.b16 %v13725
    %v13861 = vunpack.c.l.b16 %v13726
    %v13862 = vunpack.c.l.b16 %v13727
    %v13863 = vunpack.c.l.b16 %v13728
    %v13864 = vunpack.c.l.b16 %v13729
    %v13865 = vunpack.c.l.b16 %v13730
    %v13866 = vunpack.c.l.b16 %v13731
    %v13867 = vunpack.c.l.b16 %v13732
    %v13868 = vunpack.c.l.b16 %v13733
    %v13869 = vunpack.c.l.b16 %v13734
    %v13870 = vunpack.c.l.b16 %v13735
    %v13871 = vunpack.c.l.b16 %v13736
    %v13872 = vunpack.c.l.b16 %v13737
    %v13873 = vunpack.c.l.b16 %v13738
    %v13874 = vunpack.c.l.b16 %v13739
    %v13875 = vunpack.c.l.b16 %v13740
    %v13876 = vunpack.c.l.b16 %v13741
    %v13877 = vunpack.c.l.b16 %v13742
    %v13878 = vunpack.c.l.b16 %v13743
    %v13879 = vunpack.c.l.b16 %v13744
    %v13880 = vunpack.c.l.b16 %v13745
    %v13881 = vunpack.c.l.b16 %v13746
    %v13882 = vunpack.c.l.b16 %v13747
    %v13883 = vunpack.c.l.b16 %v13748
    %v13884 = vunpack.c.l.b16 %v13749
    %v13885 = vunpack.c.l.b16 %v13750
    %v13886 = vunpack.c.l.b16 %v13751
    %v13887 = vunpack.c.l.b16 %v13752
    %v13888 = vunpack.c.l.b16 %v13753
    %v13889 = vunpack.c.l.b16 %v13754
    %v13890 = vunpack.c.l.b16 %v13755
    %v13891 = vunpack.c.l.b16 %v13756
    %v13892 = vunpack.c.l.b16 %v13757
    %v13893 = vunpack.c.l.b16 %v13758
    %v13894 = vunpack.c.l.b16 %v13759
    %v13895 = vunpack.c.l.b16 %v13760
    %v13896 = vunpack.c.l.b16 %v13761
    %v13897 = vunpack.c.l.b16 %v13762
    %v13898 = vunpack.c.l.b16 %v13763
    %v13899 = vunpack.c.l.b16 %v13764
    %v13900 = vunpack.c.l.b16 %v13765
    %v13901 = vunpack.c.l.b16 %v13766
    %v13902 = vunpack.c.l.b16 %v13767
    %v13903 = vunpack.c.l.b16 %v13768
    %v13904 = vunpack.c.l.b16 %v13769
    %v13905 = vunpack.c.l.b16 %v13770
    %v13906 = vunpack.c.l.b16 %v13771
    %v13907 = vunpack.c.l.b16 %v13772
    %v13908 = vunpack.c.l.b16 %v13773
    %v13909 = vunpack.c.l.b16 %v13774
    %v13910 = vunpack.c.l.b16 %v13775
    %v13911 = vunpack.c.l.b16 %v13776
    %v13912 = vunpack.c.l.b16 %v13777
    %v13913 = vunpack.c.l.b16 %v13778
    %v13914 = vunpack.c.l.b16 %v13779
    %v13915 = vunpack.c.l.b16 %v13780
    %v13916 = vunpack.c.l.b16 %v13781
    %v13917 = vunpack.c.l.b16 %v13782
    %v13918 = vunpack.c.l.b16 %v13783
    %v13919 = vunpack.c.l.b16 %v13784
    %v13920 = vunpack.c.l.b16 %v13785
    %v13921 = vunpack.c.l.b16 %v13786
    %v13922 = vunpack.c.l.b16 %v13787
    %v13923 = vunpack.c.l.b16 %v13788
    %v13924 = vpack.c.b16 %v13861, %v13860
    %v13925 = vpack.c.b16 %v13863, %v13862
    %v13926 = vpack.c.b16 %v13865, %v13864
    %v13927 = vpack.c.b16 %v13867, %v13866
    %v13928 = vpack.c.b16 %v13869, %v13868
    %v13929 = vpack.c.b16 %v13871, %v13870
    %v13930 = vpack.c.b16 %v13873, %v13872
    %v13931 = vpack.c.b16 %v13875, %v13874
    %v13932 = vpack.c.b16 %v13877, %v13876
    %v13933 = vpack.c.b16 %v13879, %v13878
    %v13934 = vpack.c.b16 %v13881, %v13880
    %v13935 = vpack.c.b16 %v13883, %v13882
    %v13936 = vpack.c.b16 %v13885, %v13884
    %v13937 = vpack.c.b16 %v13887, %v13886
    %v13938 = vpack.c.b16 %v13889, %v13888
    %v13939 = vpack.c.b16 %v13891, %v13890
    %v13940 = vpack.c.b16 %v13893, %v13892
    %v13941 = vpack.c.b16 %v13895, %v13894
    %v13942 = vpack.c.b16 %v13897, %v13896
    %v13943 = vpack.c.b16 %v13899, %v13898
    %v13944 = vpack.c.b16 %v13901, %v13900
    %v13945 = vpack.c.b16 %v13903, %v13902
    %v13946 = vpack.c.b16 %v13905, %v13904
    %v13947 = vpack.c.b16 %v13907, %v13906
    %v13948 = vpack.c.b16 %v13909, %v13908
    %v13949 = vpack.c.b16 %v13911, %v13910
    %v13950 = vpack.c.b16 %v13913, %v13912
    %v13951 = vpack.c.b16 %v13915, %v13914
    %v13952 = vpack.c.b16 %v13917, %v13916
    %v13953 = vpack.c.b16 %v13919, %v13918
    %v13954 = vpack.c.b16 %v13921, %v13920
    %v13955 = vpack.c.b16 %v13923, %v13922
    %13988 = vmatprep.subr.bf16.mxu0 0
    %13989 = vmatpush1.bf16.msra.mxu0 %v13924
    %13990 = vmatprep.subr.bf16.mxu0 0
    %13991 = vmatpush1.bf16.msra.mxu0 %v13925
    %13992 = vmatprep.subr.bf16.mxu0 0
    %13993 = vmatpush1.bf16.msra.mxu0 %v13926
    %13994 = vmatprep.subr.bf16.mxu0 0
    %13995 = vmatpush1.bf16.msra.mxu0 %v13927
    %13996 = vmatprep.subr.bf16.mxu0 0
    %13997 = vmatpush1.bf16.msra.mxu0 %v13928
    %13998 = vmatprep.subr.bf16.mxu0 0
    %13999 = vmatpush1.bf16.msra.mxu0 %v13929
    %14000 = vmatprep.subr.bf16.mxu0 0
    %14001 = vmatpush1.bf16.msra.mxu0 %v13930
    %14002 = vmatprep.subr.bf16.mxu0 0
    %14003 = vmatpush1.bf16.msra.mxu0 %v13931
    %14004 = vmatprep.subr.bf16.mxu0 0
    %14005 = vmatpush1.bf16.msra.mxu0 %v13932
    %14006 = vmatprep.subr.bf16.mxu0 0
    %14007 = vmatpush1.bf16.msra.mxu0 %v13933
    %14008 = vmatprep.subr.bf16.mxu0 0
    %14009 = vmatpush1.bf16.msra.mxu0 %v13934
    %14010 = vmatprep.subr.bf16.mxu0 0
    %14011 = vmatpush1.bf16.msra.mxu0 %v13935
    %14012 = vmatprep.subr.bf16.mxu0 0
    %14013 = vmatpush1.bf16.msra.mxu0 %v13936
    %14014 = vmatprep.subr.bf16.mxu0 0
    %14015 = vmatpush1.bf16.msra.mxu0 %v13937
    %14016 = vmatprep.subr.bf16.mxu0 0
    %14017 = vmatpush1.bf16.msra.mxu0 %v13938
    %14018 = vmatprep.subr.bf16.mxu0 0
    %14019 = vmatpush1.bf16.msra.mxu0 %v13939
    %14020 = vmatprep.mubr.bf16.mxu0 %v13722
    %14021 = vmatmul.mubr.bf16.gmra.mrb[0].mxu0 %v13721
    %v14022 = vpop.f32.mrb[0].mxu0
    %v14023 = vadd.f32 %v13794, %v14022
    %v14024 = vpop.f32.mrb[0].mxu0
    %v14025 = vpop.f32.mrb[0].mxu0
    %v14026 = vadd.f32 %v13794, %v14025
    %v14027 = vpop.f32.mrb[0].mxu0
    %14028 = vdwg.mxu0
    %14029 = vmatprep.subr.bf16.mxu0 0
    %14030 = vmatpush1.bf16.msra.mxu0 %v13940
    %14031 = vmatprep.subr.bf16.mxu0 0
    %14032 = vmatpush1.bf16.msra.mxu0 %v13941
    %14033 = vmatprep.subr.bf16.mxu0 0
    %14034 = vmatpush1.bf16.msra.mxu0 %v13942
    %14035 = vmatprep.subr.bf16.mxu0 0
    %14036 = vmatpush1.bf16.msra.mxu0 %v13943
    %14037 = vmatprep.subr.bf16.mxu0 0
    %14038 = vmatpush1.bf16.msra.mxu0 %v13944
    %14039 = vmatprep.subr.bf16.mxu0 0
    %14040 = vmatpush1.bf16.msra.mxu0 %v13945
    %14041 = vmatprep.subr.bf16.mxu0 0
    %14042 = vmatpush1.bf16.msra.mxu0 %v13946
    %14043 = vmatprep.subr.bf16.mxu0 0
    %14044 = vmatpush1.bf16.msra.mxu0 %v13947
    %14045 = vmatprep.subr.bf16.mxu0 0
    %14046 = vmatpush1.bf16.msra.mxu0 %v13948
    %14047 = vmatprep.subr.bf16.mxu0 0
    %14048 = vmatpush1.bf16.msra.mxu0 %v13949
    %14049 = vmatprep.subr.bf16.mxu0 0
    %14050 = vmatpush1.bf16.msra.mxu0 %v13950
    %14051 = vmatprep.subr.bf16.mxu0 0
    %14052 = vmatpush1.bf16.msra.mxu0 %v13951
    %14053 = vmatprep.subr.bf16.mxu0 0
    %14054 = vmatpush1.bf16.msra.mxu0 %v13952
    %14055 = vmatprep.subr.bf16.mxu0 0
    %14056 = vmatpush1.bf16.msra.mxu0 %v13953
    %14057 = vmatprep.subr.bf16.mxu0 0
    %14058 = vmatpush1.bf16.msra.mxu0 %v13954
    %14059 = vmatprep.subr.bf16.mxu0 0
    %14060 = vmatpush1.bf16.msra.mxu0 %v13955
    %14061 = vmatprep.mubr.bf16.mxu0 %v13724
    %14062 = vmatmul.mubr.bf16.gmra.mrb[0].mxu0 %v13723
    %v14063 = vpop.f32.mrb[0].mxu0
    %v14064 = vadd.f32 %v14023, %v14063
    %v14065 = vpop.f32.mrb[0].mxu0
    %v14066 = vpop.f32.mrb[0].mxu0
    %v14067 = vadd.f32 %v14026, %v14066
    %v14068 = vpop.f32.mrb[0].mxu0
    %14069 = vdwg.mxu0
    %14070 = vst [vmem:[%s13] sm:$0xff] %v14064
    %14071 = vst [vmem:[%s13 + $0x8] sm:$0xff] %v14067
    // Predicated region
    $region94: #{resnet_conv1d_forward.1} parent=1 // pred_check
      _
    $region95: #{resnet_conv1d_forward.1} parent=1 // pred_check_branch
      %14073 = sbr.rel (0) target = $region97
    $region96: #{resnet_conv1d_forward.1} parent=1 // pred_region
      _
    $region97: #{resnet_conv1d_forward.1} parent=1 // pred_fallthru
      _
    // Predicated region
    $region98: #{resnet_conv1d_forward.1} parent=1 // pred_check
      _
    $region99: #{resnet_conv1d_forward.1} parent=1 // pred_check_branch
      %14075 = sbr.rel (0) target = $region101
    $region100: #{resnet_conv1d_forward.1} parent=1 // pred_region
      _
    $region101: #{resnet_conv1d_forward.1} parent=1 // pred_fallthru
      _
    %14076 = vsyncpa [#allocation4], 1
    %14077 = vsyncpa [#allocation6], 1
    %14078 = vsyncpa [#allocation9], 1
    %14079 = vsyncpa [#allocation12], 1
    %14080 = vsyncpa [#allocation15], 1
    %14081 = vsyncpa [#allocation18], 1

</llo_original>
